<compile_context>
chip_gen: v5e
topology: v5e:2x2
jax: 0.10.0
libtpu: 0.0.40
codegen_flags: <defaults>
</compile_context>

<pallas_src>
import functools

import numpy as np
import jax
import jax.numpy as jnp
from jax.experimental import pallas as pl
from jax.experimental.pallas import tpu as pltpu


# Flip to jnp.bfloat16 on v6e/v7x for ~2-4x MXU throughput on the K=9F matmul.
_DOT_DTYPE = jnp.float32


def _round_up(x, m):
    return (x + m - 1) // m * m


# ----------------------------------------------------------------------------
# Single fused kernel: all three pyramid levels for one batch element.
#
# Per level, the post-lateral feature map x lives in a zero-padded "wide flat"
# VMEM scratch (rows = padded pixels (r*Wp + c), lanes = channels), so every
# 3x3-conv / ConvTranspose tap is a contiguous row window.  The 9 windows are
# packed along lanes into one (Mw, 9F) im2col scratch and contracted in a
# single matmul against a combined (9F, 5F) weight whose output lane blocks
# are [3x3 conv | pee | peo | poe | poo] (the 4 ConvT subpixel phases).
# ----------------------------------------------------------------------------
def _pyramid_kernel(
    c5_ref, c4_ref, c3_ref,
    w15_ref, b15_ref, wc5_ref, bc5_ref,
    w14_ref, b14_ref, wc4_ref, bc4_ref,
    w13_ref, b13_ref, wc3_ref, bc3_ref,
    p54_ref, p43_ref,
    o5_ref, o4_ref, o3_ref,
    xs5_ref, xs4_ref, xs3_ref, im_ref, out_ref,
    *, dims, F):
    f32 = jnp.float32

    def run_level(c_ref, w1_ref, b1_ref, wc_ref, bc_ref, xs_ref, o_ref,
                  H, W, Wp, res, n_out):
        Mw = H * Wp
        # ---- 1x1 lateral conv (+ fused residual add) on dense pixel rows ----
        y = jnp.dot(c_ref[0], w1_ref[...],
                    preferred_element_type=f32) + b1_ref[...]
        if res is not None:
            y = y + res
        # ---- scatter interior rows into the zero-padded wide-flat buffer ----
        # (halo stays exactly zero, so the shifted windows see zero padding)
        xs_ref[...] = jnp.zeros(xs_ref.shape, xs_ref.dtype)
        for i in range(H):
            dst = (1 + i) * Wp + 1
            xs_ref[dst:dst + W, :] = y[i * W:(i + 1) * W, :]
        # ---- in-VMEM im2col: 9 shifted windows -> lane blocks of im_ref ----
        for kh in range(3):
            for kw in range(3):
                k = kh * 3 + kw
                off = kh * Wp + kw
                im_ref[0:Mw, k * F:(k + 1) * F] = (
                    xs_ref[off:off + Mw, :].astype(im_ref.dtype))
        # ---- single fused matmul: 3x3 conv + (optionally) 4 ConvT phases ----
        out_ref[0:Mw, 0:n_out] = (
            jnp.dot(im_ref[0:Mw, :], wc_ref[...],
                    preferred_element_type=f32) + bc_ref[...])
        # Level output: [conv | junk] = 128 lanes -> unmasked stores;
        # the wrapper slices lanes [0:F) and the junk columns j >= W.
        o_ref[0] = out_ref[0:Mw, 0:2 * F].astype(o_ref.dtype)
        return Mw

    def upsample_residual(p_ref, Mw):
        # Dense next-level residual via constant 0/1 scatter matrices:
        #   res[i*W' + j] = phase_p[m*Wp + n]   (p, m, n fixed by parities).
        res = jnp.dot(p_ref[0], out_ref[0:Mw, F:2 * F],
                      preferred_element_type=f32)
        for p in range(1, 4):
            res = res + jnp.dot(p_ref[p],
                                out_ref[0:Mw, (1 + p) * F:(2 + p) * F],
                                preferred_element_type=f32)
        return res

    (H5, W5, Wp5), (H4, W4, Wp4), (H3, W3, Wp3) = dims

    # ---- level 5: P5_x = P5_1(C5); P5_out = P5_2(P5_x); phases = ConvT(P5_x)
    Mw5 = run_level(c5_ref, w15_ref, b15_ref, wc5_ref, bc5_ref, xs5_ref,
                    o5_ref, H5, W5, Wp5, None, 5 * F)
    res4 = upsample_residual(p54_ref, Mw5)

    # ---- level 4: P4_x = P5_up + P4_1(C4); P4_out = P4_2(P4_x); ConvT(P4_x)
    Mw4 = run_level(c4_ref, w14_ref, b14_ref, wc4_ref, bc4_ref, xs4_ref,
                    o4_ref, H4, W4, Wp4, res4, 5 * F)
    res3 = upsample_residual(p43_ref, Mw4)

    # ---- level 3: P3_x = P3_1(C3) + P4_up; P3_out = P3_2(P3_x)
    run_level(c3_ref, w13_ref, b13_ref, wc3_ref, bc3_ref, xs3_ref,
              o3_ref, H3, W3, Wp3, res3, 2 * F)


# ----------------------------------------------------------------------------
# PyramidFeatures forward (NCHW in / NCHW out, like the PyTorch module).
# ----------------------------------------------------------------------------
def pyramid_features_forward(params, C3, C4, C5):
    nhwc = lambda t: jnp.transpose(t, (0, 2, 3, 1))
    nchw = lambda t: jnp.transpose(t, (0, 3, 1, 2))
    c3, c4, c5 = nhwc(C3), nhwc(C4), nhwc(C5)
    N, H5, W5, C5in = c5.shape
    _, H4, W4, C4in = c4.shape
    _, H3, W3, C3in = c3.shape
    F = params["P5_1_b"].shape[0]
    # ConvTranspose2d(k=3, s=2, p=1, output_padding=0): H_up = 2H - 1.
    assert (H4, W4) == (2 * H5 - 1, 2 * W5 - 1), "level-4 size mismatch"
    assert (H3, W3) == (2 * H4 - 1, 2 * W4 - 1), "level-3 size mismatch"

    # Wide-flat layout: padded width rounded to a multiple of 8 so kh*Wp window
    # offsets are sublane-aligned; 1 top / >=2 bottom zero rows.
    Wp5, Wp4, Wp3 = (_round_up(W + 2, 8) for W in (W5, W4, W3))
    Hp5, Hp4, Hp3 = H5 + 3, H4 + 3, H3 + 3
    Mw5, Mw4, Mw3 = H5 * Wp5, H4 * Wp4, H3 * Wp3
    Mw_max = max(Mw5, Mw4, Mw3)

    c5f = c5.reshape(N, H5 * W5, C5in)
    c4f = c4.reshape(N, H4 * W4, C4in)
    c3f = c3.reshape(N, H3 * W3, C3in)

    def w1x1(name):
        w = params[name]                       # HWIO (1, 1, Cin, F)
        return w.reshape(w.shape[2], w.shape[3])

    def bias(name):
        return params[name].reshape(1, -1)

    def wcomb_up(conv_w, convT_w, conv_b, convT_b):
        # Combined (9F, 5F) weight: cols [0:F) = 3x3 conv taps; cols [F:5F) =
        # the 4 ConvTranspose subpixel-phase weights placed at the im2col tap
        # row-blocks (1,1)=4, (1,2)=5, (2,1)=7, (2,2)=8.
        w3f = conv_w.reshape(9 * F, F)                       # HWIO flattened
        wt = jnp.transpose(convT_w, (2, 3, 0, 1))            # (3,3,Cin,Cout)
        wc = jnp.zeros((9 * F, 5 * F), w3f.dtype)
        wc = wc.at[:, 0:F].set(w3f)
        tap = lambda k: slice(k * F, (k + 1) * F)
        col = lambda p: slice((1 + p) * F, (2 + p) * F)
        wc = wc.at[tap(4), col(0)].set(wt[1, 1])             # even row, even col
        wc = wc.at[tap(4), col(1)].set(wt[1, 2])             # even row, odd col
        wc = wc.at[tap(5), col(1)].set(wt[1, 0])
        wc = wc.at[tap(4), col(2)].set(wt[2, 1])             # odd row, even col
        wc = wc.at[tap(7), col(2)].set(wt[0, 1])
        wc = wc.at[tap(4), col(3)].set(wt[2, 2])             # odd row, odd col
        wc = wc.at[tap(5), col(3)].set(wt[2, 0])
        wc = wc.at[tap(7), col(3)].set(wt[0, 2])
        wc = wc.at[tap(8), col(3)].set(wt[0, 0])
        bc = jnp.concatenate([conv_b] + [convT_b] * 4).reshape(1, 5 * F)
        return wc.astype(_DOT_DTYPE), bc

    def wcomb_noup(conv_w, conv_b):
        w3f = conv_w.reshape(9 * F, F)
        wc = jnp.concatenate([w3f, jnp.zeros_like(w3f)], axis=1)
        bc = jnp.concatenate([conv_b, jnp.zeros_like(conv_b)]).reshape(1, 2 * F)
        return wc.astype(_DOT_DTYPE), bc

    wc5, bc5 = wcomb_up(params["P5_2_w"], params["P5_up_w"],
                        params["P5_2_b"], params["P5_up_b"])
    wc4, bc4 = wcomb_up(params["P4_2_w"], params["P4_up_w"],
                        params["P4_2_b"], params["P4_up_b"])
    wc3, bc3 = wcomb_noup(params["P3_2_w"], params["P3_2_b"])

    # Constant 0/1 scatter matrices (built in numpy -> compile-time constants):
    # phase values at wide rows m*Wp+n -> dense upsampled rows i*W'+j.
    def perm_const(H, W, Wp):
        H2, W2 = 2 * H - 1, 2 * W - 1
        P = np.zeros((4, H2 * W2, H * Wp), np.float32)
        for i in range(H2):
            for j in range(W2):
                p = (i % 2) * 2 + (j % 2)
                P[p, i * W2 + j, (i // 2) * Wp + (j // 2)] = 1.0
        return jnp.asarray(P)

    p54 = perm_const(H5, W5, Wp5)
    p43 = perm_const(H4, W4, Wp4)

    kernel = functools.partial(
        _pyramid_kernel,
        dims=((H5, W5, Wp5), (H4, W4, Wp4), (H3, W3, Wp3)), F=F)

    def full(shape):
        nd = len(shape)
        return pl.BlockSpec(shape, lambda n: (0,) * nd)

    def per_batch(shape):
        nd = len(shape)
        return pl.BlockSpec((1,) + shape, lambda n: (n,) + (0,) * nd)

    in_specs = [
        per_batch((H5 * W5, C5in)),
        per_batch((H4 * W4, C4in)),
        per_batch((H3 * W3, C3in)),
        full((C5in, F)), full((1, F)), full((9 * F, 5 * F)), full((1, 5 * F)),
        full((C4in, F)), full((1, F)), full((9 * F, 5 * F)), full((1, 5 * F)),
        full((C3in, F)), full((1, F)), full((9 * F, 2 * F)), full((1, 2 * F)),
        full((4, H4 * W4, Mw5)), full((4, H3 * W3, Mw4)),
    ]
    out_specs = [per_batch((Mw5, 2 * F)),
                 per_batch((Mw4, 2 * F)),
                 per_batch((Mw3, 2 * F))]
    out_shape = [jax.ShapeDtypeStruct((N, Mw5, 2 * F), jnp.float32),
                 jax.ShapeDtypeStruct((N, Mw4, 2 * F), jnp.float32),
                 jax.ShapeDtypeStruct((N, Mw3, 2 * F), jnp.float32)]

    # Per-step VMEM footprint at these shapes is a few MiB (xs ~120 KB, im2col
    # ~470 KB, out ~270 KB, f32 weights ~2 MB double-buffered) -- far under the
    # 16/32 MiB default scoped limits on v5e/v6e/v7x.  TODO(synk): at real SSD
    # resolutions, tile Mw over rows and set vmem_limit_bytes explicitly.
    scratch_shapes = [
        pltpu.VMEM((Hp5 * Wp5, F), jnp.float32),
        pltpu.VMEM((Hp4 * Wp4, F), jnp.float32),
        pltpu.VMEM((Hp3 * Wp3, F), jnp.float32),
        pltpu.VMEM((Mw_max, 9 * F), _DOT_DTYPE),
        pltpu.VMEM((Mw_max, 5 * F), jnp.float32),
    ]

    o5, o4, o3 = pl.pallas_call(
        kernel,
        out_shape=out_shape,
        grid=(N,),
        in_specs=in_specs,
        out_specs=out_specs,
        scratch_shapes=scratch_shapes,
        compiler_params=pltpu.CompilerParams(
            dimension_semantics=("parallel",)),
    )(c5f, c4f, c3f,
      w1x1("P5_1_w"), bias("P5_1_b"), wc5, bc5,
      w1x1("P4_1_w"), bias("P4_1_b"), wc4, bc4,
      w1x1("P3_1_w"), bias("P3_1_b"), wc3, bc3,
      p54, p43)

    def unpack(o, H, W, Wp):
        return o.reshape(N, H, Wp, 2 * F)[:, :, :W, :F]

    P5_out = unpack(o5, H5, W5, Wp5)
    P4_out = unpack(o4, H4, W4, Wp4)
    P3_out = unpack(o3, H3, W3, Wp3)
    return [nchw(P3_out), nchw(P4_out), nchw(P5_out)]


# ----------------------------------------------------------------------------
# Pure-JAX reference (lax.conv_general_dilated) for correctness checking.
# ----------------------------------------------------------------------------
def _ref_conv(x, w_hwio, b, padding):
    out = jax.lax.conv_general_dilated(
        x, w_hwio, (1, 1), [(padding, padding)] * 2,
        dimension_numbers=("NHWC", "HWIO", "NHWC"),
        precision=jax.lax.Precision.HIGHEST)
    return out + b


def _ref_convT(x, w_iohw, b):
    w_eq = jnp.transpose(w_iohw[:, :, ::-1, ::-1], (2, 3, 0, 1))
    out = jax.lax.conv_general_dilated(
        x, w_eq, (1, 1), [(1, 1), (1, 1)], lhs_dilation=(2, 2),
        dimension_numbers=("NHWC", "HWIO", "NHWC"),
        precision=jax.lax.Precision.HIGHEST)
    return out + b


def pyramid_features_reference(params, C3, C4, C5):
    nhwc = lambda t: jnp.transpose(t, (0, 2, 3, 1))
    nchw = lambda t: jnp.transpose(t, (0, 3, 1, 2))
    c3, c4, c5 = nhwc(C3), nhwc(C4), nhwc(C5)
    P5_x = _ref_conv(c5, params["P5_1_w"], params["P5_1_b"], 0)
    P5_up = _ref_convT(P5_x, params["P5_up_w"], params["P5_up_b"])
    P5_out = _ref_conv(P5_x, params["P5_2_w"], params["P5_2_b"], 1)
    P4_x = P5_up + _ref_conv(c4, params["P4_1_w"], params["P4_1_b"], 0)
    P4_up = _ref_convT(P4_x, params["P4_up_w"], params["P4_up_b"])
    P4_out = _ref_conv(P4_x, params["P4_2_w"], params["P4_2_b"], 1)
    P3_x = _ref_conv(c3, params["P3_1_w"], params["P3_1_b"], 0) + P4_up
    P3_out = _ref_conv(P3_x, params["P3_2_w"], params["P3_2_b"], 1)
    return [nchw(P3_out), nchw(P4_out), nchw(P5_out)]


# ----------------------------------------------------------------------------
# Deterministic parameter initialization (PyTorch shapes -> kernel layouts).
# ----------------------------------------------------------------------------
def init_params(key, C3_size, C4_size, C5_size, feature_size):
    def conv_w(k, cout, cin, kh, kw):
        # PyTorch Conv2d weight (Cout, Cin, KH, KW) -> HWIO
        w = 0.05 * jax.random.normal(k, (cout, cin, kh, kw), jnp.float32)
        return jnp.transpose(w, (2, 3, 1, 0))

    def convT_w(k, cin, cout, kh, kw):
        # PyTorch ConvTranspose2d weight layout (Cin, Cout, KH, KW), kept as-is.
        return 0.05 * jax.random.normal(k, (cin, cout, kh, kw), jnp.float32)

    def bias(k, c):
        return 0.01 * jax.random.normal(k, (c,), jnp.float32)

    ks = jax.random.split(key, 16)
    f = feature_size
    return {
        "P5_1_w": conv_w(ks[0], f, C5_size, 1, 1), "P5_1_b": bias(ks[1], f),
        "P5_up_w": convT_w(ks[2], f, f, 3, 3),     "P5_up_b": bias(ks[3], f),
        "P5_2_w": conv_w(ks[4], f, f, 3, 3),       "P5_2_b": bias(ks[5], f),
        "P4_1_w": conv_w(ks[6], f, C4_size, 1, 1), "P4_1_b": bias(ks[7], f),
        "P4_up_w": convT_w(ks[8], f, f, 3, 3),     "P4_up_b": bias(ks[9], f),
        "P4_2_w": conv_w(ks[10], f, f, 3, 3),      "P4_2_b": bias(ks[11], f),
        "P3_1_w": conv_w(ks[12], f, C3_size, 1, 1),"P3_1_b": bias(ks[13], f),
        "P3_2_w": conv_w(ks[14], f, f, 3, 3),      "P3_2_b": bias(ks[15], f),
    }


if __name__ == "__main__":
    key = jax.random.PRNGKey(0)
    N = 2
    C3_size, C4_size, C5_size, feature_size = 16, 24, 32, 64
    # Spatial sizes consistent with ConvTranspose(k=3, s=2, p=1) upsampling:
    # H_up = 2*H - 1, so pick H5=4 -> H4=7 -> H3=13.
    H5 = 4
    H4 = 2 * H5 - 1
    H3 = 2 * H4 - 1

    kp, k3, k4, k5 = jax.random.split(key, 4)
    params = init_params(kp, C3_size, C4_size, C5_size, feature_size)
    C3 = jax.random.normal(k3, (N, C3_size, H3, H3), jnp.float32)
    C4 = jax.random.normal(k4, (N, C4_size, H4, H4), jnp.float32)
    C5 = jax.random.normal(k5, (N, C5_size, H5, H5), jnp.float32)

    fwd = jax.jit(pyramid_features_forward)
    outs = fwd(params, C3, C4, C5)
    outs = [jax.block_until_ready(o) for o in outs]

    refs = pyramid_features_reference(params, C3, C4, C5)
    for o, r in zip(outs, refs):
        assert o.shape == r.shape, (o.shape, r.shape)
        assert jnp.allclose(o, r, atol=1e-4, rtol=1e-4), (
            f"mismatch vs reference, max abs diff {jnp.max(jnp.abs(o - r))}")

    print("KERNEL_OK")
</pallas_src>

<mosaic_0001>
module attributes {stable_mosaic.version = 11 : i64} {
  func.func @_pyramid_kernel(%arg0: i32, %arg1: memref<1x16x32xf32, #tpu.memory_space<vmem>>, %arg2: memref<1x49x24xf32, #tpu.memory_space<vmem>>, %arg3: memref<1x169x16xf32, #tpu.memory_space<vmem>>, %arg4: memref<32x64xf32, #tpu.memory_space<vmem>>, %arg5: memref<1x64xf32, #tpu.memory_space<vmem>>, %arg6: memref<576x320xf32, #tpu.memory_space<vmem>>, %arg7: memref<1x320xf32, #tpu.memory_space<vmem>>, %arg8: memref<24x64xf32, #tpu.memory_space<vmem>>, %arg9: memref<1x64xf32, #tpu.memory_space<vmem>>, %arg10: memref<576x320xf32, #tpu.memory_space<vmem>>, %arg11: memref<1x320xf32, #tpu.memory_space<vmem>>, %arg12: memref<16x64xf32, #tpu.memory_space<vmem>>, %arg13: memref<1x64xf32, #tpu.memory_space<vmem>>, %arg14: memref<576x128xf32, #tpu.memory_space<vmem>>, %arg15: memref<1x128xf32, #tpu.memory_space<vmem>>, %arg16: memref<4x49x32xf32, #tpu.memory_space<vmem>>, %arg17: memref<4x169x112xf32, #tpu.memory_space<vmem>>, %arg18: memref<1x32x128xf32, #tpu.memory_space<vmem>>, %arg19: memref<1x112x128xf32, #tpu.memory_space<vmem>>, %arg20: memref<1x208x128xf32, #tpu.memory_space<vmem>>, %arg21: memref<56x64xf32, #tpu.memory_space<vmem>>, %arg22: memref<160x64xf32, #tpu.memory_space<vmem>>, %arg23: memref<256x64xf32, #tpu.memory_space<vmem>>, %arg24: memref<208x576xf32, #tpu.memory_space<vmem>>, %arg25: memref<208x320xf32, #tpu.memory_space<vmem>>) attributes {dimension_semantics = [#tpu.dimension_semantics<parallel>], iteration_bounds = array<i64: 2>, scalar_prefetch = 0 : i64, scratch_operands = 5 : i64, tpu.core_type = #tpu.core_type<tc>, window_params = [{transform_indices = @transform_0, window_bounds = array<i64: 1, 16, 32>}, {transform_indices = @transform_1, window_bounds = array<i64: 1, 49, 24>}, {transform_indices = @transform_2, window_bounds = array<i64: 1, 169, 16>}, {pipeline_mode = #tpu.pipeline_mode<synchronous>, transform_indices = @transform_3, window_bounds = array<i64: 32, 64>}, {pipeline_mode = #tpu.pipeline_mode<synchronous>, transform_indices = @transform_4, window_bounds = array<i64: 1, 64>}, {pipeline_mode = #tpu.pipeline_mode<synchronous>, transform_indices = @transform_5, window_bounds = array<i64: 576, 320>}, {pipeline_mode = #tpu.pipeline_mode<synchronous>, transform_indices = @transform_6, window_bounds = array<i64: 1, 320>}, {pipeline_mode = #tpu.pipeline_mode<synchronous>, transform_indices = @transform_7, window_bounds = array<i64: 24, 64>}, {pipeline_mode = #tpu.pipeline_mode<synchronous>, transform_indices = @transform_8, window_bounds = array<i64: 1, 64>}, {pipeline_mode = #tpu.pipeline_mode<synchronous>, transform_indices = @transform_9, window_bounds = array<i64: 576, 320>}, {pipeline_mode = #tpu.pipeline_mode<synchronous>, transform_indices = @transform_10, window_bounds = array<i64: 1, 320>}, {pipeline_mode = #tpu.pipeline_mode<synchronous>, transform_indices = @transform_11, window_bounds = array<i64: 16, 64>}, {pipeline_mode = #tpu.pipeline_mode<synchronous>, transform_indices = @transform_12, window_bounds = array<i64: 1, 64>}, {pipeline_mode = #tpu.pipeline_mode<synchronous>, transform_indices = @transform_13, window_bounds = array<i64: 576, 128>}, {pipeline_mode = #tpu.pipeline_mode<synchronous>, transform_indices = @transform_14, window_bounds = array<i64: 1, 128>}, {pipeline_mode = #tpu.pipeline_mode<synchronous>, transform_indices = @transform_15, window_bounds = array<i64: 4, 49, 32>}, {pipeline_mode = #tpu.pipeline_mode<synchronous>, transform_indices = @transform_16, window_bounds = array<i64: 4, 169, 112>}, {transform_indices = @transform_17, window_bounds = array<i64: 1, 32, 128>}, {transform_indices = @transform_18, window_bounds = array<i64: 1, 112, 128>}, {transform_indices = @transform_19, window_bounds = array<i64: 1, 208, 128>}]} {
    %c0 = arith.constant 0 : index
    %c0_0 = arith.constant 0 : index
    %c0_1 = arith.constant 0 : index
    %0 = vector.load %arg1[%c0, %c0_0, %c0_1] : memref<1x16x32xf32, #tpu.memory_space<vmem>>, vector<1x16x32xf32>
    %1 = vector.shape_cast %0 : vector<1x16x32xf32> to vector<16x32xf32>
    %c0_2 = arith.constant 0 : index
    %c0_3 = arith.constant 0 : index
    %2 = vector.load %arg4[%c0_2, %c0_3] : memref<32x64xf32, #tpu.memory_space<vmem>>, vector<32x64xf32>
    %cst = arith.constant dense<0.000000e+00> : vector<16x64xf32>
    %3 = tpu.matmul %1, %2, %cst {dimension_numbers = #tpu.dot_dimension_numbers<[1], [0], [0], [1], [0, 0, 1, 1], [], []>} : vector<16x32xf32>, vector<32x64xf32>, vector<16x64xf32> -> vector<16x64xf32>
    %c0_4 = arith.constant 0 : index
    %c0_5 = arith.constant 0 : index
    %4 = vector.load %arg5[%c0_4, %c0_5] : memref<1x64xf32, #tpu.memory_space<vmem>>, vector<1x64xf32>
    %5 = vector.broadcast %4 : vector<1x64xf32> to vector<16x64xf32>
    %6 = arith.addf %3, %5 : vector<16x64xf32>
    %cst_6 = arith.constant 0.000000e+00 : f32
    %7 = vector.broadcast %cst_6 : f32 to vector<56x64xf32>
    %c0_7 = arith.constant 0 : index
    %c0_8 = arith.constant 0 : index
    %8 = vector.load %arg21[%c0_7, %c0_8] : memref<56x64xf32, #tpu.memory_space<vmem>>, vector<56x64xf32>
    tpu.vector_store %arg21[%c0_7, %c0_8], %7 {strides = array<i32>} : memref<56x64xf32, #tpu.memory_space<vmem>>, vector<56x64xf32>,
    %9 = vector.extract_strided_slice %6 {offsets = [0, 0], sizes = [4, 64], strides = [1, 1]} : vector<16x64xf32> to vector<4x64xf32>
    %c9 = arith.constant 9 : index
    %c0_9 = arith.constant 0 : index
    %10 = vector.load %arg21[%c9, %c0_9] : memref<56x64xf32, #tpu.memory_space<vmem>>, vector<4x64xf32>
    tpu.vector_store %arg21[%c9, %c0_9], %9 {strides = array<i32>} : memref<56x64xf32, #tpu.memory_space<vmem>>, vector<4x64xf32>,
    %11 = vector.extract_strided_slice %6 {offsets = [4, 0], sizes = [4, 64], strides = [1, 1]} : vector<16x64xf32> to vector<4x64xf32>
    %c17 = arith.constant 17 : index
    %c0_10 = arith.constant 0 : index
    %12 = vector.load %arg21[%c17, %c0_10] : memref<56x64xf32, #tpu.memory_space<vmem>>, vector<4x64xf32>
    tpu.vector_store %arg21[%c17, %c0_10], %11 {strides = array<i32>} : memref<56x64xf32, #tpu.memory_space<vmem>>, vector<4x64xf32>,
    %13 = vector.extract_strided_slice %6 {offsets = [8, 0], sizes = [4, 64], strides = [1, 1]} : vector<16x64xf32> to vector<4x64xf32>
    %c25 = arith.constant 25 : index
    %c0_11 = arith.constant 0 : index
    %14 = vector.load %arg21[%c25, %c0_11] : memref<56x64xf32, #tpu.memory_space<vmem>>, vector<4x64xf32>
    tpu.vector_store %arg21[%c25, %c0_11], %13 {strides = array<i32>} : memref<56x64xf32, #tpu.memory_space<vmem>>, vector<4x64xf32>,
    %15 = vector.extract_strided_slice %6 {offsets = [12, 0], sizes = [4, 64], strides = [1, 1]} : vector<16x64xf32> to vector<4x64xf32>
    %c33 = arith.constant 33 : index
    %c0_12 = arith.constant 0 : index
    %16 = vector.load %arg21[%c33, %c0_12] : memref<56x64xf32, #tpu.memory_space<vmem>>, vector<4x64xf32>
    tpu.vector_store %arg21[%c33, %c0_12], %15 {strides = array<i32>} : memref<56x64xf32, #tpu.memory_space<vmem>>, vector<4x64xf32>,
    %c0_13 = arith.constant 0 : index
    %c0_14 = arith.constant 0 : index
    %17 = vector.load %arg21[%c0_13, %c0_14] : memref<56x64xf32, #tpu.memory_space<vmem>>, vector<32x64xf32>
    %c0_15 = arith.constant 0 : index
    %c0_16 = arith.constant 0 : index
    %18 = vector.load %arg24[%c0_15, %c0_16] : memref<208x576xf32, #tpu.memory_space<vmem>>, vector<32x64xf32>
    tpu.vector_store %arg24[%c0_15, %c0_16], %17 {strides = array<i32>} : memref<208x576xf32, #tpu.memory_space<vmem>>, vector<32x64xf32>,
    %c1 = arith.constant 1 : index
    %c0_17 = arith.constant 0 : index
    %19 = vector.load %arg21[%c1, %c0_17] : memref<56x64xf32, #tpu.memory_space<vmem>>, vector<32x64xf32>
    %c0_18 = arith.constant 0 : index
    %c64 = arith.constant 64 : index
    %20 = vector.load %arg24[%c0_18, %c64] : memref<208x576xf32, #tpu.memory_space<vmem>>, vector<32x64xf32>
    tpu.vector_store %arg24[%c0_18, %c64], %19 {strides = array<i32>} : memref<208x576xf32, #tpu.memory_space<vmem>>, vector<32x64xf32>,
    %c2 = arith.constant 2 : index
    %c0_19 = arith.constant 0 : index
    %21 = vector.load %arg21[%c2, %c0_19] : memref<56x64xf32, #tpu.memory_space<vmem>>, vector<32x64xf32>
    %c0_20 = arith.constant 0 : index
    %c128 = arith.constant 128 : index
    %22 = vector.load %arg24[%c0_20, %c128] : memref<208x576xf32, #tpu.memory_space<vmem>>, vector<32x64xf32>
    tpu.vector_store %arg24[%c0_20, %c128], %21 {strides = array<i32>} : memref<208x576xf32, #tpu.memory_space<vmem>>, vector<32x64xf32>,
    %c8 = arith.constant 8 : index
    %c0_21 = arith.constant 0 : index
    %23 = vector.load %arg21[%c8, %c0_21] : memref<56x64xf32, #tpu.memory_space<vmem>>, vector<32x64xf32>
    %c0_22 = arith.constant 0 : index
    %c192 = arith.constant 192 : index
    %24 = vector.load %arg24[%c0_22, %c192] : memref<208x576xf32, #tpu.memory_space<vmem>>, vector<32x64xf32>
    tpu.vector_store %arg24[%c0_22, %c192], %23 {strides = array<i32>} : memref<208x576xf32, #tpu.memory_space<vmem>>, vector<32x64xf32>,
    %c9_23 = arith.constant 9 : index
    %c0_24 = arith.constant 0 : index
    %25 = vector.load %arg21[%c9_23, %c0_24] : memref<56x64xf32, #tpu.memory_space<vmem>>, vector<32x64xf32>
    %c0_25 = arith.constant 0 : index
    %c256 = arith.constant 256 : index
    %26 = vector.load %arg24[%c0_25, %c256] : memref<208x576xf32, #tpu.memory_space<vmem>>, vector<32x64xf32>
    tpu.vector_store %arg24[%c0_25, %c256], %25 {strides = array<i32>} : memref<208x576xf32, #tpu.memory_space<vmem>>, vector<32x64xf32>,
    %c10 = arith.constant 10 : index
    %c0_26 = arith.constant 0 : index
    %27 = vector.load %arg21[%c10, %c0_26] : memref<56x64xf32, #tpu.memory_space<vmem>>, vector<32x64xf32>
    %c0_27 = arith.constant 0 : index
    %c320 = arith.constant 320 : index
    %28 = vector.load %arg24[%c0_27, %c320] : memref<208x576xf32, #tpu.memory_space<vmem>>, vector<32x64xf32>
    tpu.vector_store %arg24[%c0_27, %c320], %27 {strides = array<i32>} : memref<208x576xf32, #tpu.memory_space<vmem>>, vector<32x64xf32>,
    %c16 = arith.constant 16 : index
    %c0_28 = arith.constant 0 : index
    %29 = vector.load %arg21[%c16, %c0_28] : memref<56x64xf32, #tpu.memory_space<vmem>>, vector<32x64xf32>
    %c0_29 = arith.constant 0 : index
    %c384 = arith.constant 384 : index
    %30 = vector.load %arg24[%c0_29, %c384] : memref<208x576xf32, #tpu.memory_space<vmem>>, vector<32x64xf32>
    tpu.vector_store %arg24[%c0_29, %c384], %29 {strides = array<i32>} : memref<208x576xf32, #tpu.memory_space<vmem>>, vector<32x64xf32>,
    %c17_30 = arith.constant 17 : index
    %c0_31 = arith.constant 0 : index
    %31 = vector.load %arg21[%c17_30, %c0_31] : memref<56x64xf32, #tpu.memory_space<vmem>>, vector<32x64xf32>
    %c0_32 = arith.constant 0 : index
    %c448 = arith.constant 448 : index
    %32 = vector.load %arg24[%c0_32, %c448] : memref<208x576xf32, #tpu.memory_space<vmem>>, vector<32x64xf32>
    tpu.vector_store %arg24[%c0_32, %c448], %31 {strides = array<i32>} : memref<208x576xf32, #tpu.memory_space<vmem>>, vector<32x64xf32>,
    %c18 = arith.constant 18 : index
    %c0_33 = arith.constant 0 : index
    %33 = vector.load %arg21[%c18, %c0_33] : memref<56x64xf32, #tpu.memory_space<vmem>>, vector<32x64xf32>
    %c0_34 = arith.constant 0 : index
    %c512 = arith.constant 512 : index
    %34 = vector.load %arg24[%c0_34, %c512] : memref<208x576xf32, #tpu.memory_space<vmem>>, vector<32x64xf32>
    tpu.vector_store %arg24[%c0_34, %c512], %33 {strides = array<i32>} : memref<208x576xf32, #tpu.memory_space<vmem>>, vector<32x64xf32>,
    %c0_35 = arith.constant 0 : index
    %c0_36 = arith.constant 0 : index
    %35 = vector.load %arg24[%c0_35, %c0_36] : memref<208x576xf32, #tpu.memory_space<vmem>>, vector<32x576xf32>
    %c0_37 = arith.constant 0 : index
    %c0_38 = arith.constant 0 : index
    %36 = vector.load %arg6[%c0_37, %c0_38] : memref<576x320xf32, #tpu.memory_space<vmem>>, vector<576x320xf32>
    %cst_39 = arith.constant dense<0.000000e+00> : vector<32x320xf32>
    %37 = tpu.matmul %35, %36, %cst_39 {dimension_numbers = #tpu.dot_dimension_numbers<[1], [0], [0], [1], [0, 0, 1, 1], [], []>} : vector<32x576xf32>, vector<576x320xf32>, vector<32x320xf32> -> vector<32x320xf32>
    %c0_40 = arith.constant 0 : index
    %c0_41 = arith.constant 0 : index
    %38 = vector.load %arg7[%c0_40, %c0_41] : memref<1x320xf32, #tpu.memory_space<vmem>>, vector<1x320xf32>
    %39 = vector.broadcast %38 : vector<1x320xf32> to vector<32x320xf32>
    %40 = arith.addf %37, %39 : vector<32x320xf32>
    %c0_42 = arith.constant 0 : index
    %c0_43 = arith.constant 0 : index
    %41 = vector.load %arg25[%c0_42, %c0_43] : memref<208x320xf32, #tpu.memory_space<vmem>>, vector<32x320xf32>
    tpu.vector_store %arg25[%c0_42, %c0_43], %40 {strides = array<i32>} : memref<208x320xf32, #tpu.memory_space<vmem>>, vector<32x320xf32>,
    %c0_44 = arith.constant 0 : index
    %c0_45 = arith.constant 0 : index
    %42 = vector.load %arg25[%c0_44, %c0_45] : memref<208x320xf32, #tpu.memory_space<vmem>>, vector<32x128xf32>
    %c0_46 = arith.constant 0 : index
    %c0_47 = arith.constant 0 : index
    %c0_48 = arith.constant 0 : index
    %43 = vector.load %arg18[%c0_46, %c0_47, %c0_48] : memref<1x32x128xf32, #tpu.memory_space<vmem>>, vector<1x32x128xf32>
    %44 = vector.shape_cast %43 : vector<1x32x128xf32> to vector<32x128xf32>
    %45 = vector.shape_cast %42 : vector<32x128xf32> to vector<1x32x128xf32>
    tpu.vector_store %arg18[%c0_46, %c0_47, %c0_48], %45 {strides = array<i32>} : memref<1x32x128xf32, #tpu.memory_space<vmem>>, vector<1x32x128xf32>,
    %c0_49 = arith.constant 0 : index
    %c0_50 = arith.constant 0 : index
    %c0_51 = arith.constant 0 : index
    %46 = vector.load %arg16[%c0_49, %c0_50, %c0_51] : memref<4x49x32xf32, #tpu.memory_space<vmem>>, vector<1x49x32xf32>
    %47 = vector.shape_cast %46 : vector<1x49x32xf32> to vector<49x32xf32>
    %c0_52 = arith.constant 0 : index
    %c64_53 = arith.constant 64 : index
    %48 = vector.load %arg25[%c0_52, %c64_53] : memref<208x320xf32, #tpu.memory_space<vmem>>, vector<32x64xf32>
    %cst_54 = arith.constant dense<0.000000e+00> : vector<49x64xf32>
    %49 = tpu.matmul %47, %48, %cst_54 {dimension_numbers = #tpu.dot_dimension_numbers<[1], [0], [0], [1], [0, 0, 1, 1], [], []>} : vector<49x32xf32>, vector<32x64xf32>, vector<49x64xf32> -> vector<49x64xf32>
    %c1_55 = arith.constant 1 : index
    %c0_56 = arith.constant 0 : index
    %c0_57 = arith.constant 0 : index
    %50 = vector.load %arg16[%c1_55, %c0_56, %c0_57] : memref<4x49x32xf32, #tpu.memory_space<vmem>>, vector<1x49x32xf32>
    %51 = vector.shape_cast %50 : vector<1x49x32xf32> to vector<49x32xf32>
    %c0_58 = arith.constant 0 : index
    %c128_59 = arith.constant 128 : index
    %52 = vector.load %arg25[%c0_58, %c128_59] : memref<208x320xf32, #tpu.memory_space<vmem>>, vector<32x64xf32>
    %cst_60 = arith.constant dense<0.000000e+00> : vector<49x64xf32>
    %53 = tpu.matmul %51, %52, %cst_60 {dimension_numbers = #tpu.dot_dimension_numbers<[1], [0], [0], [1], [0, 0, 1, 1], [], []>} : vector<49x32xf32>, vector<32x64xf32>, vector<49x64xf32> -> vector<49x64xf32>
    %54 = arith.addf %49, %53 : vector<49x64xf32>
    %c2_61 = arith.constant 2 : index
    %c0_62 = arith.constant 0 : index
    %c0_63 = arith.constant 0 : index
    %55 = vector.load %arg16[%c2_61, %c0_62, %c0_63] : memref<4x49x32xf32, #tpu.memory_space<vmem>>, vector<1x49x32xf32>
    %56 = vector.shape_cast %55 : vector<1x49x32xf32> to vector<49x32xf32>
    %c0_64 = arith.constant 0 : index
    %c192_65 = arith.constant 192 : index
    %57 = vector.load %arg25[%c0_64, %c192_65] : memref<208x320xf32, #tpu.memory_space<vmem>>, vector<32x64xf32>
    %cst_66 = arith.constant dense<0.000000e+00> : vector<49x64xf32>
    %58 = tpu.matmul %56, %57, %cst_66 {dimension_numbers = #tpu.dot_dimension_numbers<[1], [0], [0], [1], [0, 0, 1, 1], [], []>} : vector<49x32xf32>, vector<32x64xf32>, vector<49x64xf32> -> vector<49x64xf32>
    %59 = arith.addf %54, %58 : vector<49x64xf32>
    %c3 = arith.constant 3 : index
    %c0_67 = arith.constant 0 : index
    %c0_68 = arith.constant 0 : index
    %60 = vector.load %arg16[%c3, %c0_67, %c0_68] : memref<4x49x32xf32, #tpu.memory_space<vmem>>, vector<1x49x32xf32>
    %61 = vector.shape_cast %60 : vector<1x49x32xf32> to vector<49x32xf32>
    %c0_69 = arith.constant 0 : index
    %c256_70 = arith.constant 256 : index
    %62 = vector.load %arg25[%c0_69, %c256_70] : memref<208x320xf32, #tpu.memory_space<vmem>>, vector<32x64xf32>
    %cst_71 = arith.constant dense<0.000000e+00> : vector<49x64xf32>
    %63 = tpu.matmul %61, %62, %cst_71 {dimension_numbers = #tpu.dot_dimension_numbers<[1], [0], [0], [1], [0, 0, 1, 1], [], []>} : vector<49x32xf32>, vector<32x64xf32>, vector<49x64xf32> -> vector<49x64xf32>
    %64 = arith.addf %59, %63 : vector<49x64xf32>
    %c0_72 = arith.constant 0 : index
    %c0_73 = arith.constant 0 : index
    %c0_74 = arith.constant 0 : index
    %65 = vector.load %arg2[%c0_72, %c0_73, %c0_74] : memref<1x49x24xf32, #tpu.memory_space<vmem>>, vector<1x49x24xf32>
    %66 = vector.shape_cast %65 : vector<1x49x24xf32> to vector<49x24xf32>
    %c0_75 = arith.constant 0 : index
    %c0_76 = arith.constant 0 : index
    %67 = vector.load %arg8[%c0_75, %c0_76] : memref<24x64xf32, #tpu.memory_space<vmem>>, vector<24x64xf32>
    %cst_77 = arith.constant dense<0.000000e+00> : vector<49x64xf32>
    %68 = tpu.matmul %66, %67, %cst_77 {dimension_numbers = #tpu.dot_dimension_numbers<[1], [0], [0], [1], [0, 0, 1, 1], [], []>} : vector<49x24xf32>, vector<24x64xf32>, vector<49x64xf32> -> vector<49x64xf32>
    %c0_78 = arith.constant 0 : index
    %c0_79 = arith.constant 0 : index
    %69 = vector.load %arg9[%c0_78, %c0_79] : memref<1x64xf32, #tpu.memory_space<vmem>>, vector<1x64xf32>
    %70 = vector.broadcast %69 : vector<1x64xf32> to vector<49x64xf32>
    %71 = arith.addf %68, %70 : vector<49x64xf32>
    %72 = arith.addf %71, %64 : vector<49x64xf32>
    %cst_80 = arith.constant 0.000000e+00 : f32
    %73 = vector.broadcast %cst_80 : f32 to vector<160x64xf32>
    %c0_81 = arith.constant 0 : index
    %c0_82 = arith.constant 0 : index
    %74 = vector.load %arg22[%c0_81, %c0_82] : memref<160x64xf32, #tpu.memory_space<vmem>>, vector<160x64xf32>
    tpu.vector_store %arg22[%c0_81, %c0_82], %73 {strides = array<i32>} : memref<160x64xf32, #tpu.memory_space<vmem>>, vector<160x64xf32>,
    %75 = vector.extract_strided_slice %72 {offsets = [0, 0], sizes = [7, 64], strides = [1, 1]} : vector<49x64xf32> to vector<7x64xf32>
    %c17_83 = arith.constant 17 : index
    %c0_84 = arith.constant 0 : index
    %76 = vector.load %arg22[%c17_83, %c0_84] : memref<160x64xf32, #tpu.memory_space<vmem>>, vector<7x64xf32>
    tpu.vector_store %arg22[%c17_83, %c0_84], %75 {strides = array<i32>} : memref<160x64xf32, #tpu.memory_space<vmem>>, vector<7x64xf32>,
    %77 = vector.extract_strided_slice %72 {offsets = [7, 0], sizes = [7, 64], strides = [1, 1]} : vector<49x64xf32> to vector<7x64xf32>
    %c33_85 = arith.constant 33 : index
    %c0_86 = arith.constant 0 : index
    %78 = vector.load %arg22[%c33_85, %c0_86] : memref<160x64xf32, #tpu.memory_space<vmem>>, vector<7x64xf32>
    tpu.vector_store %arg22[%c33_85, %c0_86], %77 {strides = array<i32>} : memref<160x64xf32, #tpu.memory_space<vmem>>, vector<7x64xf32>,
    %79 = vector.extract_strided_slice %72 {offsets = [14, 0], sizes = [7, 64], strides = [1, 1]} : vector<49x64xf32> to vector<7x64xf32>
    %c49 = arith.constant 49 : index
    %c0_87 = arith.constant 0 : index
    %80 = vector.load %arg22[%c49, %c0_87] : memref<160x64xf32, #tpu.memory_space<vmem>>, vector<7x64xf32>
    tpu.vector_store %arg22[%c49, %c0_87], %79 {strides = array<i32>} : memref<160x64xf32, #tpu.memory_space<vmem>>, vector<7x64xf32>,
    %81 = vector.extract_strided_slice %72 {offsets = [21, 0], sizes = [7, 64], strides = [1, 1]} : vector<49x64xf32> to vector<7x64xf32>
    %c65 = arith.constant 65 : index
    %c0_88 = arith.constant 0 : index
    %82 = vector.load %arg22[%c65, %c0_88] : memref<160x64xf32, #tpu.memory_space<vmem>>, vector<7x64xf32>
    tpu.vector_store %arg22[%c65, %c0_88], %81 {strides = array<i32>} : memref<160x64xf32, #tpu.memory_space<vmem>>, vector<7x64xf32>,
    %83 = vector.extract_strided_slice %72 {offsets = [28, 0], sizes = [7, 64], strides = [1, 1]} : vector<49x64xf32> to vector<7x64xf32>
    %c81 = arith.constant 81 : index
    %c0_89 = arith.constant 0 : index
    %84 = vector.load %arg22[%c81, %c0_89] : memref<160x64xf32, #tpu.memory_space<vmem>>, vector<7x64xf32>
    tpu.vector_store %arg22[%c81, %c0_89], %83 {strides = array<i32>} : memref<160x64xf32, #tpu.memory_space<vmem>>, vector<7x64xf32>,
    %85 = vector.extract_strided_slice %72 {offsets = [35, 0], sizes = [7, 64], strides = [1, 1]} : vector<49x64xf32> to vector<7x64xf32>
    %c97 = arith.constant 97 : index
    %c0_90 = arith.constant 0 : index
    %86 = vector.load %arg22[%c97, %c0_90] : memref<160x64xf32, #tpu.memory_space<vmem>>, vector<7x64xf32>
    tpu.vector_store %arg22[%c97, %c0_90], %85 {strides = array<i32>} : memref<160x64xf32, #tpu.memory_space<vmem>>, vector<7x64xf32>,
    %87 = vector.extract_strided_slice %72 {offsets = [42, 0], sizes = [7, 64], strides = [1, 1]} : vector<49x64xf32> to vector<7x64xf32>
    %c113 = arith.constant 113 : index
    %c0_91 = arith.constant 0 : index
    %88 = vector.load %arg22[%c113, %c0_91] : memref<160x64xf32, #tpu.memory_space<vmem>>, vector<7x64xf32>
    tpu.vector_store %arg22[%c113, %c0_91], %87 {strides = array<i32>} : memref<160x64xf32, #tpu.memory_space<vmem>>, vector<7x64xf32>,
    %c0_92 = arith.constant 0 : index
    %c0_93 = arith.constant 0 : index
    %89 = vector.load %arg22[%c0_92, %c0_93] : memref<160x64xf32, #tpu.memory_space<vmem>>, vector<112x64xf32>
    %c0_94 = arith.constant 0 : index
    %c0_95 = arith.constant 0 : index
    %90 = vector.load %arg24[%c0_94, %c0_95] : memref<208x576xf32, #tpu.memory_space<vmem>>, vector<112x64xf32>
    tpu.vector_store %arg24[%c0_94, %c0_95], %89 {strides = array<i32>} : memref<208x576xf32, #tpu.memory_space<vmem>>, vector<112x64xf32>,
    %c1_96 = arith.constant 1 : index
    %c0_97 = arith.constant 0 : index
    %91 = vector.load %arg22[%c1_96, %c0_97] : memref<160x64xf32, #tpu.memory_space<vmem>>, vector<112x64xf32>
    %c0_98 = arith.constant 0 : index
    %c64_99 = arith.constant 64 : index
    %92 = vector.load %arg24[%c0_98, %c64_99] : memref<208x576xf32, #tpu.memory_space<vmem>>, vector<112x64xf32>
    tpu.vector_store %arg24[%c0_98, %c64_99], %91 {strides = array<i32>} : memref<208x576xf32, #tpu.memory_space<vmem>>, vector<112x64xf32>,
    %c2_100 = arith.constant 2 : index
    %c0_101 = arith.constant 0 : index
    %93 = vector.load %arg22[%c2_100, %c0_101] : memref<160x64xf32, #tpu.memory_space<vmem>>, vector<112x64xf32>
    %c0_102 = arith.constant 0 : index
    %c128_103 = arith.constant 128 : index
    %94 = vector.load %arg24[%c0_102, %c128_103] : memref<208x576xf32, #tpu.memory_space<vmem>>, vector<112x64xf32>
    tpu.vector_store %arg24[%c0_102, %c128_103], %93 {strides = array<i32>} : memref<208x576xf32, #tpu.memory_space<vmem>>, vector<112x64xf32>,
    %c16_104 = arith.constant 16 : index
    %c0_105 = arith.constant 0 : index
    %95 = vector.load %arg22[%c16_104, %c0_105] : memref<160x64xf32, #tpu.memory_space<vmem>>, vector<112x64xf32>
    %c0_106 = arith.constant 0 : index
    %c192_107 = arith.constant 192 : index
    %96 = vector.load %arg24[%c0_106, %c192_107] : memref<208x576xf32, #tpu.memory_space<vmem>>, vector<112x64xf32>
    tpu.vector_store %arg24[%c0_106, %c192_107], %95 {strides = array<i32>} : memref<208x576xf32, #tpu.memory_space<vmem>>, vector<112x64xf32>,
    %c17_108 = arith.constant 17 : index
    %c0_109 = arith.constant 0 : index
    %97 = vector.load %arg22[%c17_108, %c0_109] : memref<160x64xf32, #tpu.memory_space<vmem>>, vector<112x64xf32>
    %c0_110 = arith.constant 0 : index
    %c256_111 = arith.constant 256 : index
    %98 = vector.load %arg24[%c0_110, %c256_111] : memref<208x576xf32, #tpu.memory_space<vmem>>, vector<112x64xf32>
    tpu.vector_store %arg24[%c0_110, %c256_111], %97 {strides = array<i32>} : memref<208x576xf32, #tpu.memory_space<vmem>>, vector<112x64xf32>,
    %c18_112 = arith.constant 18 : index
    %c0_113 = arith.constant 0 : index
    %99 = vector.load %arg22[%c18_112, %c0_113] : memref<160x64xf32, #tpu.memory_space<vmem>>, vector<112x64xf32>
    %c0_114 = arith.constant 0 : index
    %c320_115 = arith.constant 320 : index
    %100 = vector.load %arg24[%c0_114, %c320_115] : memref<208x576xf32, #tpu.memory_space<vmem>>, vector<112x64xf32>
    tpu.vector_store %arg24[%c0_114, %c320_115], %99 {strides = array<i32>} : memref<208x576xf32, #tpu.memory_space<vmem>>, vector<112x64xf32>,
    %c32 = arith.constant 32 : index
    %c0_116 = arith.constant 0 : index
    %101 = vector.load %arg22[%c32, %c0_116] : memref<160x64xf32, #tpu.memory_space<vmem>>, vector<112x64xf32>
    %c0_117 = arith.constant 0 : index
    %c384_118 = arith.constant 384 : index
    %102 = vector.load %arg24[%c0_117, %c384_118] : memref<208x576xf32, #tpu.memory_space<vmem>>, vector<112x64xf32>
    tpu.vector_store %arg24[%c0_117, %c384_118], %101 {strides = array<i32>} : memref<208x576xf32, #tpu.memory_space<vmem>>, vector<112x64xf32>,
    %c33_119 = arith.constant 33 : index
    %c0_120 = arith.constant 0 : index
    %103 = vector.load %arg22[%c33_119, %c0_120] : memref<160x64xf32, #tpu.memory_space<vmem>>, vector<112x64xf32>
    %c0_121 = arith.constant 0 : index
    %c448_122 = arith.constant 448 : index
    %104 = vector.load %arg24[%c0_121, %c448_122] : memref<208x576xf32, #tpu.memory_space<vmem>>, vector<112x64xf32>
    tpu.vector_store %arg24[%c0_121, %c448_122], %103 {strides = array<i32>} : memref<208x576xf32, #tpu.memory_space<vmem>>, vector<112x64xf32>,
    %c34 = arith.constant 34 : index
    %c0_123 = arith.constant 0 : index
    %105 = vector.load %arg22[%c34, %c0_123] : memref<160x64xf32, #tpu.memory_space<vmem>>, vector<112x64xf32>
    %c0_124 = arith.constant 0 : index
    %c512_125 = arith.constant 512 : index
    %106 = vector.load %arg24[%c0_124, %c512_125] : memref<208x576xf32, #tpu.memory_space<vmem>>, vector<112x64xf32>
    tpu.vector_store %arg24[%c0_124, %c512_125], %105 {strides = array<i32>} : memref<208x576xf32, #tpu.memory_space<vmem>>, vector<112x64xf32>,
    %c0_126 = arith.constant 0 : index
    %c0_127 = arith.constant 0 : index
    %107 = vector.load %arg24[%c0_126, %c0_127] : memref<208x576xf32, #tpu.memory_space<vmem>>, vector<112x576xf32>
    %c0_128 = arith.constant 0 : index
    %c0_129 = arith.constant 0 : index
    %108 = vector.load %arg10[%c0_128, %c0_129] : memref<576x320xf32, #tpu.memory_space<vmem>>, vector<576x320xf32>
    %cst_130 = arith.constant dense<0.000000e+00> : vector<112x320xf32>
    %109 = tpu.matmul %107, %108, %cst_130 {dimension_numbers = #tpu.dot_dimension_numbers<[1], [0], [0], [1], [0, 0, 1, 1], [], []>} : vector<112x576xf32>, vector<576x320xf32>, vector<112x320xf32> -> vector<112x320xf32>
    %c0_131 = arith.constant 0 : index
    %c0_132 = arith.constant 0 : index
    %110 = vector.load %arg11[%c0_131, %c0_132] : memref<1x320xf32, #tpu.memory_space<vmem>>, vector<1x320xf32>
    %111 = vector.broadcast %110 : vector<1x320xf32> to vector<112x320xf32>
    %112 = arith.addf %109, %111 : vector<112x320xf32>
    %c0_133 = arith.constant 0 : index
    %c0_134 = arith.constant 0 : index
    %113 = vector.load %arg25[%c0_133, %c0_134] : memref<208x320xf32, #tpu.memory_space<vmem>>, vector<112x320xf32>
    tpu.vector_store %arg25[%c0_133, %c0_134], %112 {strides = array<i32>} : memref<208x320xf32, #tpu.memory_space<vmem>>, vector<112x320xf32>,
    %c0_135 = arith.constant 0 : index
    %c0_136 = arith.constant 0 : index
    %114 = vector.load %arg25[%c0_135, %c0_136] : memref<208x320xf32, #tpu.memory_space<vmem>>, vector<112x128xf32>
    %c0_137 = arith.constant 0 : index
    %c0_138 = arith.constant 0 : index
    %c0_139 = arith.constant 0 : index
    %115 = vector.load %arg19[%c0_137, %c0_138, %c0_139] : memref<1x112x128xf32, #tpu.memory_space<vmem>>, vector<1x112x128xf32>
    %116 = vector.shape_cast %115 : vector<1x112x128xf32> to vector<112x128xf32>
    %117 = vector.shape_cast %114 : vector<112x128xf32> to vector<1x112x128xf32>
    tpu.vector_store %arg19[%c0_137, %c0_138, %c0_139], %117 {strides = array<i32>} : memref<1x112x128xf32, #tpu.memory_space<vmem>>, vector<1x112x128xf32>,
    %c0_140 = arith.constant 0 : index
    %c0_141 = arith.constant 0 : index
    %c0_142 = arith.constant 0 : index
    %118 = vector.load %arg17[%c0_140, %c0_141, %c0_142] : memref<4x169x112xf32, #tpu.memory_space<vmem>>, vector<1x169x112xf32>
    %119 = vector.shape_cast %118 : vector<1x169x112xf32> to vector<169x112xf32>
    %c0_143 = arith.constant 0 : index
    %c64_144 = arith.constant 64 : index
    %120 = vector.load %arg25[%c0_143, %c64_144] : memref<208x320xf32, #tpu.memory_space<vmem>>, vector<112x64xf32>
    %cst_145 = arith.constant dense<0.000000e+00> : vector<169x64xf32>
    %121 = tpu.matmul %119, %120, %cst_145 {dimension_numbers = #tpu.dot_dimension_numbers<[1], [0], [0], [1], [0, 0, 1, 1], [], []>} : vector<169x112xf32>, vector<112x64xf32>, vector<169x64xf32> -> vector<169x64xf32>
    %c1_146 = arith.constant 1 : index
    %c0_147 = arith.constant 0 : index
    %c0_148 = arith.constant 0 : index
    %122 = vector.load %arg17[%c1_146, %c0_147, %c0_148] : memref<4x169x112xf32, #tpu.memory_space<vmem>>, vector<1x169x112xf32>
    %123 = vector.shape_cast %122 : vector<1x169x112xf32> to vector<169x112xf32>
    %c0_149 = arith.constant 0 : index
    %c128_150 = arith.constant 128 : index
    %124 = vector.load %arg25[%c0_149, %c128_150] : memref<208x320xf32, #tpu.memory_space<vmem>>, vector<112x64xf32>
    %cst_151 = arith.constant dense<0.000000e+00> : vector<169x64xf32>
    %125 = tpu.matmul %123, %124, %cst_151 {dimension_numbers = #tpu.dot_dimension_numbers<[1], [0], [0], [1], [0, 0, 1, 1], [], []>} : vector<169x112xf32>, vector<112x64xf32>, vector<169x64xf32> -> vector<169x64xf32>
    %126 = arith.addf %121, %125 : vector<169x64xf32>
    %c2_152 = arith.constant 2 : index
    %c0_153 = arith.constant 0 : index
    %c0_154 = arith.constant 0 : index
    %127 = vector.load %arg17[%c2_152, %c0_153, %c0_154] : memref<4x169x112xf32, #tpu.memory_space<vmem>>, vector<1x169x112xf32>
    %128 = vector.shape_cast %127 : vector<1x169x112xf32> to vector<169x112xf32>
    %c0_155 = arith.constant 0 : index
    %c192_156 = arith.constant 192 : index
    %129 = vector.load %arg25[%c0_155, %c192_156] : memref<208x320xf32, #tpu.memory_space<vmem>>, vector<112x64xf32>
    %cst_157 = arith.constant dense<0.000000e+00> : vector<169x64xf32>
    %130 = tpu.matmul %128, %129, %cst_157 {dimension_numbers = #tpu.dot_dimension_numbers<[1], [0], [0], [1], [0, 0, 1, 1], [], []>} : vector<169x112xf32>, vector<112x64xf32>, vector<169x64xf32> -> vector<169x64xf32>
    %131 = arith.addf %126, %130 : vector<169x64xf32>
    %c3_158 = arith.constant 3 : index
    %c0_159 = arith.constant 0 : index
    %c0_160 = arith.constant 0 : index
    %132 = vector.load %arg17[%c3_158, %c0_159, %c0_160] : memref<4x169x112xf32, #tpu.memory_space<vmem>>, vector<1x169x112xf32>
    %133 = vector.shape_cast %132 : vector<1x169x112xf32> to vector<169x112xf32>
    %c0_161 = arith.constant 0 : index
    %c256_162 = arith.constant 256 : index
    %134 = vector.load %arg25[%c0_161, %c256_162] : memref<208x320xf32, #tpu.memory_space<vmem>>, vector<112x64xf32>
    %cst_163 = arith.constant dense<0.000000e+00> : vector<169x64xf32>
    %135 = tpu.matmul %133, %134, %cst_163 {dimension_numbers = #tpu.dot_dimension_numbers<[1], [0], [0], [1], [0, 0, 1, 1], [], []>} : vector<169x112xf32>, vector<112x64xf32>, vector<169x64xf32> -> vector<169x64xf32>
    %136 = arith.addf %131, %135 : vector<169x64xf32>
    %c0_164 = arith.constant 0 : index
    %c0_165 = arith.constant 0 : index
    %c0_166 = arith.constant 0 : index
    %137 = vector.load %arg3[%c0_164, %c0_165, %c0_166] : memref<1x169x16xf32, #tpu.memory_space<vmem>>, vector<1x169x16xf32>
    %138 = vector.shape_cast %137 : vector<1x169x16xf32> to vector<169x16xf32>
    %c0_167 = arith.constant 0 : index
    %c0_168 = arith.constant 0 : index
    %139 = vector.load %arg12[%c0_167, %c0_168] : memref<16x64xf32, #tpu.memory_space<vmem>>, vector<16x64xf32>
    %cst_169 = arith.constant dense<0.000000e+00> : vector<169x64xf32>
    %140 = tpu.matmul %138, %139, %cst_169 {dimension_numbers = #tpu.dot_dimension_numbers<[1], [0], [0], [1], [0, 0, 1, 1], [], []>} : vector<169x16xf32>, vector<16x64xf32>, vector<169x64xf32> -> vector<169x64xf32>
    %c0_170 = arith.constant 0 : index
    %c0_171 = arith.constant 0 : index
    %141 = vector.load %arg13[%c0_170, %c0_171] : memref<1x64xf32, #tpu.memory_space<vmem>>, vector<1x64xf32>
    %142 = vector.broadcast %141 : vector<1x64xf32> to vector<169x64xf32>
    %143 = arith.addf %140, %142 : vector<169x64xf32>
    %144 = arith.addf %143, %136 : vector<169x64xf32>
    %cst_172 = arith.constant 0.000000e+00 : f32
    %145 = vector.broadcast %cst_172 : f32 to vector<256x64xf32>
    %c0_173 = arith.constant 0 : index
    %c0_174 = arith.constant 0 : index
    %146 = vector.load %arg23[%c0_173, %c0_174] : memref<256x64xf32, #tpu.memory_space<vmem>>, vector<256x64xf32>
    tpu.vector_store %arg23[%c0_173, %c0_174], %145 {strides = array<i32>} : memref<256x64xf32, #tpu.memory_space<vmem>>, vector<256x64xf32>,
    %147 = vector.extract_strided_slice %144 {offsets = [0, 0], sizes = [13, 64], strides = [1, 1]} : vector<169x64xf32> to vector<13x64xf32>
    %c17_175 = arith.constant 17 : index
    %c0_176 = arith.constant 0 : index
    %148 = vector.load %arg23[%c17_175, %c0_176] : memref<256x64xf32, #tpu.memory_space<vmem>>, vector<13x64xf32>
    tpu.vector_store %arg23[%c17_175, %c0_176], %147 {strides = array<i32>} : memref<256x64xf32, #tpu.memory_space<vmem>>, vector<13x64xf32>,
    %149 = vector.extract_strided_slice %144 {offsets = [13, 0], sizes = [13, 64], strides = [1, 1]} : vector<169x64xf32> to vector<13x64xf32>
    %c33_177 = arith.constant 33 : index
    %c0_178 = arith.constant 0 : index
    %150 = vector.load %arg23[%c33_177, %c0_178] : memref<256x64xf32, #tpu.memory_space<vmem>>, vector<13x64xf32>
    tpu.vector_store %arg23[%c33_177, %c0_178], %149 {strides = array<i32>} : memref<256x64xf32, #tpu.memory_space<vmem>>, vector<13x64xf32>,
    %151 = vector.extract_strided_slice %144 {offsets = [26, 0], sizes = [13, 64], strides = [1, 1]} : vector<169x64xf32> to vector<13x64xf32>
    %c49_179 = arith.constant 49 : index
    %c0_180 = arith.constant 0 : index
    %152 = vector.load %arg23[%c49_179, %c0_180] : memref<256x64xf32, #tpu.memory_space<vmem>>, vector<13x64xf32>
    tpu.vector_store %arg23[%c49_179, %c0_180], %151 {strides = array<i32>} : memref<256x64xf32, #tpu.memory_space<vmem>>, vector<13x64xf32>,
    %153 = vector.extract_strided_slice %144 {offsets = [39, 0], sizes = [13, 64], strides = [1, 1]} : vector<169x64xf32> to vector<13x64xf32>
    %c65_181 = arith.constant 65 : index
    %c0_182 = arith.constant 0 : index
    %154 = vector.load %arg23[%c65_181, %c0_182] : memref<256x64xf32, #tpu.memory_space<vmem>>, vector<13x64xf32>
    tpu.vector_store %arg23[%c65_181, %c0_182], %153 {strides = array<i32>} : memref<256x64xf32, #tpu.memory_space<vmem>>, vector<13x64xf32>,
    %155 = vector.extract_strided_slice %144 {offsets = [52, 0], sizes = [13, 64], strides = [1, 1]} : vector<169x64xf32> to vector<13x64xf32>
    %c81_183 = arith.constant 81 : index
    %c0_184 = arith.constant 0 : index
    %156 = vector.load %arg23[%c81_183, %c0_184] : memref<256x64xf32, #tpu.memory_space<vmem>>, vector<13x64xf32>
    tpu.vector_store %arg23[%c81_183, %c0_184], %155 {strides = array<i32>} : memref<256x64xf32, #tpu.memory_space<vmem>>, vector<13x64xf32>,
    %157 = vector.extract_strided_slice %144 {offsets = [65, 0], sizes = [13, 64], strides = [1, 1]} : vector<169x64xf32> to vector<13x64xf32>
    %c97_185 = arith.constant 97 : index
    %c0_186 = arith.constant 0 : index
    %158 = vector.load %arg23[%c97_185, %c0_186] : memref<256x64xf32, #tpu.memory_space<vmem>>, vector<13x64xf32>
    tpu.vector_store %arg23[%c97_185, %c0_186], %157 {strides = array<i32>} : memref<256x64xf32, #tpu.memory_space<vmem>>, vector<13x64xf32>,
    %159 = vector.extract_strided_slice %144 {offsets = [78, 0], sizes = [13, 64], strides = [1, 1]} : vector<169x64xf32> to vector<13x64xf32>
    %c113_187 = arith.constant 113 : index
    %c0_188 = arith.constant 0 : index
    %160 = vector.load %arg23[%c113_187, %c0_188] : memref<256x64xf32, #tpu.memory_space<vmem>>, vector<13x64xf32>
    tpu.vector_store %arg23[%c113_187, %c0_188], %159 {strides = array<i32>} : memref<256x64xf32, #tpu.memory_space<vmem>>, vector<13x64xf32>,
    %161 = vector.extract_strided_slice %144 {offsets = [91, 0], sizes = [13, 64], strides = [1, 1]} : vector<169x64xf32> to vector<13x64xf32>
    %c129 = arith.constant 129 : index
    %c0_189 = arith.constant 0 : index
    %162 = vector.load %arg23[%c129, %c0_189] : memref<256x64xf32, #tpu.memory_space<vmem>>, vector<13x64xf32>
    tpu.vector_store %arg23[%c129, %c0_189], %161 {strides = array<i32>} : memref<256x64xf32, #tpu.memory_space<vmem>>, vector<13x64xf32>,
    %163 = vector.extract_strided_slice %144 {offsets = [104, 0], sizes = [13, 64], strides = [1, 1]} : vector<169x64xf32> to vector<13x64xf32>
    %c145 = arith.constant 145 : index
    %c0_190 = arith.constant 0 : index
    %164 = vector.load %arg23[%c145, %c0_190] : memref<256x64xf32, #tpu.memory_space<vmem>>, vector<13x64xf32>
    tpu.vector_store %arg23[%c145, %c0_190], %163 {strides = array<i32>} : memref<256x64xf32, #tpu.memory_space<vmem>>, vector<13x64xf32>,
    %165 = vector.extract_strided_slice %144 {offsets = [117, 0], sizes = [13, 64], strides = [1, 1]} : vector<169x64xf32> to vector<13x64xf32>
    %c161 = arith.constant 161 : index
    %c0_191 = arith.constant 0 : index
    %166 = vector.load %arg23[%c161, %c0_191] : memref<256x64xf32, #tpu.memory_space<vmem>>, vector<13x64xf32>
    tpu.vector_store %arg23[%c161, %c0_191], %165 {strides = array<i32>} : memref<256x64xf32, #tpu.memory_space<vmem>>, vector<13x64xf32>,
    %167 = vector.extract_strided_slice %144 {offsets = [130, 0], sizes = [13, 64], strides = [1, 1]} : vector<169x64xf32> to vector<13x64xf32>
    %c177 = arith.constant 177 : index
    %c0_192 = arith.constant 0 : index
    %168 = vector.load %arg23[%c177, %c0_192] : memref<256x64xf32, #tpu.memory_space<vmem>>, vector<13x64xf32>
    tpu.vector_store %arg23[%c177, %c0_192], %167 {strides = array<i32>} : memref<256x64xf32, #tpu.memory_space<vmem>>, vector<13x64xf32>,
    %169 = vector.extract_strided_slice %144 {offsets = [143, 0], sizes = [13, 64], strides = [1, 1]} : vector<169x64xf32> to vector<13x64xf32>
    %c193 = arith.constant 193 : index
    %c0_193 = arith.constant 0 : index
    %170 = vector.load %arg23[%c193, %c0_193] : memref<256x64xf32, #tpu.memory_space<vmem>>, vector<13x64xf32>
    tpu.vector_store %arg23[%c193, %c0_193], %169 {strides = array<i32>} : memref<256x64xf32, #tpu.memory_space<vmem>>, vector<13x64xf32>,
    %171 = vector.extract_strided_slice %144 {offsets = [156, 0], sizes = [13, 64], strides = [1, 1]} : vector<169x64xf32> to vector<13x64xf32>
    %c209 = arith.constant 209 : index
    %c0_194 = arith.constant 0 : index
    %172 = vector.load %arg23[%c209, %c0_194] : memref<256x64xf32, #tpu.memory_space<vmem>>, vector<13x64xf32>
    tpu.vector_store %arg23[%c209, %c0_194], %171 {strides = array<i32>} : memref<256x64xf32, #tpu.memory_space<vmem>>, vector<13x64xf32>,
    %c0_195 = arith.constant 0 : index
    %c0_196 = arith.constant 0 : index
    %173 = vector.load %arg23[%c0_195, %c0_196] : memref<256x64xf32, #tpu.memory_space<vmem>>, vector<208x64xf32>
    %c0_197 = arith.constant 0 : index
    %c0_198 = arith.constant 0 : index
    %174 = vector.load %arg24[%c0_197, %c0_198] : memref<208x576xf32, #tpu.memory_space<vmem>>, vector<208x64xf32>
    tpu.vector_store %arg24[%c0_197, %c0_198], %173 {strides = array<i32>} : memref<208x576xf32, #tpu.memory_space<vmem>>, vector<208x64xf32>,
    %c1_199 = arith.constant 1 : index
    %c0_200 = arith.constant 0 : index
    %175 = vector.load %arg23[%c1_199, %c0_200] : memref<256x64xf32, #tpu.memory_space<vmem>>, vector<208x64xf32>
    %c0_201 = arith.constant 0 : index
    %c64_202 = arith.constant 64 : index
    %176 = vector.load %arg24[%c0_201, %c64_202] : memref<208x576xf32, #tpu.memory_space<vmem>>, vector<208x64xf32>
    tpu.vector_store %arg24[%c0_201, %c64_202], %175 {strides = array<i32>} : memref<208x576xf32, #tpu.memory_space<vmem>>, vector<208x64xf32>,
    %c2_203 = arith.constant 2 : index
    %c0_204 = arith.constant 0 : index
    %177 = vector.load %arg23[%c2_203, %c0_204] : memref<256x64xf32, #tpu.memory_space<vmem>>, vector<208x64xf32>
    %c0_205 = arith.constant 0 : index
    %c128_206 = arith.constant 128 : index
    %178 = vector.load %arg24[%c0_205, %c128_206] : memref<208x576xf32, #tpu.memory_space<vmem>>, vector<208x64xf32>
    tpu.vector_store %arg24[%c0_205, %c128_206], %177 {strides = array<i32>} : memref<208x576xf32, #tpu.memory_space<vmem>>, vector<208x64xf32>,
    %c16_207 = arith.constant 16 : index
    %c0_208 = arith.constant 0 : index
    %179 = vector.load %arg23[%c16_207, %c0_208] : memref<256x64xf32, #tpu.memory_space<vmem>>, vector<208x64xf32>
    %c0_209 = arith.constant 0 : index
    %c192_210 = arith.constant 192 : index
    %180 = vector.load %arg24[%c0_209, %c192_210] : memref<208x576xf32, #tpu.memory_space<vmem>>, vector<208x64xf32>
    tpu.vector_store %arg24[%c0_209, %c192_210], %179 {strides = array<i32>} : memref<208x576xf32, #tpu.memory_space<vmem>>, vector<208x64xf32>,
    %c17_211 = arith.constant 17 : index
    %c0_212 = arith.constant 0 : index
    %181 = vector.load %arg23[%c17_211, %c0_212] : memref<256x64xf32, #tpu.memory_space<vmem>>, vector<208x64xf32>
    %c0_213 = arith.constant 0 : index
    %c256_214 = arith.constant 256 : index
    %182 = vector.load %arg24[%c0_213, %c256_214] : memref<208x576xf32, #tpu.memory_space<vmem>>, vector<208x64xf32>
    tpu.vector_store %arg24[%c0_213, %c256_214], %181 {strides = array<i32>} : memref<208x576xf32, #tpu.memory_space<vmem>>, vector<208x64xf32>,
    %c18_215 = arith.constant 18 : index
    %c0_216 = arith.constant 0 : index
    %183 = vector.load %arg23[%c18_215, %c0_216] : memref<256x64xf32, #tpu.memory_space<vmem>>, vector<208x64xf32>
    %c0_217 = arith.constant 0 : index
    %c320_218 = arith.constant 320 : index
    %184 = vector.load %arg24[%c0_217, %c320_218] : memref<208x576xf32, #tpu.memory_space<vmem>>, vector<208x64xf32>
    tpu.vector_store %arg24[%c0_217, %c320_218], %183 {strides = array<i32>} : memref<208x576xf32, #tpu.memory_space<vmem>>, vector<208x64xf32>,
    %c32_219 = arith.constant 32 : index
    %c0_220 = arith.constant 0 : index
    %185 = vector.load %arg23[%c32_219, %c0_220] : memref<256x64xf32, #tpu.memory_space<vmem>>, vector<208x64xf32>
    %c0_221 = arith.constant 0 : index
    %c384_222 = arith.constant 384 : index
    %186 = vector.load %arg24[%c0_221, %c384_222] : memref<208x576xf32, #tpu.memory_space<vmem>>, vector<208x64xf32>
    tpu.vector_store %arg24[%c0_221, %c384_222], %185 {strides = array<i32>} : memref<208x576xf32, #tpu.memory_space<vmem>>, vector<208x64xf32>,
    %c33_223 = arith.constant 33 : index
    %c0_224 = arith.constant 0 : index
    %187 = vector.load %arg23[%c33_223, %c0_224] : memref<256x64xf32, #tpu.memory_space<vmem>>, vector<208x64xf32>
    %c0_225 = arith.constant 0 : index
    %c448_226 = arith.constant 448 : index
    %188 = vector.load %arg24[%c0_225, %c448_226] : memref<208x576xf32, #tpu.memory_space<vmem>>, vector<208x64xf32>
    tpu.vector_store %arg24[%c0_225, %c448_226], %187 {strides = array<i32>} : memref<208x576xf32, #tpu.memory_space<vmem>>, vector<208x64xf32>,
    %c34_227 = arith.constant 34 : index
    %c0_228 = arith.constant 0 : index
    %189 = vector.load %arg23[%c34_227, %c0_228] : memref<256x64xf32, #tpu.memory_space<vmem>>, vector<208x64xf32>
    %c0_229 = arith.constant 0 : index
    %c512_230 = arith.constant 512 : index
    %190 = vector.load %arg24[%c0_229, %c512_230] : memref<208x576xf32, #tpu.memory_space<vmem>>, vector<208x64xf32>
    tpu.vector_store %arg24[%c0_229, %c512_230], %189 {strides = array<i32>} : memref<208x576xf32, #tpu.memory_space<vmem>>, vector<208x64xf32>,
    %c0_231 = arith.constant 0 : index
    %c0_232 = arith.constant 0 : index
    %191 = vector.load %arg24[%c0_231, %c0_232] : memref<208x576xf32, #tpu.memory_space<vmem>>, vector<208x576xf32>
    %c0_233 = arith.constant 0 : index
    %c0_234 = arith.constant 0 : index
    %192 = vector.load %arg14[%c0_233, %c0_234] : memref<576x128xf32, #tpu.memory_space<vmem>>, vector<576x128xf32>
    %cst_235 = arith.constant dense<0.000000e+00> : vector<208x128xf32>
    %193 = tpu.matmul %191, %192, %cst_235 {dimension_numbers = #tpu.dot_dimension_numbers<[1], [0], [0], [1], [0, 0, 1, 1], [], []>} : vector<208x576xf32>, vector<576x128xf32>, vector<208x128xf32> -> vector<208x128xf32>
    %c0_236 = arith.constant 0 : index
    %c0_237 = arith.constant 0 : index
    %194 = vector.load %arg15[%c0_236, %c0_237] : memref<1x128xf32, #tpu.memory_space<vmem>>, vector<1x128xf32>
    %195 = vector.broadcast %194 : vector<1x128xf32> to vector<208x128xf32>
    %196 = arith.addf %193, %195 : vector<208x128xf32>
    %c0_238 = arith.constant 0 : index
    %c0_239 = arith.constant 0 : index
    %197 = vector.load %arg25[%c0_238, %c0_239] : memref<208x320xf32, #tpu.memory_space<vmem>>, vector<208x128xf32>
    tpu.vector_store %arg25[%c0_238, %c0_239], %196 {strides = array<i32>} : memref<208x320xf32, #tpu.memory_space<vmem>>, vector<208x128xf32>,
    %c0_240 = arith.constant 0 : index
    %c0_241 = arith.constant 0 : index
    %198 = vector.load %arg25[%c0_240, %c0_241] : memref<208x320xf32, #tpu.memory_space<vmem>>, vector<208x128xf32>
    %c0_242 = arith.constant 0 : index
    %c0_243 = arith.constant 0 : index
    %c0_244 = arith.constant 0 : index
    %199 = vector.load %arg20[%c0_242, %c0_243, %c0_244] : memref<1x208x128xf32, #tpu.memory_space<vmem>>, vector<1x208x128xf32>
    %200 = vector.shape_cast %199 : vector<1x208x128xf32> to vector<208x128xf32>
    %201 = vector.shape_cast %198 : vector<208x128xf32> to vector<1x208x128xf32>
    tpu.vector_store %arg20[%c0_242, %c0_243, %c0_244], %201 {strides = array<i32>} : memref<1x208x128xf32, #tpu.memory_space<vmem>>, vector<1x208x128xf32>,
    return
  }
  func.func @transform_0(%arg0: i32) -> (i32, i32, i32) {
    %c0_i32 = arith.constant 0 : i32
    %c0_i32_0 = arith.constant 0 : i32
    %c0_i32_1 = arith.constant 0 : i32
    return %arg0, %c0_i32, %c0_i32_0 : i32, i32, i32
  }
  func.func @transform_1(%arg0: i32) -> (i32, i32, i32) {
    %c0_i32 = arith.constant 0 : i32
    %c0_i32_0 = arith.constant 0 : i32
    %c0_i32_1 = arith.constant 0 : i32
    return %arg0, %c0_i32, %c0_i32_0 : i32, i32, i32
  }
  func.func @transform_2(%arg0: i32) -> (i32, i32, i32) {
    %c0_i32 = arith.constant 0 : i32
    %c0_i32_0 = arith.constant 0 : i32
    %c0_i32_1 = arith.constant 0 : i32
    return %arg0, %c0_i32, %c0_i32_0 : i32, i32, i32
  }
  func.func @transform_3(%arg0: i32) -> (i32, i32) {
    %c0_i32 = arith.constant 0 : i32
    %c0_i32_0 = arith.constant 0 : i32
    %c0_i32_1 = arith.constant 0 : i32
    return %c0_i32, %c0_i32_0 : i32, i32
  }
  func.func @transform_4(%arg0: i32) -> (i32, i32) {
    %c0_i32 = arith.constant 0 : i32
    %c0_i32_0 = arith.constant 0 : i32
    %c0_i32_1 = arith.constant 0 : i32
    return %c0_i32, %c0_i32_0 : i32, i32
  }
  func.func @transform_5(%arg0: i32) -> (i32, i32) {
    %c0_i32 = arith.constant 0 : i32
    %c0_i32_0 = arith.constant 0 : i32
    %c0_i32_1 = arith.constant 0 : i32
    return %c0_i32, %c0_i32_0 : i32, i32
  }
  func.func @transform_6(%arg0: i32) -> (i32, i32) {
    %c0_i32 = arith.constant 0 : i32
    %c0_i32_0 = arith.constant 0 : i32
    %c0_i32_1 = arith.constant 0 : i32
    return %c0_i32, %c0_i32_0 : i32, i32
  }
  func.func @transform_7(%arg0: i32) -> (i32, i32) {
    %c0_i32 = arith.constant 0 : i32
    %c0_i32_0 = arith.constant 0 : i32
    %c0_i32_1 = arith.constant 0 : i32
    return %c0_i32, %c0_i32_0 : i32, i32
  }
  func.func @transform_8(%arg0: i32) -> (i32, i32) {
    %c0_i32 = arith.constant 0 : i32
    %c0_i32_0 = arith.constant 0 : i32
    %c0_i32_1 = arith.constant 0 : i32
    return %c0_i32, %c0_i32_0 : i32, i32
  }
  func.func @transform_9(%arg0: i32) -> (i32, i32) {
    %c0_i32 = arith.constant 0 : i32
    %c0_i32_0 = arith.constant 0 : i32
    %c0_i32_1 = arith.constant 0 : i32
    return %c0_i32, %c0_i32_0 : i32, i32
  }
  func.func @transform_10(%arg0: i32) -> (i32, i32) {
    %c0_i32 = arith.constant 0 : i32
    %c0_i32_0 = arith.constant 0 : i32
    %c0_i32_1 = arith.constant 0 : i32
    return %c0_i32, %c0_i32_0 : i32, i32
  }
  func.func @transform_11(%arg0: i32) -> (i32, i32) {
    %c0_i32 = arith.constant 0 : i32
    %c0_i32_0 = arith.constant 0 : i32
    %c0_i32_1 = arith.constant 0 : i32
    return %c0_i32, %c0_i32_0 : i32, i32
  }
  func.func @transform_12(%arg0: i32) -> (i32, i32) {
    %c0_i32 = arith.constant 0 : i32
    %c0_i32_0 = arith.constant 0 : i32
    %c0_i32_1 = arith.constant 0 : i32
    return %c0_i32, %c0_i32_0 : i32, i32
  }
  func.func @transform_13(%arg0: i32) -> (i32, i32) {
    %c0_i32 = arith.constant 0 : i32
    %c0_i32_0 = arith.constant 0 : i32
    %c0_i32_1 = arith.constant 0 : i32
    return %c0_i32, %c0_i32_0 : i32, i32
  }
  func.func @transform_14(%arg0: i32) -> (i32, i32) {
    %c0_i32 = arith.constant 0 : i32
    %c0_i32_0 = arith.constant 0 : i32
    %c0_i32_1 = arith.constant 0 : i32
    return %c0_i32, %c0_i32_0 : i32, i32
  }
  func.func @transform_15(%arg0: i32) -> (i32, i32, i32) {
    %c0_i32 = arith.constant 0 : i32
    %c0_i32_0 = arith.constant 0 : i32
    %c0_i32_1 = arith.constant 0 : i32
    %c0_i32_2 = arith.constant 0 : i32
    return %c0_i32, %c0_i32_0, %c0_i32_1 : i32, i32, i32
  }
  func.func @transform_16(%arg0: i32) -> (i32, i32, i32) {
    %c0_i32 = arith.constant 0 : i32
    %c0_i32_0 = arith.constant 0 : i32
    %c0_i32_1 = arith.constant 0 : i32
    %c0_i32_2 = arith.constant 0 : i32
    return %c0_i32, %c0_i32_0, %c0_i32_1 : i32, i32, i32
  }
  func.func @transform_17(%arg0: i32) -> (i32, i32, i32) {
    %c0_i32 = arith.constant 0 : i32
    %c0_i32_0 = arith.constant 0 : i32
    %c0_i32_1 = arith.constant 0 : i32
    return %arg0, %c0_i32, %c0_i32_0 : i32, i32, i32
  }
  func.func @transform_18(%arg0: i32) -> (i32, i32, i32) {
    %c0_i32 = arith.constant 0 : i32
    %c0_i32_0 = arith.constant 0 : i32
    %c0_i32_1 = arith.constant 0 : i32
    return %arg0, %c0_i32, %c0_i32_0 : i32, i32, i32
  }
  func.func @transform_19(%arg0: i32) -> (i32, i32, i32) {
    %c0_i32 = arith.constant 0 : i32
    %c0_i32_0 = arith.constant 0 : i32
    %c0_i32_1 = arith.constant 0 : i32
    return %arg0, %c0_i32, %c0_i32_0 : i32, i32, i32
  }
}

</mosaic_0001>

<llo_original>
// kernel: pyramid_features_forward.1
$region0: #{pyramid_features_forward.1}
  #allocation0 [shape = 'u32[]', space=smem, size = 0x4, offset = 0x4, fixed_abs, tag = 'smem constant byte address 0x4 - core index']
  #allocation1 [shape = 'u32[72,128]{1,0:T(1,128)}', space=vmem, size = 0x9000, scoped, tag = 'internal scratch']
  #allocation2 [shape = 'f32[56,64]{1,0:T(8,128)}', space=vmem, size = 0x7000, scoped, tag = 'scratch operand']
  #allocation3 [shape = 'f32[160,64]{1,0:T(8,128)}', space=vmem, size = 0x14000, scoped, tag = 'scratch operand']
  #allocation4 [shape = 'f32[256,64]{1,0:T(8,128)}', space=vmem, size = 0x20000, scoped, tag = 'scratch operand']
  #allocation5 [shape = 'f32[208,576]{1,0:T(8,128)}', space=vmem, size = 0x82000, scoped, tag = 'scratch operand']
  #allocation6 [shape = 'f32[208,320]{1,0:T(8,128)}', space=vmem, size = 0x4e000, scoped, tag = 'scratch operand']
  %s0 = inlined_call_operand.vmem [shape: f32[2,16,32], index: 0, kind: input, shape index: {}]
  %s1 = inlined_call_operand.vmem [shape: f32[2,49,24], index: 1, kind: input, shape index: {}]
  %s2 = inlined_call_operand.vmem [shape: f32[2,169,16], index: 2, kind: input, shape index: {}]
  %s3 = inlined_call_operand.vmem [shape: f32[32,64], index: 3, kind: input, shape index: {}]
  %s4 = inlined_call_operand.vmem [shape: f32[1,64], index: 4, kind: input, shape index: {}]
  %s5 = inlined_call_operand.vmem [shape: f32[576,320], index: 5, kind: input, shape index: {}]
  %s6 = inlined_call_operand.vmem [shape: f32[1,320], index: 6, kind: input, shape index: {}]
  %s7 = inlined_call_operand.vmem [shape: f32[24,64], index: 7, kind: input, shape index: {}]
  %s8 = inlined_call_operand.vmem [shape: f32[1,64], index: 8, kind: input, shape index: {}]
  %s9 = inlined_call_operand.vmem [shape: f32[576,320], index: 9, kind: input, shape index: {}]
  %s10 = inlined_call_operand.vmem [shape: f32[1,320], index: 10, kind: input, shape index: {}]
  %s11 = inlined_call_operand.vmem [shape: f32[16,64], index: 11, kind: input, shape index: {}]
  %s12 = inlined_call_operand.vmem [shape: f32[1,64], index: 12, kind: input, shape index: {}]
  %s13 = inlined_call_operand.vmem [shape: f32[576,128], index: 13, kind: input, shape index: {}]
  %s14 = inlined_call_operand.vmem [shape: f32[1,128], index: 14, kind: input, shape index: {}]
  %s15 = inlined_call_operand.vmem [shape: f32[4,49,32], index: 15, kind: input, shape index: {}]
  %s16 = inlined_call_operand.vmem [shape: f32[4,169,112], index: 16, kind: input, shape index: {}]
  %s17 = inlined_call_operand.vmem [shape: f32[2,32,128], index: 17, kind: output, shape index: {0}]
  %s18 = inlined_call_operand.vmem [shape: f32[2,112,128], index: 18, kind: output, shape index: {1}]
  %s19 = inlined_call_operand.vmem [shape: f32[2,208,128], index: 19, kind: output, shape index: {2}]
  %20 = xla_tuple %s17, %s18, %s19
  %s21 = sld [smem:[#allocation0]]
  $region117: #{pyramid_features_forward.1} parent=0
    _
  %s23 = ssub.s32 1, %s21
  %s24 = scalar_select 0, %s23, %s21
  loop: start=0, step=1, limit=4
  $region2: #{pyramid_features_forward.1} parent=0 // loop_pre_header
    _
  $region3: #{pyramid_features_forward.1} parent=0 // loop_header
    %s26 = sphi 0, %s30
    %p27 = scmp.ge.s32.totalorder %s26, 4
    %s36 = sphi 0, %s38
    %s39 = sphi 0, %s36
    %s40 = sphi 0, %s39
    %s56 = sphi 0, %s40
    %s62 = sphi 0, %s64
    %s65 = sphi 0, %s62
    %s66 = sphi 0, %s65
    %s82 = sphi 0, %s66
    %s88 = sphi 0, %s90
    %s91 = sphi 0, %s88
    %s92 = sphi 0, %s91
    %s108 = sphi 0, %s92
    %s112 = sphi 0, %s112
    %s114 = sphi 0, %s112
    %s115 = sphi 0, %s114
    %s129 = sphi 0, %s115
    %s133 = sphi 0, %s133
    %s135 = sphi 0, %s133
    %s136 = sphi 0, %s135
    %s150 = sphi 0, %s136
    %s154 = sphi 0, %s154
    %s156 = sphi 0, %s154
    %s157 = sphi 0, %s156
    %s171 = sphi 0, %s157
    %s175 = sphi 0, %s175
    %s177 = sphi 0, %s175
    %s178 = sphi 0, %s177
    %s192 = sphi 0, %s178
    %s196 = sphi 0, %s196
    %s198 = sphi 0, %s196
    %s199 = sphi 0, %s198
    %s213 = sphi 0, %s199
    %s217 = sphi 0, %s217
    %s219 = sphi 0, %s217
    %s220 = sphi 0, %s219
    %s234 = sphi 0, %s220
    %s238 = sphi 0, %s238
    %s240 = sphi 0, %s238
    %s241 = sphi 0, %s240
    %s255 = sphi 0, %s241
    %s259 = sphi 0, %s259
    %s261 = sphi 0, %s259
    %s262 = sphi 0, %s261
    %s276 = sphi 0, %s262
    %s280 = sphi 0, %s280
    %s282 = sphi 0, %s280
    %s283 = sphi 0, %s282
    %s297 = sphi 0, %s283
    %s301 = sphi 0, %s301
    %s303 = sphi 0, %s301
    %s304 = sphi 0, %s303
    %s318 = sphi 0, %s304
    %s322 = sphi 0, %s322
    %s324 = sphi 0, %s322
    %s325 = sphi 0, %s324
    %s339 = sphi 0, %s325
    %s343 = sphi 0, %s343
    %s345 = sphi 0, %s343
    %s346 = sphi 0, %s345
    %s360 = sphi 0, %s346
    %s364 = sphi 0, %s364
    %s366 = sphi 0, %s364
    %s367 = sphi 0, %s366
    %s381 = sphi 0, %s367
    %s385 = sphi 0, %s385
    %s387 = sphi 0, %s385
    %s388 = sphi 0, %s387
    %s402 = sphi 0, %s388
    %s408 = sphi 0, %s410
    %s411 = sphi 0, %s408
    %s412 = sphi 0, %s411
    %s428 = sphi 0, %s412
    %s434 = sphi 0, %s436
    %s437 = sphi 0, %s434
    %s438 = sphi 0, %s437
    %s454 = sphi 0, %s438
    %s460 = sphi 0, %s462
    %s463 = sphi 0, %s460
    %s464 = sphi 0, %s463
    %s480 = sphi 0, %s464
  $region4: #{pyramid_features_forward.1} parent=0 // loop_header_branch
    %29 = sbr.rel (%p27) target = $region8
  $region5: #{pyramid_features_forward.1} parent=0 // loop_body
    %s31 = ssub.s32 %s26, 1
    %s32 = ssub.s32 %s26, 2
    %s33 = sadd.s32 %s26, 1
    %s34 = ssub.s32 %s26, %s33
    %p35 = scmp.eq.s32.totalorder %s34, 0
    %s37 = sadd.s32 %s36, 1
    %s38 = scalar_select %p35, %s36, %s37
    %p41 = pneg %p35
    %p42 = scmp.eq.s32.totalorder %s26, 1
    %p43 = por %p41, %p42
    %p44 = scmp.ne.s32.totalorder %s36, %s39
    %p45 = scmp.eq.s32.totalorder %s26, 0
    %p46 = por %p44, %p45
    %p47 = scmp.ne.s32.totalorder %s36, %s39
    %p48 = scmp.eq.s32.totalorder %s31, 1
    %p49 = por %p47, %p48
    %p50 = scmp.ne.s32.totalorder %s39, %s40
    %p51 = scmp.eq.s32.totalorder %s31, 0
    %p52 = por %p50, %p51
    %p53 = scmp.ne.s32.totalorder %s39, %s40
    %p54 = scmp.eq.s32.totalorder %s32, 1
    %p55 = por %p53, %p54
    %p57 = scmp.ne.s32.totalorder %s40, %s56
    %p58 = scmp.eq.s32.totalorder %s32, 0
    %p59 = por %p57, %p58
    %s60 = ssub.s32 %s26, %s33
    %p61 = scmp.eq.s32.totalorder %s60, 0
    %s63 = sadd.s32 %s62, 1
    %s64 = scalar_select %p61, %s62, %s63
    %p67 = pneg %p61
    %p68 = scmp.eq.s32.totalorder %s26, 1
    %p69 = por %p67, %p68
    %p70 = scmp.ne.s32.totalorder %s62, %s65
    %p71 = scmp.eq.s32.totalorder %s26, 0
    %p72 = por %p70, %p71
    %p73 = scmp.ne.s32.totalorder %s62, %s65
    %p74 = scmp.eq.s32.totalorder %s31, 1
    %p75 = por %p73, %p74
    %p76 = scmp.ne.s32.totalorder %s65, %s66
    %p77 = scmp.eq.s32.totalorder %s31, 0
    %p78 = por %p76, %p77
    %p79 = scmp.ne.s32.totalorder %s65, %s66
    %p80 = scmp.eq.s32.totalorder %s32, 1
    %p81 = por %p79, %p80
    %p83 = scmp.ne.s32.totalorder %s66, %s82
    %p84 = scmp.eq.s32.totalorder %s32, 0
    %p85 = por %p83, %p84
    %s86 = ssub.s32 %s26, %s33
    %p87 = scmp.eq.s32.totalorder %s86, 0
    %s89 = sadd.s32 %s88, 1
    %s90 = scalar_select %p87, %s88, %s89
    %p93 = pneg %p87
    %p94 = scmp.eq.s32.totalorder %s26, 1
    %p95 = por %p93, %p94
    %p96 = scmp.ne.s32.totalorder %s88, %s91
    %p97 = scmp.eq.s32.totalorder %s26, 0
    %p98 = por %p96, %p97
    %p99 = scmp.ne.s32.totalorder %s88, %s91
    %p100 = scmp.eq.s32.totalorder %s31, 1
    %p101 = por %p99, %p100
    %p102 = scmp.ne.s32.totalorder %s91, %s92
    %p103 = scmp.eq.s32.totalorder %s31, 0
    %p104 = por %p102, %p103
    %p105 = scmp.ne.s32.totalorder %s91, %s92
    %p106 = scmp.eq.s32.totalorder %s32, 1
    %p107 = por %p105, %p106
    %p109 = scmp.ne.s32.totalorder %s92, %s108
    %p110 = scmp.eq.s32.totalorder %s32, 0
    %p111 = por %p109, %p110
    %s113 = sadd.s32 %s112, 1
    %p116 = scmp.eq.s32.totalorder %s26, 1
    %p117 = scmp.ne.s32.totalorder %s112, %s114
    %p118 = scmp.eq.s32.totalorder %s26, 0
    %p119 = por %p117, %p118
    %p120 = scmp.ne.s32.totalorder %s112, %s114
    %p121 = scmp.eq.s32.totalorder %s31, 1
    %p122 = por %p120, %p121
    %p123 = scmp.ne.s32.totalorder %s114, %s115
    %p124 = scmp.eq.s32.totalorder %s31, 0
    %p125 = por %p123, %p124
    %p126 = scmp.ne.s32.totalorder %s114, %s115
    %p127 = scmp.eq.s32.totalorder %s32, 1
    %p128 = por %p126, %p127
    %p130 = scmp.ne.s32.totalorder %s115, %s129
    %p131 = scmp.eq.s32.totalorder %s32, 0
    %p132 = por %p130, %p131
    %s134 = sadd.s32 %s133, 1
    %p137 = scmp.eq.s32.totalorder %s26, 1
    %p138 = scmp.ne.s32.totalorder %s133, %s135
    %p139 = scmp.eq.s32.totalorder %s26, 0
    %p140 = por %p138, %p139
    %p141 = scmp.ne.s32.totalorder %s133, %s135
    %p142 = scmp.eq.s32.totalorder %s31, 1
    %p143 = por %p141, %p142
    %p144 = scmp.ne.s32.totalorder %s135, %s136
    %p145 = scmp.eq.s32.totalorder %s31, 0
    %p146 = por %p144, %p145
    %p147 = scmp.ne.s32.totalorder %s135, %s136
    %p148 = scmp.eq.s32.totalorder %s32, 1
    %p149 = por %p147, %p148
    %p151 = scmp.ne.s32.totalorder %s136, %s150
    %p152 = scmp.eq.s32.totalorder %s32, 0
    %p153 = por %p151, %p152
    %s155 = sadd.s32 %s154, 1
    %p158 = scmp.eq.s32.totalorder %s26, 1
    %p159 = scmp.ne.s32.totalorder %s154, %s156
    %p160 = scmp.eq.s32.totalorder %s26, 0
    %p161 = por %p159, %p160
    %p162 = scmp.ne.s32.totalorder %s154, %s156
    %p163 = scmp.eq.s32.totalorder %s31, 1
    %p164 = por %p162, %p163
    %p165 = scmp.ne.s32.totalorder %s156, %s157
    %p166 = scmp.eq.s32.totalorder %s31, 0
    %p167 = por %p165, %p166
    %p168 = scmp.ne.s32.totalorder %s156, %s157
    %p169 = scmp.eq.s32.totalorder %s32, 1
    %p170 = por %p168, %p169
    %p172 = scmp.ne.s32.totalorder %s157, %s171
    %p173 = scmp.eq.s32.totalorder %s32, 0
    %p174 = por %p172, %p173
    %s176 = sadd.s32 %s175, 1
    %p179 = scmp.eq.s32.totalorder %s26, 1
    %p180 = scmp.ne.s32.totalorder %s175, %s177
    %p181 = scmp.eq.s32.totalorder %s26, 0
    %p182 = por %p180, %p181
    %p183 = scmp.ne.s32.totalorder %s175, %s177
    %p184 = scmp.eq.s32.totalorder %s31, 1
    %p185 = por %p183, %p184
    %p186 = scmp.ne.s32.totalorder %s177, %s178
    %p187 = scmp.eq.s32.totalorder %s31, 0
    %p188 = por %p186, %p187
    %p189 = scmp.ne.s32.totalorder %s177, %s178
    %p190 = scmp.eq.s32.totalorder %s32, 1
    %p191 = por %p189, %p190
    %p193 = scmp.ne.s32.totalorder %s178, %s192
    %p194 = scmp.eq.s32.totalorder %s32, 0
    %p195 = por %p193, %p194
    %s197 = sadd.s32 %s196, 1
    %p200 = scmp.eq.s32.totalorder %s26, 1
    %p201 = scmp.ne.s32.totalorder %s196, %s198
    %p202 = scmp.eq.s32.totalorder %s26, 0
    %p203 = por %p201, %p202
    %p204 = scmp.ne.s32.totalorder %s196, %s198
    %p205 = scmp.eq.s32.totalorder %s31, 1
    %p206 = por %p204, %p205
    %p207 = scmp.ne.s32.totalorder %s198, %s199
    %p208 = scmp.eq.s32.totalorder %s31, 0
    %p209 = por %p207, %p208
    %p210 = scmp.ne.s32.totalorder %s198, %s199
    %p211 = scmp.eq.s32.totalorder %s32, 1
    %p212 = por %p210, %p211
    %p214 = scmp.ne.s32.totalorder %s199, %s213
    %p215 = scmp.eq.s32.totalorder %s32, 0
    %p216 = por %p214, %p215
    %s218 = sadd.s32 %s217, 1
    %p221 = scmp.eq.s32.totalorder %s26, 1
    %p222 = scmp.ne.s32.totalorder %s217, %s219
    %p223 = scmp.eq.s32.totalorder %s26, 0
    %p224 = por %p222, %p223
    %p225 = scmp.ne.s32.totalorder %s217, %s219
    %p226 = scmp.eq.s32.totalorder %s31, 1
    %p227 = por %p225, %p226
    %p228 = scmp.ne.s32.totalorder %s219, %s220
    %p229 = scmp.eq.s32.totalorder %s31, 0
    %p230 = por %p228, %p229
    %p231 = scmp.ne.s32.totalorder %s219, %s220
    %p232 = scmp.eq.s32.totalorder %s32, 1
    %p233 = por %p231, %p232
    %p235 = scmp.ne.s32.totalorder %s220, %s234
    %p236 = scmp.eq.s32.totalorder %s32, 0
    %p237 = por %p235, %p236
    %s239 = sadd.s32 %s238, 1
    %p242 = scmp.eq.s32.totalorder %s26, 1
    %p243 = scmp.ne.s32.totalorder %s238, %s240
    %p244 = scmp.eq.s32.totalorder %s26, 0
    %p245 = por %p243, %p244
    %p246 = scmp.ne.s32.totalorder %s238, %s240
    %p247 = scmp.eq.s32.totalorder %s31, 1
    %p248 = por %p246, %p247
    %p249 = scmp.ne.s32.totalorder %s240, %s241
    %p250 = scmp.eq.s32.totalorder %s31, 0
    %p251 = por %p249, %p250
    %p252 = scmp.ne.s32.totalorder %s240, %s241
    %p253 = scmp.eq.s32.totalorder %s32, 1
    %p254 = por %p252, %p253
    %p256 = scmp.ne.s32.totalorder %s241, %s255
    %p257 = scmp.eq.s32.totalorder %s32, 0
    %p258 = por %p256, %p257
    %s260 = sadd.s32 %s259, 1
    %p263 = scmp.eq.s32.totalorder %s26, 1
    %p264 = scmp.ne.s32.totalorder %s259, %s261
    %p265 = scmp.eq.s32.totalorder %s26, 0
    %p266 = por %p264, %p265
    %p267 = scmp.ne.s32.totalorder %s259, %s261
    %p268 = scmp.eq.s32.totalorder %s31, 1
    %p269 = por %p267, %p268
    %p270 = scmp.ne.s32.totalorder %s261, %s262
    %p271 = scmp.eq.s32.totalorder %s31, 0
    %p272 = por %p270, %p271
    %p273 = scmp.ne.s32.totalorder %s261, %s262
    %p274 = scmp.eq.s32.totalorder %s32, 1
    %p275 = por %p273, %p274
    %p277 = scmp.ne.s32.totalorder %s262, %s276
    %p278 = scmp.eq.s32.totalorder %s32, 0
    %p279 = por %p277, %p278
    %s281 = sadd.s32 %s280, 1
    %p284 = scmp.eq.s32.totalorder %s26, 1
    %p285 = scmp.ne.s32.totalorder %s280, %s282
    %p286 = scmp.eq.s32.totalorder %s26, 0
    %p287 = por %p285, %p286
    %p288 = scmp.ne.s32.totalorder %s280, %s282
    %p289 = scmp.eq.s32.totalorder %s31, 1
    %p290 = por %p288, %p289
    %p291 = scmp.ne.s32.totalorder %s282, %s283
    %p292 = scmp.eq.s32.totalorder %s31, 0
    %p293 = por %p291, %p292
    %p294 = scmp.ne.s32.totalorder %s282, %s283
    %p295 = scmp.eq.s32.totalorder %s32, 1
    %p296 = por %p294, %p295
    %p298 = scmp.ne.s32.totalorder %s283, %s297
    %p299 = scmp.eq.s32.totalorder %s32, 0
    %p300 = por %p298, %p299
    %s302 = sadd.s32 %s301, 1
    %p305 = scmp.eq.s32.totalorder %s26, 1
    %p306 = scmp.ne.s32.totalorder %s301, %s303
    %p307 = scmp.eq.s32.totalorder %s26, 0
    %p308 = por %p306, %p307
    %p309 = scmp.ne.s32.totalorder %s301, %s303
    %p310 = scmp.eq.s32.totalorder %s31, 1
    %p311 = por %p309, %p310
    %p312 = scmp.ne.s32.totalorder %s303, %s304
    %p313 = scmp.eq.s32.totalorder %s31, 0
    %p314 = por %p312, %p313
    %p315 = scmp.ne.s32.totalorder %s303, %s304
    %p316 = scmp.eq.s32.totalorder %s32, 1
    %p317 = por %p315, %p316
    %p319 = scmp.ne.s32.totalorder %s304, %s318
    %p320 = scmp.eq.s32.totalorder %s32, 0
    %p321 = por %p319, %p320
    %s323 = sadd.s32 %s322, 1
    %p326 = scmp.eq.s32.totalorder %s26, 1
    %p327 = scmp.ne.s32.totalorder %s322, %s324
    %p328 = scmp.eq.s32.totalorder %s26, 0
    %p329 = por %p327, %p328
    %p330 = scmp.ne.s32.totalorder %s322, %s324
    %p331 = scmp.eq.s32.totalorder %s31, 1
    %p332 = por %p330, %p331
    %p333 = scmp.ne.s32.totalorder %s324, %s325
    %p334 = scmp.eq.s32.totalorder %s31, 0
    %p335 = por %p333, %p334
    %p336 = scmp.ne.s32.totalorder %s324, %s325
    %p337 = scmp.eq.s32.totalorder %s32, 1
    %p338 = por %p336, %p337
    %p340 = scmp.ne.s32.totalorder %s325, %s339
    %p341 = scmp.eq.s32.totalorder %s32, 0
    %p342 = por %p340, %p341
    %s344 = sadd.s32 %s343, 1
    %p347 = scmp.eq.s32.totalorder %s26, 1
    %p348 = scmp.ne.s32.totalorder %s343, %s345
    %p349 = scmp.eq.s32.totalorder %s26, 0
    %p350 = por %p348, %p349
    %p351 = scmp.ne.s32.totalorder %s343, %s345
    %p352 = scmp.eq.s32.totalorder %s31, 1
    %p353 = por %p351, %p352
    %p354 = scmp.ne.s32.totalorder %s345, %s346
    %p355 = scmp.eq.s32.totalorder %s31, 0
    %p356 = por %p354, %p355
    %p357 = scmp.ne.s32.totalorder %s345, %s346
    %p358 = scmp.eq.s32.totalorder %s32, 1
    %p359 = por %p357, %p358
    %p361 = scmp.ne.s32.totalorder %s346, %s360
    %p362 = scmp.eq.s32.totalorder %s32, 0
    %p363 = por %p361, %p362
    %s365 = sadd.s32 %s364, 1
    %p368 = scmp.eq.s32.totalorder %s26, 1
    %p369 = scmp.ne.s32.totalorder %s364, %s366
    %p370 = scmp.eq.s32.totalorder %s26, 0
    %p371 = por %p369, %p370
    %p372 = scmp.ne.s32.totalorder %s364, %s366
    %p373 = scmp.eq.s32.totalorder %s31, 1
    %p374 = por %p372, %p373
    %p375 = scmp.ne.s32.totalorder %s366, %s367
    %p376 = scmp.eq.s32.totalorder %s31, 0
    %p377 = por %p375, %p376
    %p378 = scmp.ne.s32.totalorder %s366, %s367
    %p379 = scmp.eq.s32.totalorder %s32, 1
    %p380 = por %p378, %p379
    %p382 = scmp.ne.s32.totalorder %s367, %s381
    %p383 = scmp.eq.s32.totalorder %s32, 0
    %p384 = por %p382, %p383
    %s386 = sadd.s32 %s385, 1
    %p389 = scmp.eq.s32.totalorder %s26, 1
    %p390 = scmp.ne.s32.totalorder %s385, %s387
    %p391 = scmp.eq.s32.totalorder %s26, 0
    %p392 = por %p390, %p391
    %p393 = scmp.ne.s32.totalorder %s385, %s387
    %p394 = scmp.eq.s32.totalorder %s31, 1
    %p395 = por %p393, %p394
    %p396 = scmp.ne.s32.totalorder %s387, %s388
    %p397 = scmp.eq.s32.totalorder %s31, 0
    %p398 = por %p396, %p397
    %p399 = scmp.ne.s32.totalorder %s387, %s388
    %p400 = scmp.eq.s32.totalorder %s32, 1
    %p401 = por %p399, %p400
    %p403 = scmp.ne.s32.totalorder %s388, %s402
    %p404 = scmp.eq.s32.totalorder %s32, 0
    %p405 = por %p403, %p404
    %s406 = ssub.s32 %s26, %s33
    %p407 = scmp.eq.s32.totalorder %s406, 0
    %s409 = sadd.s32 %s408, 1
    %s410 = scalar_select %p407, %s408, %s409
    %p413 = pneg %p407
    %p414 = scmp.eq.s32.totalorder %s26, 1
    %p415 = por %p413, %p414
    %p416 = scmp.ne.s32.totalorder %s408, %s411
    %p417 = scmp.eq.s32.totalorder %s26, 0
    %p418 = por %p416, %p417
    %p419 = scmp.ne.s32.totalorder %s408, %s411
    %p420 = scmp.eq.s32.totalorder %s31, 1
    %p421 = por %p419, %p420
    %p422 = scmp.ne.s32.totalorder %s411, %s412
    %p423 = scmp.eq.s32.totalorder %s31, 0
    %p424 = por %p422, %p423
    %p425 = scmp.ne.s32.totalorder %s411, %s412
    %p426 = scmp.eq.s32.totalorder %s32, 1
    %p427 = por %p425, %p426
    %p429 = scmp.ne.s32.totalorder %s412, %s428
    %p430 = scmp.eq.s32.totalorder %s32, 0
    %p431 = por %p429, %p430
    %s432 = ssub.s32 %s26, %s33
    %p433 = scmp.eq.s32.totalorder %s432, 0
    %s435 = sadd.s32 %s434, 1
    %s436 = scalar_select %p433, %s434, %s435
    %p439 = pneg %p433
    %p440 = scmp.eq.s32.totalorder %s26, 1
    %p441 = por %p439, %p440
    %p442 = scmp.ne.s32.totalorder %s434, %s437
    %p443 = scmp.eq.s32.totalorder %s26, 0
    %p444 = por %p442, %p443
    %p445 = scmp.ne.s32.totalorder %s434, %s437
    %p446 = scmp.eq.s32.totalorder %s31, 1
    %p447 = por %p445, %p446
    %p448 = scmp.ne.s32.totalorder %s437, %s438
    %p449 = scmp.eq.s32.totalorder %s31, 0
    %p450 = por %p448, %p449
    %p451 = scmp.ne.s32.totalorder %s437, %s438
    %p452 = scmp.eq.s32.totalorder %s32, 1
    %p453 = por %p451, %p452
    %p455 = scmp.ne.s32.totalorder %s438, %s454
    %p456 = scmp.eq.s32.totalorder %s32, 0
    %p457 = por %p455, %p456
    %s458 = ssub.s32 %s26, %s33
    %p459 = scmp.eq.s32.totalorder %s458, 0
    %s461 = sadd.s32 %s460, 1
    %s462 = scalar_select %p459, %s460, %s461
    %p465 = pneg %p459
    %p466 = scmp.eq.s32.totalorder %s26, 1
    %p467 = por %p465, %p466
    %p468 = scmp.ne.s32.totalorder %s460, %s463
    %p469 = scmp.eq.s32.totalorder %s26, 0
    %p470 = por %p468, %p469
    %p471 = scmp.ne.s32.totalorder %s460, %s463
    %p472 = scmp.eq.s32.totalorder %s31, 1
    %p473 = por %p471, %p472
    %p474 = scmp.ne.s32.totalorder %s463, %s464
    %p475 = scmp.eq.s32.totalorder %s31, 0
    %p476 = por %p474, %p475
    %p477 = scmp.ne.s32.totalorder %s463, %s464
    %p478 = scmp.eq.s32.totalorder %s32, 1
    %p479 = por %p477, %p478
    %p481 = scmp.ne.s32.totalorder %s464, %s480
    %p482 = scmp.eq.s32.totalorder %s32, 0
    %p483 = por %p481, %p482
    %p484 = scmp.le.s32.totalorder 1, %s26
    %p485 = scmp.lt.s32.totalorder %s26, 3
    %p486 = pnand %p484, %p485
    %p487 = pneg %p486
    // Predicated region
    $region9: #{pyramid_features_forward.1} parent=5 // pred_check
      _
    $region10: #{pyramid_features_forward.1} parent=5 // pred_check_branch
      %489 = sbr.rel (%p486) target = $region12
    $region11: #{pyramid_features_forward.1} parent=5 // pred_region
      %s490 = ssub.s32 %s26, 1
      // Predicated region
      $region13: #{pyramid_features_forward.1} parent=11 // pred_check
        %p491 = pneg %p125
      $region14: #{pyramid_features_forward.1} parent=11 // pred_check_branch
        %493 = sbr.rel (%p491) target = $region16
      $region15: #{pyramid_features_forward.1} parent=11 // pred_region
        _
      $region16: #{pyramid_features_forward.1} parent=11 // pred_fallthru
        _
      // Predicated region
      $region17: #{pyramid_features_forward.1} parent=11 // pred_check
        %p494 = pneg %p146
      $region18: #{pyramid_features_forward.1} parent=11 // pred_check_branch
        %496 = sbr.rel (%p494) target = $region20
      $region19: #{pyramid_features_forward.1} parent=11 // pred_region
        _
      $region20: #{pyramid_features_forward.1} parent=11 // pred_fallthru
        _
      // Predicated region
      $region21: #{pyramid_features_forward.1} parent=11 // pred_check
        %p497 = pneg %p167
      $region22: #{pyramid_features_forward.1} parent=11 // pred_check_branch
        %499 = sbr.rel (%p497) target = $region24
      $region23: #{pyramid_features_forward.1} parent=11 // pred_region
        _
      $region24: #{pyramid_features_forward.1} parent=11 // pred_fallthru
        _
      // Predicated region
      $region25: #{pyramid_features_forward.1} parent=11 // pred_check
        %p500 = pneg %p188
      $region26: #{pyramid_features_forward.1} parent=11 // pred_check_branch
        %502 = sbr.rel (%p500) target = $region28
      $region27: #{pyramid_features_forward.1} parent=11 // pred_region
        _
      $region28: #{pyramid_features_forward.1} parent=11 // pred_fallthru
        _
      // Predicated region
      $region29: #{pyramid_features_forward.1} parent=11 // pred_check
        %p503 = pneg %p209
      $region30: #{pyramid_features_forward.1} parent=11 // pred_check_branch
        %505 = sbr.rel (%p503) target = $region32
      $region31: #{pyramid_features_forward.1} parent=11 // pred_region
        _
      $region32: #{pyramid_features_forward.1} parent=11 // pred_fallthru
        _
      // Predicated region
      $region33: #{pyramid_features_forward.1} parent=11 // pred_check
        %p506 = pneg %p230
      $region34: #{pyramid_features_forward.1} parent=11 // pred_check_branch
        %508 = sbr.rel (%p506) target = $region36
      $region35: #{pyramid_features_forward.1} parent=11 // pred_region
        _
      $region36: #{pyramid_features_forward.1} parent=11 // pred_fallthru
        _
      // Predicated region
      $region37: #{pyramid_features_forward.1} parent=11 // pred_check
        %p509 = pneg %p251
      $region38: #{pyramid_features_forward.1} parent=11 // pred_check_branch
        %511 = sbr.rel (%p509) target = $region40
      $region39: #{pyramid_features_forward.1} parent=11 // pred_region
        _
      $region40: #{pyramid_features_forward.1} parent=11 // pred_fallthru
        _
      // Predicated region
      $region41: #{pyramid_features_forward.1} parent=11 // pred_check
        %p512 = pneg %p272
      $region42: #{pyramid_features_forward.1} parent=11 // pred_check_branch
        %514 = sbr.rel (%p512) target = $region44
      $region43: #{pyramid_features_forward.1} parent=11 // pred_region
        _
      $region44: #{pyramid_features_forward.1} parent=11 // pred_fallthru
        _
      // Predicated region
      $region45: #{pyramid_features_forward.1} parent=11 // pred_check
        %p515 = pneg %p293
      $region46: #{pyramid_features_forward.1} parent=11 // pred_check_branch
        %517 = sbr.rel (%p515) target = $region48
      $region47: #{pyramid_features_forward.1} parent=11 // pred_region
        _
      $region48: #{pyramid_features_forward.1} parent=11 // pred_fallthru
        _
      // Predicated region
      $region49: #{pyramid_features_forward.1} parent=11 // pred_check
        %p518 = pneg %p314
      $region50: #{pyramid_features_forward.1} parent=11 // pred_check_branch
        %520 = sbr.rel (%p518) target = $region52
      $region51: #{pyramid_features_forward.1} parent=11 // pred_region
        _
      $region52: #{pyramid_features_forward.1} parent=11 // pred_fallthru
        _
      // Predicated region
      $region53: #{pyramid_features_forward.1} parent=11 // pred_check
        %p521 = pneg %p335
      $region54: #{pyramid_features_forward.1} parent=11 // pred_check_branch
        %523 = sbr.rel (%p521) target = $region56
      $region55: #{pyramid_features_forward.1} parent=11 // pred_region
        _
      $region56: #{pyramid_features_forward.1} parent=11 // pred_fallthru
        _
      // Predicated region
      $region57: #{pyramid_features_forward.1} parent=11 // pred_check
        %p524 = pneg %p356
      $region58: #{pyramid_features_forward.1} parent=11 // pred_check_branch
        %526 = sbr.rel (%p524) target = $region60
      $region59: #{pyramid_features_forward.1} parent=11 // pred_region
        _
      $region60: #{pyramid_features_forward.1} parent=11 // pred_fallthru
        _
      // Predicated region
      $region61: #{pyramid_features_forward.1} parent=11 // pred_check
        %p527 = pneg %p377
      $region62: #{pyramid_features_forward.1} parent=11 // pred_check_branch
        %529 = sbr.rel (%p527) target = $region64
      $region63: #{pyramid_features_forward.1} parent=11 // pred_region
        _
      $region64: #{pyramid_features_forward.1} parent=11 // pred_fallthru
        _
      // Predicated region
      $region65: #{pyramid_features_forward.1} parent=11 // pred_check
        %p530 = pneg %p398
      $region66: #{pyramid_features_forward.1} parent=11 // pred_check_branch
        %532 = sbr.rel (%p530) target = $region68
      $region67: #{pyramid_features_forward.1} parent=11 // pred_region
        _
      $region68: #{pyramid_features_forward.1} parent=11 // pred_fallthru
        _
    $region12: #{pyramid_features_forward.1} parent=5 // pred_fallthru
      _
    %p533 = scmp.lt.s32.totalorder %s26, 2
    // Predicated region
    $region69: #{pyramid_features_forward.1} parent=5 // pred_check
      %p534 = pneg %p533
    $region70: #{pyramid_features_forward.1} parent=5 // pred_check_branch
      %536 = sbr.rel (%p534) target = $region72
    $region71: #{pyramid_features_forward.1} parent=5 // pred_region
      // Predicated region
      $region73: #{pyramid_features_forward.1} parent=71 // pred_check
        %p537 = pneg %p46
      $region74: #{pyramid_features_forward.1} parent=71 // pred_check_branch
        %539 = sbr.rel (%p537) target = $region76
      $region75: #{pyramid_features_forward.1} parent=71 // pred_region
        %p540 = scmp.lt.s32.totalorder %s26, 1
        %s541 = scalar_select %p540, %s26, 1
        %s542 = smul.addr %s541, 2
        %s543 = smul.addr %s542, 8
        %s544 = scalar_lea.vmem %s0, %s543
      $region76: #{pyramid_features_forward.1} parent=71 // pred_fallthru
        _
      // Predicated region
      $region77: #{pyramid_features_forward.1} parent=71 // pred_check
        %p545 = pneg %p72
      $region78: #{pyramid_features_forward.1} parent=71 // pred_check_branch
        %547 = sbr.rel (%p545) target = $region80
      $region79: #{pyramid_features_forward.1} parent=71 // pred_region
        %p548 = scmp.lt.s32.totalorder %s26, 1
        %s549 = scalar_select %p548, %s26, 1
        %s550 = smul.addr %s549, 7
        %s551 = smul.addr %s550, 8
        %s552 = scalar_lea.vmem %s1, %s551
      $region80: #{pyramid_features_forward.1} parent=71 // pred_fallthru
        _
      // Predicated region
      $region81: #{pyramid_features_forward.1} parent=71 // pred_check
        %p553 = pneg %p98
      $region82: #{pyramid_features_forward.1} parent=71 // pred_check_branch
        %555 = sbr.rel (%p553) target = $region84
      $region83: #{pyramid_features_forward.1} parent=71 // pred_region
        %p556 = scmp.lt.s32.totalorder %s26, 1
        %s557 = scalar_select %p556, %s26, 1
        %s558 = smul.addr %s557, 22
        %s559 = smul.addr %s558, 8
        %s560 = scalar_lea.vmem %s2, %s559
      $region84: #{pyramid_features_forward.1} parent=71 // pred_fallthru
        _
    $region72: #{pyramid_features_forward.1} parent=5 // pred_fallthru
      _
    %p561 = scmp.le.s32.totalorder 1, %s26
    %p562 = scmp.lt.s32.totalorder %s26, 3
    %p563 = pnand %p561, %p562
    %p564 = pneg %p563
    // Predicated region
    $region85: #{pyramid_features_forward.1} parent=5 // pred_check
      _
    $region86: #{pyramid_features_forward.1} parent=5 // pred_check_branch
      %566 = sbr.rel (%p563) target = $region88
    $region87: #{pyramid_features_forward.1} parent=5 // pred_region
      %s567 = ssub.s32 %s26, 1
      %p568 = scmp.lt.s32.totalorder %s31, 1
      %s569 = scalar_select %p568, %s31, 1
      %s570 = smul.addr %s569, 2
      %s571 = smul.addr %s570, 8
      %s572 = scalar_lea.vmem %s0, %s571
      %p573 = pneg %p52
      %p574 = pneg %p49
      %p575 = scmp.lt.s32.totalorder %s31, 1
      %s576 = scalar_select %p575, %s31, 1
      %s577 = smul.addr %s576, 7
      %s578 = smul.addr %s577, 8
      %s579 = scalar_lea.vmem %s1, %s578
      %p580 = pneg %p78
      %p581 = pneg %p75
      %p582 = scmp.lt.s32.totalorder %s31, 1
      %s583 = scalar_select %p582, %s31, 1
      %s584 = smul.addr %s583, 22
      %s585 = smul.addr %s584, 8
      %s586 = scalar_lea.vmem %s2, %s585
      %p587 = pneg %p104
      %p588 = pneg %p101
      %p589 = pneg %p125
      %p590 = pneg %p122
      %p591 = pneg %p146
      %p592 = pneg %p143
      %p593 = pneg %p167
      %p594 = pneg %p164
      %p595 = pneg %p188
      %p596 = pneg %p185
      %p597 = pneg %p209
      %p598 = pneg %p206
      %p599 = pneg %p230
      %p600 = pneg %p227
      %p601 = pneg %p251
      %p602 = pneg %p248
      %p603 = pneg %p272
      %p604 = pneg %p269
      %p605 = pneg %p293
      %p606 = pneg %p290
      %p607 = pneg %p314
      %p608 = pneg %p311
      %p609 = pneg %p335
      %p610 = pneg %p332
      %p611 = pneg %p356
      %p612 = pneg %p353
      %p613 = pneg %p377
      %p614 = pneg %p374
      %p615 = pneg %p398
      %p616 = pneg %p395
      %p617 = pneg %p424
      %p618 = pneg %p421
      %p619 = scmp.lt.s32.totalorder %s31, 1
      %s620 = scalar_select %p619, %s31, 1
      %s621 = smul.addr %s620, 4
      %s622 = smul.addr %s621, 8
      %s623 = scalar_lea.vmem %s17, %s622
      %p624 = pneg %p450
      %p625 = pneg %p447
      %p626 = scmp.lt.s32.totalorder %s31, 1
      %s627 = scalar_select %p626, %s31, 1
      %s628 = smul.addr %s627, 14
      %s629 = smul.addr %s628, 8
      %s630 = scalar_lea.vmem %s18, %s629
      %p631 = pneg %p476
      %p632 = pneg %p473
      %p633 = scmp.lt.s32.totalorder %s31, 1
      %s634 = scalar_select %p633, %s31, 1
      %s635 = smul.addr %s634, 26
      %s636 = smul.addr %s635, 8
      %s637 = scalar_lea.vmem %s19, %s636
      %p638 = scmp.lt.s32.totalorder %s31, 1
      %s639 = scalar_select %p638, %s31, 1
      %s640 = smul.addr %s639, 2
      %s641 = smul.addr %s640, 8
      %s642 = scalar_lea.vmem %s0, %s641
      %p643 = scmp.lt.s32.totalorder %s31, 1
      %s644 = scalar_select %p643, %s31, 1
      %s645 = smul.addr %s644, 7
      %s646 = smul.addr %s645, 8
      %s647 = scalar_lea.vmem %s1, %s646
      %p648 = scmp.lt.s32.totalorder %s31, 1
      %s649 = scalar_select %p648, %s31, 1
      %s650 = smul.addr %s649, 22
      %s651 = smul.addr %s650, 8
      %s652 = scalar_lea.vmem %s2, %s651
      %p653 = scmp.lt.s32.totalorder %s31, 1
      %s654 = scalar_select %p653, %s31, 1
      %s655 = smul.addr %s654, 4
      %s656 = smul.addr %s655, 8
      %s657 = scalar_lea.vmem %s17, %s656
      %p658 = scmp.lt.s32.totalorder %s31, 1
      %s659 = scalar_select %p658, %s31, 1
      %s660 = smul.addr %s659, 14
      %s661 = smul.addr %s660, 8
      %s662 = scalar_lea.vmem %s18, %s661
      %p663 = scmp.lt.s32.totalorder %s31, 1
      %s664 = scalar_select %p663, %s31, 1
      %s665 = smul.addr %s664, 26
      %s666 = smul.addr %s665, 8
      %s667 = scalar_lea.vmem %s19, %s666
      %v668 = vld [vmem:[%s642] sm:$0xff]
      %v669 = vld [vmem:[%s642 + $0x8] sm:$0xff]
      %v670 = vld [vmem:[%s3] sm:$0xff]
      %v671 = vld [vmem:[%s3 + $0x8] sm:$0xff]
      %v672 = vld [vmem:[%s3 + $0x10] sm:$0xff]
      %v673 = vld [vmem:[%s3 + $0x18] sm:$0xff]
      %v674 = vld [vmem:[%s4] sm:$0x1]
      %v676 = vperm.slane %v674, 0
      %vm678 = vcmask 261120
      %v680 = vsel %vm678, %v668, 0
      %v683 = vsel %vm678, %v669, 0
      %685 = vmatpush.msra.mxu0 0.0
      %686 = vmatpush.msra.mxu0 0.0
      %687 = vmatpush.msra.mxu0 0.0
      %688 = vmatpush.msra.mxu0 0.0
      %689 = vmatpush.msra.mxu0 0.0
      %690 = vmatpush.msra.mxu0 0.0
      %691 = vmatpush.msra.mxu0 0.0
      %692 = vmatpush.msra.mxu0 0.0
      %693 = vmatpush.msra.mxu0 0.0
      %694 = vmatpush.msra.mxu0 0.0
      %695 = vmatpush.msra.mxu0 0.0
      %696 = vmatpush.msra.mxu0 0.0
      %697 = vmatpush.msra.mxu0 %v673
      %698 = vmatpush.msra.mxu0 %v672
      %699 = vmatpush.msra.mxu0 %v671
      %700 = vmatpush.msra.mxu0 %v670
      %701 = vmatmul.f32.gmra.mxu0 %v680
      %v702 = vpop.f32.mrf.mxu0
      %v703 = vadd.f32 %v676, %v702
      %704 = vmatmul.f32.gmra.mxu0 %v683
      %v705 = vpop.f32.mrf.mxu0
      %v706 = vadd.f32 %v676, %v705
      %707 = vdwg.mxu0
      %vm708 = vcmask 523264
      %709 = vst.msk [vmem:[#allocation2] sm:$0xff] %vm708, 0.0
      %710 = vst.msk [vmem:[#allocation2 + $0x8] sm:$0xff] %vm708, 0.0
      %711 = vst.msk [vmem:[#allocation2 + $0x10] sm:$0xff] %vm708, 0.0
      %712 = vst.msk [vmem:[#allocation2 + $0x18] sm:$0xff] %vm708, 0.0
      %713 = vst.msk [vmem:[#allocation2 + $0x20] sm:$0xff] %vm708, 0.0
      %714 = vst.msk [vmem:[#allocation2 + $0x28] sm:$0xff] %vm708, 0.0
      %715 = vst.msk [vmem:[#allocation2 + $0x30] sm:$0xff] %vm708, 0.0
      %vm716 = vcmask 519168
      %717 = vst.msk [vmem:[#allocation2 + $0x9] sm:$0xf] %vm716, %v703
      %vm718 = vcmask 523268
      %719 = vst.msk [vmem:[#allocation2 + $0xd] sm:$0xf0] %vm718, %v703
      %720 = vst.msk [vmem:[#allocation2 + $0x19] sm:$0xf] %vm716, %v706
      %721 = vst.msk [vmem:[#allocation2 + $0x1d] sm:$0xf0] %vm718, %v706
      %v722 = vld [vmem:[#allocation2] sm:$0xff]
      %v723 = vld [vmem:[#allocation2 + $0x8] sm:$0xff]
      %v724 = vld [vmem:[#allocation2 + $0x10] sm:$0xff]
      %v725 = vld [vmem:[#allocation2 + $0x18] sm:$0xff]
      %726 = vst.msk [vmem:[#allocation5] sm:$0xff] %vm708, %v722
      %727 = vst.msk [vmem:[#allocation5 + $0x28] sm:$0xff] %vm708, %v723
      %728 = vst.msk [vmem:[#allocation5 + $0x50] sm:$0xff] %vm708, %v724
      %729 = vst.msk [vmem:[#allocation5 + $0x78] sm:$0xff] %vm708, %v725
      %v730 = vld [vmem:[#allocation2 + $0x1] sm:$0xff]
      %v731 = vld [vmem:[#allocation2 + $0x9] sm:$0xff]
      %v732 = vld [vmem:[#allocation2 + $0x11] sm:$0xff]
      %v733 = vld [vmem:[#allocation2 + $0x19] sm:$0xff]
      %738 = vrot.lane.b32.xlu0 %v730, 64
      %v739 = vpop.permute.xlu0 %738
      %740 = vrot.lane.b32.xlu0 %v731, 64
      %v741 = vpop.permute.xlu0 %740
      %742 = vrot.lane.b32.xlu0 %v732, 64
      %v743 = vpop.permute.xlu0 %742
      %744 = vrot.lane.b32.xlu0 %v733, 64
      %v745 = vpop.permute.xlu0 %744
      %vm750 = vcmask 1048064
      %751 = vst.msk [vmem:[#allocation5] sm:$0xff] %vm750, %v739
      %752 = vst.msk [vmem:[#allocation5 + $0x28] sm:$0xff] %vm750, %v741
      %753 = vst.msk [vmem:[#allocation5 + $0x50] sm:$0xff] %vm750, %v743
      %754 = vst.msk [vmem:[#allocation5 + $0x78] sm:$0xff] %vm750, %v745
      %v755 = vld [vmem:[#allocation2 + $0x2] sm:$0xff]
      %v756 = vld [vmem:[#allocation2 + $0xa] sm:$0xff]
      %v757 = vld [vmem:[#allocation2 + $0x12] sm:$0xff]
      %v758 = vld [vmem:[#allocation2 + $0x1a] sm:$0xff]
      %759 = vst.msk [vmem:[#allocation5 + $0x8] sm:$0xff] %vm708, %v755
      %760 = vst.msk [vmem:[#allocation5 + $0x30] sm:$0xff] %vm708, %v756
      %761 = vst.msk [vmem:[#allocation5 + $0x58] sm:$0xff] %vm708, %v757
      %762 = vst.msk [vmem:[#allocation5 + $0x80] sm:$0xff] %vm708, %v758
      %v763 = vld [vmem:[#allocation2 + $0x8] sm:$0xff]
      %v764 = vld [vmem:[#allocation2 + $0x10] sm:$0xff]
      %v765 = vld [vmem:[#allocation2 + $0x18] sm:$0xff]
      %v766 = vld [vmem:[#allocation2 + $0x20] sm:$0xff]
      %771 = vrot.lane.b32.xlu0 %v763, 64
      %v772 = vpop.permute.xlu0 %771
      %773 = vrot.lane.b32.xlu0 %v764, 64
      %v774 = vpop.permute.xlu0 %773
      %775 = vrot.lane.b32.xlu0 %v765, 64
      %v776 = vpop.permute.xlu0 %775
      %777 = vrot.lane.b32.xlu0 %v766, 64
      %v778 = vpop.permute.xlu0 %777
      %783 = vst.msk [vmem:[#allocation5 + $0x8] sm:$0xff] %vm750, %v772
      %784 = vst.msk [vmem:[#allocation5 + $0x30] sm:$0xff] %vm750, %v774
      %785 = vst.msk [vmem:[#allocation5 + $0x58] sm:$0xff] %vm750, %v776
      %786 = vst.msk [vmem:[#allocation5 + $0x80] sm:$0xff] %vm750, %v778
      %v787 = vld [vmem:[#allocation2 + $0x9] sm:$0xff]
      %v788 = vld [vmem:[#allocation2 + $0x11] sm:$0xff]
      %v789 = vld [vmem:[#allocation2 + $0x19] sm:$0xff]
      %v790 = vld [vmem:[#allocation2 + $0x21] sm:$0xff]
      %791 = vst.msk [vmem:[#allocation5 + $0x10] sm:$0xff] %vm708, %v787
      %792 = vst.msk [vmem:[#allocation5 + $0x38] sm:$0xff] %vm708, %v788
      %793 = vst.msk [vmem:[#allocation5 + $0x60] sm:$0xff] %vm708, %v789
      %794 = vst.msk [vmem:[#allocation5 + $0x88] sm:$0xff] %vm708, %v790
      %v795 = vld [vmem:[#allocation2 + $0xa] sm:$0xff]
      %v796 = vld [vmem:[#allocation2 + $0x12] sm:$0xff]
      %v797 = vld [vmem:[#allocation2 + $0x1a] sm:$0xff]
      %v798 = vld [vmem:[#allocation2 + $0x22] sm:$0xff]
      %803 = vrot.lane.b32.xlu0 %v795, 64
      %v804 = vpop.permute.xlu0 %803
      %805 = vrot.lane.b32.xlu0 %v796, 64
      %v806 = vpop.permute.xlu0 %805
      %807 = vrot.lane.b32.xlu0 %v797, 64
      %v808 = vpop.permute.xlu0 %807
      %809 = vrot.lane.b32.xlu0 %v798, 64
      %v810 = vpop.permute.xlu0 %809
      %815 = vst.msk [vmem:[#allocation5 + $0x10] sm:$0xff] %vm750, %v804
      %816 = vst.msk [vmem:[#allocation5 + $0x38] sm:$0xff] %vm750, %v806
      %817 = vst.msk [vmem:[#allocation5 + $0x60] sm:$0xff] %vm750, %v808
      %818 = vst.msk [vmem:[#allocation5 + $0x88] sm:$0xff] %vm750, %v810
      %v819 = vld [vmem:[#allocation2 + $0x10] sm:$0xff]
      %v820 = vld [vmem:[#allocation2 + $0x18] sm:$0xff]
      %v821 = vld [vmem:[#allocation2 + $0x20] sm:$0xff]
      %v822 = vld [vmem:[#allocation2 + $0x28] sm:$0xff]
      %823 = vst.msk [vmem:[#allocation5 + $0x18] sm:$0xff] %vm708, %v819
      %824 = vst.msk [vmem:[#allocation5 + $0x40] sm:$0xff] %vm708, %v820
      %825 = vst.msk [vmem:[#allocation5 + $0x68] sm:$0xff] %vm708, %v821
      %826 = vst.msk [vmem:[#allocation5 + $0x90] sm:$0xff] %vm708, %v822
      %v827 = vld [vmem:[#allocation2 + $0x11] sm:$0xff]
      %v828 = vld [vmem:[#allocation2 + $0x19] sm:$0xff]
      %v829 = vld [vmem:[#allocation2 + $0x21] sm:$0xff]
      %v830 = vld [vmem:[#allocation2 + $0x29] sm:$0xff]
      %835 = vrot.lane.b32.xlu0 %v827, 64
      %v836 = vpop.permute.xlu0 %835
      %837 = vrot.lane.b32.xlu0 %v828, 64
      %v838 = vpop.permute.xlu0 %837
      %839 = vrot.lane.b32.xlu0 %v829, 64
      %v840 = vpop.permute.xlu0 %839
      %841 = vrot.lane.b32.xlu0 %v830, 64
      %v842 = vpop.permute.xlu0 %841
      %847 = vst.msk [vmem:[#allocation5 + $0x18] sm:$0xff] %vm750, %v836
      %848 = vst.msk [vmem:[#allocation5 + $0x40] sm:$0xff] %vm750, %v838
      %849 = vst.msk [vmem:[#allocation5 + $0x68] sm:$0xff] %vm750, %v840
      %850 = vst.msk [vmem:[#allocation5 + $0x90] sm:$0xff] %vm750, %v842
      %v851 = vld [vmem:[#allocation2 + $0x12] sm:$0xff]
      %v852 = vld [vmem:[#allocation2 + $0x1a] sm:$0xff]
      %v853 = vld [vmem:[#allocation2 + $0x22] sm:$0xff]
      %v854 = vld [vmem:[#allocation2 + $0x2a] sm:$0xff]
      %855 = vst.msk [vmem:[#allocation5 + $0x20] sm:$0xff] %vm708, %v851
      %856 = vst.msk [vmem:[#allocation5 + $0x48] sm:$0xff] %vm708, %v852
      %857 = vst.msk [vmem:[#allocation5 + $0x70] sm:$0xff] %vm708, %v853
      %858 = vst.msk [vmem:[#allocation5 + $0x98] sm:$0xff] %vm708, %v854
      %v859 = vld [vmem:[#allocation5] sm:$0xff]
      %v860 = vld [vmem:[#allocation5 + $0x8] sm:$0xff]
      %v861 = vld [vmem:[#allocation5 + $0x10] sm:$0xff]
      %v862 = vld [vmem:[#allocation5 + $0x18] sm:$0xff]
      %v863 = vld [vmem:[#allocation5 + $0x20] sm:$0xff]
      %v864 = vld [vmem:[#allocation5 + $0x28] sm:$0xff]
      %v865 = vld [vmem:[#allocation5 + $0x30] sm:$0xff]
      %v866 = vld [vmem:[#allocation5 + $0x38] sm:$0xff]
      %v867 = vld [vmem:[#allocation5 + $0x40] sm:$0xff]
      %v868 = vld [vmem:[#allocation5 + $0x48] sm:$0xff]
      %v869 = vld [vmem:[#allocation5 + $0x50] sm:$0xff]
      %v870 = vld [vmem:[#allocation5 + $0x58] sm:$0xff]
      %v871 = vld [vmem:[#allocation5 + $0x60] sm:$0xff]
      %v872 = vld [vmem:[#allocation5 + $0x68] sm:$0xff]
      %v873 = vld [vmem:[#allocation5 + $0x70] sm:$0xff]
      %v874 = vld [vmem:[#allocation5 + $0x78] sm:$0xff]
      %v875 = vld [vmem:[#allocation5 + $0x80] sm:$0xff]
      %v876 = vld [vmem:[#allocation5 + $0x88] sm:$0xff]
      %v877 = vld [vmem:[#allocation5 + $0x90] sm:$0xff]
      %v878 = vld [vmem:[#allocation5 + $0x98] sm:$0xff]
      %v879 = vld [vmem:[%s5] sm:$0xff]
      %v880 = vld [vmem:[%s5 + $0x8] sm:$0xff]
      %v881 = vld [vmem:[%s5 + $0x10] sm:$0xff]
      %v882 = vld [vmem:[%s5 + $0x18] sm:$0xff]
      %v883 = vld [vmem:[%s5 + $0x20] sm:$0xff]
      %v884 = vld [vmem:[%s5 + $0x28] sm:$0xff]
      %v885 = vld [vmem:[%s5 + $0x30] sm:$0xff]
      %v886 = vld [vmem:[%s5 + $0x38] sm:$0xff]
      %v887 = vld [vmem:[%s5 + $0x40] sm:$0xff]
      %v888 = vld [vmem:[%s5 + $0x48] sm:$0xff]
      %v889 = vld [vmem:[%s5 + $0x50] sm:$0xff]
      %v890 = vld [vmem:[%s5 + $0x58] sm:$0xff]
      %v891 = vld [vmem:[%s5 + $0x60] sm:$0xff]
      %v892 = vld [vmem:[%s5 + $0x68] sm:$0xff]
      %v893 = vld [vmem:[%s5 + $0x70] sm:$0xff]
      %v894 = vld [vmem:[%s5 + $0x78] sm:$0xff]
      %v895 = vld [vmem:[%s5 + $0x80] sm:$0xff]
      %v896 = vld [vmem:[%s5 + $0x88] sm:$0xff]
      %v897 = vld [vmem:[%s5 + $0x90] sm:$0xff]
      %v898 = vld [vmem:[%s5 + $0x98] sm:$0xff]
      %v899 = vld [vmem:[%s5 + $0xa0] sm:$0xff]
      %v900 = vld [vmem:[%s5 + $0xa8] sm:$0xff]
      %v901 = vld [vmem:[%s5 + $0xb0] sm:$0xff]
      %v902 = vld [vmem:[%s5 + $0xb8] sm:$0xff]
      %v903 = vld [vmem:[%s5 + $0xc0] sm:$0xff]
      %v904 = vld [vmem:[%s5 + $0xc8] sm:$0xff]
      %v905 = vld [vmem:[%s5 + $0xd0] sm:$0xff]
      %v906 = vld [vmem:[%s5 + $0xd8] sm:$0xff]
      %v907 = vld [vmem:[%s5 + $0xe0] sm:$0xff]
      %v908 = vld [vmem:[%s5 + $0xe8] sm:$0xff]
      %v909 = vld [vmem:[%s5 + $0xf0] sm:$0xff]
      %v910 = vld [vmem:[%s5 + $0xf8] sm:$0xff]
      %v911 = vld [vmem:[%s5 + $0x100] sm:$0xff]
      %v912 = vld [vmem:[%s5 + $0x108] sm:$0xff]
      %v913 = vld [vmem:[%s5 + $0x110] sm:$0xff]
      %v914 = vld [vmem:[%s5 + $0x118] sm:$0xff]
      %v915 = vld [vmem:[%s5 + $0x120] sm:$0xff]
      %v916 = vld [vmem:[%s5 + $0x128] sm:$0xff]
      %v917 = vld [vmem:[%s5 + $0x130] sm:$0xff]
      %v918 = vld [vmem:[%s5 + $0x138] sm:$0xff]
      %v919 = vld [vmem:[%s5 + $0x140] sm:$0xff]
      %v920 = vld [vmem:[%s5 + $0x148] sm:$0xff]
      %v921 = vld [vmem:[%s5 + $0x150] sm:$0xff]
      %v922 = vld [vmem:[%s5 + $0x158] sm:$0xff]
      %v923 = vld [vmem:[%s5 + $0x160] sm:$0xff]
      %v924 = vld [vmem:[%s5 + $0x168] sm:$0xff]
      %v925 = vld [vmem:[%s5 + $0x170] sm:$0xff]
      %v926 = vld [vmem:[%s5 + $0x178] sm:$0xff]
      %v927 = vld [vmem:[%s5 + $0x180] sm:$0xff]
      %v928 = vld [vmem:[%s5 + $0x188] sm:$0xff]
      %v929 = vld [vmem:[%s5 + $0x190] sm:$0xff]
      %v930 = vld [vmem:[%s5 + $0x198] sm:$0xff]
      %v931 = vld [vmem:[%s5 + $0x1a0] sm:$0xff]
      %v932 = vld [vmem:[%s5 + $0x1a8] sm:$0xff]
      %v933 = vld [vmem:[%s5 + $0x1b0] sm:$0xff]
      %v934 = vld [vmem:[%s5 + $0x1b8] sm:$0xff]
      %v935 = vld [vmem:[%s5 + $0x1c0] sm:$0xff]
      %v936 = vld [vmem:[%s5 + $0x1c8] sm:$0xff]
      %v937 = vld [vmem:[%s5 + $0x1d0] sm:$0xff]
      %v938 = vld [vmem:[%s5 + $0x1d8] sm:$0xff]
      %v939 = vld [vmem:[%s5 + $0x1e0] sm:$0xff]
      %v940 = vld [vmem:[%s5 + $0x1e8] sm:$0xff]
      %v941 = vld [vmem:[%s5 + $0x1f0] sm:$0xff]
      %v942 = vld [vmem:[%s5 + $0x1f8] sm:$0xff]
      %v943 = vld [vmem:[%s5 + $0x200] sm:$0xff]
      %v944 = vld [vmem:[%s5 + $0x208] sm:$0xff]
      %v945 = vld [vmem:[%s5 + $0x210] sm:$0xff]
      %v946 = vld [vmem:[%s5 + $0x218] sm:$0xff]
      %v947 = vld [vmem:[%s5 + $0x220] sm:$0xff]
      %v948 = vld [vmem:[%s5 + $0x228] sm:$0xff]
      %v949 = vld [vmem:[%s5 + $0x230] sm:$0xff]
      %v950 = vld [vmem:[%s5 + $0x238] sm:$0xff]
      %v951 = vld [vmem:[%s5 + $0x240] sm:$0xff]
      %v952 = vld [vmem:[%s5 + $0x248] sm:$0xff]
      %v953 = vld [vmem:[%s5 + $0x250] sm:$0xff]
      %v954 = vld [vmem:[%s5 + $0x258] sm:$0xff]
      %v955 = vld [vmem:[%s5 + $0x260] sm:$0xff]
      %v956 = vld [vmem:[%s5 + $0x268] sm:$0xff]
      %v957 = vld [vmem:[%s5 + $0x270] sm:$0xff]
      %v958 = vld [vmem:[%s5 + $0x278] sm:$0xff]
      %v959 = vld [vmem:[%s5 + $0x280] sm:$0xff]
      %v960 = vld [vmem:[%s5 + $0x288] sm:$0xff]
      %v961 = vld [vmem:[%s5 + $0x290] sm:$0xff]
      %v962 = vld [vmem:[%s5 + $0x298] sm:$0xff]
      %v963 = vld [vmem:[%s5 + $0x2a0] sm:$0xff]
      %v964 = vld [vmem:[%s5 + $0x2a8] sm:$0xff]
      %v965 = vld [vmem:[%s5 + $0x2b0] sm:$0xff]
      %v966 = vld [vmem:[%s5 + $0x2b8] sm:$0xff]
      %v967 = vld [vmem:[%s5 + $0x2c0] sm:$0xff]
      %v968 = vld [vmem:[%s5 + $0x2c8] sm:$0xff]
      %v969 = vld [vmem:[%s5 + $0x2d0] sm:$0xff]
      %v970 = vld [vmem:[%s5 + $0x2d8] sm:$0xff]
      %v971 = vld [vmem:[%s5 + $0x2e0] sm:$0xff]
      %v972 = vld [vmem:[%s5 + $0x2e8] sm:$0xff]
      %v973 = vld [vmem:[%s5 + $0x2f0] sm:$0xff]
      %v974 = vld [vmem:[%s5 + $0x2f8] sm:$0xff]
      %v975 = vld [vmem:[%s5 + $0x300] sm:$0xff]
      %v976 = vld [vmem:[%s5 + $0x308] sm:$0xff]
      %v977 = vld [vmem:[%s5 + $0x310] sm:$0xff]
      %v978 = vld [vmem:[%s5 + $0x318] sm:$0xff]
      %v979 = vld [vmem:[%s5 + $0x320] sm:$0xff]
      %v980 = vld [vmem:[%s5 + $0x328] sm:$0xff]
      %v981 = vld [vmem:[%s5 + $0x330] sm:$0xff]
      %v982 = vld [vmem:[%s5 + $0x338] sm:$0xff]
      %v983 = vld [vmem:[%s5 + $0x340] sm:$0xff]
      %v984 = vld [vmem:[%s5 + $0x348] sm:$0xff]
      %v985 = vld [vmem:[%s5 + $0x350] sm:$0xff]
      %v986 = vld [vmem:[%s5 + $0x358] sm:$0xff]
      %v987 = vld [vmem:[%s5 + $0x360] sm:$0xff]
      %v988 = vld [vmem:[%s5 + $0x368] sm:$0xff]
      %v989 = vld [vmem:[%s5 + $0x370] sm:$0xff]
      %v990 = vld [vmem:[%s5 + $0x378] sm:$0xff]
      %v991 = vld [vmem:[%s5 + $0x380] sm:$0xff]
      %v992 = vld [vmem:[%s5 + $0x388] sm:$0xff]
      %v993 = vld [vmem:[%s5 + $0x390] sm:$0xff]
      %v994 = vld [vmem:[%s5 + $0x398] sm:$0xff]
      %v995 = vld [vmem:[%s5 + $0x3a0] sm:$0xff]
      %v996 = vld [vmem:[%s5 + $0x3a8] sm:$0xff]
      %v997 = vld [vmem:[%s5 + $0x3b0] sm:$0xff]
      %v998 = vld [vmem:[%s5 + $0x3b8] sm:$0xff]
      %v999 = vld [vmem:[%s5 + $0x3c0] sm:$0xff]
      %v1000 = vld [vmem:[%s5 + $0x3c8] sm:$0xff]
      %v1001 = vld [vmem:[%s5 + $0x3d0] sm:$0xff]
      %v1002 = vld [vmem:[%s5 + $0x3d8] sm:$0xff]
      %v1003 = vld [vmem:[%s5 + $0x3e0] sm:$0xff]
      %v1004 = vld [vmem:[%s5 + $0x3e8] sm:$0xff]
      %v1005 = vld [vmem:[%s5 + $0x3f0] sm:$0xff]
      %v1006 = vld [vmem:[%s5 + $0x3f8] sm:$0xff]
      %v1007 = vld [vmem:[%s5 + $0x400] sm:$0xff]
      %v1008 = vld [vmem:[%s5 + $0x408] sm:$0xff]
      %v1009 = vld [vmem:[%s5 + $0x410] sm:$0xff]
      %v1010 = vld [vmem:[%s5 + $0x418] sm:$0xff]
      %v1011 = vld [vmem:[%s5 + $0x420] sm:$0xff]
      %v1012 = vld [vmem:[%s5 + $0x428] sm:$0xff]
      %v1013 = vld [vmem:[%s5 + $0x430] sm:$0xff]
      %v1014 = vld [vmem:[%s5 + $0x438] sm:$0xff]
      %v1015 = vld [vmem:[%s5 + $0x440] sm:$0xff]
      %v1016 = vld [vmem:[%s5 + $0x448] sm:$0xff]
      %v1017 = vld [vmem:[%s5 + $0x450] sm:$0xff]
      %v1018 = vld [vmem:[%s5 + $0x458] sm:$0xff]
      %v1019 = vld [vmem:[%s5 + $0x460] sm:$0xff]
      %v1020 = vld [vmem:[%s5 + $0x468] sm:$0xff]
      %v1021 = vld [vmem:[%s5 + $0x470] sm:$0xff]
      %v1022 = vld [vmem:[%s5 + $0x478] sm:$0xff]
      %v1023 = vld [vmem:[%s5 + $0x480] sm:$0xff]
      %v1024 = vld [vmem:[%s5 + $0x488] sm:$0xff]
      %v1025 = vld [vmem:[%s5 + $0x490] sm:$0xff]
      %v1026 = vld [vmem:[%s5 + $0x498] sm:$0xff]
      %v1027 = vld [vmem:[%s5 + $0x4a0] sm:$0xff]
      %v1028 = vld [vmem:[%s5 + $0x4a8] sm:$0xff]
      %v1029 = vld [vmem:[%s5 + $0x4b0] sm:$0xff]
      %v1030 = vld [vmem:[%s5 + $0x4b8] sm:$0xff]
      %v1031 = vld [vmem:[%s5 + $0x4c0] sm:$0xff]
      %v1032 = vld [vmem:[%s5 + $0x4c8] sm:$0xff]
      %v1033 = vld [vmem:[%s5 + $0x4d0] sm:$0xff]
      %v1034 = vld [vmem:[%s5 + $0x4d8] sm:$0xff]
      %v1035 = vld [vmem:[%s5 + $0x4e0] sm:$0xff]
      %v1036 = vld [vmem:[%s5 + $0x4e8] sm:$0xff]
      %v1037 = vld [vmem:[%s5 + $0x4f0] sm:$0xff]
      %v1038 = vld [vmem:[%s5 + $0x4f8] sm:$0xff]
      %v1039 = vld [vmem:[%s5 + $0x500] sm:$0xff]
      %v1040 = vld [vmem:[%s5 + $0x508] sm:$0xff]
      %v1041 = vld [vmem:[%s5 + $0x510] sm:$0xff]
      %v1042 = vld [vmem:[%s5 + $0x518] sm:$0xff]
      %v1043 = vld [vmem:[%s5 + $0x520] sm:$0xff]
      %v1044 = vld [vmem:[%s5 + $0x528] sm:$0xff]
      %v1045 = vld [vmem:[%s5 + $0x530] sm:$0xff]
      %v1046 = vld [vmem:[%s5 + $0x538] sm:$0xff]
      %v1047 = vld [vmem:[%s5 + $0x540] sm:$0xff]
      %v1048 = vld [vmem:[%s5 + $0x548] sm:$0xff]
      %v1049 = vld [vmem:[%s5 + $0x550] sm:$0xff]
      %v1050 = vld [vmem:[%s5 + $0x558] sm:$0xff]
      %v1051 = vld [vmem:[%s5 + $0x560] sm:$0xff]
      %v1052 = vld [vmem:[%s5 + $0x568] sm:$0xff]
      %v1053 = vld [vmem:[%s5 + $0x570] sm:$0xff]
      %v1054 = vld [vmem:[%s5 + $0x578] sm:$0xff]
      %v1055 = vld [vmem:[%s5 + $0x580] sm:$0xff]
      %v1056 = vld [vmem:[%s5 + $0x588] sm:$0xff]
      %v1057 = vld [vmem:[%s5 + $0x590] sm:$0xff]
      %v1058 = vld [vmem:[%s5 + $0x598] sm:$0xff]
      %v1059 = vld [vmem:[%s5 + $0x5a0] sm:$0xff]
      %v1060 = vld [vmem:[%s5 + $0x5a8] sm:$0xff]
      %v1061 = vld [vmem:[%s5 + $0x5b0] sm:$0xff]
      %v1062 = vld [vmem:[%s5 + $0x5b8] sm:$0xff]
      %v1063 = vld [vmem:[%s5 + $0x5c0] sm:$0xff]
      %v1064 = vld [vmem:[%s5 + $0x5c8] sm:$0xff]
      %v1065 = vld [vmem:[%s5 + $0x5d0] sm:$0xff]
      %v1066 = vld [vmem:[%s5 + $0x5d8] sm:$0xff]
      %v1067 = vld [vmem:[%s5 + $0x5e0] sm:$0xff]
      %v1068 = vld [vmem:[%s5 + $0x5e8] sm:$0xff]
      %v1069 = vld [vmem:[%s5 + $0x5f0] sm:$0xff]
      %v1070 = vld [vmem:[%s5 + $0x5f8] sm:$0xff]
      %v1071 = vld [vmem:[%s5 + $0x600] sm:$0xff]
      %v1072 = vld [vmem:[%s5 + $0x608] sm:$0xff]
      %v1073 = vld [vmem:[%s5 + $0x610] sm:$0xff]
      %v1074 = vld [vmem:[%s5 + $0x618] sm:$0xff]
      %v1075 = vld [vmem:[%s5 + $0x620] sm:$0xff]
      %v1076 = vld [vmem:[%s5 + $0x628] sm:$0xff]
      %v1077 = vld [vmem:[%s5 + $0x630] sm:$0xff]
      %v1078 = vld [vmem:[%s5 + $0x638] sm:$0xff]
      %v1079 = vld [vmem:[%s5 + $0x640] sm:$0xff]
      %v1080 = vld [vmem:[%s5 + $0x648] sm:$0xff]
      %v1081 = vld [vmem:[%s5 + $0x650] sm:$0xff]
      %v1082 = vld [vmem:[%s5 + $0x658] sm:$0xff]
      %v1083 = vld [vmem:[%s5 + $0x660] sm:$0xff]
      %v1084 = vld [vmem:[%s5 + $0x668] sm:$0xff]
      %v1085 = vld [vmem:[%s5 + $0x670] sm:$0xff]
      %v1086 = vld [vmem:[%s5 + $0x678] sm:$0xff]
      %v1087 = vld [vmem:[%s5 + $0x680] sm:$0xff]
      %v1088 = vld [vmem:[%s5 + $0x688] sm:$0xff]
      %v1089 = vld [vmem:[%s5 + $0x690] sm:$0xff]
      %v1090 = vld [vmem:[%s5 + $0x698] sm:$0xff]
      %v1091 = vld [vmem:[%s5 + $0x6a0] sm:$0xff]
      %v1092 = vld [vmem:[%s5 + $0x6a8] sm:$0xff]
      %v1093 = vld [vmem:[%s5 + $0x6b0] sm:$0xff]
      %v1094 = vld [vmem:[%s5 + $0x6b8] sm:$0xff]
      %v1095 = vld [vmem:[%s6] sm:$0x7]
      %v1097 = vperm.slane %v1095, 0
      %v1098 = vperm.slane %v1095, 1
      %v1099 = vperm.slane %v1095, 2
      %v1104 = vsel %vm708, %v863, 0
      %v1107 = vsel %vm708, %v868, 0
      %v1110 = vsel %vm708, %v873, 0
      %v1113 = vsel %vm708, %v878, 0
      %1115 = vmatpush.msra.mxu0 %v924
      %1116 = vmatpush.msra.mxu0 %v921
      %1117 = vmatpush.msra.mxu0 %v918
      %1118 = vmatpush.msra.mxu0 %v915
      %1119 = vmatpush.msra.mxu0 %v912
      %1120 = vmatpush.msra.mxu0 %v909
      %1121 = vmatpush.msra.mxu0 %v906
      %1122 = vmatpush.msra.mxu0 %v903
      %1123 = vmatpush.msra.mxu0 %v900
      %1124 = vmatpush.msra.mxu0 %v897
      %1125 = vmatpush.msra.mxu0 %v894
      %1126 = vmatpush.msra.mxu0 %v891
      %1127 = vmatpush.msra.mxu0 %v888
      %1128 = vmatpush.msra.mxu0 %v885
      %1129 = vmatpush.msra.mxu0 %v882
      %1130 = vmatpush.msra.mxu0 %v879
      %1131 = vmatmul.f32.gmra.mxu0 %v859
      %v1132 = vpop.f32.mrf.mxu0
      %v1133 = vadd.f32 %v1097, %v1132
      %1134 = vmatmul.f32.gmra.mxu0 %v864
      %v1135 = vpop.f32.mrf.mxu0
      %v1136 = vadd.f32 %v1097, %v1135
      %1137 = vmatmul.f32.gmra.mxu0 %v869
      %v1138 = vpop.f32.mrf.mxu0
      %v1139 = vadd.f32 %v1097, %v1138
      %1140 = vmatmul.f32.gmra.mxu0 %v874
      %v1141 = vpop.f32.mrf.mxu0
      %v1142 = vadd.f32 %v1097, %v1141
      %1143 = vdwg.mxu0
      %1144 = vmatpush.msra.mxu0 %v972
      %1145 = vmatpush.msra.mxu0 %v969
      %1146 = vmatpush.msra.mxu0 %v966
      %1147 = vmatpush.msra.mxu0 %v963
      %1148 = vmatpush.msra.mxu0 %v960
      %1149 = vmatpush.msra.mxu0 %v957
      %1150 = vmatpush.msra.mxu0 %v954
      %1151 = vmatpush.msra.mxu0 %v951
      %1152 = vmatpush.msra.mxu0 %v948
      %1153 = vmatpush.msra.mxu0 %v945
      %1154 = vmatpush.msra.mxu0 %v942
      %1155 = vmatpush.msra.mxu0 %v939
      %1156 = vmatpush.msra.mxu0 %v936
      %1157 = vmatpush.msra.mxu0 %v933
      %1158 = vmatpush.msra.mxu0 %v930
      %1159 = vmatpush.msra.mxu0 %v927
      %1160 = vmatmul.f32.gmra.mxu0 %v860
      %v1161 = vpop.f32.mrf.mxu0
      %v1162 = vadd.f32 %v1133, %v1161
      %1163 = vmatmul.f32.gmra.mxu0 %v865
      %v1164 = vpop.f32.mrf.mxu0
      %v1165 = vadd.f32 %v1136, %v1164
      %1166 = vmatmul.f32.gmra.mxu0 %v870
      %v1167 = vpop.f32.mrf.mxu0
      %v1168 = vadd.f32 %v1139, %v1167
      %1169 = vmatmul.f32.gmra.mxu0 %v875
      %v1170 = vpop.f32.mrf.mxu0
      %v1171 = vadd.f32 %v1142, %v1170
      %1172 = vdwg.mxu0
      %1173 = vmatpush.msra.mxu0 %v1020
      %1174 = vmatpush.msra.mxu0 %v1017
      %1175 = vmatpush.msra.mxu0 %v1014
      %1176 = vmatpush.msra.mxu0 %v1011
      %1177 = vmatpush.msra.mxu0 %v1008
      %1178 = vmatpush.msra.mxu0 %v1005
      %1179 = vmatpush.msra.mxu0 %v1002
      %1180 = vmatpush.msra.mxu0 %v999
      %1181 = vmatpush.msra.mxu0 %v996
      %1182 = vmatpush.msra.mxu0 %v993
      %1183 = vmatpush.msra.mxu0 %v990
      %1184 = vmatpush.msra.mxu0 %v987
      %1185 = vmatpush.msra.mxu0 %v984
      %1186 = vmatpush.msra.mxu0 %v981
      %1187 = vmatpush.msra.mxu0 %v978
      %1188 = vmatpush.msra.mxu0 %v975
      %1189 = vmatmul.f32.gmra.mxu0 %v861
      %v1190 = vpop.f32.mrf.mxu0
      %v1191 = vadd.f32 %v1162, %v1190
      %1192 = vmatmul.f32.gmra.mxu0 %v866
      %v1193 = vpop.f32.mrf.mxu0
      %v1194 = vadd.f32 %v1165, %v1193
      %1195 = vmatmul.f32.gmra.mxu0 %v871
      %v1196 = vpop.f32.mrf.mxu0
      %v1197 = vadd.f32 %v1168, %v1196
      %1198 = vmatmul.f32.gmra.mxu0 %v876
      %v1199 = vpop.f32.mrf.mxu0
      %v1200 = vadd.f32 %v1171, %v1199
      %1201 = vdwg.mxu0
      %1202 = vmatpush.msra.mxu0 %v1068
      %1203 = vmatpush.msra.mxu0 %v1065
      %1204 = vmatpush.msra.mxu0 %v1062
      %1205 = vmatpush.msra.mxu0 %v1059
      %1206 = vmatpush.msra.mxu0 %v1056
      %1207 = vmatpush.msra.mxu0 %v1053
      %1208 = vmatpush.msra.mxu0 %v1050
      %1209 = vmatpush.msra.mxu0 %v1047
      %1210 = vmatpush.msra.mxu0 %v1044
      %1211 = vmatpush.msra.mxu0 %v1041
      %1212 = vmatpush.msra.mxu0 %v1038
      %1213 = vmatpush.msra.mxu0 %v1035
      %1214 = vmatpush.msra.mxu0 %v1032
      %1215 = vmatpush.msra.mxu0 %v1029
      %1216 = vmatpush.msra.mxu0 %v1026
      %1217 = vmatpush.msra.mxu0 %v1023
      %1218 = vmatmul.f32.gmra.mxu0 %v862
      %v1219 = vpop.f32.mrf.mxu0
      %v1220 = vadd.f32 %v1191, %v1219
      %1221 = vmatmul.f32.gmra.mxu0 %v867
      %v1222 = vpop.f32.mrf.mxu0
      %v1223 = vadd.f32 %v1194, %v1222
      %1224 = vmatmul.f32.gmra.mxu0 %v872
      %v1225 = vpop.f32.mrf.mxu0
      %v1226 = vadd.f32 %v1197, %v1225
      %1227 = vmatmul.f32.gmra.mxu0 %v877
      %v1228 = vpop.f32.mrf.mxu0
      %v1229 = vadd.f32 %v1200, %v1228
      %1230 = vdwg.mxu0
      %1231 = vmatpush.msra.mxu0 0.0
      %1232 = vmatpush.msra.mxu0 0.0
      %1233 = vmatpush.msra.mxu0 0.0
      %1234 = vmatpush.msra.mxu0 0.0
      %1235 = vmatpush.msra.mxu0 0.0
      %1236 = vmatpush.msra.mxu0 0.0
      %1237 = vmatpush.msra.mxu0 0.0
      %1238 = vmatpush.msra.mxu0 0.0
      %1239 = vmatpush.msra.mxu0 %v1092
      %1240 = vmatpush.msra.mxu0 %v1089
      %1241 = vmatpush.msra.mxu0 %v1086
      %1242 = vmatpush.msra.mxu0 %v1083
      %1243 = vmatpush.msra.mxu0 %v1080
      %1244 = vmatpush.msra.mxu0 %v1077
      %1245 = vmatpush.msra.mxu0 %v1074
      %1246 = vmatpush.msra.mxu0 %v1071
      %1247 = vmatmul.f32.gmra.mxu0 %v1104
      %v1248 = vpop.f32.mrf.mxu0
      %v1249 = vadd.f32 %v1220, %v1248
      %1250 = vmatmul.f32.gmra.mxu0 %v1107
      %v1251 = vpop.f32.mrf.mxu0
      %v1252 = vadd.f32 %v1223, %v1251
      %1253 = vmatmul.f32.gmra.mxu0 %v1110
      %v1254 = vpop.f32.mrf.mxu0
      %v1255 = vadd.f32 %v1226, %v1254
      %1256 = vmatmul.f32.gmra.mxu0 %v1113
      %v1257 = vpop.f32.mrf.mxu0
      %v1258 = vadd.f32 %v1229, %v1257
      %1259 = vdwg.mxu0
      %1260 = vmatpush.msra.mxu0 %v925
      %1261 = vmatpush.msra.mxu0 %v922
      %1262 = vmatpush.msra.mxu0 %v919
      %1263 = vmatpush.msra.mxu0 %v916
      %1264 = vmatpush.msra.mxu0 %v913
      %1265 = vmatpush.msra.mxu0 %v910
      %1266 = vmatpush.msra.mxu0 %v907
      %1267 = vmatpush.msra.mxu0 %v904
      %1268 = vmatpush.msra.mxu0 %v901
      %1269 = vmatpush.msra.mxu0 %v898
      %1270 = vmatpush.msra.mxu0 %v895
      %1271 = vmatpush.msra.mxu0 %v892
      %1272 = vmatpush.msra.mxu0 %v889
      %1273 = vmatpush.msra.mxu0 %v886
      %1274 = vmatpush.msra.mxu0 %v883
      %1275 = vmatpush.msra.mxu0 %v880
      %1276 = vmatmul.f32.gmra.mxu0 %v859
      %v1277 = vpop.f32.mrf.mxu0
      %v1278 = vadd.f32 %v1098, %v1277
      %1279 = vmatmul.f32.gmra.mxu0 %v864
      %v1280 = vpop.f32.mrf.mxu0
      %v1281 = vadd.f32 %v1098, %v1280
      %1282 = vmatmul.f32.gmra.mxu0 %v869
      %v1283 = vpop.f32.mrf.mxu0
      %v1284 = vadd.f32 %v1098, %v1283
      %1285 = vmatmul.f32.gmra.mxu0 %v874
      %v1286 = vpop.f32.mrf.mxu0
      %v1287 = vadd.f32 %v1098, %v1286
      %1288 = vdwg.mxu0
      %1289 = vmatpush.msra.mxu0 %v973
      %1290 = vmatpush.msra.mxu0 %v970
      %1291 = vmatpush.msra.mxu0 %v967
      %1292 = vmatpush.msra.mxu0 %v964
      %1293 = vmatpush.msra.mxu0 %v961
      %1294 = vmatpush.msra.mxu0 %v958
      %1295 = vmatpush.msra.mxu0 %v955
      %1296 = vmatpush.msra.mxu0 %v952
      %1297 = vmatpush.msra.mxu0 %v949
      %1298 = vmatpush.msra.mxu0 %v946
      %1299 = vmatpush.msra.mxu0 %v943
      %1300 = vmatpush.msra.mxu0 %v940
      %1301 = vmatpush.msra.mxu0 %v937
      %1302 = vmatpush.msra.mxu0 %v934
      %1303 = vmatpush.msra.mxu0 %v931
      %1304 = vmatpush.msra.mxu0 %v928
      %1305 = vmatmul.f32.gmra.mxu0 %v860
      %v1306 = vpop.f32.mrf.mxu0
      %v1307 = vadd.f32 %v1278, %v1306
      %1308 = vmatmul.f32.gmra.mxu0 %v865
      %v1309 = vpop.f32.mrf.mxu0
      %v1310 = vadd.f32 %v1281, %v1309
      %1311 = vmatmul.f32.gmra.mxu0 %v870
      %v1312 = vpop.f32.mrf.mxu0
      %v1313 = vadd.f32 %v1284, %v1312
      %1314 = vmatmul.f32.gmra.mxu0 %v875
      %v1315 = vpop.f32.mrf.mxu0
      %v1316 = vadd.f32 %v1287, %v1315
      %1317 = vdwg.mxu0
      %1318 = vmatpush.msra.mxu0 %v1021
      %1319 = vmatpush.msra.mxu0 %v1018
      %1320 = vmatpush.msra.mxu0 %v1015
      %1321 = vmatpush.msra.mxu0 %v1012
      %1322 = vmatpush.msra.mxu0 %v1009
      %1323 = vmatpush.msra.mxu0 %v1006
      %1324 = vmatpush.msra.mxu0 %v1003
      %1325 = vmatpush.msra.mxu0 %v1000
      %1326 = vmatpush.msra.mxu0 %v997
      %1327 = vmatpush.msra.mxu0 %v994
      %1328 = vmatpush.msra.mxu0 %v991
      %1329 = vmatpush.msra.mxu0 %v988
      %1330 = vmatpush.msra.mxu0 %v985
      %1331 = vmatpush.msra.mxu0 %v982
      %1332 = vmatpush.msra.mxu0 %v979
      %1333 = vmatpush.msra.mxu0 %v976
      %1334 = vmatmul.f32.gmra.mxu0 %v861
      %v1335 = vpop.f32.mrf.mxu0
      %v1336 = vadd.f32 %v1307, %v1335
      %1337 = vmatmul.f32.gmra.mxu0 %v866
      %v1338 = vpop.f32.mrf.mxu0
      %v1339 = vadd.f32 %v1310, %v1338
      %1340 = vmatmul.f32.gmra.mxu0 %v871
      %v1341 = vpop.f32.mrf.mxu0
      %v1342 = vadd.f32 %v1313, %v1341
      %1343 = vmatmul.f32.gmra.mxu0 %v876
      %v1344 = vpop.f32.mrf.mxu0
      %v1345 = vadd.f32 %v1316, %v1344
      %1346 = vdwg.mxu0
      %1347 = vmatpush.msra.mxu0 %v1069
      %1348 = vmatpush.msra.mxu0 %v1066
      %1349 = vmatpush.msra.mxu0 %v1063
      %1350 = vmatpush.msra.mxu0 %v1060
      %1351 = vmatpush.msra.mxu0 %v1057
      %1352 = vmatpush.msra.mxu0 %v1054
      %1353 = vmatpush.msra.mxu0 %v1051
      %1354 = vmatpush.msra.mxu0 %v1048
      %1355 = vmatpush.msra.mxu0 %v1045
      %1356 = vmatpush.msra.mxu0 %v1042
      %1357 = vmatpush.msra.mxu0 %v1039
      %1358 = vmatpush.msra.mxu0 %v1036
      %1359 = vmatpush.msra.mxu0 %v1033
      %1360 = vmatpush.msra.mxu0 %v1030
      %1361 = vmatpush.msra.mxu0 %v1027
      %1362 = vmatpush.msra.mxu0 %v1024
      %1363 = vmatmul.f32.gmra.mxu0 %v862
      %v1364 = vpop.f32.mrf.mxu0
      %v1365 = vadd.f32 %v1336, %v1364
      %1366 = vmatmul.f32.gmra.mxu0 %v867
      %v1367 = vpop.f32.mrf.mxu0
      %v1368 = vadd.f32 %v1339, %v1367
      %1369 = vmatmul.f32.gmra.mxu0 %v872
      %v1370 = vpop.f32.mrf.mxu0
      %v1371 = vadd.f32 %v1342, %v1370
      %1372 = vmatmul.f32.gmra.mxu0 %v877
      %v1373 = vpop.f32.mrf.mxu0
      %v1374 = vadd.f32 %v1345, %v1373
      %1375 = vdwg.mxu0
      %1376 = vmatpush.msra.mxu0 0.0
      %1377 = vmatpush.msra.mxu0 0.0
      %1378 = vmatpush.msra.mxu0 0.0
      %1379 = vmatpush.msra.mxu0 0.0
      %1380 = vmatpush.msra.mxu0 0.0
      %1381 = vmatpush.msra.mxu0 0.0
      %1382 = vmatpush.msra.mxu0 0.0
      %1383 = vmatpush.msra.mxu0 0.0
      %1384 = vmatpush.msra.mxu0 %v1093
      %1385 = vmatpush.msra.mxu0 %v1090
      %1386 = vmatpush.msra.mxu0 %v1087
      %1387 = vmatpush.msra.mxu0 %v1084
      %1388 = vmatpush.msra.mxu0 %v1081
      %1389 = vmatpush.msra.mxu0 %v1078
      %1390 = vmatpush.msra.mxu0 %v1075
      %1391 = vmatpush.msra.mxu0 %v1072
      %1392 = vmatmul.f32.gmra.mxu0 %v1104
      %v1393 = vpop.f32.mrf.mxu0
      %v1394 = vadd.f32 %v1365, %v1393
      %1395 = vmatmul.f32.gmra.mxu0 %v1107
      %v1396 = vpop.f32.mrf.mxu0
      %v1397 = vadd.f32 %v1368, %v1396
      %1398 = vmatmul.f32.gmra.mxu0 %v1110
      %v1399 = vpop.f32.mrf.mxu0
      %v1400 = vadd.f32 %v1371, %v1399
      %1401 = vmatmul.f32.gmra.mxu0 %v1113
      %v1402 = vpop.f32.mrf.mxu0
      %v1403 = vadd.f32 %v1374, %v1402
      %1404 = vdwg.mxu0
      %1405 = vmatpush.msra.mxu0 %v926
      %1406 = vmatpush.msra.mxu0 %v923
      %1407 = vmatpush.msra.mxu0 %v920
      %1408 = vmatpush.msra.mxu0 %v917
      %1409 = vmatpush.msra.mxu0 %v914
      %1410 = vmatpush.msra.mxu0 %v911
      %1411 = vmatpush.msra.mxu0 %v908
      %1412 = vmatpush.msra.mxu0 %v905
      %1413 = vmatpush.msra.mxu0 %v902
      %1414 = vmatpush.msra.mxu0 %v899
      %1415 = vmatpush.msra.mxu0 %v896
      %1416 = vmatpush.msra.mxu0 %v893
      %1417 = vmatpush.msra.mxu0 %v890
      %1418 = vmatpush.msra.mxu0 %v887
      %1419 = vmatpush.msra.mxu0 %v884
      %1420 = vmatpush.msra.mxu0 %v881
      %1421 = vmatmul.f32.gmra.mxu0 %v859
      %v1422 = vpop.f32.mrf.mxu0
      %v1423 = vadd.f32 %v1099, %v1422
      %1424 = vmatmul.f32.gmra.mxu0 %v864
      %v1425 = vpop.f32.mrf.mxu0
      %v1426 = vadd.f32 %v1099, %v1425
      %1427 = vmatmul.f32.gmra.mxu0 %v869
      %v1428 = vpop.f32.mrf.mxu0
      %v1429 = vadd.f32 %v1099, %v1428
      %1430 = vmatmul.f32.gmra.mxu0 %v874
      %v1431 = vpop.f32.mrf.mxu0
      %v1432 = vadd.f32 %v1099, %v1431
      %1433 = vdwg.mxu0
      %1434 = vmatpush.msra.mxu0 %v974
      %1435 = vmatpush.msra.mxu0 %v971
      %1436 = vmatpush.msra.mxu0 %v968
      %1437 = vmatpush.msra.mxu0 %v965
      %1438 = vmatpush.msra.mxu0 %v962
      %1439 = vmatpush.msra.mxu0 %v959
      %1440 = vmatpush.msra.mxu0 %v956
      %1441 = vmatpush.msra.mxu0 %v953
      %1442 = vmatpush.msra.mxu0 %v950
      %1443 = vmatpush.msra.mxu0 %v947
      %1444 = vmatpush.msra.mxu0 %v944
      %1445 = vmatpush.msra.mxu0 %v941
      %1446 = vmatpush.msra.mxu0 %v938
      %1447 = vmatpush.msra.mxu0 %v935
      %1448 = vmatpush.msra.mxu0 %v932
      %1449 = vmatpush.msra.mxu0 %v929
      %1450 = vmatmul.f32.gmra.mxu0 %v860
      %v1451 = vpop.f32.mrf.mxu0
      %v1452 = vadd.f32 %v1423, %v1451
      %1453 = vmatmul.f32.gmra.mxu0 %v865
      %v1454 = vpop.f32.mrf.mxu0
      %v1455 = vadd.f32 %v1426, %v1454
      %1456 = vmatmul.f32.gmra.mxu0 %v870
      %v1457 = vpop.f32.mrf.mxu0
      %v1458 = vadd.f32 %v1429, %v1457
      %1459 = vmatmul.f32.gmra.mxu0 %v875
      %v1460 = vpop.f32.mrf.mxu0
      %v1461 = vadd.f32 %v1432, %v1460
      %1462 = vdwg.mxu0
      %1463 = vmatpush.msra.mxu0 %v1022
      %1464 = vmatpush.msra.mxu0 %v1019
      %1465 = vmatpush.msra.mxu0 %v1016
      %1466 = vmatpush.msra.mxu0 %v1013
      %1467 = vmatpush.msra.mxu0 %v1010
      %1468 = vmatpush.msra.mxu0 %v1007
      %1469 = vmatpush.msra.mxu0 %v1004
      %1470 = vmatpush.msra.mxu0 %v1001
      %1471 = vmatpush.msra.mxu0 %v998
      %1472 = vmatpush.msra.mxu0 %v995
      %1473 = vmatpush.msra.mxu0 %v992
      %1474 = vmatpush.msra.mxu0 %v989
      %1475 = vmatpush.msra.mxu0 %v986
      %1476 = vmatpush.msra.mxu0 %v983
      %1477 = vmatpush.msra.mxu0 %v980
      %1478 = vmatpush.msra.mxu0 %v977
      %1479 = vmatmul.f32.gmra.mxu0 %v861
      %v1480 = vpop.f32.mrf.mxu0
      %v1481 = vadd.f32 %v1452, %v1480
      %1482 = vmatmul.f32.gmra.mxu0 %v866
      %v1483 = vpop.f32.mrf.mxu0
      %v1484 = vadd.f32 %v1455, %v1483
      %1485 = vmatmul.f32.gmra.mxu0 %v871
      %v1486 = vpop.f32.mrf.mxu0
      %v1487 = vadd.f32 %v1458, %v1486
      %1488 = vmatmul.f32.gmra.mxu0 %v876
      %v1489 = vpop.f32.mrf.mxu0
      %v1490 = vadd.f32 %v1461, %v1489
      %1491 = vdwg.mxu0
      %1492 = vmatpush.msra.mxu0 %v1070
      %1493 = vmatpush.msra.mxu0 %v1067
      %1494 = vmatpush.msra.mxu0 %v1064
      %1495 = vmatpush.msra.mxu0 %v1061
      %1496 = vmatpush.msra.mxu0 %v1058
      %1497 = vmatpush.msra.mxu0 %v1055
      %1498 = vmatpush.msra.mxu0 %v1052
      %1499 = vmatpush.msra.mxu0 %v1049
      %1500 = vmatpush.msra.mxu0 %v1046
      %1501 = vmatpush.msra.mxu0 %v1043
      %1502 = vmatpush.msra.mxu0 %v1040
      %1503 = vmatpush.msra.mxu0 %v1037
      %1504 = vmatpush.msra.mxu0 %v1034
      %1505 = vmatpush.msra.mxu0 %v1031
      %1506 = vmatpush.msra.mxu0 %v1028
      %1507 = vmatpush.msra.mxu0 %v1025
      %1508 = vmatmul.f32.gmra.mxu0 %v862
      %v1509 = vpop.f32.mrf.mxu0
      %v1510 = vadd.f32 %v1481, %v1509
      %1511 = vmatmul.f32.gmra.mxu0 %v867
      %v1512 = vpop.f32.mrf.mxu0
      %v1513 = vadd.f32 %v1484, %v1512
      %1514 = vmatmul.f32.gmra.mxu0 %v872
      %v1515 = vpop.f32.mrf.mxu0
      %v1516 = vadd.f32 %v1487, %v1515
      %1517 = vmatmul.f32.gmra.mxu0 %v877
      %v1518 = vpop.f32.mrf.mxu0
      %v1519 = vadd.f32 %v1490, %v1518
      %1520 = vdwg.mxu0
      %1521 = vmatpush.msra.mxu0 0.0
      %1522 = vmatpush.msra.mxu0 0.0
      %1523 = vmatpush.msra.mxu0 0.0
      %1524 = vmatpush.msra.mxu0 0.0
      %1525 = vmatpush.msra.mxu0 0.0
      %1526 = vmatpush.msra.mxu0 0.0
      %1527 = vmatpush.msra.mxu0 0.0
      %1528 = vmatpush.msra.mxu0 0.0
      %1529 = vmatpush.msra.mxu0 %v1094
      %1530 = vmatpush.msra.mxu0 %v1091
      %1531 = vmatpush.msra.mxu0 %v1088
      %1532 = vmatpush.msra.mxu0 %v1085
      %1533 = vmatpush.msra.mxu0 %v1082
      %1534 = vmatpush.msra.mxu0 %v1079
      %1535 = vmatpush.msra.mxu0 %v1076
      %1536 = vmatpush.msra.mxu0 %v1073
      %1537 = vmatmul.f32.gmra.mxu0 %v1104
      %v1538 = vpop.f32.mrf.mxu0
      %v1539 = vadd.f32 %v1510, %v1538
      %1540 = vmatmul.f32.gmra.mxu0 %v1107
      %v1541 = vpop.f32.mrf.mxu0
      %v1542 = vadd.f32 %v1513, %v1541
      %1543 = vmatmul.f32.gmra.mxu0 %v1110
      %v1544 = vpop.f32.mrf.mxu0
      %v1545 = vadd.f32 %v1516, %v1544
      %1546 = vmatmul.f32.gmra.mxu0 %v1113
      %v1547 = vpop.f32.mrf.mxu0
      %v1548 = vadd.f32 %v1519, %v1547
      %1549 = vdwg.mxu0
      %1550 = vst [vmem:[#allocation6] sm:$0xff] %v1249
      %1551 = vst [vmem:[#allocation6 + $0x8] sm:$0xff] %v1394
      %1552 = vst.msk [vmem:[#allocation6 + $0x10] sm:$0xff] %vm708, %v1539
      %1553 = vst [vmem:[#allocation6 + $0x18] sm:$0xff] %v1252
      %1554 = vst [vmem:[#allocation6 + $0x20] sm:$0xff] %v1397
      %1555 = vst.msk [vmem:[#allocation6 + $0x28] sm:$0xff] %vm708, %v1542
      %1556 = vst [vmem:[#allocation6 + $0x30] sm:$0xff] %v1255
      %1557 = vst [vmem:[#allocation6 + $0x38] sm:$0xff] %v1400
      %1558 = vst.msk [vmem:[#allocation6 + $0x40] sm:$0xff] %vm708, %v1545
      %1559 = vst [vmem:[#allocation6 + $0x48] sm:$0xff] %v1258
      %1560 = vst [vmem:[#allocation6 + $0x50] sm:$0xff] %v1403
      %1561 = vst.msk [vmem:[#allocation6 + $0x58] sm:$0xff] %vm708, %v1548
      %v1562 = vld [vmem:[#allocation6] sm:$0xff]
      %v1563 = vld [vmem:[#allocation6 + $0x18] sm:$0xff]
      %v1564 = vld [vmem:[#allocation6 + $0x30] sm:$0xff]
      %v1565 = vld [vmem:[#allocation6 + $0x48] sm:$0xff]
      %1566 = vst [vmem:[%s657] sm:$0xff] %v1562
      %1567 = vst [vmem:[%s657 + $0x8] sm:$0xff] %v1563
      %1568 = vst [vmem:[%s657 + $0x10] sm:$0xff] %v1564
      %1569 = vst [vmem:[%s657 + $0x18] sm:$0xff] %v1565
      %v1570 = vld [vmem:[%s15] sm:$0xff]
      %v1571 = vld [vmem:[%s15 + $0x8] sm:$0xff]
      %v1572 = vld [vmem:[%s15 + $0x10] sm:$0xff]
      %v1573 = vld [vmem:[%s15 + $0x18] sm:$0xff]
      %v1574 = vld [vmem:[%s15 + $0x20] sm:$0xff]
      %v1575 = vld [vmem:[%s15 + $0x28] sm:$0xff]
      %v1576 = vld [vmem:[%s15 + $0x30] sm:$0x1]
      %v1577 = vld [vmem:[#allocation6] sm:$0xff]
      %v1578 = vld [vmem:[#allocation6 + $0x18] sm:$0xff]
      %v1579 = vld [vmem:[#allocation6 + $0x30] sm:$0xff]
      %v1580 = vld [vmem:[#allocation6 + $0x48] sm:$0xff]
      %s1581 = scalar_lea.vmem %s15, 56
      %v1582 = vld [vmem:[%s1581] sm:$0xff]
      %v1583 = vld [vmem:[%s1581 + $0x8] sm:$0xff]
      %v1584 = vld [vmem:[%s1581 + $0x10] sm:$0xff]
      %v1585 = vld [vmem:[%s1581 + $0x18] sm:$0xff]
      %v1586 = vld [vmem:[%s1581 + $0x20] sm:$0xff]
      %v1587 = vld [vmem:[%s1581 + $0x28] sm:$0xff]
      %v1588 = vld [vmem:[%s1581 + $0x30] sm:$0x1]
      %v1589 = vld [vmem:[#allocation6 + $0x8] sm:$0xff]
      %v1590 = vld [vmem:[#allocation6 + $0x20] sm:$0xff]
      %v1591 = vld [vmem:[#allocation6 + $0x38] sm:$0xff]
      %v1592 = vld [vmem:[#allocation6 + $0x50] sm:$0xff]
      %v1594 = vsel %vm678, %v1582, 0
      %v1597 = vsel %vm678, %v1583, 0
      %v1600 = vsel %vm678, %v1584, 0
      %v1603 = vsel %vm678, %v1585, 0
      %v1606 = vsel %vm678, %v1586, 0
      %v1609 = vsel %vm678, %v1587, 0
      %v1612 = vsel %vm678, %v1588, 0
      %1614 = vmatpush.msra.mxu0 0.0
      %1615 = vmatpush.msra.mxu0 0.0
      %1616 = vmatpush.msra.mxu0 0.0
      %1617 = vmatpush.msra.mxu0 0.0
      %1618 = vmatpush.msra.mxu0 0.0
      %1619 = vmatpush.msra.mxu0 0.0
      %1620 = vmatpush.msra.mxu0 0.0
      %1621 = vmatpush.msra.mxu0 0.0
      %1622 = vmatpush.msra.mxu0 0.0
      %1623 = vmatpush.msra.mxu0 0.0
      %1624 = vmatpush.msra.mxu0 0.0
      %1625 = vmatpush.msra.mxu0 0.0
      %1626 = vmatpush.msra.mxu0 %v1592
      %1627 = vmatpush.msra.mxu0 %v1591
      %1628 = vmatpush.msra.mxu0 %v1590
      %1629 = vmatpush.msra.mxu0 %v1589
      %1630 = vmatmul.f32.gmra.mxu0 %v1594
      %v1631 = vpop.f32.mrf.mxu0
      %v1632 = vadd.f32 0.0, %v1631
      %1633 = vmatmul.f32.gmra.mxu0 %v1597
      %v1634 = vpop.f32.mrf.mxu0
      %v1635 = vadd.f32 0.0, %v1634
      %1636 = vmatmul.f32.gmra.mxu0 %v1600
      %v1637 = vpop.f32.mrf.mxu0
      %v1638 = vadd.f32 0.0, %v1637
      %1639 = vmatmul.f32.gmra.mxu0 %v1603
      %v1640 = vpop.f32.mrf.mxu0
      %v1641 = vadd.f32 0.0, %v1640
      %1642 = vmatmul.f32.gmra.mxu0 %v1606
      %v1643 = vpop.f32.mrf.mxu0
      %v1644 = vadd.f32 0.0, %v1643
      %1645 = vmatmul.f32.gmra.mxu0 %v1609
      %v1646 = vpop.f32.mrf.mxu0
      %v1647 = vadd.f32 0.0, %v1646
      %1648 = vmatmul.f32.gmra.mxu0 %v1612
      %v1649 = vpop.f32.mrf.mxu0
      %v1650 = vadd.f32 0.0, %v1649
      %1651 = vdwg.mxu0
      %1656 = vrot.lane.b32.xlu0 %v1577, 64
      %v1657 = vpop.permute.xlu0 %1656
      %1658 = vrot.lane.b32.xlu0 %v1578, 64
      %v1659 = vpop.permute.xlu0 %1658
      %1660 = vrot.lane.b32.xlu0 %v1579, 64
      %v1661 = vpop.permute.xlu0 %1660
      %1662 = vrot.lane.b32.xlu0 %v1580, 64
      %v1663 = vpop.permute.xlu0 %1662
      %v1669 = vsel %vm678, %v1570, 0
      %v1672 = vsel %vm678, %v1571, 0
      %v1675 = vsel %vm678, %v1572, 0
      %v1678 = vsel %vm678, %v1573, 0
      %v1681 = vsel %vm678, %v1574, 0
      %v1684 = vsel %vm678, %v1575, 0
      %v1687 = vsel %vm678, %v1576, 0
      %1689 = vmatpush.msra.mxu0 0.0
      %1690 = vmatpush.msra.mxu0 0.0
      %1691 = vmatpush.msra.mxu0 0.0
      %1692 = vmatpush.msra.mxu0 0.0
      %1693 = vmatpush.msra.mxu0 0.0
      %1694 = vmatpush.msra.mxu0 0.0
      %1695 = vmatpush.msra.mxu0 0.0
      %1696 = vmatpush.msra.mxu0 0.0
      %1697 = vmatpush.msra.mxu0 0.0
      %1698 = vmatpush.msra.mxu0 0.0
      %1699 = vmatpush.msra.mxu0 0.0
      %1700 = vmatpush.msra.mxu0 0.0
      %1701 = vmatpush.msra.mxu0 %v1663
      %1702 = vmatpush.msra.mxu0 %v1661
      %1703 = vmatpush.msra.mxu0 %v1659
      %1704 = vmatpush.msra.mxu0 %v1657
      %1705 = vmatmul.f32.gmra.mxu0 %v1669
      %v1706 = vpop.f32.mrf.mxu0
      %v1707 = vadd.f32 %v1632, %v1706
      %1708 = vmatmul.f32.gmra.mxu0 %v1672
      %v1709 = vpop.f32.mrf.mxu0
      %v1710 = vadd.f32 %v1635, %v1709
      %1711 = vmatmul.f32.gmra.mxu0 %v1675
      %v1712 = vpop.f32.mrf.mxu0
      %v1713 = vadd.f32 %v1638, %v1712
      %1714 = vmatmul.f32.gmra.mxu0 %v1678
      %v1715 = vpop.f32.mrf.mxu0
      %v1716 = vadd.f32 %v1641, %v1715
      %1717 = vmatmul.f32.gmra.mxu0 %v1681
      %v1718 = vpop.f32.mrf.mxu0
      %v1719 = vadd.f32 %v1644, %v1718
      %1720 = vmatmul.f32.gmra.mxu0 %v1684
      %v1721 = vpop.f32.mrf.mxu0
      %v1722 = vadd.f32 %v1647, %v1721
      %1723 = vmatmul.f32.gmra.mxu0 %v1687
      %v1724 = vpop.f32.mrf.mxu0
      %v1725 = vadd.f32 %v1650, %v1724
      %1726 = vdwg.mxu0
      %s1727 = scalar_lea.vmem %s15, 112
      %v1728 = vld [vmem:[%s1727] sm:$0xff]
      %v1729 = vld [vmem:[%s1727 + $0x8] sm:$0xff]
      %v1730 = vld [vmem:[%s1727 + $0x10] sm:$0xff]
      %v1731 = vld [vmem:[%s1727 + $0x18] sm:$0xff]
      %v1732 = vld [vmem:[%s1727 + $0x20] sm:$0xff]
      %v1733 = vld [vmem:[%s1727 + $0x28] sm:$0xff]
      %v1734 = vld [vmem:[%s1727 + $0x30] sm:$0x1]
      %1739 = vrot.lane.b32.xlu0 %v1589, 64
      %v1740 = vpop.permute.xlu0 %1739
      %1741 = vrot.lane.b32.xlu0 %v1590, 64
      %v1742 = vpop.permute.xlu0 %1741
      %1743 = vrot.lane.b32.xlu0 %v1591, 64
      %v1744 = vpop.permute.xlu0 %1743
      %1745 = vrot.lane.b32.xlu0 %v1592, 64
      %v1746 = vpop.permute.xlu0 %1745
      %v1752 = vsel %vm678, %v1728, 0
      %v1755 = vsel %vm678, %v1729, 0
      %v1758 = vsel %vm678, %v1730, 0
      %v1761 = vsel %vm678, %v1731, 0
      %v1764 = vsel %vm678, %v1732, 0
      %v1767 = vsel %vm678, %v1733, 0
      %v1770 = vsel %vm678, %v1734, 0
      %1772 = vmatpush.msra.mxu0 0.0
      %1773 = vmatpush.msra.mxu0 0.0
      %1774 = vmatpush.msra.mxu0 0.0
      %1775 = vmatpush.msra.mxu0 0.0
      %1776 = vmatpush.msra.mxu0 0.0
      %1777 = vmatpush.msra.mxu0 0.0
      %1778 = vmatpush.msra.mxu0 0.0
      %1779 = vmatpush.msra.mxu0 0.0
      %1780 = vmatpush.msra.mxu0 0.0
      %1781 = vmatpush.msra.mxu0 0.0
      %1782 = vmatpush.msra.mxu0 0.0
      %1783 = vmatpush.msra.mxu0 0.0
      %1784 = vmatpush.msra.mxu0 %v1746
      %1785 = vmatpush.msra.mxu0 %v1744
      %1786 = vmatpush.msra.mxu0 %v1742
      %1787 = vmatpush.msra.mxu0 %v1740
      %1788 = vmatmul.f32.gmra.mxu0 %v1752
      %v1789 = vpop.f32.mrf.mxu0
      %v1790 = vadd.f32 0.0, %v1789
      %1791 = vmatmul.f32.gmra.mxu0 %v1755
      %v1792 = vpop.f32.mrf.mxu0
      %v1793 = vadd.f32 0.0, %v1792
      %1794 = vmatmul.f32.gmra.mxu0 %v1758
      %v1795 = vpop.f32.mrf.mxu0
      %v1796 = vadd.f32 0.0, %v1795
      %1797 = vmatmul.f32.gmra.mxu0 %v1761
      %v1798 = vpop.f32.mrf.mxu0
      %v1799 = vadd.f32 0.0, %v1798
      %1800 = vmatmul.f32.gmra.mxu0 %v1764
      %v1801 = vpop.f32.mrf.mxu0
      %v1802 = vadd.f32 0.0, %v1801
      %1803 = vmatmul.f32.gmra.mxu0 %v1767
      %v1804 = vpop.f32.mrf.mxu0
      %v1805 = vadd.f32 0.0, %v1804
      %1806 = vmatmul.f32.gmra.mxu0 %v1770
      %v1807 = vpop.f32.mrf.mxu0
      %v1808 = vadd.f32 0.0, %v1807
      %1809 = vdwg.mxu0
      %v1810 = vadd.f32 %v1707, %v1790
      %v1811 = vadd.f32 %v1710, %v1793
      %v1812 = vadd.f32 %v1713, %v1796
      %v1813 = vadd.f32 %v1716, %v1799
      %v1814 = vadd.f32 %v1719, %v1802
      %v1815 = vadd.f32 %v1722, %v1805
      %v1816 = vadd.f32 %v1725, %v1808
      %s1817 = scalar_lea.vmem %s15, 168
      %v1818 = vld [vmem:[%s1817] sm:$0xff]
      %v1819 = vld [vmem:[%s1817 + $0x8] sm:$0xff]
      %v1820 = vld [vmem:[%s1817 + $0x10] sm:$0xff]
      %v1821 = vld [vmem:[%s1817 + $0x18] sm:$0xff]
      %v1822 = vld [vmem:[%s1817 + $0x20] sm:$0xff]
      %v1823 = vld [vmem:[%s1817 + $0x28] sm:$0xff]
      %v1824 = vld [vmem:[%s1817 + $0x30] sm:$0x1]
      %v1825 = vld [vmem:[#allocation6 + $0x10] sm:$0xff]
      %v1826 = vld [vmem:[#allocation6 + $0x28] sm:$0xff]
      %v1827 = vld [vmem:[#allocation6 + $0x40] sm:$0xff]
      %v1828 = vld [vmem:[#allocation6 + $0x58] sm:$0xff]
      %v1830 = vsel %vm678, %v1818, 0
      %v1833 = vsel %vm678, %v1819, 0
      %v1836 = vsel %vm678, %v1820, 0
      %v1839 = vsel %vm678, %v1821, 0
      %v1842 = vsel %vm678, %v1822, 0
      %v1845 = vsel %vm678, %v1823, 0
      %v1848 = vsel %vm678, %v1824, 0
      %1850 = vmatpush.msra.mxu0 0.0
      %1851 = vmatpush.msra.mxu0 0.0
      %1852 = vmatpush.msra.mxu0 0.0
      %1853 = vmatpush.msra.mxu0 0.0
      %1854 = vmatpush.msra.mxu0 0.0
      %1855 = vmatpush.msra.mxu0 0.0
      %1856 = vmatpush.msra.mxu0 0.0
      %1857 = vmatpush.msra.mxu0 0.0
      %1858 = vmatpush.msra.mxu0 0.0
      %1859 = vmatpush.msra.mxu0 0.0
      %1860 = vmatpush.msra.mxu0 0.0
      %1861 = vmatpush.msra.mxu0 0.0
      %1862 = vmatpush.msra.mxu0 %v1828
      %1863 = vmatpush.msra.mxu0 %v1827
      %1864 = vmatpush.msra.mxu0 %v1826
      %1865 = vmatpush.msra.mxu0 %v1825
      %1866 = vmatmul.f32.gmra.mxu0 %v1830
      %v1867 = vpop.f32.mrf.mxu0
      %v1868 = vadd.f32 0.0, %v1867
      %1869 = vmatmul.f32.gmra.mxu0 %v1833
      %v1870 = vpop.f32.mrf.mxu0
      %v1871 = vadd.f32 0.0, %v1870
      %1872 = vmatmul.f32.gmra.mxu0 %v1836
      %v1873 = vpop.f32.mrf.mxu0
      %v1874 = vadd.f32 0.0, %v1873
      %1875 = vmatmul.f32.gmra.mxu0 %v1839
      %v1876 = vpop.f32.mrf.mxu0
      %v1877 = vadd.f32 0.0, %v1876
      %1878 = vmatmul.f32.gmra.mxu0 %v1842
      %v1879 = vpop.f32.mrf.mxu0
      %v1880 = vadd.f32 0.0, %v1879
      %1881 = vmatmul.f32.gmra.mxu0 %v1845
      %v1882 = vpop.f32.mrf.mxu0
      %v1883 = vadd.f32 0.0, %v1882
      %1884 = vmatmul.f32.gmra.mxu0 %v1848
      %v1885 = vpop.f32.mrf.mxu0
      %v1886 = vadd.f32 0.0, %v1885
      %1887 = vdwg.mxu0
      %v1888 = vadd.f32 %v1810, %v1868
      %v1889 = vadd.f32 %v1811, %v1871
      %v1890 = vadd.f32 %v1812, %v1874
      %v1891 = vadd.f32 %v1813, %v1877
      %v1892 = vadd.f32 %v1814, %v1880
      %v1893 = vadd.f32 %v1815, %v1883
      %v1894 = vadd.f32 %v1816, %v1886
      %v1895 = vld [vmem:[%s647] sm:$0xff]
      %v1896 = vld [vmem:[%s647 + $0x8] sm:$0xff]
      %v1897 = vld [vmem:[%s647 + $0x10] sm:$0xff]
      %v1898 = vld [vmem:[%s647 + $0x18] sm:$0xff]
      %v1899 = vld [vmem:[%s647 + $0x20] sm:$0xff]
      %v1900 = vld [vmem:[%s647 + $0x28] sm:$0xff]
      %v1901 = vld [vmem:[%s647 + $0x30] sm:$0x1]
      %v1902 = vld [vmem:[%s7] sm:$0xff]
      %v1903 = vld [vmem:[%s7 + $0x8] sm:$0xff]
      %v1904 = vld [vmem:[%s7 + $0x10] sm:$0xff]
      %v1905 = vld [vmem:[%s8] sm:$0x1]
      %v1907 = vperm.slane %v1905, 0
      %vm1909 = vcmask 195584
      %v1911 = vsel %vm1909, %v1895, 0
      %v1914 = vsel %vm1909, %v1896, 0
      %v1917 = vsel %vm1909, %v1897, 0
      %v1920 = vsel %vm1909, %v1898, 0
      %v1923 = vsel %vm1909, %v1899, 0
      %v1926 = vsel %vm1909, %v1900, 0
      %v1929 = vsel %vm1909, %v1901, 0
      %1931 = vmatpush.msra.mxu0 0.0
      %1932 = vmatpush.msra.mxu0 0.0
      %1933 = vmatpush.msra.mxu0 0.0
      %1934 = vmatpush.msra.mxu0 0.0
      %1935 = vmatpush.msra.mxu0 0.0
      %1936 = vmatpush.msra.mxu0 0.0
      %1937 = vmatpush.msra.mxu0 0.0
      %1938 = vmatpush.msra.mxu0 0.0
      %1939 = vmatpush.msra.mxu0 0.0
      %1940 = vmatpush.msra.mxu0 0.0
      %1941 = vmatpush.msra.mxu0 0.0
      %1942 = vmatpush.msra.mxu0 0.0
      %1943 = vmatpush.msra.mxu0 0.0
      %1944 = vmatpush.msra.mxu0 %v1904
      %1945 = vmatpush.msra.mxu0 %v1903
      %1946 = vmatpush.msra.mxu0 %v1902
      %1947 = vmatmul.f32.gmra.mxu0 %v1911
      %v1948 = vpop.f32.mrf.mxu0
      %v1949 = vadd.f32 %v1907, %v1948
      %1950 = vmatmul.f32.gmra.mxu0 %v1914
      %v1951 = vpop.f32.mrf.mxu0
      %v1952 = vadd.f32 %v1907, %v1951
      %1953 = vmatmul.f32.gmra.mxu0 %v1917
      %v1954 = vpop.f32.mrf.mxu0
      %v1955 = vadd.f32 %v1907, %v1954
      %1956 = vmatmul.f32.gmra.mxu0 %v1920
      %v1957 = vpop.f32.mrf.mxu0
      %v1958 = vadd.f32 %v1907, %v1957
      %1959 = vmatmul.f32.gmra.mxu0 %v1923
      %v1960 = vpop.f32.mrf.mxu0
      %v1961 = vadd.f32 %v1907, %v1960
      %1962 = vmatmul.f32.gmra.mxu0 %v1926
      %v1963 = vpop.f32.mrf.mxu0
      %v1964 = vadd.f32 %v1907, %v1963
      %1965 = vmatmul.f32.gmra.mxu0 %v1929
      %v1966 = vpop.f32.mrf.mxu0
      %v1967 = vadd.f32 %v1907, %v1966
      %1968 = vdwg.mxu0
      %v1969 = vadd.f32 %v1949, %v1888
      %v1970 = vadd.f32 %v1952, %v1889
      %v1971 = vadd.f32 %v1955, %v1890
      %v1972 = vadd.f32 %v1958, %v1891
      %v1973 = vadd.f32 %v1961, %v1892
      %v1974 = vadd.f32 %v1964, %v1893
      %v1975 = vadd.f32 %v1967, %v1894
      %1976 = vst.msk [vmem:[#allocation3] sm:$0xff] %vm708, 0.0
      %1977 = vst.msk [vmem:[#allocation3 + $0x8] sm:$0xff] %vm708, 0.0
      %1978 = vst.msk [vmem:[#allocation3 + $0x10] sm:$0xff] %vm708, 0.0
      %1979 = vst.msk [vmem:[#allocation3 + $0x18] sm:$0xff] %vm708, 0.0
      %1980 = vst.msk [vmem:[#allocation3 + $0x20] sm:$0xff] %vm708, 0.0
      %1981 = vst.msk [vmem:[#allocation3 + $0x28] sm:$0xff] %vm708, 0.0
      %1982 = vst.msk [vmem:[#allocation3 + $0x30] sm:$0xff] %vm708, 0.0
      %1983 = vst.msk [vmem:[#allocation3 + $0x38] sm:$0xff] %vm708, 0.0
      %1984 = vst.msk [vmem:[#allocation3 + $0x40] sm:$0xff] %vm708, 0.0
      %1985 = vst.msk [vmem:[#allocation3 + $0x48] sm:$0xff] %vm708, 0.0
      %1986 = vst.msk [vmem:[#allocation3 + $0x50] sm:$0xff] %vm708, 0.0
      %1987 = vst.msk [vmem:[#allocation3 + $0x58] sm:$0xff] %vm708, 0.0
      %1988 = vst.msk [vmem:[#allocation3 + $0x60] sm:$0xff] %vm708, 0.0
      %1989 = vst.msk [vmem:[#allocation3 + $0x68] sm:$0xff] %vm708, 0.0
      %1990 = vst.msk [vmem:[#allocation3 + $0x70] sm:$0xff] %vm708, 0.0
      %1991 = vst.msk [vmem:[#allocation3 + $0x78] sm:$0xff] %vm708, 0.0
      %1992 = vst.msk [vmem:[#allocation3 + $0x80] sm:$0xff] %vm708, 0.0
      %1993 = vst.msk [vmem:[#allocation3 + $0x88] sm:$0xff] %vm708, 0.0
      %1994 = vst.msk [vmem:[#allocation3 + $0x90] sm:$0xff] %vm708, 0.0
      %1995 = vst.msk [vmem:[#allocation3 + $0x98] sm:$0xff] %vm708, 0.0
      %vm1996 = vcmask 522240
      %1997 = vst.msk [vmem:[#allocation3 + $0x11] sm:$0x7f] %vm1996, %v1969
      %vm1998 = vcmask 523271
      %1999 = vst.msk [vmem:[#allocation3 + $0x1a] sm:$0x80] %vm1998, %v1969
      %vm2000 = vcmask 521216
      %2001 = vst.msk [vmem:[#allocation3 + $0x22] sm:$0x3f] %vm2000, %v1970
      %vm2002 = vcmask 523270
      %2003 = vst.msk [vmem:[#allocation3 + $0x2b] sm:$0xc0] %vm2002, %v1970
      %vm2004 = vcmask 520192
      %2005 = vst.msk [vmem:[#allocation3 + $0x33] sm:$0x1f] %vm2004, %v1971
      %vm2006 = vcmask 523269
      %2007 = vst.msk [vmem:[#allocation3 + $0x3c] sm:$0xe0] %vm2006, %v1971
      %2008 = vst.msk [vmem:[#allocation3 + $0x44] sm:$0xf] %vm716, %v1972
      %2009 = vst.msk [vmem:[#allocation3 + $0x4d] sm:$0xf0] %vm718, %v1972
      %vm2010 = vcmask 518144
      %2011 = vst.msk [vmem:[#allocation3 + $0x55] sm:$0x7] %vm2010, %v1973
      %vm2012 = vcmask 523267
      %2013 = vst.msk [vmem:[#allocation3 + $0x5e] sm:$0xf8] %vm2012, %v1973
      %vm2014 = vcmask 517120
      %2015 = vst.msk [vmem:[#allocation3 + $0x66] sm:$0x3] %vm2014, %v1974
      %vm2016 = vcmask 523266
      %2017 = vst.msk [vmem:[#allocation3 + $0x6f] sm:$0xfc] %vm2016, %v1974
      %vm2018 = vcmask 516096
      %2019 = vst.msk [vmem:[#allocation3 + $0x77] sm:$0x1] %vm2018, %v1975
      %v2020 = vld [vmem:[#allocation3] sm:$0xff]
      %v2021 = vld [vmem:[#allocation3 + $0x8] sm:$0xff]
      %v2022 = vld [vmem:[#allocation3 + $0x10] sm:$0xff]
      %v2023 = vld [vmem:[#allocation3 + $0x18] sm:$0xff]
      %v2024 = vld [vmem:[#allocation3 + $0x20] sm:$0xff]
      %v2025 = vld [vmem:[#allocation3 + $0x28] sm:$0xff]
      %v2026 = vld [vmem:[#allocation3 + $0x30] sm:$0xff]
      %v2027 = vld [vmem:[#allocation3 + $0x38] sm:$0xff]
      %v2028 = vld [vmem:[#allocation3 + $0x40] sm:$0xff]
      %v2029 = vld [vmem:[#allocation3 + $0x48] sm:$0xff]
      %v2030 = vld [vmem:[#allocation3 + $0x50] sm:$0xff]
      %v2031 = vld [vmem:[#allocation3 + $0x58] sm:$0xff]
      %v2032 = vld [vmem:[#allocation3 + $0x60] sm:$0xff]
      %v2033 = vld [vmem:[#allocation3 + $0x68] sm:$0xff]
      %2034 = vst.msk [vmem:[#allocation5] sm:$0xff] %vm708, %v2020
      %2035 = vst.msk [vmem:[#allocation5 + $0x28] sm:$0xff] %vm708, %v2021
      %2036 = vst.msk [vmem:[#allocation5 + $0x50] sm:$0xff] %vm708, %v2022
      %2037 = vst.msk [vmem:[#allocation5 + $0x78] sm:$0xff] %vm708, %v2023
      %2038 = vst.msk [vmem:[#allocation5 + $0xa0] sm:$0xff] %vm708, %v2024
      %2039 = vst.msk [vmem:[#allocation5 + $0xc8] sm:$0xff] %vm708, %v2025
      %2040 = vst.msk [vmem:[#allocation5 + $0xf0] sm:$0xff] %vm708, %v2026
      %2041 = vst.msk [vmem:[#allocation5 + $0x118] sm:$0xff] %vm708, %v2027
      %2042 = vst.msk [vmem:[#allocation5 + $0x140] sm:$0xff] %vm708, %v2028
      %2043 = vst.msk [vmem:[#allocation5 + $0x168] sm:$0xff] %vm708, %v2029
      %2044 = vst.msk [vmem:[#allocation5 + $0x190] sm:$0xff] %vm708, %v2030
      %2045 = vst.msk [vmem:[#allocation5 + $0x1b8] sm:$0xff] %vm708, %v2031
      %2046 = vst.msk [vmem:[#allocation5 + $0x1e0] sm:$0xff] %vm708, %v2032
      %2047 = vst.msk [vmem:[#allocation5 + $0x208] sm:$0xff] %vm708, %v2033
      %v2048 = vld [vmem:[#allocation3 + $0x1] sm:$0xff]
      %v2049 = vld [vmem:[#allocation3 + $0x9] sm:$0xff]
      %v2050 = vld [vmem:[#allocation3 + $0x11] sm:$0xff]
      %v2051 = vld [vmem:[#allocation3 + $0x19] sm:$0xff]
      %v2052 = vld [vmem:[#allocation3 + $0x21] sm:$0xff]
      %v2053 = vld [vmem:[#allocation3 + $0x29] sm:$0xff]
      %v2054 = vld [vmem:[#allocation3 + $0x31] sm:$0xff]
      %v2055 = vld [vmem:[#allocation3 + $0x39] sm:$0xff]
      %v2056 = vld [vmem:[#allocation3 + $0x41] sm:$0xff]
      %v2057 = vld [vmem:[#allocation3 + $0x49] sm:$0xff]
      %v2058 = vld [vmem:[#allocation3 + $0x51] sm:$0xff]
      %v2059 = vld [vmem:[#allocation3 + $0x59] sm:$0xff]
      %v2060 = vld [vmem:[#allocation3 + $0x61] sm:$0xff]
      %v2061 = vld [vmem:[#allocation3 + $0x69] sm:$0xff]
      %2076 = vrot.lane.b32.xlu0 %v2048, 64
      %v2077 = vpop.permute.xlu0 %2076
      %2078 = vrot.lane.b32.xlu0 %v2049, 64
      %v2079 = vpop.permute.xlu0 %2078
      %2080 = vrot.lane.b32.xlu0 %v2050, 64
      %v2081 = vpop.permute.xlu0 %2080
      %2082 = vrot.lane.b32.xlu0 %v2051, 64
      %v2083 = vpop.permute.xlu0 %2082
      %2084 = vrot.lane.b32.xlu0 %v2052, 64
      %v2085 = vpop.permute.xlu0 %2084
      %2086 = vrot.lane.b32.xlu0 %v2053, 64
      %v2087 = vpop.permute.xlu0 %2086
      %2088 = vrot.lane.b32.xlu0 %v2054, 64
      %v2089 = vpop.permute.xlu0 %2088
      %2090 = vrot.lane.b32.xlu0 %v2055, 64
      %v2091 = vpop.permute.xlu0 %2090
      %2092 = vrot.lane.b32.xlu0 %v2056, 64
      %v2093 = vpop.permute.xlu0 %2092
      %2094 = vrot.lane.b32.xlu0 %v2057, 64
      %v2095 = vpop.permute.xlu0 %2094
      %2096 = vrot.lane.b32.xlu0 %v2058, 64
      %v2097 = vpop.permute.xlu0 %2096
      %2098 = vrot.lane.b32.xlu0 %v2059, 64
      %v2099 = vpop.permute.xlu0 %2098
      %2100 = vrot.lane.b32.xlu0 %v2060, 64
      %v2101 = vpop.permute.xlu0 %2100
      %2102 = vrot.lane.b32.xlu0 %v2061, 64
      %v2103 = vpop.permute.xlu0 %2102
      %2118 = vst.msk [vmem:[#allocation5] sm:$0xff] %vm750, %v2077
      %2119 = vst.msk [vmem:[#allocation5 + $0x28] sm:$0xff] %vm750, %v2079
      %2120 = vst.msk [vmem:[#allocation5 + $0x50] sm:$0xff] %vm750, %v2081
      %2121 = vst.msk [vmem:[#allocation5 + $0x78] sm:$0xff] %vm750, %v2083
      %2122 = vst.msk [vmem:[#allocation5 + $0xa0] sm:$0xff] %vm750, %v2085
      %2123 = vst.msk [vmem:[#allocation5 + $0xc8] sm:$0xff] %vm750, %v2087
      %2124 = vst.msk [vmem:[#allocation5 + $0xf0] sm:$0xff] %vm750, %v2089
      %2125 = vst.msk [vmem:[#allocation5 + $0x118] sm:$0xff] %vm750, %v2091
      %2126 = vst.msk [vmem:[#allocation5 + $0x140] sm:$0xff] %vm750, %v2093
      %2127 = vst.msk [vmem:[#allocation5 + $0x168] sm:$0xff] %vm750, %v2095
      %2128 = vst.msk [vmem:[#allocation5 + $0x190] sm:$0xff] %vm750, %v2097
      %2129 = vst.msk [vmem:[#allocation5 + $0x1b8] sm:$0xff] %vm750, %v2099
      %2130 = vst.msk [vmem:[#allocation5 + $0x1e0] sm:$0xff] %vm750, %v2101
      %2131 = vst.msk [vmem:[#allocation5 + $0x208] sm:$0xff] %vm750, %v2103
      %v2132 = vld [vmem:[#allocation3 + $0x2] sm:$0xff]
      %v2133 = vld [vmem:[#allocation3 + $0xa] sm:$0xff]
      %v2134 = vld [vmem:[#allocation3 + $0x12] sm:$0xff]
      %v2135 = vld [vmem:[#allocation3 + $0x1a] sm:$0xff]
      %v2136 = vld [vmem:[#allocation3 + $0x22] sm:$0xff]
      %v2137 = vld [vmem:[#allocation3 + $0x2a] sm:$0xff]
      %v2138 = vld [vmem:[#allocation3 + $0x32] sm:$0xff]
      %v2139 = vld [vmem:[#allocation3 + $0x3a] sm:$0xff]
      %v2140 = vld [vmem:[#allocation3 + $0x42] sm:$0xff]
      %v2141 = vld [vmem:[#allocation3 + $0x4a] sm:$0xff]
      %v2142 = vld [vmem:[#allocation3 + $0x52] sm:$0xff]
      %v2143 = vld [vmem:[#allocation3 + $0x5a] sm:$0xff]
      %v2144 = vld [vmem:[#allocation3 + $0x62] sm:$0xff]
      %v2145 = vld [vmem:[#allocation3 + $0x6a] sm:$0xff]
      %2146 = vst.msk [vmem:[#allocation5 + $0x8] sm:$0xff] %vm708, %v2132
      %2147 = vst.msk [vmem:[#allocation5 + $0x30] sm:$0xff] %vm708, %v2133
      %2148 = vst.msk [vmem:[#allocation5 + $0x58] sm:$0xff] %vm708, %v2134
      %2149 = vst.msk [vmem:[#allocation5 + $0x80] sm:$0xff] %vm708, %v2135
      %2150 = vst.msk [vmem:[#allocation5 + $0xa8] sm:$0xff] %vm708, %v2136
      %2151 = vst.msk [vmem:[#allocation5 + $0xd0] sm:$0xff] %vm708, %v2137
      %2152 = vst.msk [vmem:[#allocation5 + $0xf8] sm:$0xff] %vm708, %v2138
      %2153 = vst.msk [vmem:[#allocation5 + $0x120] sm:$0xff] %vm708, %v2139
      %2154 = vst.msk [vmem:[#allocation5 + $0x148] sm:$0xff] %vm708, %v2140
      %2155 = vst.msk [vmem:[#allocation5 + $0x170] sm:$0xff] %vm708, %v2141
      %2156 = vst.msk [vmem:[#allocation5 + $0x198] sm:$0xff] %vm708, %v2142
      %2157 = vst.msk [vmem:[#allocation5 + $0x1c0] sm:$0xff] %vm708, %v2143
      %2158 = vst.msk [vmem:[#allocation5 + $0x1e8] sm:$0xff] %vm708, %v2144
      %2159 = vst.msk [vmem:[#allocation5 + $0x210] sm:$0xff] %vm708, %v2145
      %v2160 = vld [vmem:[#allocation3 + $0x10] sm:$0xff]
      %v2161 = vld [vmem:[#allocation3 + $0x18] sm:$0xff]
      %v2162 = vld [vmem:[#allocation3 + $0x20] sm:$0xff]
      %v2163 = vld [vmem:[#allocation3 + $0x28] sm:$0xff]
      %v2164 = vld [vmem:[#allocation3 + $0x30] sm:$0xff]
      %v2165 = vld [vmem:[#allocation3 + $0x38] sm:$0xff]
      %v2166 = vld [vmem:[#allocation3 + $0x40] sm:$0xff]
      %v2167 = vld [vmem:[#allocation3 + $0x48] sm:$0xff]
      %v2168 = vld [vmem:[#allocation3 + $0x50] sm:$0xff]
      %v2169 = vld [vmem:[#allocation3 + $0x58] sm:$0xff]
      %v2170 = vld [vmem:[#allocation3 + $0x60] sm:$0xff]
      %v2171 = vld [vmem:[#allocation3 + $0x68] sm:$0xff]
      %v2172 = vld [vmem:[#allocation3 + $0x70] sm:$0xff]
      %v2173 = vld [vmem:[#allocation3 + $0x78] sm:$0xff]
      %2188 = vrot.lane.b32.xlu0 %v2160, 64
      %v2189 = vpop.permute.xlu0 %2188
      %2190 = vrot.lane.b32.xlu0 %v2161, 64
      %v2191 = vpop.permute.xlu0 %2190
      %2192 = vrot.lane.b32.xlu0 %v2162, 64
      %v2193 = vpop.permute.xlu0 %2192
      %2194 = vrot.lane.b32.xlu0 %v2163, 64
      %v2195 = vpop.permute.xlu0 %2194
      %2196 = vrot.lane.b32.xlu0 %v2164, 64
      %v2197 = vpop.permute.xlu0 %2196
      %2198 = vrot.lane.b32.xlu0 %v2165, 64
      %v2199 = vpop.permute.xlu0 %2198
      %2200 = vrot.lane.b32.xlu0 %v2166, 64
      %v2201 = vpop.permute.xlu0 %2200
      %2202 = vrot.lane.b32.xlu0 %v2167, 64
      %v2203 = vpop.permute.xlu0 %2202
      %2204 = vrot.lane.b32.xlu0 %v2168, 64
      %v2205 = vpop.permute.xlu0 %2204
      %2206 = vrot.lane.b32.xlu0 %v2169, 64
      %v2207 = vpop.permute.xlu0 %2206
      %2208 = vrot.lane.b32.xlu0 %v2170, 64
      %v2209 = vpop.permute.xlu0 %2208
      %2210 = vrot.lane.b32.xlu0 %v2171, 64
      %v2211 = vpop.permute.xlu0 %2210
      %2212 = vrot.lane.b32.xlu0 %v2172, 64
      %v2213 = vpop.permute.xlu0 %2212
      %2214 = vrot.lane.b32.xlu0 %v2173, 64
      %v2215 = vpop.permute.xlu0 %2214
      %2230 = vst.msk [vmem:[#allocation5 + $0x8] sm:$0xff] %vm750, %v2189
      %2231 = vst.msk [vmem:[#allocation5 + $0x30] sm:$0xff] %vm750, %v2191
      %2232 = vst.msk [vmem:[#allocation5 + $0x58] sm:$0xff] %vm750, %v2193
      %2233 = vst.msk [vmem:[#allocation5 + $0x80] sm:$0xff] %vm750, %v2195
      %2234 = vst.msk [vmem:[#allocation5 + $0xa8] sm:$0xff] %vm750, %v2197
      %2235 = vst.msk [vmem:[#allocation5 + $0xd0] sm:$0xff] %vm750, %v2199
      %2236 = vst.msk [vmem:[#allocation5 + $0xf8] sm:$0xff] %vm750, %v2201
      %2237 = vst.msk [vmem:[#allocation5 + $0x120] sm:$0xff] %vm750, %v2203
      %2238 = vst.msk [vmem:[#allocation5 + $0x148] sm:$0xff] %vm750, %v2205
      %2239 = vst.msk [vmem:[#allocation5 + $0x170] sm:$0xff] %vm750, %v2207
      %2240 = vst.msk [vmem:[#allocation5 + $0x198] sm:$0xff] %vm750, %v2209
      %2241 = vst.msk [vmem:[#allocation5 + $0x1c0] sm:$0xff] %vm750, %v2211
      %2242 = vst.msk [vmem:[#allocation5 + $0x1e8] sm:$0xff] %vm750, %v2213
      %2243 = vst.msk [vmem:[#allocation5 + $0x210] sm:$0xff] %vm750, %v2215
      %v2244 = vld [vmem:[#allocation3 + $0x11] sm:$0xff]
      %v2245 = vld [vmem:[#allocation3 + $0x19] sm:$0xff]
      %v2246 = vld [vmem:[#allocation3 + $0x21] sm:$0xff]
      %v2247 = vld [vmem:[#allocation3 + $0x29] sm:$0xff]
      %v2248 = vld [vmem:[#allocation3 + $0x31] sm:$0xff]
      %v2249 = vld [vmem:[#allocation3 + $0x39] sm:$0xff]
      %v2250 = vld [vmem:[#allocation3 + $0x41] sm:$0xff]
      %v2251 = vld [vmem:[#allocation3 + $0x49] sm:$0xff]
      %v2252 = vld [vmem:[#allocation3 + $0x51] sm:$0xff]
      %v2253 = vld [vmem:[#allocation3 + $0x59] sm:$0xff]
      %v2254 = vld [vmem:[#allocation3 + $0x61] sm:$0xff]
      %v2255 = vld [vmem:[#allocation3 + $0x69] sm:$0xff]
      %v2256 = vld [vmem:[#allocation3 + $0x71] sm:$0xff]
      %v2257 = vld [vmem:[#allocation3 + $0x79] sm:$0xff]
      %2258 = vst.msk [vmem:[#allocation5 + $0x10] sm:$0xff] %vm708, %v2244
      %2259 = vst.msk [vmem:[#allocation5 + $0x38] sm:$0xff] %vm708, %v2245
      %2260 = vst.msk [vmem:[#allocation5 + $0x60] sm:$0xff] %vm708, %v2246
      %2261 = vst.msk [vmem:[#allocation5 + $0x88] sm:$0xff] %vm708, %v2247
      %2262 = vst.msk [vmem:[#allocation5 + $0xb0] sm:$0xff] %vm708, %v2248
      %2263 = vst.msk [vmem:[#allocation5 + $0xd8] sm:$0xff] %vm708, %v2249
      %2264 = vst.msk [vmem:[#allocation5 + $0x100] sm:$0xff] %vm708, %v2250
      %2265 = vst.msk [vmem:[#allocation5 + $0x128] sm:$0xff] %vm708, %v2251
      %2266 = vst.msk [vmem:[#allocation5 + $0x150] sm:$0xff] %vm708, %v2252
      %2267 = vst.msk [vmem:[#allocation5 + $0x178] sm:$0xff] %vm708, %v2253
      %2268 = vst.msk [vmem:[#allocation5 + $0x1a0] sm:$0xff] %vm708, %v2254
      %2269 = vst.msk [vmem:[#allocation5 + $0x1c8] sm:$0xff] %vm708, %v2255
      %2270 = vst.msk [vmem:[#allocation5 + $0x1f0] sm:$0xff] %vm708, %v2256
      %2271 = vst.msk [vmem:[#allocation5 + $0x218] sm:$0xff] %vm708, %v2257
      %v2272 = vld [vmem:[#allocation3 + $0x12] sm:$0xff]
      %v2273 = vld [vmem:[#allocation3 + $0x1a] sm:$0xff]
      %v2274 = vld [vmem:[#allocation3 + $0x22] sm:$0xff]
      %v2275 = vld [vmem:[#allocation3 + $0x2a] sm:$0xff]
      %v2276 = vld [vmem:[#allocation3 + $0x32] sm:$0xff]
      %v2277 = vld [vmem:[#allocation3 + $0x3a] sm:$0xff]
      %v2278 = vld [vmem:[#allocation3 + $0x42] sm:$0xff]
      %v2279 = vld [vmem:[#allocation3 + $0x4a] sm:$0xff]
      %v2280 = vld [vmem:[#allocation3 + $0x52] sm:$0xff]
      %v2281 = vld [vmem:[#allocation3 + $0x5a] sm:$0xff]
      %v2282 = vld [vmem:[#allocation3 + $0x62] sm:$0xff]
      %v2283 = vld [vmem:[#allocation3 + $0x6a] sm:$0xff]
      %v2284 = vld [vmem:[#allocation3 + $0x72] sm:$0xff]
      %v2285 = vld [vmem:[#allocation3 + $0x7a] sm:$0xff]
      %2300 = vrot.lane.b32.xlu0 %v2272, 64
      %v2301 = vpop.permute.xlu0 %2300
      %2302 = vrot.lane.b32.xlu0 %v2273, 64
      %v2303 = vpop.permute.xlu0 %2302
      %2304 = vrot.lane.b32.xlu0 %v2274, 64
      %v2305 = vpop.permute.xlu0 %2304
      %2306 = vrot.lane.b32.xlu0 %v2275, 64
      %v2307 = vpop.permute.xlu0 %2306
      %2308 = vrot.lane.b32.xlu0 %v2276, 64
      %v2309 = vpop.permute.xlu0 %2308
      %2310 = vrot.lane.b32.xlu0 %v2277, 64
      %v2311 = vpop.permute.xlu0 %2310
      %2312 = vrot.lane.b32.xlu0 %v2278, 64
      %v2313 = vpop.permute.xlu0 %2312
      %2314 = vrot.lane.b32.xlu0 %v2279, 64
      %v2315 = vpop.permute.xlu0 %2314
      %2316 = vrot.lane.b32.xlu0 %v2280, 64
      %v2317 = vpop.permute.xlu0 %2316
      %2318 = vrot.lane.b32.xlu0 %v2281, 64
      %v2319 = vpop.permute.xlu0 %2318
      %2320 = vrot.lane.b32.xlu0 %v2282, 64
      %v2321 = vpop.permute.xlu0 %2320
      %2322 = vrot.lane.b32.xlu0 %v2283, 64
      %v2323 = vpop.permute.xlu0 %2322
      %2324 = vrot.lane.b32.xlu0 %v2284, 64
      %v2325 = vpop.permute.xlu0 %2324
      %2326 = vrot.lane.b32.xlu0 %v2285, 64
      %v2327 = vpop.permute.xlu0 %2326
      %2342 = vst.msk [vmem:[#allocation5 + $0x10] sm:$0xff] %vm750, %v2301
      %2343 = vst.msk [vmem:[#allocation5 + $0x38] sm:$0xff] %vm750, %v2303
      %2344 = vst.msk [vmem:[#allocation5 + $0x60] sm:$0xff] %vm750, %v2305
      %2345 = vst.msk [vmem:[#allocation5 + $0x88] sm:$0xff] %vm750, %v2307
      %2346 = vst.msk [vmem:[#allocation5 + $0xb0] sm:$0xff] %vm750, %v2309
      %2347 = vst.msk [vmem:[#allocation5 + $0xd8] sm:$0xff] %vm750, %v2311
      %2348 = vst.msk [vmem:[#allocation5 + $0x100] sm:$0xff] %vm750, %v2313
      %2349 = vst.msk [vmem:[#allocation5 + $0x128] sm:$0xff] %vm750, %v2315
      %2350 = vst.msk [vmem:[#allocation5 + $0x150] sm:$0xff] %vm750, %v2317
      %2351 = vst.msk [vmem:[#allocation5 + $0x178] sm:$0xff] %vm750, %v2319
      %2352 = vst.msk [vmem:[#allocation5 + $0x1a0] sm:$0xff] %vm750, %v2321
      %2353 = vst.msk [vmem:[#allocation5 + $0x1c8] sm:$0xff] %vm750, %v2323
      %2354 = vst.msk [vmem:[#allocation5 + $0x1f0] sm:$0xff] %vm750, %v2325
      %2355 = vst.msk [vmem:[#allocation5 + $0x218] sm:$0xff] %vm750, %v2327
      %v2356 = vld [vmem:[#allocation3 + $0x20] sm:$0xff]
      %v2357 = vld [vmem:[#allocation3 + $0x28] sm:$0xff]
      %v2358 = vld [vmem:[#allocation3 + $0x30] sm:$0xff]
      %v2359 = vld [vmem:[#allocation3 + $0x38] sm:$0xff]
      %v2360 = vld [vmem:[#allocation3 + $0x40] sm:$0xff]
      %v2361 = vld [vmem:[#allocation3 + $0x48] sm:$0xff]
      %v2362 = vld [vmem:[#allocation3 + $0x50] sm:$0xff]
      %v2363 = vld [vmem:[#allocation3 + $0x58] sm:$0xff]
      %v2364 = vld [vmem:[#allocation3 + $0x60] sm:$0xff]
      %v2365 = vld [vmem:[#allocation3 + $0x68] sm:$0xff]
      %v2366 = vld [vmem:[#allocation3 + $0x70] sm:$0xff]
      %v2367 = vld [vmem:[#allocation3 + $0x78] sm:$0xff]
      %v2368 = vld [vmem:[#allocation3 + $0x80] sm:$0xff]
      %v2369 = vld [vmem:[#allocation3 + $0x88] sm:$0xff]
      %2370 = vst.msk [vmem:[#allocation5 + $0x18] sm:$0xff] %vm708, %v2356
      %2371 = vst.msk [vmem:[#allocation5 + $0x40] sm:$0xff] %vm708, %v2357
      %2372 = vst.msk [vmem:[#allocation5 + $0x68] sm:$0xff] %vm708, %v2358
      %2373 = vst.msk [vmem:[#allocation5 + $0x90] sm:$0xff] %vm708, %v2359
      %2374 = vst.msk [vmem:[#allocation5 + $0xb8] sm:$0xff] %vm708, %v2360
      %2375 = vst.msk [vmem:[#allocation5 + $0xe0] sm:$0xff] %vm708, %v2361
      %2376 = vst.msk [vmem:[#allocation5 + $0x108] sm:$0xff] %vm708, %v2362
      %2377 = vst.msk [vmem:[#allocation5 + $0x130] sm:$0xff] %vm708, %v2363
      %2378 = vst.msk [vmem:[#allocation5 + $0x158] sm:$0xff] %vm708, %v2364
      %2379 = vst.msk [vmem:[#allocation5 + $0x180] sm:$0xff] %vm708, %v2365
      %2380 = vst.msk [vmem:[#allocation5 + $0x1a8] sm:$0xff] %vm708, %v2366
      %2381 = vst.msk [vmem:[#allocation5 + $0x1d0] sm:$0xff] %vm708, %v2367
      %2382 = vst.msk [vmem:[#allocation5 + $0x1f8] sm:$0xff] %vm708, %v2368
      %2383 = vst.msk [vmem:[#allocation5 + $0x220] sm:$0xff] %vm708, %v2369
      %v2384 = vld [vmem:[#allocation3 + $0x21] sm:$0xff]
      %v2385 = vld [vmem:[#allocation3 + $0x29] sm:$0xff]
      %v2386 = vld [vmem:[#allocation3 + $0x31] sm:$0xff]
      %v2387 = vld [vmem:[#allocation3 + $0x39] sm:$0xff]
      %v2388 = vld [vmem:[#allocation3 + $0x41] sm:$0xff]
      %v2389 = vld [vmem:[#allocation3 + $0x49] sm:$0xff]
      %v2390 = vld [vmem:[#allocation3 + $0x51] sm:$0xff]
      %v2391 = vld [vmem:[#allocation3 + $0x59] sm:$0xff]
      %v2392 = vld [vmem:[#allocation3 + $0x61] sm:$0xff]
      %v2393 = vld [vmem:[#allocation3 + $0x69] sm:$0xff]
      %v2394 = vld [vmem:[#allocation3 + $0x71] sm:$0xff]
      %v2395 = vld [vmem:[#allocation3 + $0x79] sm:$0xff]
      %v2396 = vld [vmem:[#allocation3 + $0x81] sm:$0xff]
      %v2397 = vld [vmem:[#allocation3 + $0x89] sm:$0xff]
      %2412 = vrot.lane.b32.xlu0 %v2384, 64
      %v2413 = vpop.permute.xlu0 %2412
      %2414 = vrot.lane.b32.xlu0 %v2385, 64
      %v2415 = vpop.permute.xlu0 %2414
      %2416 = vrot.lane.b32.xlu0 %v2386, 64
      %v2417 = vpop.permute.xlu0 %2416
      %2418 = vrot.lane.b32.xlu0 %v2387, 64
      %v2419 = vpop.permute.xlu0 %2418
      %2420 = vrot.lane.b32.xlu0 %v2388, 64
      %v2421 = vpop.permute.xlu0 %2420
      %2422 = vrot.lane.b32.xlu0 %v2389, 64
      %v2423 = vpop.permute.xlu0 %2422
      %2424 = vrot.lane.b32.xlu0 %v2390, 64
      %v2425 = vpop.permute.xlu0 %2424
      %2426 = vrot.lane.b32.xlu0 %v2391, 64
      %v2427 = vpop.permute.xlu0 %2426
      %2428 = vrot.lane.b32.xlu0 %v2392, 64
      %v2429 = vpop.permute.xlu0 %2428
      %2430 = vrot.lane.b32.xlu0 %v2393, 64
      %v2431 = vpop.permute.xlu0 %2430
      %2432 = vrot.lane.b32.xlu0 %v2394, 64
      %v2433 = vpop.permute.xlu0 %2432
      %2434 = vrot.lane.b32.xlu0 %v2395, 64
      %v2435 = vpop.permute.xlu0 %2434
      %2436 = vrot.lane.b32.xlu0 %v2396, 64
      %v2437 = vpop.permute.xlu0 %2436
      %2438 = vrot.lane.b32.xlu0 %v2397, 64
      %v2439 = vpop.permute.xlu0 %2438
      %2454 = vst.msk [vmem:[#allocation5 + $0x18] sm:$0xff] %vm750, %v2413
      %2455 = vst.msk [vmem:[#allocation5 + $0x40] sm:$0xff] %vm750, %v2415
      %2456 = vst.msk [vmem:[#allocation5 + $0x68] sm:$0xff] %vm750, %v2417
      %2457 = vst.msk [vmem:[#allocation5 + $0x90] sm:$0xff] %vm750, %v2419
      %2458 = vst.msk [vmem:[#allocation5 + $0xb8] sm:$0xff] %vm750, %v2421
      %2459 = vst.msk [vmem:[#allocation5 + $0xe0] sm:$0xff] %vm750, %v2423
      %2460 = vst.msk [vmem:[#allocation5 + $0x108] sm:$0xff] %vm750, %v2425
      %2461 = vst.msk [vmem:[#allocation5 + $0x130] sm:$0xff] %vm750, %v2427
      %2462 = vst.msk [vmem:[#allocation5 + $0x158] sm:$0xff] %vm750, %v2429
      %2463 = vst.msk [vmem:[#allocation5 + $0x180] sm:$0xff] %vm750, %v2431
      %2464 = vst.msk [vmem:[#allocation5 + $0x1a8] sm:$0xff] %vm750, %v2433
      %2465 = vst.msk [vmem:[#allocation5 + $0x1d0] sm:$0xff] %vm750, %v2435
      %2466 = vst.msk [vmem:[#allocation5 + $0x1f8] sm:$0xff] %vm750, %v2437
      %2467 = vst.msk [vmem:[#allocation5 + $0x220] sm:$0xff] %vm750, %v2439
      %v2468 = vld [vmem:[#allocation3 + $0x22] sm:$0xff]
      %v2469 = vld [vmem:[#allocation3 + $0x2a] sm:$0xff]
      %v2470 = vld [vmem:[#allocation3 + $0x32] sm:$0xff]
      %v2471 = vld [vmem:[#allocation3 + $0x3a] sm:$0xff]
      %v2472 = vld [vmem:[#allocation3 + $0x42] sm:$0xff]
      %v2473 = vld [vmem:[#allocation3 + $0x4a] sm:$0xff]
      %v2474 = vld [vmem:[#allocation3 + $0x52] sm:$0xff]
      %v2475 = vld [vmem:[#allocation3 + $0x5a] sm:$0xff]
      %v2476 = vld [vmem:[#allocation3 + $0x62] sm:$0xff]
      %v2477 = vld [vmem:[#allocation3 + $0x6a] sm:$0xff]
      %v2478 = vld [vmem:[#allocation3 + $0x72] sm:$0xff]
      %v2479 = vld [vmem:[#allocation3 + $0x7a] sm:$0xff]
      %v2480 = vld [vmem:[#allocation3 + $0x82] sm:$0xff]
      %v2481 = vld [vmem:[#allocation3 + $0x8a] sm:$0xff]
      %2482 = vst.msk [vmem:[#allocation5 + $0x20] sm:$0xff] %vm708, %v2468
      %2483 = vst.msk [vmem:[#allocation5 + $0x48] sm:$0xff] %vm708, %v2469
      %2484 = vst.msk [vmem:[#allocation5 + $0x70] sm:$0xff] %vm708, %v2470
      %2485 = vst.msk [vmem:[#allocation5 + $0x98] sm:$0xff] %vm708, %v2471
      %2486 = vst.msk [vmem:[#allocation5 + $0xc0] sm:$0xff] %vm708, %v2472
      %2487 = vst.msk [vmem:[#allocation5 + $0xe8] sm:$0xff] %vm708, %v2473
      %2488 = vst.msk [vmem:[#allocation5 + $0x110] sm:$0xff] %vm708, %v2474
      %2489 = vst.msk [vmem:[#allocation5 + $0x138] sm:$0xff] %vm708, %v2475
      %2490 = vst.msk [vmem:[#allocation5 + $0x160] sm:$0xff] %vm708, %v2476
      %2491 = vst.msk [vmem:[#allocation5 + $0x188] sm:$0xff] %vm708, %v2477
      %2492 = vst.msk [vmem:[#allocation5 + $0x1b0] sm:$0xff] %vm708, %v2478
      %2493 = vst.msk [vmem:[#allocation5 + $0x1d8] sm:$0xff] %vm708, %v2479
      %2494 = vst.msk [vmem:[#allocation5 + $0x200] sm:$0xff] %vm708, %v2480
      %2495 = vst.msk [vmem:[#allocation5 + $0x228] sm:$0xff] %vm708, %v2481
      %v2496 = vld [vmem:[#allocation5] sm:$0xff]
      %v2497 = vld [vmem:[#allocation5 + $0x8] sm:$0xff]
      %v2498 = vld [vmem:[#allocation5 + $0x10] sm:$0xff]
      %v2499 = vld [vmem:[#allocation5 + $0x18] sm:$0xff]
      %v2500 = vld [vmem:[#allocation5 + $0x20] sm:$0xff]
      %v2501 = vld [vmem:[#allocation5 + $0x28] sm:$0xff]
      %v2502 = vld [vmem:[#allocation5 + $0x30] sm:$0xff]
      %v2503 = vld [vmem:[#allocation5 + $0x38] sm:$0xff]
      %v2504 = vld [vmem:[#allocation5 + $0x40] sm:$0xff]
      %v2505 = vld [vmem:[#allocation5 + $0x48] sm:$0xff]
      %v2506 = vld [vmem:[#allocation5 + $0x50] sm:$0xff]
      %v2507 = vld [vmem:[#allocation5 + $0x58] sm:$0xff]
      %v2508 = vld [vmem:[#allocation5 + $0x60] sm:$0xff]
      %v2509 = vld [vmem:[#allocation5 + $0x68] sm:$0xff]
      %v2510 = vld [vmem:[#allocation5 + $0x70] sm:$0xff]
      %v2511 = vld [vmem:[#allocation5 + $0x78] sm:$0xff]
      %v2512 = vld [vmem:[#allocation5 + $0x80] sm:$0xff]
      %v2513 = vld [vmem:[#allocation5 + $0x88] sm:$0xff]
      %v2514 = vld [vmem:[#allocation5 + $0x90] sm:$0xff]
      %v2515 = vld [vmem:[#allocation5 + $0x98] sm:$0xff]
      %v2516 = vld [vmem:[#allocation5 + $0xa0] sm:$0xff]
      %v2517 = vld [vmem:[#allocation5 + $0xa8] sm:$0xff]
      %v2518 = vld [vmem:[#allocation5 + $0xb0] sm:$0xff]
      %v2519 = vld [vmem:[#allocation5 + $0xb8] sm:$0xff]
      %v2520 = vld [vmem:[#allocation5 + $0xc0] sm:$0xff]
      %v2521 = vld [vmem:[#allocation5 + $0xc8] sm:$0xff]
      %v2522 = vld [vmem:[#allocation5 + $0xd0] sm:$0xff]
      %v2523 = vld [vmem:[#allocation5 + $0xd8] sm:$0xff]
      %v2524 = vld [vmem:[#allocation5 + $0xe0] sm:$0xff]
      %v2525 = vld [vmem:[#allocation5 + $0xe8] sm:$0xff]
      %v2526 = vld [vmem:[#allocation5 + $0xf0] sm:$0xff]
      %v2527 = vld [vmem:[#allocation5 + $0xf8] sm:$0xff]
      %v2528 = vld [vmem:[#allocation5 + $0x100] sm:$0xff]
      %v2529 = vld [vmem:[#allocation5 + $0x108] sm:$0xff]
      %v2530 = vld [vmem:[#allocation5 + $0x110] sm:$0xff]
      %v2531 = vld [vmem:[#allocation5 + $0x118] sm:$0xff]
      %v2532 = vld [vmem:[#allocation5 + $0x120] sm:$0xff]
      %v2533 = vld [vmem:[#allocation5 + $0x128] sm:$0xff]
      %v2534 = vld [vmem:[#allocation5 + $0x130] sm:$0xff]
      %v2535 = vld [vmem:[#allocation5 + $0x138] sm:$0xff]
      %v2536 = vld [vmem:[#allocation5 + $0x140] sm:$0xff]
      %v2537 = vld [vmem:[#allocation5 + $0x148] sm:$0xff]
      %v2538 = vld [vmem:[#allocation5 + $0x150] sm:$0xff]
      %v2539 = vld [vmem:[#allocation5 + $0x158] sm:$0xff]
      %v2540 = vld [vmem:[#allocation5 + $0x160] sm:$0xff]
      %v2541 = vld [vmem:[#allocation5 + $0x168] sm:$0xff]
      %v2542 = vld [vmem:[#allocation5 + $0x170] sm:$0xff]
      %v2543 = vld [vmem:[#allocation5 + $0x178] sm:$0xff]
      %v2544 = vld [vmem:[#allocation5 + $0x180] sm:$0xff]
      %v2545 = vld [vmem:[#allocation5 + $0x188] sm:$0xff]
      %v2546 = vld [vmem:[#allocation5 + $0x190] sm:$0xff]
      %v2547 = vld [vmem:[#allocation5 + $0x198] sm:$0xff]
      %v2548 = vld [vmem:[#allocation5 + $0x1a0] sm:$0xff]
      %v2549 = vld [vmem:[#allocation5 + $0x1a8] sm:$0xff]
      %v2550 = vld [vmem:[#allocation5 + $0x1b0] sm:$0xff]
      %v2551 = vld [vmem:[#allocation5 + $0x1b8] sm:$0xff]
      %v2552 = vld [vmem:[#allocation5 + $0x1c0] sm:$0xff]
      %v2553 = vld [vmem:[#allocation5 + $0x1c8] sm:$0xff]
      %v2554 = vld [vmem:[#allocation5 + $0x1d0] sm:$0xff]
      %v2555 = vld [vmem:[#allocation5 + $0x1d8] sm:$0xff]
      %v2556 = vld [vmem:[#allocation5 + $0x1e0] sm:$0xff]
      %v2557 = vld [vmem:[#allocation5 + $0x1e8] sm:$0xff]
      %v2558 = vld [vmem:[#allocation5 + $0x1f0] sm:$0xff]
      %v2559 = vld [vmem:[#allocation5 + $0x1f8] sm:$0xff]
      %v2560 = vld [vmem:[#allocation5 + $0x200] sm:$0xff]
      %v2561 = vld [vmem:[#allocation5 + $0x208] sm:$0xff]
      %v2562 = vld [vmem:[#allocation5 + $0x210] sm:$0xff]
      %v2563 = vld [vmem:[#allocation5 + $0x218] sm:$0xff]
      %v2564 = vld [vmem:[#allocation5 + $0x220] sm:$0xff]
      %v2565 = vld [vmem:[#allocation5 + $0x228] sm:$0xff]
      %v2566 = vld [vmem:[%s9] sm:$0xff]
      %v2567 = vld [vmem:[%s9 + $0x8] sm:$0xff]
      %v2568 = vld [vmem:[%s9 + $0x10] sm:$0xff]
      %v2569 = vld [vmem:[%s9 + $0x18] sm:$0xff]
      %v2570 = vld [vmem:[%s9 + $0x20] sm:$0xff]
      %v2571 = vld [vmem:[%s9 + $0x28] sm:$0xff]
      %v2572 = vld [vmem:[%s9 + $0x30] sm:$0xff]
      %v2573 = vld [vmem:[%s9 + $0x38] sm:$0xff]
      %v2574 = vld [vmem:[%s9 + $0x40] sm:$0xff]
      %v2575 = vld [vmem:[%s9 + $0x48] sm:$0xff]
      %v2576 = vld [vmem:[%s9 + $0x50] sm:$0xff]
      %v2577 = vld [vmem:[%s9 + $0x58] sm:$0xff]
      %v2578 = vld [vmem:[%s9 + $0x60] sm:$0xff]
      %v2579 = vld [vmem:[%s9 + $0x68] sm:$0xff]
      %v2580 = vld [vmem:[%s9 + $0x70] sm:$0xff]
      %v2581 = vld [vmem:[%s9 + $0x78] sm:$0xff]
      %v2582 = vld [vmem:[%s9 + $0x80] sm:$0xff]
      %v2583 = vld [vmem:[%s9 + $0x88] sm:$0xff]
      %v2584 = vld [vmem:[%s9 + $0x90] sm:$0xff]
      %v2585 = vld [vmem:[%s9 + $0x98] sm:$0xff]
      %v2586 = vld [vmem:[%s9 + $0xa0] sm:$0xff]
      %v2587 = vld [vmem:[%s9 + $0xa8] sm:$0xff]
      %v2588 = vld [vmem:[%s9 + $0xb0] sm:$0xff]
      %v2589 = vld [vmem:[%s9 + $0xb8] sm:$0xff]
      %v2590 = vld [vmem:[%s9 + $0xc0] sm:$0xff]
      %v2591 = vld [vmem:[%s9 + $0xc8] sm:$0xff]
      %v2592 = vld [vmem:[%s9 + $0xd0] sm:$0xff]
      %v2593 = vld [vmem:[%s9 + $0xd8] sm:$0xff]
      %v2594 = vld [vmem:[%s9 + $0xe0] sm:$0xff]
      %v2595 = vld [vmem:[%s9 + $0xe8] sm:$0xff]
      %v2596 = vld [vmem:[%s9 + $0xf0] sm:$0xff]
      %v2597 = vld [vmem:[%s9 + $0xf8] sm:$0xff]
      %v2598 = vld [vmem:[%s9 + $0x100] sm:$0xff]
      %v2599 = vld [vmem:[%s9 + $0x108] sm:$0xff]
      %v2600 = vld [vmem:[%s9 + $0x110] sm:$0xff]
      %v2601 = vld [vmem:[%s9 + $0x118] sm:$0xff]
      %v2602 = vld [vmem:[%s9 + $0x120] sm:$0xff]
      %v2603 = vld [vmem:[%s9 + $0x128] sm:$0xff]
      %v2604 = vld [vmem:[%s9 + $0x130] sm:$0xff]
      %v2605 = vld [vmem:[%s9 + $0x138] sm:$0xff]
      %v2606 = vld [vmem:[%s9 + $0x140] sm:$0xff]
      %v2607 = vld [vmem:[%s9 + $0x148] sm:$0xff]
      %v2608 = vld [vmem:[%s9 + $0x150] sm:$0xff]
      %v2609 = vld [vmem:[%s9 + $0x158] sm:$0xff]
      %v2610 = vld [vmem:[%s9 + $0x160] sm:$0xff]
      %v2611 = vld [vmem:[%s9 + $0x168] sm:$0xff]
      %v2612 = vld [vmem:[%s9 + $0x170] sm:$0xff]
      %v2613 = vld [vmem:[%s9 + $0x178] sm:$0xff]
      %v2614 = vld [vmem:[%s9 + $0x180] sm:$0xff]
      %v2615 = vld [vmem:[%s9 + $0x188] sm:$0xff]
      %v2616 = vld [vmem:[%s9 + $0x190] sm:$0xff]
      %v2617 = vld [vmem:[%s9 + $0x198] sm:$0xff]
      %v2618 = vld [vmem:[%s9 + $0x1a0] sm:$0xff]
      %v2619 = vld [vmem:[%s9 + $0x1a8] sm:$0xff]
      %v2620 = vld [vmem:[%s9 + $0x1b0] sm:$0xff]
      %v2621 = vld [vmem:[%s9 + $0x1b8] sm:$0xff]
      %v2622 = vld [vmem:[%s9 + $0x1c0] sm:$0xff]
      %v2623 = vld [vmem:[%s9 + $0x1c8] sm:$0xff]
      %v2624 = vld [vmem:[%s9 + $0x1d0] sm:$0xff]
      %v2625 = vld [vmem:[%s9 + $0x1d8] sm:$0xff]
      %v2626 = vld [vmem:[%s9 + $0x1e0] sm:$0xff]
      %v2627 = vld [vmem:[%s9 + $0x1e8] sm:$0xff]
      %v2628 = vld [vmem:[%s9 + $0x1f0] sm:$0xff]
      %v2629 = vld [vmem:[%s9 + $0x1f8] sm:$0xff]
      %v2630 = vld [vmem:[%s9 + $0x200] sm:$0xff]
      %v2631 = vld [vmem:[%s9 + $0x208] sm:$0xff]
      %v2632 = vld [vmem:[%s9 + $0x210] sm:$0xff]
      %v2633 = vld [vmem:[%s9 + $0x218] sm:$0xff]
      %v2634 = vld [vmem:[%s9 + $0x220] sm:$0xff]
      %v2635 = vld [vmem:[%s9 + $0x228] sm:$0xff]
      %v2636 = vld [vmem:[%s9 + $0x230] sm:$0xff]
      %v2637 = vld [vmem:[%s9 + $0x238] sm:$0xff]
      %v2638 = vld [vmem:[%s9 + $0x240] sm:$0xff]
      %v2639 = vld [vmem:[%s9 + $0x248] sm:$0xff]
      %v2640 = vld [vmem:[%s9 + $0x250] sm:$0xff]
      %v2641 = vld [vmem:[%s9 + $0x258] sm:$0xff]
      %v2642 = vld [vmem:[%s9 + $0x260] sm:$0xff]
      %v2643 = vld [vmem:[%s9 + $0x268] sm:$0xff]
      %v2644 = vld [vmem:[%s9 + $0x270] sm:$0xff]
      %v2645 = vld [vmem:[%s9 + $0x278] sm:$0xff]
      %v2646 = vld [vmem:[%s9 + $0x280] sm:$0xff]
      %v2647 = vld [vmem:[%s9 + $0x288] sm:$0xff]
      %v2648 = vld [vmem:[%s9 + $0x290] sm:$0xff]
      %v2649 = vld [vmem:[%s9 + $0x298] sm:$0xff]
      %v2650 = vld [vmem:[%s9 + $0x2a0] sm:$0xff]
      %v2651 = vld [vmem:[%s9 + $0x2a8] sm:$0xff]
      %v2652 = vld [vmem:[%s9 + $0x2b0] sm:$0xff]
      %v2653 = vld [vmem:[%s9 + $0x2b8] sm:$0xff]
      %v2654 = vld [vmem:[%s9 + $0x2c0] sm:$0xff]
      %v2655 = vld [vmem:[%s9 + $0x2c8] sm:$0xff]
      %v2656 = vld [vmem:[%s9 + $0x2d0] sm:$0xff]
      %v2657 = vld [vmem:[%s9 + $0x2d8] sm:$0xff]
      %v2658 = vld [vmem:[%s9 + $0x2e0] sm:$0xff]
      %v2659 = vld [vmem:[%s9 + $0x2e8] sm:$0xff]
      %v2660 = vld [vmem:[%s9 + $0x2f0] sm:$0xff]
      %v2661 = vld [vmem:[%s9 + $0x2f8] sm:$0xff]
      %v2662 = vld [vmem:[%s9 + $0x300] sm:$0xff]
      %v2663 = vld [vmem:[%s9 + $0x308] sm:$0xff]
      %v2664 = vld [vmem:[%s9 + $0x310] sm:$0xff]
      %v2665 = vld [vmem:[%s9 + $0x318] sm:$0xff]
      %v2666 = vld [vmem:[%s9 + $0x320] sm:$0xff]
      %v2667 = vld [vmem:[%s9 + $0x328] sm:$0xff]
      %v2668 = vld [vmem:[%s9 + $0x330] sm:$0xff]
      %v2669 = vld [vmem:[%s9 + $0x338] sm:$0xff]
      %v2670 = vld [vmem:[%s9 + $0x340] sm:$0xff]
      %v2671 = vld [vmem:[%s9 + $0x348] sm:$0xff]
      %v2672 = vld [vmem:[%s9 + $0x350] sm:$0xff]
      %v2673 = vld [vmem:[%s9 + $0x358] sm:$0xff]
      %v2674 = vld [vmem:[%s9 + $0x360] sm:$0xff]
      %v2675 = vld [vmem:[%s9 + $0x368] sm:$0xff]
      %v2676 = vld [vmem:[%s9 + $0x370] sm:$0xff]
      %v2677 = vld [vmem:[%s9 + $0x378] sm:$0xff]
      %v2678 = vld [vmem:[%s9 + $0x380] sm:$0xff]
      %v2679 = vld [vmem:[%s9 + $0x388] sm:$0xff]
      %v2680 = vld [vmem:[%s9 + $0x390] sm:$0xff]
      %v2681 = vld [vmem:[%s9 + $0x398] sm:$0xff]
      %v2682 = vld [vmem:[%s9 + $0x3a0] sm:$0xff]
      %v2683 = vld [vmem:[%s9 + $0x3a8] sm:$0xff]
      %v2684 = vld [vmem:[%s9 + $0x3b0] sm:$0xff]
      %v2685 = vld [vmem:[%s9 + $0x3b8] sm:$0xff]
      %v2686 = vld [vmem:[%s9 + $0x3c0] sm:$0xff]
      %v2687 = vld [vmem:[%s9 + $0x3c8] sm:$0xff]
      %v2688 = vld [vmem:[%s9 + $0x3d0] sm:$0xff]
      %v2689 = vld [vmem:[%s9 + $0x3d8] sm:$0xff]
      %v2690 = vld [vmem:[%s9 + $0x3e0] sm:$0xff]
      %v2691 = vld [vmem:[%s9 + $0x3e8] sm:$0xff]
      %v2692 = vld [vmem:[%s9 + $0x3f0] sm:$0xff]
      %v2693 = vld [vmem:[%s9 + $0x3f8] sm:$0xff]
      %v2694 = vld [vmem:[%s9 + $0x400] sm:$0xff]
      %v2695 = vld [vmem:[%s9 + $0x408] sm:$0xff]
      %v2696 = vld [vmem:[%s9 + $0x410] sm:$0xff]
      %v2697 = vld [vmem:[%s9 + $0x418] sm:$0xff]
      %v2698 = vld [vmem:[%s9 + $0x420] sm:$0xff]
      %v2699 = vld [vmem:[%s9 + $0x428] sm:$0xff]
      %v2700 = vld [vmem:[%s9 + $0x430] sm:$0xff]
      %v2701 = vld [vmem:[%s9 + $0x438] sm:$0xff]
      %v2702 = vld [vmem:[%s9 + $0x440] sm:$0xff]
      %v2703 = vld [vmem:[%s9 + $0x448] sm:$0xff]
      %v2704 = vld [vmem:[%s9 + $0x450] sm:$0xff]
      %v2705 = vld [vmem:[%s9 + $0x458] sm:$0xff]
      %v2706 = vld [vmem:[%s9 + $0x460] sm:$0xff]
      %v2707 = vld [vmem:[%s9 + $0x468] sm:$0xff]
      %v2708 = vld [vmem:[%s9 + $0x470] sm:$0xff]
      %v2709 = vld [vmem:[%s9 + $0x478] sm:$0xff]
      %v2710 = vld [vmem:[%s9 + $0x480] sm:$0xff]
      %v2711 = vld [vmem:[%s9 + $0x488] sm:$0xff]
      %v2712 = vld [vmem:[%s9 + $0x490] sm:$0xff]
      %v2713 = vld [vmem:[%s9 + $0x498] sm:$0xff]
      %v2714 = vld [vmem:[%s9 + $0x4a0] sm:$0xff]
      %v2715 = vld [vmem:[%s9 + $0x4a8] sm:$0xff]
      %v2716 = vld [vmem:[%s9 + $0x4b0] sm:$0xff]
      %v2717 = vld [vmem:[%s9 + $0x4b8] sm:$0xff]
      %v2718 = vld [vmem:[%s9 + $0x4c0] sm:$0xff]
      %v2719 = vld [vmem:[%s9 + $0x4c8] sm:$0xff]
      %v2720 = vld [vmem:[%s9 + $0x4d0] sm:$0xff]
      %v2721 = vld [vmem:[%s9 + $0x4d8] sm:$0xff]
      %v2722 = vld [vmem:[%s9 + $0x4e0] sm:$0xff]
      %v2723 = vld [vmem:[%s9 + $0x4e8] sm:$0xff]
      %v2724 = vld [vmem:[%s9 + $0x4f0] sm:$0xff]
      %v2725 = vld [vmem:[%s9 + $0x4f8] sm:$0xff]
      %v2726 = vld [vmem:[%s9 + $0x500] sm:$0xff]
      %v2727 = vld [vmem:[%s9 + $0x508] sm:$0xff]
      %v2728 = vld [vmem:[%s9 + $0x510] sm:$0xff]
      %v2729 = vld [vmem:[%s9 + $0x518] sm:$0xff]
      %v2730 = vld [vmem:[%s9 + $0x520] sm:$0xff]
      %v2731 = vld [vmem:[%s9 + $0x528] sm:$0xff]
      %v2732 = vld [vmem:[%s9 + $0x530] sm:$0xff]
      %v2733 = vld [vmem:[%s9 + $0x538] sm:$0xff]
      %v2734 = vld [vmem:[%s9 + $0x540] sm:$0xff]
      %v2735 = vld [vmem:[%s9 + $0x548] sm:$0xff]
      %v2736 = vld [vmem:[%s9 + $0x550] sm:$0xff]
      %v2737 = vld [vmem:[%s9 + $0x558] sm:$0xff]
      %v2738 = vld [vmem:[%s9 + $0x560] sm:$0xff]
      %v2739 = vld [vmem:[%s9 + $0x568] sm:$0xff]
      %v2740 = vld [vmem:[%s9 + $0x570] sm:$0xff]
      %v2741 = vld [vmem:[%s9 + $0x578] sm:$0xff]
      %v2742 = vld [vmem:[%s9 + $0x580] sm:$0xff]
      %v2743 = vld [vmem:[%s9 + $0x588] sm:$0xff]
      %v2744 = vld [vmem:[%s9 + $0x590] sm:$0xff]
      %v2745 = vld [vmem:[%s9 + $0x598] sm:$0xff]
      %v2746 = vld [vmem:[%s9 + $0x5a0] sm:$0xff]
      %v2747 = vld [vmem:[%s9 + $0x5a8] sm:$0xff]
      %v2748 = vld [vmem:[%s9 + $0x5b0] sm:$0xff]
      %v2749 = vld [vmem:[%s9 + $0x5b8] sm:$0xff]
      %v2750 = vld [vmem:[%s9 + $0x5c0] sm:$0xff]
      %v2751 = vld [vmem:[%s9 + $0x5c8] sm:$0xff]
      %v2752 = vld [vmem:[%s9 + $0x5d0] sm:$0xff]
      %v2753 = vld [vmem:[%s9 + $0x5d8] sm:$0xff]
      %v2754 = vld [vmem:[%s9 + $0x5e0] sm:$0xff]
      %v2755 = vld [vmem:[%s9 + $0x5e8] sm:$0xff]
      %v2756 = vld [vmem:[%s9 + $0x5f0] sm:$0xff]
      %v2757 = vld [vmem:[%s9 + $0x5f8] sm:$0xff]
      %v2758 = vld [vmem:[%s9 + $0x600] sm:$0xff]
      %v2759 = vld [vmem:[%s9 + $0x608] sm:$0xff]
      %v2760 = vld [vmem:[%s9 + $0x610] sm:$0xff]
      %v2761 = vld [vmem:[%s9 + $0x618] sm:$0xff]
      %v2762 = vld [vmem:[%s9 + $0x620] sm:$0xff]
      %v2763 = vld [vmem:[%s9 + $0x628] sm:$0xff]
      %v2764 = vld [vmem:[%s9 + $0x630] sm:$0xff]
      %v2765 = vld [vmem:[%s9 + $0x638] sm:$0xff]
      %v2766 = vld [vmem:[%s9 + $0x640] sm:$0xff]
      %v2767 = vld [vmem:[%s9 + $0x648] sm:$0xff]
      %v2768 = vld [vmem:[%s9 + $0x650] sm:$0xff]
      %v2769 = vld [vmem:[%s9 + $0x658] sm:$0xff]
      %v2770 = vld [vmem:[%s9 + $0x660] sm:$0xff]
      %v2771 = vld [vmem:[%s9 + $0x668] sm:$0xff]
      %v2772 = vld [vmem:[%s9 + $0x670] sm:$0xff]
      %v2773 = vld [vmem:[%s9 + $0x678] sm:$0xff]
      %v2774 = vld [vmem:[%s9 + $0x680] sm:$0xff]
      %v2775 = vld [vmem:[%s9 + $0x688] sm:$0xff]
      %v2776 = vld [vmem:[%s9 + $0x690] sm:$0xff]
      %v2777 = vld [vmem:[%s9 + $0x698] sm:$0xff]
      %v2778 = vld [vmem:[%s9 + $0x6a0] sm:$0xff]
      %v2779 = vld [vmem:[%s9 + $0x6a8] sm:$0xff]
      %v2780 = vld [vmem:[%s9 + $0x6b0] sm:$0xff]
      %v2781 = vld [vmem:[%s9 + $0x6b8] sm:$0xff]
      %v2782 = vld [vmem:[%s10] sm:$0x7]
      %v2784 = vperm.slane %v2782, 0
      %v2785 = vperm.slane %v2782, 1
      %v2786 = vperm.slane %v2782, 2
      %v2791 = vsel %vm708, %v2500, 0
      %v2794 = vsel %vm708, %v2505, 0
      %v2797 = vsel %vm708, %v2510, 0
      %v2800 = vsel %vm708, %v2515, 0
      %v2803 = vsel %vm708, %v2520, 0
      %v2806 = vsel %vm708, %v2525, 0
      %v2809 = vsel %vm708, %v2530, 0
      %v2812 = vsel %vm708, %v2535, 0
      %v2815 = vsel %vm708, %v2540, 0
      %v2818 = vsel %vm708, %v2545, 0
      %v2821 = vsel %vm708, %v2550, 0
      %v2824 = vsel %vm708, %v2555, 0
      %v2827 = vsel %vm708, %v2560, 0
      %v2830 = vsel %vm708, %v2565, 0
      %2832 = vmatpush.msra.mxu0 %v2611
      %2833 = vmatpush.msra.mxu0 %v2608
      %2834 = vmatpush.msra.mxu0 %v2605
      %2835 = vmatpush.msra.mxu0 %v2602
      %2836 = vmatpush.msra.mxu0 %v2599
      %2837 = vmatpush.msra.mxu0 %v2596
      %2838 = vmatpush.msra.mxu0 %v2593
      %2839 = vmatpush.msra.mxu0 %v2590
      %2840 = vmatpush.msra.mxu0 %v2587
      %2841 = vmatpush.msra.mxu0 %v2584
      %2842 = vmatpush.msra.mxu0 %v2581
      %2843 = vmatpush.msra.mxu0 %v2578
      %2844 = vmatpush.msra.mxu0 %v2575
      %2845 = vmatpush.msra.mxu0 %v2572
      %2846 = vmatpush.msra.mxu0 %v2569
      %2847 = vmatpush.msra.mxu0 %v2566
      %2848 = vmatmul.f32.gmra.mxu0 %v2496
      %v2849 = vpop.f32.mrf.mxu0
      %v2850 = vadd.f32 %v2784, %v2849
      %2851 = vmatmul.f32.gmra.mxu0 %v2501
      %v2852 = vpop.f32.mrf.mxu0
      %v2853 = vadd.f32 %v2784, %v2852
      %2854 = vmatmul.f32.gmra.mxu0 %v2506
      %v2855 = vpop.f32.mrf.mxu0
      %v2856 = vadd.f32 %v2784, %v2855
      %2857 = vmatmul.f32.gmra.mxu0 %v2511
      %v2858 = vpop.f32.mrf.mxu0
      %v2859 = vadd.f32 %v2784, %v2858
      %2860 = vmatmul.f32.gmra.mxu0 %v2516
      %v2861 = vpop.f32.mrf.mxu0
      %v2862 = vadd.f32 %v2784, %v2861
      %2863 = vmatmul.f32.gmra.mxu0 %v2521
      %v2864 = vpop.f32.mrf.mxu0
      %v2865 = vadd.f32 %v2784, %v2864
      %2866 = vmatmul.f32.gmra.mxu0 %v2526
      %v2867 = vpop.f32.mrf.mxu0
      %v2868 = vadd.f32 %v2784, %v2867
      %2869 = vmatmul.f32.gmra.mxu0 %v2531
      %v2870 = vpop.f32.mrf.mxu0
      %v2871 = vadd.f32 %v2784, %v2870
      %2872 = vmatmul.f32.gmra.mxu0 %v2536
      %v2873 = vpop.f32.mrf.mxu0
      %v2874 = vadd.f32 %v2784, %v2873
      %2875 = vmatmul.f32.gmra.mxu0 %v2541
      %v2876 = vpop.f32.mrf.mxu0
      %v2877 = vadd.f32 %v2784, %v2876
      %2878 = vmatmul.f32.gmra.mxu0 %v2546
      %v2879 = vpop.f32.mrf.mxu0
      %v2880 = vadd.f32 %v2784, %v2879
      %2881 = vmatmul.f32.gmra.mxu0 %v2551
      %v2882 = vpop.f32.mrf.mxu0
      %v2883 = vadd.f32 %v2784, %v2882
      %2884 = vmatmul.f32.gmra.mxu0 %v2556
      %v2885 = vpop.f32.mrf.mxu0
      %v2886 = vadd.f32 %v2784, %v2885
      %2887 = vmatmul.f32.gmra.mxu0 %v2561
      %v2888 = vpop.f32.mrf.mxu0
      %v2889 = vadd.f32 %v2784, %v2888
      %2890 = vdwg.mxu0
      %2891 = vmatpush.msra.mxu0 %v2659
      %2892 = vmatpush.msra.mxu0 %v2656
      %2893 = vmatpush.msra.mxu0 %v2653
      %2894 = vmatpush.msra.mxu0 %v2650
      %2895 = vmatpush.msra.mxu0 %v2647
      %2896 = vmatpush.msra.mxu0 %v2644
      %2897 = vmatpush.msra.mxu0 %v2641
      %2898 = vmatpush.msra.mxu0 %v2638
      %2899 = vmatpush.msra.mxu0 %v2635
      %2900 = vmatpush.msra.mxu0 %v2632
      %2901 = vmatpush.msra.mxu0 %v2629
      %2902 = vmatpush.msra.mxu0 %v2626
      %2903 = vmatpush.msra.mxu0 %v2623
      %2904 = vmatpush.msra.mxu0 %v2620
      %2905 = vmatpush.msra.mxu0 %v2617
      %2906 = vmatpush.msra.mxu0 %v2614
      %2907 = vmatmul.f32.gmra.mxu0 %v2497
      %v2908 = vpop.f32.mrf.mxu0
      %v2909 = vadd.f32 %v2850, %v2908
      %2910 = vmatmul.f32.gmra.mxu0 %v2502
      %v2911 = vpop.f32.mrf.mxu0
      %v2912 = vadd.f32 %v2853, %v2911
      %2913 = vmatmul.f32.gmra.mxu0 %v2507
      %v2914 = vpop.f32.mrf.mxu0
      %v2915 = vadd.f32 %v2856, %v2914
      %2916 = vmatmul.f32.gmra.mxu0 %v2512
      %v2917 = vpop.f32.mrf.mxu0
      %v2918 = vadd.f32 %v2859, %v2917
      %2919 = vmatmul.f32.gmra.mxu0 %v2517
      %v2920 = vpop.f32.mrf.mxu0
      %v2921 = vadd.f32 %v2862, %v2920
      %2922 = vmatmul.f32.gmra.mxu0 %v2522
      %v2923 = vpop.f32.mrf.mxu0
      %v2924 = vadd.f32 %v2865, %v2923
      %2925 = vmatmul.f32.gmra.mxu0 %v2527
      %v2926 = vpop.f32.mrf.mxu0
      %v2927 = vadd.f32 %v2868, %v2926
      %2928 = vmatmul.f32.gmra.mxu0 %v2532
      %v2929 = vpop.f32.mrf.mxu0
      %v2930 = vadd.f32 %v2871, %v2929
      %2931 = vmatmul.f32.gmra.mxu0 %v2537
      %v2932 = vpop.f32.mrf.mxu0
      %v2933 = vadd.f32 %v2874, %v2932
      %2934 = vmatmul.f32.gmra.mxu0 %v2542
      %v2935 = vpop.f32.mrf.mxu0
      %v2936 = vadd.f32 %v2877, %v2935
      %2937 = vmatmul.f32.gmra.mxu0 %v2547
      %v2938 = vpop.f32.mrf.mxu0
      %v2939 = vadd.f32 %v2880, %v2938
      %2940 = vmatmul.f32.gmra.mxu0 %v2552
      %v2941 = vpop.f32.mrf.mxu0
      %v2942 = vadd.f32 %v2883, %v2941
      %2943 = vmatmul.f32.gmra.mxu0 %v2557
      %v2944 = vpop.f32.mrf.mxu0
      %v2945 = vadd.f32 %v2886, %v2944
      %2946 = vmatmul.f32.gmra.mxu0 %v2562
      %v2947 = vpop.f32.mrf.mxu0
      %v2948 = vadd.f32 %v2889, %v2947
      %2949 = vdwg.mxu0
      %2950 = vmatpush.msra.mxu0 %v2707
      %2951 = vmatpush.msra.mxu0 %v2704
      %2952 = vmatpush.msra.mxu0 %v2701
      %2953 = vmatpush.msra.mxu0 %v2698
      %2954 = vmatpush.msra.mxu0 %v2695
      %2955 = vmatpush.msra.mxu0 %v2692
      %2956 = vmatpush.msra.mxu0 %v2689
      %2957 = vmatpush.msra.mxu0 %v2686
      %2958 = vmatpush.msra.mxu0 %v2683
      %2959 = vmatpush.msra.mxu0 %v2680
      %2960 = vmatpush.msra.mxu0 %v2677
      %2961 = vmatpush.msra.mxu0 %v2674
      %2962 = vmatpush.msra.mxu0 %v2671
      %2963 = vmatpush.msra.mxu0 %v2668
      %2964 = vmatpush.msra.mxu0 %v2665
      %2965 = vmatpush.msra.mxu0 %v2662
      %2966 = vmatmul.f32.gmra.mxu0 %v2498
      %v2967 = vpop.f32.mrf.mxu0
      %v2968 = vadd.f32 %v2909, %v2967
      %2969 = vmatmul.f32.gmra.mxu0 %v2503
      %v2970 = vpop.f32.mrf.mxu0
      %v2971 = vadd.f32 %v2912, %v2970
      %2972 = vmatmul.f32.gmra.mxu0 %v2508
      %v2973 = vpop.f32.mrf.mxu0
      %v2974 = vadd.f32 %v2915, %v2973
      %2975 = vmatmul.f32.gmra.mxu0 %v2513
      %v2976 = vpop.f32.mrf.mxu0
      %v2977 = vadd.f32 %v2918, %v2976
      %2978 = vmatmul.f32.gmra.mxu0 %v2518
      %v2979 = vpop.f32.mrf.mxu0
      %v2980 = vadd.f32 %v2921, %v2979
      %2981 = vmatmul.f32.gmra.mxu0 %v2523
      %v2982 = vpop.f32.mrf.mxu0
      %v2983 = vadd.f32 %v2924, %v2982
      %2984 = vmatmul.f32.gmra.mxu0 %v2528
      %v2985 = vpop.f32.mrf.mxu0
      %v2986 = vadd.f32 %v2927, %v2985
      %2987 = vmatmul.f32.gmra.mxu0 %v2533
      %v2988 = vpop.f32.mrf.mxu0
      %v2989 = vadd.f32 %v2930, %v2988
      %2990 = vmatmul.f32.gmra.mxu0 %v2538
      %v2991 = vpop.f32.mrf.mxu0
      %v2992 = vadd.f32 %v2933, %v2991
      %2993 = vmatmul.f32.gmra.mxu0 %v2543
      %v2994 = vpop.f32.mrf.mxu0
      %v2995 = vadd.f32 %v2936, %v2994
      %2996 = vmatmul.f32.gmra.mxu0 %v2548
      %v2997 = vpop.f32.mrf.mxu0
      %v2998 = vadd.f32 %v2939, %v2997
      %2999 = vmatmul.f32.gmra.mxu0 %v2553
      %v3000 = vpop.f32.mrf.mxu0
      %v3001 = vadd.f32 %v2942, %v3000
      %3002 = vmatmul.f32.gmra.mxu0 %v2558
      %v3003 = vpop.f32.mrf.mxu0
      %v3004 = vadd.f32 %v2945, %v3003
      %3005 = vmatmul.f32.gmra.mxu0 %v2563
      %v3006 = vpop.f32.mrf.mxu0
      %v3007 = vadd.f32 %v2948, %v3006
      %3008 = vdwg.mxu0
      %3009 = vmatpush.msra.mxu0 %v2755
      %3010 = vmatpush.msra.mxu0 %v2752
      %3011 = vmatpush.msra.mxu0 %v2749
      %3012 = vmatpush.msra.mxu0 %v2746
      %3013 = vmatpush.msra.mxu0 %v2743
      %3014 = vmatpush.msra.mxu0 %v2740
      %3015 = vmatpush.msra.mxu0 %v2737
      %3016 = vmatpush.msra.mxu0 %v2734
      %3017 = vmatpush.msra.mxu0 %v2731
      %3018 = vmatpush.msra.mxu0 %v2728
      %3019 = vmatpush.msra.mxu0 %v2725
      %3020 = vmatpush.msra.mxu0 %v2722
      %3021 = vmatpush.msra.mxu0 %v2719
      %3022 = vmatpush.msra.mxu0 %v2716
      %3023 = vmatpush.msra.mxu0 %v2713
      %3024 = vmatpush.msra.mxu0 %v2710
      %3025 = vmatmul.f32.gmra.mxu0 %v2499
      %v3026 = vpop.f32.mrf.mxu0
      %v3027 = vadd.f32 %v2968, %v3026
      %3028 = vmatmul.f32.gmra.mxu0 %v2504
      %v3029 = vpop.f32.mrf.mxu0
      %v3030 = vadd.f32 %v2971, %v3029
      %3031 = vmatmul.f32.gmra.mxu0 %v2509
      %v3032 = vpop.f32.mrf.mxu0
      %v3033 = vadd.f32 %v2974, %v3032
      %3034 = vmatmul.f32.gmra.mxu0 %v2514
      %v3035 = vpop.f32.mrf.mxu0
      %v3036 = vadd.f32 %v2977, %v3035
      %3037 = vmatmul.f32.gmra.mxu0 %v2519
      %v3038 = vpop.f32.mrf.mxu0
      %v3039 = vadd.f32 %v2980, %v3038
      %3040 = vmatmul.f32.gmra.mxu0 %v2524
      %v3041 = vpop.f32.mrf.mxu0
      %v3042 = vadd.f32 %v2983, %v3041
      %3043 = vmatmul.f32.gmra.mxu0 %v2529
      %v3044 = vpop.f32.mrf.mxu0
      %v3045 = vadd.f32 %v2986, %v3044
      %3046 = vmatmul.f32.gmra.mxu0 %v2534
      %v3047 = vpop.f32.mrf.mxu0
      %v3048 = vadd.f32 %v2989, %v3047
      %3049 = vmatmul.f32.gmra.mxu0 %v2539
      %v3050 = vpop.f32.mrf.mxu0
      %v3051 = vadd.f32 %v2992, %v3050
      %3052 = vmatmul.f32.gmra.mxu0 %v2544
      %v3053 = vpop.f32.mrf.mxu0
      %v3054 = vadd.f32 %v2995, %v3053
      %3055 = vmatmul.f32.gmra.mxu0 %v2549
      %v3056 = vpop.f32.mrf.mxu0
      %v3057 = vadd.f32 %v2998, %v3056
      %3058 = vmatmul.f32.gmra.mxu0 %v2554
      %v3059 = vpop.f32.mrf.mxu0
      %v3060 = vadd.f32 %v3001, %v3059
      %3061 = vmatmul.f32.gmra.mxu0 %v2559
      %v3062 = vpop.f32.mrf.mxu0
      %v3063 = vadd.f32 %v3004, %v3062
      %3064 = vmatmul.f32.gmra.mxu0 %v2564
      %v3065 = vpop.f32.mrf.mxu0
      %v3066 = vadd.f32 %v3007, %v3065
      %3067 = vdwg.mxu0
      %3068 = vmatpush.msra.mxu0 0.0
      %3069 = vmatpush.msra.mxu0 0.0
      %3070 = vmatpush.msra.mxu0 0.0
      %3071 = vmatpush.msra.mxu0 0.0
      %3072 = vmatpush.msra.mxu0 0.0
      %3073 = vmatpush.msra.mxu0 0.0
      %3074 = vmatpush.msra.mxu0 0.0
      %3075 = vmatpush.msra.mxu0 0.0
      %3076 = vmatpush.msra.mxu0 %v2779
      %3077 = vmatpush.msra.mxu0 %v2776
      %3078 = vmatpush.msra.mxu0 %v2773
      %3079 = vmatpush.msra.mxu0 %v2770
      %3080 = vmatpush.msra.mxu0 %v2767
      %3081 = vmatpush.msra.mxu0 %v2764
      %3082 = vmatpush.msra.mxu0 %v2761
      %3083 = vmatpush.msra.mxu0 %v2758
      %3084 = vmatmul.f32.gmra.mxu0 %v2791
      %v3085 = vpop.f32.mrf.mxu0
      %v3086 = vadd.f32 %v3027, %v3085
      %3087 = vmatmul.f32.gmra.mxu0 %v2794
      %v3088 = vpop.f32.mrf.mxu0
      %v3089 = vadd.f32 %v3030, %v3088
      %3090 = vmatmul.f32.gmra.mxu0 %v2797
      %v3091 = vpop.f32.mrf.mxu0
      %v3092 = vadd.f32 %v3033, %v3091
      %3093 = vmatmul.f32.gmra.mxu0 %v2800
      %v3094 = vpop.f32.mrf.mxu0
      %v3095 = vadd.f32 %v3036, %v3094
      %3096 = vmatmul.f32.gmra.mxu0 %v2803
      %v3097 = vpop.f32.mrf.mxu0
      %v3098 = vadd.f32 %v3039, %v3097
      %3099 = vmatmul.f32.gmra.mxu0 %v2806
      %v3100 = vpop.f32.mrf.mxu0
      %v3101 = vadd.f32 %v3042, %v3100
      %3102 = vmatmul.f32.gmra.mxu0 %v2809
      %v3103 = vpop.f32.mrf.mxu0
      %v3104 = vadd.f32 %v3045, %v3103
      %3105 = vmatmul.f32.gmra.mxu0 %v2812
      %v3106 = vpop.f32.mrf.mxu0
      %v3107 = vadd.f32 %v3048, %v3106
      %3108 = vmatmul.f32.gmra.mxu0 %v2815
      %v3109 = vpop.f32.mrf.mxu0
      %v3110 = vadd.f32 %v3051, %v3109
      %3111 = vmatmul.f32.gmra.mxu0 %v2818
      %v3112 = vpop.f32.mrf.mxu0
      %v3113 = vadd.f32 %v3054, %v3112
      %3114 = vmatmul.f32.gmra.mxu0 %v2821
      %v3115 = vpop.f32.mrf.mxu0
      %v3116 = vadd.f32 %v3057, %v3115
      %3117 = vmatmul.f32.gmra.mxu0 %v2824
      %v3118 = vpop.f32.mrf.mxu0
      %v3119 = vadd.f32 %v3060, %v3118
      %3120 = vmatmul.f32.gmra.mxu0 %v2827
      %v3121 = vpop.f32.mrf.mxu0
      %v3122 = vadd.f32 %v3063, %v3121
      %3123 = vmatmul.f32.gmra.mxu0 %v2830
      %v3124 = vpop.f32.mrf.mxu0
      %v3125 = vadd.f32 %v3066, %v3124
      %3126 = vdwg.mxu0
      %3127 = vmatpush.msra.mxu0 %v2612
      %3128 = vmatpush.msra.mxu0 %v2609
      %3129 = vmatpush.msra.mxu0 %v2606
      %3130 = vmatpush.msra.mxu0 %v2603
      %3131 = vmatpush.msra.mxu0 %v2600
      %3132 = vmatpush.msra.mxu0 %v2597
      %3133 = vmatpush.msra.mxu0 %v2594
      %3134 = vmatpush.msra.mxu0 %v2591
      %3135 = vmatpush.msra.mxu0 %v2588
      %3136 = vmatpush.msra.mxu0 %v2585
      %3137 = vmatpush.msra.mxu0 %v2582
      %3138 = vmatpush.msra.mxu0 %v2579
      %3139 = vmatpush.msra.mxu0 %v2576
      %3140 = vmatpush.msra.mxu0 %v2573
      %3141 = vmatpush.msra.mxu0 %v2570
      %3142 = vmatpush.msra.mxu0 %v2567
      %3143 = vmatmul.f32.gmra.mxu0 %v2496
      %v3144 = vpop.f32.mrf.mxu0
      %v3145 = vadd.f32 %v2785, %v3144
      %3146 = vmatmul.f32.gmra.mxu0 %v2501
      %v3147 = vpop.f32.mrf.mxu0
      %v3148 = vadd.f32 %v2785, %v3147
      %3149 = vmatmul.f32.gmra.mxu0 %v2506
      %v3150 = vpop.f32.mrf.mxu0
      %v3151 = vadd.f32 %v2785, %v3150
      %3152 = vmatmul.f32.gmra.mxu0 %v2511
      %v3153 = vpop.f32.mrf.mxu0
      %v3154 = vadd.f32 %v2785, %v3153
      %3155 = vmatmul.f32.gmra.mxu0 %v2516
      %v3156 = vpop.f32.mrf.mxu0
      %v3157 = vadd.f32 %v2785, %v3156
      %3158 = vmatmul.f32.gmra.mxu0 %v2521
      %v3159 = vpop.f32.mrf.mxu0
      %v3160 = vadd.f32 %v2785, %v3159
      %3161 = vmatmul.f32.gmra.mxu0 %v2526
      %v3162 = vpop.f32.mrf.mxu0
      %v3163 = vadd.f32 %v2785, %v3162
      %3164 = vmatmul.f32.gmra.mxu0 %v2531
      %v3165 = vpop.f32.mrf.mxu0
      %v3166 = vadd.f32 %v2785, %v3165
      %3167 = vmatmul.f32.gmra.mxu0 %v2536
      %v3168 = vpop.f32.mrf.mxu0
      %v3169 = vadd.f32 %v2785, %v3168
      %3170 = vmatmul.f32.gmra.mxu0 %v2541
      %v3171 = vpop.f32.mrf.mxu0
      %v3172 = vadd.f32 %v2785, %v3171
      %3173 = vmatmul.f32.gmra.mxu0 %v2546
      %v3174 = vpop.f32.mrf.mxu0
      %v3175 = vadd.f32 %v2785, %v3174
      %3176 = vmatmul.f32.gmra.mxu0 %v2551
      %v3177 = vpop.f32.mrf.mxu0
      %v3178 = vadd.f32 %v2785, %v3177
      %3179 = vmatmul.f32.gmra.mxu0 %v2556
      %v3180 = vpop.f32.mrf.mxu0
      %v3181 = vadd.f32 %v2785, %v3180
      %3182 = vmatmul.f32.gmra.mxu0 %v2561
      %v3183 = vpop.f32.mrf.mxu0
      %v3184 = vadd.f32 %v2785, %v3183
      %3185 = vdwg.mxu0
      %3186 = vmatpush.msra.mxu0 %v2660
      %3187 = vmatpush.msra.mxu0 %v2657
      %3188 = vmatpush.msra.mxu0 %v2654
      %3189 = vmatpush.msra.mxu0 %v2651
      %3190 = vmatpush.msra.mxu0 %v2648
      %3191 = vmatpush.msra.mxu0 %v2645
      %3192 = vmatpush.msra.mxu0 %v2642
      %3193 = vmatpush.msra.mxu0 %v2639
      %3194 = vmatpush.msra.mxu0 %v2636
      %3195 = vmatpush.msra.mxu0 %v2633
      %3196 = vmatpush.msra.mxu0 %v2630
      %3197 = vmatpush.msra.mxu0 %v2627
      %3198 = vmatpush.msra.mxu0 %v2624
      %3199 = vmatpush.msra.mxu0 %v2621
      %3200 = vmatpush.msra.mxu0 %v2618
      %3201 = vmatpush.msra.mxu0 %v2615
      %3202 = vmatmul.f32.gmra.mxu0 %v2497
      %v3203 = vpop.f32.mrf.mxu0
      %v3204 = vadd.f32 %v3145, %v3203
      %3205 = vmatmul.f32.gmra.mxu0 %v2502
      %v3206 = vpop.f32.mrf.mxu0
      %v3207 = vadd.f32 %v3148, %v3206
      %3208 = vmatmul.f32.gmra.mxu0 %v2507
      %v3209 = vpop.f32.mrf.mxu0
      %v3210 = vadd.f32 %v3151, %v3209
      %3211 = vmatmul.f32.gmra.mxu0 %v2512
      %v3212 = vpop.f32.mrf.mxu0
      %v3213 = vadd.f32 %v3154, %v3212
      %3214 = vmatmul.f32.gmra.mxu0 %v2517
      %v3215 = vpop.f32.mrf.mxu0
      %v3216 = vadd.f32 %v3157, %v3215
      %3217 = vmatmul.f32.gmra.mxu0 %v2522
      %v3218 = vpop.f32.mrf.mxu0
      %v3219 = vadd.f32 %v3160, %v3218
      %3220 = vmatmul.f32.gmra.mxu0 %v2527
      %v3221 = vpop.f32.mrf.mxu0
      %v3222 = vadd.f32 %v3163, %v3221
      %3223 = vmatmul.f32.gmra.mxu0 %v2532
      %v3224 = vpop.f32.mrf.mxu0
      %v3225 = vadd.f32 %v3166, %v3224
      %3226 = vmatmul.f32.gmra.mxu0 %v2537
      %v3227 = vpop.f32.mrf.mxu0
      %v3228 = vadd.f32 %v3169, %v3227
      %3229 = vmatmul.f32.gmra.mxu0 %v2542
      %v3230 = vpop.f32.mrf.mxu0
      %v3231 = vadd.f32 %v3172, %v3230
      %3232 = vmatmul.f32.gmra.mxu0 %v2547
      %v3233 = vpop.f32.mrf.mxu0
      %v3234 = vadd.f32 %v3175, %v3233
      %3235 = vmatmul.f32.gmra.mxu0 %v2552
      %v3236 = vpop.f32.mrf.mxu0
      %v3237 = vadd.f32 %v3178, %v3236
      %3238 = vmatmul.f32.gmra.mxu0 %v2557
      %v3239 = vpop.f32.mrf.mxu0
      %v3240 = vadd.f32 %v3181, %v3239
      %3241 = vmatmul.f32.gmra.mxu0 %v2562
      %v3242 = vpop.f32.mrf.mxu0
      %v3243 = vadd.f32 %v3184, %v3242
      %3244 = vdwg.mxu0
      %3245 = vmatpush.msra.mxu0 %v2708
      %3246 = vmatpush.msra.mxu0 %v2705
      %3247 = vmatpush.msra.mxu0 %v2702
      %3248 = vmatpush.msra.mxu0 %v2699
      %3249 = vmatpush.msra.mxu0 %v2696
      %3250 = vmatpush.msra.mxu0 %v2693
      %3251 = vmatpush.msra.mxu0 %v2690
      %3252 = vmatpush.msra.mxu0 %v2687
      %3253 = vmatpush.msra.mxu0 %v2684
      %3254 = vmatpush.msra.mxu0 %v2681
      %3255 = vmatpush.msra.mxu0 %v2678
      %3256 = vmatpush.msra.mxu0 %v2675
      %3257 = vmatpush.msra.mxu0 %v2672
      %3258 = vmatpush.msra.mxu0 %v2669
      %3259 = vmatpush.msra.mxu0 %v2666
      %3260 = vmatpush.msra.mxu0 %v2663
      %3261 = vmatmul.f32.gmra.mxu0 %v2498
      %v3262 = vpop.f32.mrf.mxu0
      %v3263 = vadd.f32 %v3204, %v3262
      %3264 = vmatmul.f32.gmra.mxu0 %v2503
      %v3265 = vpop.f32.mrf.mxu0
      %v3266 = vadd.f32 %v3207, %v3265
      %3267 = vmatmul.f32.gmra.mxu0 %v2508
      %v3268 = vpop.f32.mrf.mxu0
      %v3269 = vadd.f32 %v3210, %v3268
      %3270 = vmatmul.f32.gmra.mxu0 %v2513
      %v3271 = vpop.f32.mrf.mxu0
      %v3272 = vadd.f32 %v3213, %v3271
      %3273 = vmatmul.f32.gmra.mxu0 %v2518
      %v3274 = vpop.f32.mrf.mxu0
      %v3275 = vadd.f32 %v3216, %v3274
      %3276 = vmatmul.f32.gmra.mxu0 %v2523
      %v3277 = vpop.f32.mrf.mxu0
      %v3278 = vadd.f32 %v3219, %v3277
      %3279 = vmatmul.f32.gmra.mxu0 %v2528
      %v3280 = vpop.f32.mrf.mxu0
      %v3281 = vadd.f32 %v3222, %v3280
      %3282 = vmatmul.f32.gmra.mxu0 %v2533
      %v3283 = vpop.f32.mrf.mxu0
      %v3284 = vadd.f32 %v3225, %v3283
      %3285 = vmatmul.f32.gmra.mxu0 %v2538
      %v3286 = vpop.f32.mrf.mxu0
      %v3287 = vadd.f32 %v3228, %v3286
      %3288 = vmatmul.f32.gmra.mxu0 %v2543
      %v3289 = vpop.f32.mrf.mxu0
      %v3290 = vadd.f32 %v3231, %v3289
      %3291 = vmatmul.f32.gmra.mxu0 %v2548
      %v3292 = vpop.f32.mrf.mxu0
      %v3293 = vadd.f32 %v3234, %v3292
      %3294 = vmatmul.f32.gmra.mxu0 %v2553
      %v3295 = vpop.f32.mrf.mxu0
      %v3296 = vadd.f32 %v3237, %v3295
      %3297 = vmatmul.f32.gmra.mxu0 %v2558
      %v3298 = vpop.f32.mrf.mxu0
      %v3299 = vadd.f32 %v3240, %v3298
      %3300 = vmatmul.f32.gmra.mxu0 %v2563
      %v3301 = vpop.f32.mrf.mxu0
      %v3302 = vadd.f32 %v3243, %v3301
      %3303 = vdwg.mxu0
      %3304 = vmatpush.msra.mxu0 %v2756
      %3305 = vmatpush.msra.mxu0 %v2753
      %3306 = vmatpush.msra.mxu0 %v2750
      %3307 = vmatpush.msra.mxu0 %v2747
      %3308 = vmatpush.msra.mxu0 %v2744
      %3309 = vmatpush.msra.mxu0 %v2741
      %3310 = vmatpush.msra.mxu0 %v2738
      %3311 = vmatpush.msra.mxu0 %v2735
      %3312 = vmatpush.msra.mxu0 %v2732
      %3313 = vmatpush.msra.mxu0 %v2729
      %3314 = vmatpush.msra.mxu0 %v2726
      %3315 = vmatpush.msra.mxu0 %v2723
      %3316 = vmatpush.msra.mxu0 %v2720
      %3317 = vmatpush.msra.mxu0 %v2717
      %3318 = vmatpush.msra.mxu0 %v2714
      %3319 = vmatpush.msra.mxu0 %v2711
      %3320 = vmatmul.f32.gmra.mxu0 %v2499
      %v3321 = vpop.f32.mrf.mxu0
      %v3322 = vadd.f32 %v3263, %v3321
      %3323 = vmatmul.f32.gmra.mxu0 %v2504
      %v3324 = vpop.f32.mrf.mxu0
      %v3325 = vadd.f32 %v3266, %v3324
      %3326 = vmatmul.f32.gmra.mxu0 %v2509
      %v3327 = vpop.f32.mrf.mxu0
      %v3328 = vadd.f32 %v3269, %v3327
      %3329 = vmatmul.f32.gmra.mxu0 %v2514
      %v3330 = vpop.f32.mrf.mxu0
      %v3331 = vadd.f32 %v3272, %v3330
      %3332 = vmatmul.f32.gmra.mxu0 %v2519
      %v3333 = vpop.f32.mrf.mxu0
      %v3334 = vadd.f32 %v3275, %v3333
      %3335 = vmatmul.f32.gmra.mxu0 %v2524
      %v3336 = vpop.f32.mrf.mxu0
      %v3337 = vadd.f32 %v3278, %v3336
      %3338 = vmatmul.f32.gmra.mxu0 %v2529
      %v3339 = vpop.f32.mrf.mxu0
      %v3340 = vadd.f32 %v3281, %v3339
      %3341 = vmatmul.f32.gmra.mxu0 %v2534
      %v3342 = vpop.f32.mrf.mxu0
      %v3343 = vadd.f32 %v3284, %v3342
      %3344 = vmatmul.f32.gmra.mxu0 %v2539
      %v3345 = vpop.f32.mrf.mxu0
      %v3346 = vadd.f32 %v3287, %v3345
      %3347 = vmatmul.f32.gmra.mxu0 %v2544
      %v3348 = vpop.f32.mrf.mxu0
      %v3349 = vadd.f32 %v3290, %v3348
      %3350 = vmatmul.f32.gmra.mxu0 %v2549
      %v3351 = vpop.f32.mrf.mxu0
      %v3352 = vadd.f32 %v3293, %v3351
      %3353 = vmatmul.f32.gmra.mxu0 %v2554
      %v3354 = vpop.f32.mrf.mxu0
      %v3355 = vadd.f32 %v3296, %v3354
      %3356 = vmatmul.f32.gmra.mxu0 %v2559
      %v3357 = vpop.f32.mrf.mxu0
      %v3358 = vadd.f32 %v3299, %v3357
      %3359 = vmatmul.f32.gmra.mxu0 %v2564
      %v3360 = vpop.f32.mrf.mxu0
      %v3361 = vadd.f32 %v3302, %v3360
      %3362 = vdwg.mxu0
      %3363 = vmatpush.msra.mxu0 0.0
      %3364 = vmatpush.msra.mxu0 0.0
      %3365 = vmatpush.msra.mxu0 0.0
      %3366 = vmatpush.msra.mxu0 0.0
      %3367 = vmatpush.msra.mxu0 0.0
      %3368 = vmatpush.msra.mxu0 0.0
      %3369 = vmatpush.msra.mxu0 0.0
      %3370 = vmatpush.msra.mxu0 0.0
      %3371 = vmatpush.msra.mxu0 %v2780
      %3372 = vmatpush.msra.mxu0 %v2777
      %3373 = vmatpush.msra.mxu0 %v2774
      %3374 = vmatpush.msra.mxu0 %v2771
      %3375 = vmatpush.msra.mxu0 %v2768
      %3376 = vmatpush.msra.mxu0 %v2765
      %3377 = vmatpush.msra.mxu0 %v2762
      %3378 = vmatpush.msra.mxu0 %v2759
      %3379 = vmatmul.f32.gmra.mxu0 %v2791
      %v3380 = vpop.f32.mrf.mxu0
      %v3381 = vadd.f32 %v3322, %v3380
      %3382 = vmatmul.f32.gmra.mxu0 %v2794
      %v3383 = vpop.f32.mrf.mxu0
      %v3384 = vadd.f32 %v3325, %v3383
      %3385 = vmatmul.f32.gmra.mxu0 %v2797
      %v3386 = vpop.f32.mrf.mxu0
      %v3387 = vadd.f32 %v3328, %v3386
      %3388 = vmatmul.f32.gmra.mxu0 %v2800
      %v3389 = vpop.f32.mrf.mxu0
      %v3390 = vadd.f32 %v3331, %v3389
      %3391 = vmatmul.f32.gmra.mxu0 %v2803
      %v3392 = vpop.f32.mrf.mxu0
      %v3393 = vadd.f32 %v3334, %v3392
      %3394 = vmatmul.f32.gmra.mxu0 %v2806
      %v3395 = vpop.f32.mrf.mxu0
      %v3396 = vadd.f32 %v3337, %v3395
      %3397 = vmatmul.f32.gmra.mxu0 %v2809
      %v3398 = vpop.f32.mrf.mxu0
      %v3399 = vadd.f32 %v3340, %v3398
      %3400 = vmatmul.f32.gmra.mxu0 %v2812
      %v3401 = vpop.f32.mrf.mxu0
      %v3402 = vadd.f32 %v3343, %v3401
      %3403 = vmatmul.f32.gmra.mxu0 %v2815
      %v3404 = vpop.f32.mrf.mxu0
      %v3405 = vadd.f32 %v3346, %v3404
      %3406 = vmatmul.f32.gmra.mxu0 %v2818
      %v3407 = vpop.f32.mrf.mxu0
      %v3408 = vadd.f32 %v3349, %v3407
      %3409 = vmatmul.f32.gmra.mxu0 %v2821
      %v3410 = vpop.f32.mrf.mxu0
      %v3411 = vadd.f32 %v3352, %v3410
      %3412 = vmatmul.f32.gmra.mxu0 %v2824
      %v3413 = vpop.f32.mrf.mxu0
      %v3414 = vadd.f32 %v3355, %v3413
      %3415 = vmatmul.f32.gmra.mxu0 %v2827
      %v3416 = vpop.f32.mrf.mxu0
      %v3417 = vadd.f32 %v3358, %v3416
      %3418 = vmatmul.f32.gmra.mxu0 %v2830
      %v3419 = vpop.f32.mrf.mxu0
      %v3420 = vadd.f32 %v3361, %v3419
      %3421 = vdwg.mxu0
      %3422 = vmatpush.msra.mxu0 %v2613
      %3423 = vmatpush.msra.mxu0 %v2610
      %3424 = vmatpush.msra.mxu0 %v2607
      %3425 = vmatpush.msra.mxu0 %v2604
      %3426 = vmatpush.msra.mxu0 %v2601
      %3427 = vmatpush.msra.mxu0 %v2598
      %3428 = vmatpush.msra.mxu0 %v2595
      %3429 = vmatpush.msra.mxu0 %v2592
      %3430 = vmatpush.msra.mxu0 %v2589
      %3431 = vmatpush.msra.mxu0 %v2586
      %3432 = vmatpush.msra.mxu0 %v2583
      %3433 = vmatpush.msra.mxu0 %v2580
      %3434 = vmatpush.msra.mxu0 %v2577
      %3435 = vmatpush.msra.mxu0 %v2574
      %3436 = vmatpush.msra.mxu0 %v2571
      %3437 = vmatpush.msra.mxu0 %v2568
      %3438 = vmatmul.f32.gmra.mxu0 %v2496
      %v3439 = vpop.f32.mrf.mxu0
      %v3440 = vadd.f32 %v2786, %v3439
      %3441 = vmatmul.f32.gmra.mxu0 %v2501
      %v3442 = vpop.f32.mrf.mxu0
      %v3443 = vadd.f32 %v2786, %v3442
      %3444 = vmatmul.f32.gmra.mxu0 %v2506
      %v3445 = vpop.f32.mrf.mxu0
      %v3446 = vadd.f32 %v2786, %v3445
      %3447 = vmatmul.f32.gmra.mxu0 %v2511
      %v3448 = vpop.f32.mrf.mxu0
      %v3449 = vadd.f32 %v2786, %v3448
      %3450 = vmatmul.f32.gmra.mxu0 %v2516
      %v3451 = vpop.f32.mrf.mxu0
      %v3452 = vadd.f32 %v2786, %v3451
      %3453 = vmatmul.f32.gmra.mxu0 %v2521
      %v3454 = vpop.f32.mrf.mxu0
      %v3455 = vadd.f32 %v2786, %v3454
      %3456 = vmatmul.f32.gmra.mxu0 %v2526
      %v3457 = vpop.f32.mrf.mxu0
      %v3458 = vadd.f32 %v2786, %v3457
      %3459 = vmatmul.f32.gmra.mxu0 %v2531
      %v3460 = vpop.f32.mrf.mxu0
      %v3461 = vadd.f32 %v2786, %v3460
      %3462 = vmatmul.f32.gmra.mxu0 %v2536
      %v3463 = vpop.f32.mrf.mxu0
      %v3464 = vadd.f32 %v2786, %v3463
      %3465 = vmatmul.f32.gmra.mxu0 %v2541
      %v3466 = vpop.f32.mrf.mxu0
      %v3467 = vadd.f32 %v2786, %v3466
      %3468 = vmatmul.f32.gmra.mxu0 %v2546
      %v3469 = vpop.f32.mrf.mxu0
      %v3470 = vadd.f32 %v2786, %v3469
      %3471 = vmatmul.f32.gmra.mxu0 %v2551
      %v3472 = vpop.f32.mrf.mxu0
      %v3473 = vadd.f32 %v2786, %v3472
      %3474 = vmatmul.f32.gmra.mxu0 %v2556
      %v3475 = vpop.f32.mrf.mxu0
      %v3476 = vadd.f32 %v2786, %v3475
      %3477 = vmatmul.f32.gmra.mxu0 %v2561
      %v3478 = vpop.f32.mrf.mxu0
      %v3479 = vadd.f32 %v2786, %v3478
      %3480 = vdwg.mxu0
      %3481 = vmatpush.msra.mxu0 %v2661
      %3482 = vmatpush.msra.mxu0 %v2658
      %3483 = vmatpush.msra.mxu0 %v2655
      %3484 = vmatpush.msra.mxu0 %v2652
      %3485 = vmatpush.msra.mxu0 %v2649
      %3486 = vmatpush.msra.mxu0 %v2646
      %3487 = vmatpush.msra.mxu0 %v2643
      %3488 = vmatpush.msra.mxu0 %v2640
      %3489 = vmatpush.msra.mxu0 %v2637
      %3490 = vmatpush.msra.mxu0 %v2634
      %3491 = vmatpush.msra.mxu0 %v2631
      %3492 = vmatpush.msra.mxu0 %v2628
      %3493 = vmatpush.msra.mxu0 %v2625
      %3494 = vmatpush.msra.mxu0 %v2622
      %3495 = vmatpush.msra.mxu0 %v2619
      %3496 = vmatpush.msra.mxu0 %v2616
      %3497 = vmatmul.f32.gmra.mxu0 %v2497
      %v3498 = vpop.f32.mrf.mxu0
      %v3499 = vadd.f32 %v3440, %v3498
      %3500 = vmatmul.f32.gmra.mxu0 %v2502
      %v3501 = vpop.f32.mrf.mxu0
      %v3502 = vadd.f32 %v3443, %v3501
      %3503 = vmatmul.f32.gmra.mxu0 %v2507
      %v3504 = vpop.f32.mrf.mxu0
      %v3505 = vadd.f32 %v3446, %v3504
      %3506 = vmatmul.f32.gmra.mxu0 %v2512
      %v3507 = vpop.f32.mrf.mxu0
      %v3508 = vadd.f32 %v3449, %v3507
      %3509 = vmatmul.f32.gmra.mxu0 %v2517
      %v3510 = vpop.f32.mrf.mxu0
      %v3511 = vadd.f32 %v3452, %v3510
      %3512 = vmatmul.f32.gmra.mxu0 %v2522
      %v3513 = vpop.f32.mrf.mxu0
      %v3514 = vadd.f32 %v3455, %v3513
      %3515 = vmatmul.f32.gmra.mxu0 %v2527
      %v3516 = vpop.f32.mrf.mxu0
      %v3517 = vadd.f32 %v3458, %v3516
      %3518 = vmatmul.f32.gmra.mxu0 %v2532
      %v3519 = vpop.f32.mrf.mxu0
      %v3520 = vadd.f32 %v3461, %v3519
      %3521 = vmatmul.f32.gmra.mxu0 %v2537
      %v3522 = vpop.f32.mrf.mxu0
      %v3523 = vadd.f32 %v3464, %v3522
      %3524 = vmatmul.f32.gmra.mxu0 %v2542
      %v3525 = vpop.f32.mrf.mxu0
      %v3526 = vadd.f32 %v3467, %v3525
      %3527 = vmatmul.f32.gmra.mxu0 %v2547
      %v3528 = vpop.f32.mrf.mxu0
      %v3529 = vadd.f32 %v3470, %v3528
      %3530 = vmatmul.f32.gmra.mxu0 %v2552
      %v3531 = vpop.f32.mrf.mxu0
      %v3532 = vadd.f32 %v3473, %v3531
      %3533 = vmatmul.f32.gmra.mxu0 %v2557
      %v3534 = vpop.f32.mrf.mxu0
      %v3535 = vadd.f32 %v3476, %v3534
      %3536 = vmatmul.f32.gmra.mxu0 %v2562
      %v3537 = vpop.f32.mrf.mxu0
      %v3538 = vadd.f32 %v3479, %v3537
      %3539 = vdwg.mxu0
      %3540 = vmatpush.msra.mxu0 %v2709
      %3541 = vmatpush.msra.mxu0 %v2706
      %3542 = vmatpush.msra.mxu0 %v2703
      %3543 = vmatpush.msra.mxu0 %v2700
      %3544 = vmatpush.msra.mxu0 %v2697
      %3545 = vmatpush.msra.mxu0 %v2694
      %3546 = vmatpush.msra.mxu0 %v2691
      %3547 = vmatpush.msra.mxu0 %v2688
      %3548 = vmatpush.msra.mxu0 %v2685
      %3549 = vmatpush.msra.mxu0 %v2682
      %3550 = vmatpush.msra.mxu0 %v2679
      %3551 = vmatpush.msra.mxu0 %v2676
      %3552 = vmatpush.msra.mxu0 %v2673
      %3553 = vmatpush.msra.mxu0 %v2670
      %3554 = vmatpush.msra.mxu0 %v2667
      %3555 = vmatpush.msra.mxu0 %v2664
      %3556 = vmatmul.f32.gmra.mxu0 %v2498
      %v3557 = vpop.f32.mrf.mxu0
      %v3558 = vadd.f32 %v3499, %v3557
      %3559 = vmatmul.f32.gmra.mxu0 %v2503
      %v3560 = vpop.f32.mrf.mxu0
      %v3561 = vadd.f32 %v3502, %v3560
      %3562 = vmatmul.f32.gmra.mxu0 %v2508
      %v3563 = vpop.f32.mrf.mxu0
      %v3564 = vadd.f32 %v3505, %v3563
      %3565 = vmatmul.f32.gmra.mxu0 %v2513
      %v3566 = vpop.f32.mrf.mxu0
      %v3567 = vadd.f32 %v3508, %v3566
      %3568 = vmatmul.f32.gmra.mxu0 %v2518
      %v3569 = vpop.f32.mrf.mxu0
      %v3570 = vadd.f32 %v3511, %v3569
      %3571 = vmatmul.f32.gmra.mxu0 %v2523
      %v3572 = vpop.f32.mrf.mxu0
      %v3573 = vadd.f32 %v3514, %v3572
      %3574 = vmatmul.f32.gmra.mxu0 %v2528
      %v3575 = vpop.f32.mrf.mxu0
      %v3576 = vadd.f32 %v3517, %v3575
      %3577 = vmatmul.f32.gmra.mxu0 %v2533
      %v3578 = vpop.f32.mrf.mxu0
      %v3579 = vadd.f32 %v3520, %v3578
      %3580 = vmatmul.f32.gmra.mxu0 %v2538
      %v3581 = vpop.f32.mrf.mxu0
      %v3582 = vadd.f32 %v3523, %v3581
      %3583 = vmatmul.f32.gmra.mxu0 %v2543
      %v3584 = vpop.f32.mrf.mxu0
      %v3585 = vadd.f32 %v3526, %v3584
      %3586 = vmatmul.f32.gmra.mxu0 %v2548
      %v3587 = vpop.f32.mrf.mxu0
      %v3588 = vadd.f32 %v3529, %v3587
      %3589 = vmatmul.f32.gmra.mxu0 %v2553
      %v3590 = vpop.f32.mrf.mxu0
      %v3591 = vadd.f32 %v3532, %v3590
      %3592 = vmatmul.f32.gmra.mxu0 %v2558
      %v3593 = vpop.f32.mrf.mxu0
      %v3594 = vadd.f32 %v3535, %v3593
      %3595 = vmatmul.f32.gmra.mxu0 %v2563
      %v3596 = vpop.f32.mrf.mxu0
      %v3597 = vadd.f32 %v3538, %v3596
      %3598 = vdwg.mxu0
      %3599 = vmatpush.msra.mxu0 %v2757
      %3600 = vmatpush.msra.mxu0 %v2754
      %3601 = vmatpush.msra.mxu0 %v2751
      %3602 = vmatpush.msra.mxu0 %v2748
      %3603 = vmatpush.msra.mxu0 %v2745
      %3604 = vmatpush.msra.mxu0 %v2742
      %3605 = vmatpush.msra.mxu0 %v2739
      %3606 = vmatpush.msra.mxu0 %v2736
      %3607 = vmatpush.msra.mxu0 %v2733
      %3608 = vmatpush.msra.mxu0 %v2730
      %3609 = vmatpush.msra.mxu0 %v2727
      %3610 = vmatpush.msra.mxu0 %v2724
      %3611 = vmatpush.msra.mxu0 %v2721
      %3612 = vmatpush.msra.mxu0 %v2718
      %3613 = vmatpush.msra.mxu0 %v2715
      %3614 = vmatpush.msra.mxu0 %v2712
      %3615 = vmatmul.f32.gmra.mxu0 %v2499
      %v3616 = vpop.f32.mrf.mxu0
      %v3617 = vadd.f32 %v3558, %v3616
      %3618 = vmatmul.f32.gmra.mxu0 %v2504
      %v3619 = vpop.f32.mrf.mxu0
      %v3620 = vadd.f32 %v3561, %v3619
      %3621 = vmatmul.f32.gmra.mxu0 %v2509
      %v3622 = vpop.f32.mrf.mxu0
      %v3623 = vadd.f32 %v3564, %v3622
      %3624 = vmatmul.f32.gmra.mxu0 %v2514
      %v3625 = vpop.f32.mrf.mxu0
      %v3626 = vadd.f32 %v3567, %v3625
      %3627 = vmatmul.f32.gmra.mxu0 %v2519
      %v3628 = vpop.f32.mrf.mxu0
      %v3629 = vadd.f32 %v3570, %v3628
      %3630 = vmatmul.f32.gmra.mxu0 %v2524
      %v3631 = vpop.f32.mrf.mxu0
      %v3632 = vadd.f32 %v3573, %v3631
      %3633 = vmatmul.f32.gmra.mxu0 %v2529
      %v3634 = vpop.f32.mrf.mxu0
      %v3635 = vadd.f32 %v3576, %v3634
      %3636 = vmatmul.f32.gmra.mxu0 %v2534
      %v3637 = vpop.f32.mrf.mxu0
      %v3638 = vadd.f32 %v3579, %v3637
      %3639 = vmatmul.f32.gmra.mxu0 %v2539
      %v3640 = vpop.f32.mrf.mxu0
      %v3641 = vadd.f32 %v3582, %v3640
      %3642 = vmatmul.f32.gmra.mxu0 %v2544
      %v3643 = vpop.f32.mrf.mxu0
      %v3644 = vadd.f32 %v3585, %v3643
      %3645 = vmatmul.f32.gmra.mxu0 %v2549
      %v3646 = vpop.f32.mrf.mxu0
      %v3647 = vadd.f32 %v3588, %v3646
      %3648 = vmatmul.f32.gmra.mxu0 %v2554
      %v3649 = vpop.f32.mrf.mxu0
      %v3650 = vadd.f32 %v3591, %v3649
      %3651 = vmatmul.f32.gmra.mxu0 %v2559
      %v3652 = vpop.f32.mrf.mxu0
      %v3653 = vadd.f32 %v3594, %v3652
      %3654 = vmatmul.f32.gmra.mxu0 %v2564
      %v3655 = vpop.f32.mrf.mxu0
      %v3656 = vadd.f32 %v3597, %v3655
      %3657 = vdwg.mxu0
      %3658 = vmatpush.msra.mxu0 0.0
      %3659 = vmatpush.msra.mxu0 0.0
      %3660 = vmatpush.msra.mxu0 0.0
      %3661 = vmatpush.msra.mxu0 0.0
      %3662 = vmatpush.msra.mxu0 0.0
      %3663 = vmatpush.msra.mxu0 0.0
      %3664 = vmatpush.msra.mxu0 0.0
      %3665 = vmatpush.msra.mxu0 0.0
      %3666 = vmatpush.msra.mxu0 %v2781
      %3667 = vmatpush.msra.mxu0 %v2778
      %3668 = vmatpush.msra.mxu0 %v2775
      %3669 = vmatpush.msra.mxu0 %v2772
      %3670 = vmatpush.msra.mxu0 %v2769
      %3671 = vmatpush.msra.mxu0 %v2766
      %3672 = vmatpush.msra.mxu0 %v2763
      %3673 = vmatpush.msra.mxu0 %v2760
      %3674 = vmatmul.f32.gmra.mxu0 %v2791
      %v3675 = vpop.f32.mrf.mxu0
      %v3676 = vadd.f32 %v3617, %v3675
      %3677 = vmatmul.f32.gmra.mxu0 %v2794
      %v3678 = vpop.f32.mrf.mxu0
      %v3679 = vadd.f32 %v3620, %v3678
      %3680 = vmatmul.f32.gmra.mxu0 %v2797
      %v3681 = vpop.f32.mrf.mxu0
      %v3682 = vadd.f32 %v3623, %v3681
      %3683 = vmatmul.f32.gmra.mxu0 %v2800
      %v3684 = vpop.f32.mrf.mxu0
      %v3685 = vadd.f32 %v3626, %v3684
      %3686 = vmatmul.f32.gmra.mxu0 %v2803
      %v3687 = vpop.f32.mrf.mxu0
      %v3688 = vadd.f32 %v3629, %v3687
      %3689 = vmatmul.f32.gmra.mxu0 %v2806
      %v3690 = vpop.f32.mrf.mxu0
      %v3691 = vadd.f32 %v3632, %v3690
      %3692 = vmatmul.f32.gmra.mxu0 %v2809
      %v3693 = vpop.f32.mrf.mxu0
      %v3694 = vadd.f32 %v3635, %v3693
      %3695 = vmatmul.f32.gmra.mxu0 %v2812
      %v3696 = vpop.f32.mrf.mxu0
      %v3697 = vadd.f32 %v3638, %v3696
      %3698 = vmatmul.f32.gmra.mxu0 %v2815
      %v3699 = vpop.f32.mrf.mxu0
      %v3700 = vadd.f32 %v3641, %v3699
      %3701 = vmatmul.f32.gmra.mxu0 %v2818
      %v3702 = vpop.f32.mrf.mxu0
      %v3703 = vadd.f32 %v3644, %v3702
      %3704 = vmatmul.f32.gmra.mxu0 %v2821
      %v3705 = vpop.f32.mrf.mxu0
      %v3706 = vadd.f32 %v3647, %v3705
      %3707 = vmatmul.f32.gmra.mxu0 %v2824
      %v3708 = vpop.f32.mrf.mxu0
      %v3709 = vadd.f32 %v3650, %v3708
      %3710 = vmatmul.f32.gmra.mxu0 %v2827
      %v3711 = vpop.f32.mrf.mxu0
      %v3712 = vadd.f32 %v3653, %v3711
      %3713 = vmatmul.f32.gmra.mxu0 %v2830
      %v3714 = vpop.f32.mrf.mxu0
      %v3715 = vadd.f32 %v3656, %v3714
      %3716 = vdwg.mxu0
      %3717 = vst [vmem:[#allocation6] sm:$0xff] %v3086
      %3718 = vst [vmem:[#allocation6 + $0x8] sm:$0xff] %v3381
      %3719 = vst.msk [vmem:[#allocation6 + $0x10] sm:$0xff] %vm708, %v3676
      %3720 = vst [vmem:[#allocation6 + $0x18] sm:$0xff] %v3089
      %3721 = vst [vmem:[#allocation6 + $0x20] sm:$0xff] %v3384
      %3722 = vst.msk [vmem:[#allocation6 + $0x28] sm:$0xff] %vm708, %v3679
      %3723 = vst [vmem:[#allocation6 + $0x30] sm:$0xff] %v3092
      %3724 = vst [vmem:[#allocation6 + $0x38] sm:$0xff] %v3387
      %3725 = vst.msk [vmem:[#allocation6 + $0x40] sm:$0xff] %vm708, %v3682
      %3726 = vst [vmem:[#allocation6 + $0x48] sm:$0xff] %v3095
      %3727 = vst [vmem:[#allocation6 + $0x50] sm:$0xff] %v3390
      %3728 = vst.msk [vmem:[#allocation6 + $0x58] sm:$0xff] %vm708, %v3685
      %3729 = vst [vmem:[#allocation6 + $0x60] sm:$0xff] %v3098
      %3730 = vst [vmem:[#allocation6 + $0x68] sm:$0xff] %v3393
      %3731 = vst.msk [vmem:[#allocation6 + $0x70] sm:$0xff] %vm708, %v3688
      %3732 = vst [vmem:[#allocation6 + $0x78] sm:$0xff] %v3101
      %3733 = vst [vmem:[#allocation6 + $0x80] sm:$0xff] %v3396
      %3734 = vst.msk [vmem:[#allocation6 + $0x88] sm:$0xff] %vm708, %v3691
      %3735 = vst [vmem:[#allocation6 + $0x90] sm:$0xff] %v3104
      %3736 = vst [vmem:[#allocation6 + $0x98] sm:$0xff] %v3399
      %3737 = vst.msk [vmem:[#allocation6 + $0xa0] sm:$0xff] %vm708, %v3694
      %3738 = vst [vmem:[#allocation6 + $0xa8] sm:$0xff] %v3107
      %3739 = vst [vmem:[#allocation6 + $0xb0] sm:$0xff] %v3402
      %3740 = vst.msk [vmem:[#allocation6 + $0xb8] sm:$0xff] %vm708, %v3697
      %3741 = vst [vmem:[#allocation6 + $0xc0] sm:$0xff] %v3110
      %3742 = vst [vmem:[#allocation6 + $0xc8] sm:$0xff] %v3405
      %3743 = vst.msk [vmem:[#allocation6 + $0xd0] sm:$0xff] %vm708, %v3700
      %3744 = vst [vmem:[#allocation6 + $0xd8] sm:$0xff] %v3113
      %3745 = vst [vmem:[#allocation6 + $0xe0] sm:$0xff] %v3408
      %3746 = vst.msk [vmem:[#allocation6 + $0xe8] sm:$0xff] %vm708, %v3703
      %3747 = vst [vmem:[#allocation6 + $0xf0] sm:$0xff] %v3116
      %3748 = vst [vmem:[#allocation6 + $0xf8] sm:$0xff] %v3411
      %3749 = vst.msk [vmem:[#allocation6 + $0x100] sm:$0xff] %vm708, %v3706
      %3750 = vst [vmem:[#allocation6 + $0x108] sm:$0xff] %v3119
      %3751 = vst [vmem:[#allocation6 + $0x110] sm:$0xff] %v3414
      %3752 = vst.msk [vmem:[#allocation6 + $0x118] sm:$0xff] %vm708, %v3709
      %3753 = vst [vmem:[#allocation6 + $0x120] sm:$0xff] %v3122
      %3754 = vst [vmem:[#allocation6 + $0x128] sm:$0xff] %v3417
      %3755 = vst.msk [vmem:[#allocation6 + $0x130] sm:$0xff] %vm708, %v3712
      %3756 = vst [vmem:[#allocation6 + $0x138] sm:$0xff] %v3125
      %3757 = vst [vmem:[#allocation6 + $0x140] sm:$0xff] %v3420
      %3758 = vst.msk [vmem:[#allocation6 + $0x148] sm:$0xff] %vm708, %v3715
      %v3759 = vld [vmem:[#allocation6] sm:$0xff]
      %v3760 = vld [vmem:[#allocation6 + $0x18] sm:$0xff]
      %v3761 = vld [vmem:[#allocation6 + $0x30] sm:$0xff]
      %v3762 = vld [vmem:[#allocation6 + $0x48] sm:$0xff]
      %v3763 = vld [vmem:[#allocation6 + $0x60] sm:$0xff]
      %v3764 = vld [vmem:[#allocation6 + $0x78] sm:$0xff]
      %v3765 = vld [vmem:[#allocation6 + $0x90] sm:$0xff]
      %v3766 = vld [vmem:[#allocation6 + $0xa8] sm:$0xff]
      %v3767 = vld [vmem:[#allocation6 + $0xc0] sm:$0xff]
      %v3768 = vld [vmem:[#allocation6 + $0xd8] sm:$0xff]
      %v3769 = vld [vmem:[#allocation6 + $0xf0] sm:$0xff]
      %v3770 = vld [vmem:[#allocation6 + $0x108] sm:$0xff]
      %v3771 = vld [vmem:[#allocation6 + $0x120] sm:$0xff]
      %v3772 = vld [vmem:[#allocation6 + $0x138] sm:$0xff]
      %3773 = vst [vmem:[%s662] sm:$0xff] %v3759
      %3774 = vst [vmem:[%s662 + $0x8] sm:$0xff] %v3760
      %3775 = vst [vmem:[%s662 + $0x10] sm:$0xff] %v3761
      %3776 = vst [vmem:[%s662 + $0x18] sm:$0xff] %v3762
      %3777 = vst [vmem:[%s662 + $0x20] sm:$0xff] %v3763
      %3778 = vst [vmem:[%s662 + $0x28] sm:$0xff] %v3764
      %3779 = vst [vmem:[%s662 + $0x30] sm:$0xff] %v3765
      %3780 = vst [vmem:[%s662 + $0x38] sm:$0xff] %v3766
      %3781 = vst [vmem:[%s662 + $0x40] sm:$0xff] %v3767
      %3782 = vst [vmem:[%s662 + $0x48] sm:$0xff] %v3768
      %3783 = vst [vmem:[%s662 + $0x50] sm:$0xff] %v3769
      %3784 = vst [vmem:[%s662 + $0x58] sm:$0xff] %v3770
      %3785 = vst [vmem:[%s662 + $0x60] sm:$0xff] %v3771
      %3786 = vst [vmem:[%s662 + $0x68] sm:$0xff] %v3772
      %v3787 = vld [vmem:[%s16] sm:$0xff]
      %v3788 = vld [vmem:[%s16 + $0x8] sm:$0xff]
      %v3789 = vld [vmem:[%s16 + $0x10] sm:$0xff]
      %v3790 = vld [vmem:[%s16 + $0x18] sm:$0xff]
      %v3791 = vld [vmem:[%s16 + $0x20] sm:$0xff]
      %v3792 = vld [vmem:[%s16 + $0x28] sm:$0xff]
      %v3793 = vld [vmem:[%s16 + $0x30] sm:$0xff]
      %v3794 = vld [vmem:[%s16 + $0x38] sm:$0xff]
      %v3795 = vld [vmem:[%s16 + $0x40] sm:$0xff]
      %v3796 = vld [vmem:[%s16 + $0x48] sm:$0xff]
      %v3797 = vld [vmem:[%s16 + $0x50] sm:$0xff]
      %v3798 = vld [vmem:[%s16 + $0x58] sm:$0xff]
      %v3799 = vld [vmem:[%s16 + $0x60] sm:$0xff]
      %v3800 = vld [vmem:[%s16 + $0x68] sm:$0xff]
      %v3801 = vld [vmem:[%s16 + $0x70] sm:$0xff]
      %v3802 = vld [vmem:[%s16 + $0x78] sm:$0xff]
      %v3803 = vld [vmem:[%s16 + $0x80] sm:$0xff]
      %v3804 = vld [vmem:[%s16 + $0x88] sm:$0xff]
      %v3805 = vld [vmem:[%s16 + $0x90] sm:$0xff]
      %v3806 = vld [vmem:[%s16 + $0x98] sm:$0xff]
      %v3807 = vld [vmem:[%s16 + $0xa0] sm:$0xff]
      %v3808 = vld [vmem:[%s16 + $0xa8] sm:$0x1]
      %v3809 = vld [vmem:[#allocation6] sm:$0xff]
      %v3810 = vld [vmem:[#allocation6 + $0x18] sm:$0xff]
      %v3811 = vld [vmem:[#allocation6 + $0x30] sm:$0xff]
      %v3812 = vld [vmem:[#allocation6 + $0x48] sm:$0xff]
      %v3813 = vld [vmem:[#allocation6 + $0x60] sm:$0xff]
      %v3814 = vld [vmem:[#allocation6 + $0x78] sm:$0xff]
      %v3815 = vld [vmem:[#allocation6 + $0x90] sm:$0xff]
      %v3816 = vld [vmem:[#allocation6 + $0xa8] sm:$0xff]
      %v3817 = vld [vmem:[#allocation6 + $0xc0] sm:$0xff]
      %v3818 = vld [vmem:[#allocation6 + $0xd8] sm:$0xff]
      %v3819 = vld [vmem:[#allocation6 + $0xf0] sm:$0xff]
      %v3820 = vld [vmem:[#allocation6 + $0x108] sm:$0xff]
      %v3821 = vld [vmem:[#allocation6 + $0x120] sm:$0xff]
      %v3822 = vld [vmem:[#allocation6 + $0x138] sm:$0xff]
      %s3823 = scalar_lea.vmem %s16, 176
      %v3824 = vld [vmem:[%s3823] sm:$0xff]
      %v3825 = vld [vmem:[%s3823 + $0x8] sm:$0xff]
      %v3826 = vld [vmem:[%s3823 + $0x10] sm:$0xff]
      %v3827 = vld [vmem:[%s3823 + $0x18] sm:$0xff]
      %v3828 = vld [vmem:[%s3823 + $0x20] sm:$0xff]
      %v3829 = vld [vmem:[%s3823 + $0x28] sm:$0xff]
      %v3830 = vld [vmem:[%s3823 + $0x30] sm:$0xff]
      %v3831 = vld [vmem:[%s3823 + $0x38] sm:$0xff]
      %v3832 = vld [vmem:[%s3823 + $0x40] sm:$0xff]
      %v3833 = vld [vmem:[%s3823 + $0x48] sm:$0xff]
      %v3834 = vld [vmem:[%s3823 + $0x50] sm:$0xff]
      %v3835 = vld [vmem:[%s3823 + $0x58] sm:$0xff]
      %v3836 = vld [vmem:[%s3823 + $0x60] sm:$0xff]
      %v3837 = vld [vmem:[%s3823 + $0x68] sm:$0xff]
      %v3838 = vld [vmem:[%s3823 + $0x70] sm:$0xff]
      %v3839 = vld [vmem:[%s3823 + $0x78] sm:$0xff]
      %v3840 = vld [vmem:[%s3823 + $0x80] sm:$0xff]
      %v3841 = vld [vmem:[%s3823 + $0x88] sm:$0xff]
      %v3842 = vld [vmem:[%s3823 + $0x90] sm:$0xff]
      %v3843 = vld [vmem:[%s3823 + $0x98] sm:$0xff]
      %v3844 = vld [vmem:[%s3823 + $0xa0] sm:$0xff]
      %v3845 = vld [vmem:[%s3823 + $0xa8] sm:$0x1]
      %v3846 = vld [vmem:[#allocation6 + $0x8] sm:$0xff]
      %v3847 = vld [vmem:[#allocation6 + $0x20] sm:$0xff]
      %v3848 = vld [vmem:[#allocation6 + $0x38] sm:$0xff]
      %v3849 = vld [vmem:[#allocation6 + $0x50] sm:$0xff]
      %v3850 = vld [vmem:[#allocation6 + $0x68] sm:$0xff]
      %v3851 = vld [vmem:[#allocation6 + $0x80] sm:$0xff]
      %v3852 = vld [vmem:[#allocation6 + $0x98] sm:$0xff]
      %v3853 = vld [vmem:[#allocation6 + $0xb0] sm:$0xff]
      %v3854 = vld [vmem:[#allocation6 + $0xc8] sm:$0xff]
      %v3855 = vld [vmem:[#allocation6 + $0xe0] sm:$0xff]
      %v3856 = vld [vmem:[#allocation6 + $0xf8] sm:$0xff]
      %v3857 = vld [vmem:[#allocation6 + $0x110] sm:$0xff]
      %v3858 = vld [vmem:[#allocation6 + $0x128] sm:$0xff]
      %v3859 = vld [vmem:[#allocation6 + $0x140] sm:$0xff]
      %vm3860 = vcmask 916480
      %v3862 = vsel %vm3860, %v3824, 0
      %v3865 = vsel %vm3860, %v3825, 0
      %v3868 = vsel %vm3860, %v3826, 0
      %v3871 = vsel %vm3860, %v3827, 0
      %v3874 = vsel %vm3860, %v3828, 0
      %v3877 = vsel %vm3860, %v3829, 0
      %v3880 = vsel %vm3860, %v3830, 0
      %v3883 = vsel %vm3860, %v3831, 0
      %v3886 = vsel %vm3860, %v3832, 0
      %v3889 = vsel %vm3860, %v3833, 0
      %v3892 = vsel %vm3860, %v3834, 0
      %v3895 = vsel %vm3860, %v3835, 0
      %v3898 = vsel %vm3860, %v3836, 0
      %v3901 = vsel %vm3860, %v3837, 0
      %v3904 = vsel %vm3860, %v3838, 0
      %v3907 = vsel %vm3860, %v3839, 0
      %v3910 = vsel %vm3860, %v3840, 0
      %v3913 = vsel %vm3860, %v3841, 0
      %v3916 = vsel %vm3860, %v3842, 0
      %v3919 = vsel %vm3860, %v3843, 0
      %v3922 = vsel %vm3860, %v3844, 0
      %v3925 = vsel %vm3860, %v3845, 0
      %3927 = vmatpush.msra.mxu0 0.0
      %3928 = vmatpush.msra.mxu0 0.0
      %3929 = vmatpush.msra.mxu0 %v3859
      %3930 = vmatpush.msra.mxu0 %v3858
      %3931 = vmatpush.msra.mxu0 %v3857
      %3932 = vmatpush.msra.mxu0 %v3856
      %3933 = vmatpush.msra.mxu0 %v3855
      %3934 = vmatpush.msra.mxu0 %v3854
      %3935 = vmatpush.msra.mxu0 %v3853
      %3936 = vmatpush.msra.mxu0 %v3852
      %3937 = vmatpush.msra.mxu0 %v3851
      %3938 = vmatpush.msra.mxu0 %v3850
      %3939 = vmatpush.msra.mxu0 %v3849
      %3940 = vmatpush.msra.mxu0 %v3848
      %3941 = vmatpush.msra.mxu0 %v3847
      %3942 = vmatpush.msra.mxu0 %v3846
      %3943 = vmatmul.f32.gmra.mxu0 %v3862
      %v3944 = vpop.f32.mrf.mxu0
      %v3945 = vadd.f32 0.0, %v3944
      %3946 = vmatmul.f32.gmra.mxu0 %v3865
      %v3947 = vpop.f32.mrf.mxu0
      %v3948 = vadd.f32 0.0, %v3947
      %3949 = vmatmul.f32.gmra.mxu0 %v3868
      %v3950 = vpop.f32.mrf.mxu0
      %v3951 = vadd.f32 0.0, %v3950
      %3952 = vmatmul.f32.gmra.mxu0 %v3871
      %v3953 = vpop.f32.mrf.mxu0
      %v3954 = vadd.f32 0.0, %v3953
      %3955 = vmatmul.f32.gmra.mxu0 %v3874
      %v3956 = vpop.f32.mrf.mxu0
      %v3957 = vadd.f32 0.0, %v3956
      %3958 = vmatmul.f32.gmra.mxu0 %v3877
      %v3959 = vpop.f32.mrf.mxu0
      %v3960 = vadd.f32 0.0, %v3959
      %3961 = vmatmul.f32.gmra.mxu0 %v3880
      %v3962 = vpop.f32.mrf.mxu0
      %v3963 = vadd.f32 0.0, %v3962
      %3964 = vmatmul.f32.gmra.mxu0 %v3883
      %v3965 = vpop.f32.mrf.mxu0
      %v3966 = vadd.f32 0.0, %v3965
      %3967 = vmatmul.f32.gmra.mxu0 %v3886
      %v3968 = vpop.f32.mrf.mxu0
      %v3969 = vadd.f32 0.0, %v3968
      %3970 = vmatmul.f32.gmra.mxu0 %v3889
      %v3971 = vpop.f32.mrf.mxu0
      %v3972 = vadd.f32 0.0, %v3971
      %3973 = vmatmul.f32.gmra.mxu0 %v3892
      %v3974 = vpop.f32.mrf.mxu0
      %v3975 = vadd.f32 0.0, %v3974
      %3976 = vmatmul.f32.gmra.mxu0 %v3895
      %v3977 = vpop.f32.mrf.mxu0
      %v3978 = vadd.f32 0.0, %v3977
      %3979 = vmatmul.f32.gmra.mxu0 %v3898
      %v3980 = vpop.f32.mrf.mxu0
      %v3981 = vadd.f32 0.0, %v3980
      %3982 = vmatmul.f32.gmra.mxu0 %v3901
      %v3983 = vpop.f32.mrf.mxu0
      %v3984 = vadd.f32 0.0, %v3983
      %3985 = vmatmul.f32.gmra.mxu0 %v3904
      %v3986 = vpop.f32.mrf.mxu0
      %v3987 = vadd.f32 0.0, %v3986
      %3988 = vmatmul.f32.gmra.mxu0 %v3907
      %v3989 = vpop.f32.mrf.mxu0
      %v3990 = vadd.f32 0.0, %v3989
      %3991 = vmatmul.f32.gmra.mxu0 %v3910
      %v3992 = vpop.f32.mrf.mxu0
      %v3993 = vadd.f32 0.0, %v3992
      %3994 = vmatmul.f32.gmra.mxu0 %v3913
      %v3995 = vpop.f32.mrf.mxu0
      %v3996 = vadd.f32 0.0, %v3995
      %3997 = vmatmul.f32.gmra.mxu0 %v3916
      %v3998 = vpop.f32.mrf.mxu0
      %v3999 = vadd.f32 0.0, %v3998
      %4000 = vmatmul.f32.gmra.mxu0 %v3919
      %v4001 = vpop.f32.mrf.mxu0
      %v4002 = vadd.f32 0.0, %v4001
      %4003 = vmatmul.f32.gmra.mxu0 %v3922
      %v4004 = vpop.f32.mrf.mxu0
      %v4005 = vadd.f32 0.0, %v4004
      %4006 = vmatmul.f32.gmra.mxu0 %v3925
      %v4007 = vpop.f32.mrf.mxu0
      %v4008 = vadd.f32 0.0, %v4007
      %4009 = vdwg.mxu0
      %4024 = vrot.lane.b32.xlu0 %v3809, 64
      %v4025 = vpop.permute.xlu0 %4024
      %4026 = vrot.lane.b32.xlu0 %v3810, 64
      %v4027 = vpop.permute.xlu0 %4026
      %4028 = vrot.lane.b32.xlu0 %v3811, 64
      %v4029 = vpop.permute.xlu0 %4028
      %4030 = vrot.lane.b32.xlu0 %v3812, 64
      %v4031 = vpop.permute.xlu0 %4030
      %4032 = vrot.lane.b32.xlu0 %v3813, 64
      %v4033 = vpop.permute.xlu0 %4032
      %4034 = vrot.lane.b32.xlu0 %v3814, 64
      %v4035 = vpop.permute.xlu0 %4034
      %4036 = vrot.lane.b32.xlu0 %v3815, 64
      %v4037 = vpop.permute.xlu0 %4036
      %4038 = vrot.lane.b32.xlu0 %v3816, 64
      %v4039 = vpop.permute.xlu0 %4038
      %4040 = vrot.lane.b32.xlu0 %v3817, 64
      %v4041 = vpop.permute.xlu0 %4040
      %4042 = vrot.lane.b32.xlu0 %v3818, 64
      %v4043 = vpop.permute.xlu0 %4042
      %4044 = vrot.lane.b32.xlu0 %v3819, 64
      %v4045 = vpop.permute.xlu0 %4044
      %4046 = vrot.lane.b32.xlu0 %v3820, 64
      %v4047 = vpop.permute.xlu0 %4046
      %4048 = vrot.lane.b32.xlu0 %v3821, 64
      %v4049 = vpop.permute.xlu0 %4048
      %4050 = vrot.lane.b32.xlu0 %v3822, 64
      %v4051 = vpop.permute.xlu0 %4050
      %v4067 = vsel %vm3860, %v3787, 0
      %v4070 = vsel %vm3860, %v3788, 0
      %v4073 = vsel %vm3860, %v3789, 0
      %v4076 = vsel %vm3860, %v3790, 0
      %v4079 = vsel %vm3860, %v3791, 0
      %v4082 = vsel %vm3860, %v3792, 0
      %v4085 = vsel %vm3860, %v3793, 0
      %v4088 = vsel %vm3860, %v3794, 0
      %v4091 = vsel %vm3860, %v3795, 0
      %v4094 = vsel %vm3860, %v3796, 0
      %v4097 = vsel %vm3860, %v3797, 0
      %v4100 = vsel %vm3860, %v3798, 0
      %v4103 = vsel %vm3860, %v3799, 0
      %v4106 = vsel %vm3860, %v3800, 0
      %v4109 = vsel %vm3860, %v3801, 0
      %v4112 = vsel %vm3860, %v3802, 0
      %v4115 = vsel %vm3860, %v3803, 0
      %v4118 = vsel %vm3860, %v3804, 0
      %v4121 = vsel %vm3860, %v3805, 0
      %v4124 = vsel %vm3860, %v3806, 0
      %v4127 = vsel %vm3860, %v3807, 0
      %v4130 = vsel %vm3860, %v3808, 0
      %4132 = vmatpush.msra.mxu0 0.0
      %4133 = vmatpush.msra.mxu0 0.0
      %4134 = vmatpush.msra.mxu0 %v4051
      %4135 = vmatpush.msra.mxu0 %v4049
      %4136 = vmatpush.msra.mxu0 %v4047
      %4137 = vmatpush.msra.mxu0 %v4045
      %4138 = vmatpush.msra.mxu0 %v4043
      %4139 = vmatpush.msra.mxu0 %v4041
      %4140 = vmatpush.msra.mxu0 %v4039
      %4141 = vmatpush.msra.mxu0 %v4037
      %4142 = vmatpush.msra.mxu0 %v4035
      %4143 = vmatpush.msra.mxu0 %v4033
      %4144 = vmatpush.msra.mxu0 %v4031
      %4145 = vmatpush.msra.mxu0 %v4029
      %4146 = vmatpush.msra.mxu0 %v4027
      %4147 = vmatpush.msra.mxu0 %v4025
      %4148 = vmatmul.f32.gmra.mxu0 %v4067
      %v4149 = vpop.f32.mrf.mxu0
      %v4150 = vadd.f32 %v3945, %v4149
      %4151 = vmatmul.f32.gmra.mxu0 %v4070
      %v4152 = vpop.f32.mrf.mxu0
      %v4153 = vadd.f32 %v3948, %v4152
      %4154 = vmatmul.f32.gmra.mxu0 %v4073
      %v4155 = vpop.f32.mrf.mxu0
      %v4156 = vadd.f32 %v3951, %v4155
      %4157 = vmatmul.f32.gmra.mxu0 %v4076
      %v4158 = vpop.f32.mrf.mxu0
      %v4159 = vadd.f32 %v3954, %v4158
      %4160 = vmatmul.f32.gmra.mxu0 %v4079
      %v4161 = vpop.f32.mrf.mxu0
      %v4162 = vadd.f32 %v3957, %v4161
      %4163 = vmatmul.f32.gmra.mxu0 %v4082
      %v4164 = vpop.f32.mrf.mxu0
      %v4165 = vadd.f32 %v3960, %v4164
      %4166 = vmatmul.f32.gmra.mxu0 %v4085
      %v4167 = vpop.f32.mrf.mxu0
      %v4168 = vadd.f32 %v3963, %v4167
      %4169 = vmatmul.f32.gmra.mxu0 %v4088
      %v4170 = vpop.f32.mrf.mxu0
      %v4171 = vadd.f32 %v3966, %v4170
      %4172 = vmatmul.f32.gmra.mxu0 %v4091
      %v4173 = vpop.f32.mrf.mxu0
      %v4174 = vadd.f32 %v3969, %v4173
      %4175 = vmatmul.f32.gmra.mxu0 %v4094
      %v4176 = vpop.f32.mrf.mxu0
      %v4177 = vadd.f32 %v3972, %v4176
      %4178 = vmatmul.f32.gmra.mxu0 %v4097
      %v4179 = vpop.f32.mrf.mxu0
      %v4180 = vadd.f32 %v3975, %v4179
      %4181 = vmatmul.f32.gmra.mxu0 %v4100
      %v4182 = vpop.f32.mrf.mxu0
      %v4183 = vadd.f32 %v3978, %v4182
      %4184 = vmatmul.f32.gmra.mxu0 %v4103
      %v4185 = vpop.f32.mrf.mxu0
      %v4186 = vadd.f32 %v3981, %v4185
      %4187 = vmatmul.f32.gmra.mxu0 %v4106
      %v4188 = vpop.f32.mrf.mxu0
      %v4189 = vadd.f32 %v3984, %v4188
      %4190 = vmatmul.f32.gmra.mxu0 %v4109
      %v4191 = vpop.f32.mrf.mxu0
      %v4192 = vadd.f32 %v3987, %v4191
      %4193 = vmatmul.f32.gmra.mxu0 %v4112
      %v4194 = vpop.f32.mrf.mxu0
      %v4195 = vadd.f32 %v3990, %v4194
      %4196 = vmatmul.f32.gmra.mxu0 %v4115
      %v4197 = vpop.f32.mrf.mxu0
      %v4198 = vadd.f32 %v3993, %v4197
      %4199 = vmatmul.f32.gmra.mxu0 %v4118
      %v4200 = vpop.f32.mrf.mxu0
      %v4201 = vadd.f32 %v3996, %v4200
      %4202 = vmatmul.f32.gmra.mxu0 %v4121
      %v4203 = vpop.f32.mrf.mxu0
      %v4204 = vadd.f32 %v3999, %v4203
      %4205 = vmatmul.f32.gmra.mxu0 %v4124
      %v4206 = vpop.f32.mrf.mxu0
      %v4207 = vadd.f32 %v4002, %v4206
      %4208 = vmatmul.f32.gmra.mxu0 %v4127
      %v4209 = vpop.f32.mrf.mxu0
      %v4210 = vadd.f32 %v4005, %v4209
      %4211 = vmatmul.f32.gmra.mxu0 %v4130
      %v4212 = vpop.f32.mrf.mxu0
      %v4213 = vadd.f32 %v4008, %v4212
      %4214 = vdwg.mxu0
      %s4215 = scalar_lea.vmem %s16, 352
      %v4216 = vld [vmem:[%s4215] sm:$0xff]
      %v4217 = vld [vmem:[%s4215 + $0x8] sm:$0xff]
      %v4218 = vld [vmem:[%s4215 + $0x10] sm:$0xff]
      %v4219 = vld [vmem:[%s4215 + $0x18] sm:$0xff]
      %v4220 = vld [vmem:[%s4215 + $0x20] sm:$0xff]
      %v4221 = vld [vmem:[%s4215 + $0x28] sm:$0xff]
      %v4222 = vld [vmem:[%s4215 + $0x30] sm:$0xff]
      %v4223 = vld [vmem:[%s4215 + $0x38] sm:$0xff]
      %v4224 = vld [vmem:[%s4215 + $0x40] sm:$0xff]
      %v4225 = vld [vmem:[%s4215 + $0x48] sm:$0xff]
      %v4226 = vld [vmem:[%s4215 + $0x50] sm:$0xff]
      %v4227 = vld [vmem:[%s4215 + $0x58] sm:$0xff]
      %v4228 = vld [vmem:[%s4215 + $0x60] sm:$0xff]
      %v4229 = vld [vmem:[%s4215 + $0x68] sm:$0xff]
      %v4230 = vld [vmem:[%s4215 + $0x70] sm:$0xff]
      %v4231 = vld [vmem:[%s4215 + $0x78] sm:$0xff]
      %v4232 = vld [vmem:[%s4215 + $0x80] sm:$0xff]
      %v4233 = vld [vmem:[%s4215 + $0x88] sm:$0xff]
      %v4234 = vld [vmem:[%s4215 + $0x90] sm:$0xff]
      %v4235 = vld [vmem:[%s4215 + $0x98] sm:$0xff]
      %v4236 = vld [vmem:[%s4215 + $0xa0] sm:$0xff]
      %v4237 = vld [vmem:[%s4215 + $0xa8] sm:$0x1]
      %4252 = vrot.lane.b32.xlu0 %v3846, 64
      %v4253 = vpop.permute.xlu0 %4252
      %4254 = vrot.lane.b32.xlu0 %v3847, 64
      %v4255 = vpop.permute.xlu0 %4254
      %4256 = vrot.lane.b32.xlu0 %v3848, 64
      %v4257 = vpop.permute.xlu0 %4256
      %4258 = vrot.lane.b32.xlu0 %v3849, 64
      %v4259 = vpop.permute.xlu0 %4258
      %4260 = vrot.lane.b32.xlu0 %v3850, 64
      %v4261 = vpop.permute.xlu0 %4260
      %4262 = vrot.lane.b32.xlu0 %v3851, 64
      %v4263 = vpop.permute.xlu0 %4262
      %4264 = vrot.lane.b32.xlu0 %v3852, 64
      %v4265 = vpop.permute.xlu0 %4264
      %4266 = vrot.lane.b32.xlu0 %v3853, 64
      %v4267 = vpop.permute.xlu0 %4266
      %4268 = vrot.lane.b32.xlu0 %v3854, 64
      %v4269 = vpop.permute.xlu0 %4268
      %4270 = vrot.lane.b32.xlu0 %v3855, 64
      %v4271 = vpop.permute.xlu0 %4270
      %4272 = vrot.lane.b32.xlu0 %v3856, 64
      %v4273 = vpop.permute.xlu0 %4272
      %4274 = vrot.lane.b32.xlu0 %v3857, 64
      %v4275 = vpop.permute.xlu0 %4274
      %4276 = vrot.lane.b32.xlu0 %v3858, 64
      %v4277 = vpop.permute.xlu0 %4276
      %4278 = vrot.lane.b32.xlu0 %v3859, 64
      %v4279 = vpop.permute.xlu0 %4278
      %v4295 = vsel %vm3860, %v4216, 0
      %v4298 = vsel %vm3860, %v4217, 0
      %v4301 = vsel %vm3860, %v4218, 0
      %v4304 = vsel %vm3860, %v4219, 0
      %v4307 = vsel %vm3860, %v4220, 0
      %v4310 = vsel %vm3860, %v4221, 0
      %v4313 = vsel %vm3860, %v4222, 0
      %v4316 = vsel %vm3860, %v4223, 0
      %v4319 = vsel %vm3860, %v4224, 0
      %v4322 = vsel %vm3860, %v4225, 0
      %v4325 = vsel %vm3860, %v4226, 0
      %v4328 = vsel %vm3860, %v4227, 0
      %v4331 = vsel %vm3860, %v4228, 0
      %v4334 = vsel %vm3860, %v4229, 0
      %v4337 = vsel %vm3860, %v4230, 0
      %v4340 = vsel %vm3860, %v4231, 0
      %v4343 = vsel %vm3860, %v4232, 0
      %v4346 = vsel %vm3860, %v4233, 0
      %v4349 = vsel %vm3860, %v4234, 0
      %v4352 = vsel %vm3860, %v4235, 0
      %v4355 = vsel %vm3860, %v4236, 0
      %v4358 = vsel %vm3860, %v4237, 0
      %4360 = vmatpush.msra.mxu0 0.0
      %4361 = vmatpush.msra.mxu0 0.0
      %4362 = vmatpush.msra.mxu0 %v4279
      %4363 = vmatpush.msra.mxu0 %v4277
      %4364 = vmatpush.msra.mxu0 %v4275
      %4365 = vmatpush.msra.mxu0 %v4273
      %4366 = vmatpush.msra.mxu0 %v4271
      %4367 = vmatpush.msra.mxu0 %v4269
      %4368 = vmatpush.msra.mxu0 %v4267
      %4369 = vmatpush.msra.mxu0 %v4265
      %4370 = vmatpush.msra.mxu0 %v4263
      %4371 = vmatpush.msra.mxu0 %v4261
      %4372 = vmatpush.msra.mxu0 %v4259
      %4373 = vmatpush.msra.mxu0 %v4257
      %4374 = vmatpush.msra.mxu0 %v4255
      %4375 = vmatpush.msra.mxu0 %v4253
      %4376 = vmatmul.f32.gmra.mxu0 %v4295
      %v4377 = vpop.f32.mrf.mxu0
      %v4378 = vadd.f32 0.0, %v4377
      %4379 = vmatmul.f32.gmra.mxu0 %v4298
      %v4380 = vpop.f32.mrf.mxu0
      %v4381 = vadd.f32 0.0, %v4380
      %4382 = vmatmul.f32.gmra.mxu0 %v4301
      %v4383 = vpop.f32.mrf.mxu0
      %v4384 = vadd.f32 0.0, %v4383
      %4385 = vmatmul.f32.gmra.mxu0 %v4304
      %v4386 = vpop.f32.mrf.mxu0
      %v4387 = vadd.f32 0.0, %v4386
      %4388 = vmatmul.f32.gmra.mxu0 %v4307
      %v4389 = vpop.f32.mrf.mxu0
      %v4390 = vadd.f32 0.0, %v4389
      %4391 = vmatmul.f32.gmra.mxu0 %v4310
      %v4392 = vpop.f32.mrf.mxu0
      %v4393 = vadd.f32 0.0, %v4392
      %4394 = vmatmul.f32.gmra.mxu0 %v4313
      %v4395 = vpop.f32.mrf.mxu0
      %v4396 = vadd.f32 0.0, %v4395
      %4397 = vmatmul.f32.gmra.mxu0 %v4316
      %v4398 = vpop.f32.mrf.mxu0
      %v4399 = vadd.f32 0.0, %v4398
      %4400 = vmatmul.f32.gmra.mxu0 %v4319
      %v4401 = vpop.f32.mrf.mxu0
      %v4402 = vadd.f32 0.0, %v4401
      %4403 = vmatmul.f32.gmra.mxu0 %v4322
      %v4404 = vpop.f32.mrf.mxu0
      %v4405 = vadd.f32 0.0, %v4404
      %4406 = vmatmul.f32.gmra.mxu0 %v4325
      %v4407 = vpop.f32.mrf.mxu0
      %v4408 = vadd.f32 0.0, %v4407
      %4409 = vmatmul.f32.gmra.mxu0 %v4328
      %v4410 = vpop.f32.mrf.mxu0
      %v4411 = vadd.f32 0.0, %v4410
      %4412 = vmatmul.f32.gmra.mxu0 %v4331
      %v4413 = vpop.f32.mrf.mxu0
      %v4414 = vadd.f32 0.0, %v4413
      %4415 = vmatmul.f32.gmra.mxu0 %v4334
      %v4416 = vpop.f32.mrf.mxu0
      %v4417 = vadd.f32 0.0, %v4416
      %4418 = vmatmul.f32.gmra.mxu0 %v4337
      %v4419 = vpop.f32.mrf.mxu0
      %v4420 = vadd.f32 0.0, %v4419
      %4421 = vmatmul.f32.gmra.mxu0 %v4340
      %v4422 = vpop.f32.mrf.mxu0
      %v4423 = vadd.f32 0.0, %v4422
      %4424 = vmatmul.f32.gmra.mxu0 %v4343
      %v4425 = vpop.f32.mrf.mxu0
      %v4426 = vadd.f32 0.0, %v4425
      %4427 = vmatmul.f32.gmra.mxu0 %v4346
      %v4428 = vpop.f32.mrf.mxu0
      %v4429 = vadd.f32 0.0, %v4428
      %4430 = vmatmul.f32.gmra.mxu0 %v4349
      %v4431 = vpop.f32.mrf.mxu0
      %v4432 = vadd.f32 0.0, %v4431
      %4433 = vmatmul.f32.gmra.mxu0 %v4352
      %v4434 = vpop.f32.mrf.mxu0
      %v4435 = vadd.f32 0.0, %v4434
      %4436 = vmatmul.f32.gmra.mxu0 %v4355
      %v4437 = vpop.f32.mrf.mxu0
      %v4438 = vadd.f32 0.0, %v4437
      %4439 = vmatmul.f32.gmra.mxu0 %v4358
      %v4440 = vpop.f32.mrf.mxu0
      %v4441 = vadd.f32 0.0, %v4440
      %4442 = vdwg.mxu0
      %v4443 = vadd.f32 %v4150, %v4378
      %v4444 = vadd.f32 %v4153, %v4381
      %v4445 = vadd.f32 %v4156, %v4384
      %v4446 = vadd.f32 %v4159, %v4387
      %v4447 = vadd.f32 %v4162, %v4390
      %v4448 = vadd.f32 %v4165, %v4393
      %v4449 = vadd.f32 %v4168, %v4396
      %v4450 = vadd.f32 %v4171, %v4399
      %v4451 = vadd.f32 %v4174, %v4402
      %v4452 = vadd.f32 %v4177, %v4405
      %v4453 = vadd.f32 %v4180, %v4408
      %v4454 = vadd.f32 %v4183, %v4411
      %v4455 = vadd.f32 %v4186, %v4414
      %v4456 = vadd.f32 %v4189, %v4417
      %v4457 = vadd.f32 %v4192, %v4420
      %v4458 = vadd.f32 %v4195, %v4423
      %v4459 = vadd.f32 %v4198, %v4426
      %v4460 = vadd.f32 %v4201, %v4429
      %v4461 = vadd.f32 %v4204, %v4432
      %v4462 = vadd.f32 %v4207, %v4435
      %v4463 = vadd.f32 %v4210, %v4438
      %v4464 = vadd.f32 %v4213, %v4441
      %s4465 = scalar_lea.vmem %s16, 528
      %v4466 = vld [vmem:[%s4465] sm:$0xff]
      %v4467 = vld [vmem:[%s4465 + $0x8] sm:$0xff]
      %v4468 = vld [vmem:[%s4465 + $0x10] sm:$0xff]
      %v4469 = vld [vmem:[%s4465 + $0x18] sm:$0xff]
      %v4470 = vld [vmem:[%s4465 + $0x20] sm:$0xff]
      %v4471 = vld [vmem:[%s4465 + $0x28] sm:$0xff]
      %v4472 = vld [vmem:[%s4465 + $0x30] sm:$0xff]
      %v4473 = vld [vmem:[%s4465 + $0x38] sm:$0xff]
      %v4474 = vld [vmem:[%s4465 + $0x40] sm:$0xff]
      %v4475 = vld [vmem:[%s4465 + $0x48] sm:$0xff]
      %v4476 = vld [vmem:[%s4465 + $0x50] sm:$0xff]
      %v4477 = vld [vmem:[%s4465 + $0x58] sm:$0xff]
      %v4478 = vld [vmem:[%s4465 + $0x60] sm:$0xff]
      %v4479 = vld [vmem:[%s4465 + $0x68] sm:$0xff]
      %v4480 = vld [vmem:[%s4465 + $0x70] sm:$0xff]
      %v4481 = vld [vmem:[%s4465 + $0x78] sm:$0xff]
      %v4482 = vld [vmem:[%s4465 + $0x80] sm:$0xff]
      %v4483 = vld [vmem:[%s4465 + $0x88] sm:$0xff]
      %v4484 = vld [vmem:[%s4465 + $0x90] sm:$0xff]
      %v4485 = vld [vmem:[%s4465 + $0x98] sm:$0xff]
      %v4486 = vld [vmem:[%s4465 + $0xa0] sm:$0xff]
      %v4487 = vld [vmem:[%s4465 + $0xa8] sm:$0x1]
      %v4488 = vld [vmem:[#allocation6 + $0x10] sm:$0xff]
      %v4489 = vld [vmem:[#allocation6 + $0x28] sm:$0xff]
      %v4490 = vld [vmem:[#allocation6 + $0x40] sm:$0xff]
      %v4491 = vld [vmem:[#allocation6 + $0x58] sm:$0xff]
      %v4492 = vld [vmem:[#allocation6 + $0x70] sm:$0xff]
      %v4493 = vld [vmem:[#allocation6 + $0x88] sm:$0xff]
      %v4494 = vld [vmem:[#allocation6 + $0xa0] sm:$0xff]
      %v4495 = vld [vmem:[#allocation6 + $0xb8] sm:$0xff]
      %v4496 = vld [vmem:[#allocation6 + $0xd0] sm:$0xff]
      %v4497 = vld [vmem:[#allocation6 + $0xe8] sm:$0xff]
      %v4498 = vld [vmem:[#allocation6 + $0x100] sm:$0xff]
      %v4499 = vld [vmem:[#allocation6 + $0x118] sm:$0xff]
      %v4500 = vld [vmem:[#allocation6 + $0x130] sm:$0xff]
      %v4501 = vld [vmem:[#allocation6 + $0x148] sm:$0xff]
      %v4503 = vsel %vm3860, %v4466, 0
      %v4506 = vsel %vm3860, %v4467, 0
      %v4509 = vsel %vm3860, %v4468, 0
      %v4512 = vsel %vm3860, %v4469, 0
      %v4515 = vsel %vm3860, %v4470, 0
      %v4518 = vsel %vm3860, %v4471, 0
      %v4521 = vsel %vm3860, %v4472, 0
      %v4524 = vsel %vm3860, %v4473, 0
      %v4527 = vsel %vm3860, %v4474, 0
      %v4530 = vsel %vm3860, %v4475, 0
      %v4533 = vsel %vm3860, %v4476, 0
      %v4536 = vsel %vm3860, %v4477, 0
      %v4539 = vsel %vm3860, %v4478, 0
      %v4542 = vsel %vm3860, %v4479, 0
      %v4545 = vsel %vm3860, %v4480, 0
      %v4548 = vsel %vm3860, %v4481, 0
      %v4551 = vsel %vm3860, %v4482, 0
      %v4554 = vsel %vm3860, %v4483, 0
      %v4557 = vsel %vm3860, %v4484, 0
      %v4560 = vsel %vm3860, %v4485, 0
      %v4563 = vsel %vm3860, %v4486, 0
      %v4566 = vsel %vm3860, %v4487, 0
      %4568 = vmatpush.msra.mxu0 0.0
      %4569 = vmatpush.msra.mxu0 0.0
      %4570 = vmatpush.msra.mxu0 %v4501
      %4571 = vmatpush.msra.mxu0 %v4500
      %4572 = vmatpush.msra.mxu0 %v4499
      %4573 = vmatpush.msra.mxu0 %v4498
      %4574 = vmatpush.msra.mxu0 %v4497
      %4575 = vmatpush.msra.mxu0 %v4496
      %4576 = vmatpush.msra.mxu0 %v4495
      %4577 = vmatpush.msra.mxu0 %v4494
      %4578 = vmatpush.msra.mxu0 %v4493
      %4579 = vmatpush.msra.mxu0 %v4492
      %4580 = vmatpush.msra.mxu0 %v4491
      %4581 = vmatpush.msra.mxu0 %v4490
      %4582 = vmatpush.msra.mxu0 %v4489
      %4583 = vmatpush.msra.mxu0 %v4488
      %4584 = vmatmul.f32.gmra.mxu0 %v4503
      %v4585 = vpop.f32.mrf.mxu0
      %v4586 = vadd.f32 0.0, %v4585
      %4587 = vmatmul.f32.gmra.mxu0 %v4506
      %v4588 = vpop.f32.mrf.mxu0
      %v4589 = vadd.f32 0.0, %v4588
      %4590 = vmatmul.f32.gmra.mxu0 %v4509
      %v4591 = vpop.f32.mrf.mxu0
      %v4592 = vadd.f32 0.0, %v4591
      %4593 = vmatmul.f32.gmra.mxu0 %v4512
      %v4594 = vpop.f32.mrf.mxu0
      %v4595 = vadd.f32 0.0, %v4594
      %4596 = vmatmul.f32.gmra.mxu0 %v4515
      %v4597 = vpop.f32.mrf.mxu0
      %v4598 = vadd.f32 0.0, %v4597
      %4599 = vmatmul.f32.gmra.mxu0 %v4518
      %v4600 = vpop.f32.mrf.mxu0
      %v4601 = vadd.f32 0.0, %v4600
      %4602 = vmatmul.f32.gmra.mxu0 %v4521
      %v4603 = vpop.f32.mrf.mxu0
      %v4604 = vadd.f32 0.0, %v4603
      %4605 = vmatmul.f32.gmra.mxu0 %v4524
      %v4606 = vpop.f32.mrf.mxu0
      %v4607 = vadd.f32 0.0, %v4606
      %4608 = vmatmul.f32.gmra.mxu0 %v4527
      %v4609 = vpop.f32.mrf.mxu0
      %v4610 = vadd.f32 0.0, %v4609
      %4611 = vmatmul.f32.gmra.mxu0 %v4530
      %v4612 = vpop.f32.mrf.mxu0
      %v4613 = vadd.f32 0.0, %v4612
      %4614 = vmatmul.f32.gmra.mxu0 %v4533
      %v4615 = vpop.f32.mrf.mxu0
      %v4616 = vadd.f32 0.0, %v4615
      %4617 = vmatmul.f32.gmra.mxu0 %v4536
      %v4618 = vpop.f32.mrf.mxu0
      %v4619 = vadd.f32 0.0, %v4618
      %4620 = vmatmul.f32.gmra.mxu0 %v4539
      %v4621 = vpop.f32.mrf.mxu0
      %v4622 = vadd.f32 0.0, %v4621
      %4623 = vmatmul.f32.gmra.mxu0 %v4542
      %v4624 = vpop.f32.mrf.mxu0
      %v4625 = vadd.f32 0.0, %v4624
      %4626 = vmatmul.f32.gmra.mxu0 %v4545
      %v4627 = vpop.f32.mrf.mxu0
      %v4628 = vadd.f32 0.0, %v4627
      %4629 = vmatmul.f32.gmra.mxu0 %v4548
      %v4630 = vpop.f32.mrf.mxu0
      %v4631 = vadd.f32 0.0, %v4630
      %4632 = vmatmul.f32.gmra.mxu0 %v4551
      %v4633 = vpop.f32.mrf.mxu0
      %v4634 = vadd.f32 0.0, %v4633
      %4635 = vmatmul.f32.gmra.mxu0 %v4554
      %v4636 = vpop.f32.mrf.mxu0
      %v4637 = vadd.f32 0.0, %v4636
      %4638 = vmatmul.f32.gmra.mxu0 %v4557
      %v4639 = vpop.f32.mrf.mxu0
      %v4640 = vadd.f32 0.0, %v4639
      %4641 = vmatmul.f32.gmra.mxu0 %v4560
      %v4642 = vpop.f32.mrf.mxu0
      %v4643 = vadd.f32 0.0, %v4642
      %4644 = vmatmul.f32.gmra.mxu0 %v4563
      %v4645 = vpop.f32.mrf.mxu0
      %v4646 = vadd.f32 0.0, %v4645
      %4647 = vmatmul.f32.gmra.mxu0 %v4566
      %v4648 = vpop.f32.mrf.mxu0
      %v4649 = vadd.f32 0.0, %v4648
      %4650 = vdwg.mxu0
      %v4651 = vadd.f32 %v4443, %v4586
      %v4652 = vadd.f32 %v4444, %v4589
      %v4653 = vadd.f32 %v4445, %v4592
      %v4654 = vadd.f32 %v4446, %v4595
      %v4655 = vadd.f32 %v4447, %v4598
      %v4656 = vadd.f32 %v4448, %v4601
      %v4657 = vadd.f32 %v4449, %v4604
      %v4658 = vadd.f32 %v4450, %v4607
      %v4659 = vadd.f32 %v4451, %v4610
      %v4660 = vadd.f32 %v4452, %v4613
      %v4661 = vadd.f32 %v4453, %v4616
      %v4662 = vadd.f32 %v4454, %v4619
      %v4663 = vadd.f32 %v4455, %v4622
      %v4664 = vadd.f32 %v4456, %v4625
      %v4665 = vadd.f32 %v4457, %v4628
      %v4666 = vadd.f32 %v4458, %v4631
      %v4667 = vadd.f32 %v4459, %v4634
      %v4668 = vadd.f32 %v4460, %v4637
      %v4669 = vadd.f32 %v4461, %v4640
      %v4670 = vadd.f32 %v4462, %v4643
      %v4671 = vadd.f32 %v4463, %v4646
      %v4672 = vadd.f32 %v4464, %v4649
      %v4673 = vld [vmem:[%s652] sm:$0xff]
      %v4674 = vld [vmem:[%s652 + $0x8] sm:$0xff]
      %v4675 = vld [vmem:[%s652 + $0x10] sm:$0xff]
      %v4676 = vld [vmem:[%s652 + $0x18] sm:$0xff]
      %v4677 = vld [vmem:[%s652 + $0x20] sm:$0xff]
      %v4678 = vld [vmem:[%s652 + $0x28] sm:$0xff]
      %v4679 = vld [vmem:[%s652 + $0x30] sm:$0xff]
      %v4680 = vld [vmem:[%s652 + $0x38] sm:$0xff]
      %v4681 = vld [vmem:[%s652 + $0x40] sm:$0xff]
      %v4682 = vld [vmem:[%s652 + $0x48] sm:$0xff]
      %v4683 = vld [vmem:[%s652 + $0x50] sm:$0xff]
      %v4684 = vld [vmem:[%s652 + $0x58] sm:$0xff]
      %v4685 = vld [vmem:[%s652 + $0x60] sm:$0xff]
      %v4686 = vld [vmem:[%s652 + $0x68] sm:$0xff]
      %v4687 = vld [vmem:[%s652 + $0x70] sm:$0xff]
      %v4688 = vld [vmem:[%s652 + $0x78] sm:$0xff]
      %v4689 = vld [vmem:[%s652 + $0x80] sm:$0xff]
      %v4690 = vld [vmem:[%s652 + $0x88] sm:$0xff]
      %v4691 = vld [vmem:[%s652 + $0x90] sm:$0xff]
      %v4692 = vld [vmem:[%s652 + $0x98] sm:$0xff]
      %v4693 = vld [vmem:[%s652 + $0xa0] sm:$0xff]
      %v4694 = vld [vmem:[%s652 + $0xa8] sm:$0x1]
      %v4695 = vld [vmem:[%s11] sm:$0xff]
      %v4696 = vld [vmem:[%s11 + $0x8] sm:$0xff]
      %v4697 = vld [vmem:[%s12] sm:$0x1]
      %v4699 = vperm.slane %v4697, 0
      %vm4701 = vcmask 130048
      %v4703 = vsel %vm4701, %v4673, 0
      %v4706 = vsel %vm4701, %v4674, 0
      %v4709 = vsel %vm4701, %v4675, 0
      %v4712 = vsel %vm4701, %v4676, 0
      %v4715 = vsel %vm4701, %v4677, 0
      %v4718 = vsel %vm4701, %v4678, 0
      %v4721 = vsel %vm4701, %v4679, 0
      %v4724 = vsel %vm4701, %v4680, 0
      %v4727 = vsel %vm4701, %v4681, 0
      %v4730 = vsel %vm4701, %v4682, 0
      %v4733 = vsel %vm4701, %v4683, 0
      %v4736 = vsel %vm4701, %v4684, 0
      %v4739 = vsel %vm4701, %v4685, 0
      %v4742 = vsel %vm4701, %v4686, 0
      %v4745 = vsel %vm4701, %v4687, 0
      %v4748 = vsel %vm4701, %v4688, 0
      %v4751 = vsel %vm4701, %v4689, 0
      %v4754 = vsel %vm4701, %v4690, 0
      %v4757 = vsel %vm4701, %v4691, 0
      %v4760 = vsel %vm4701, %v4692, 0
      %v4763 = vsel %vm4701, %v4693, 0
      %v4766 = vsel %vm4701, %v4694, 0
      %4768 = vmatpush.msra.mxu0 0.0
      %4769 = vmatpush.msra.mxu0 0.0
      %4770 = vmatpush.msra.mxu0 0.0
      %4771 = vmatpush.msra.mxu0 0.0
      %4772 = vmatpush.msra.mxu0 0.0
      %4773 = vmatpush.msra.mxu0 0.0
      %4774 = vmatpush.msra.mxu0 0.0
      %4775 = vmatpush.msra.mxu0 0.0
      %4776 = vmatpush.msra.mxu0 0.0
      %4777 = vmatpush.msra.mxu0 0.0
      %4778 = vmatpush.msra.mxu0 0.0
      %4779 = vmatpush.msra.mxu0 0.0
      %4780 = vmatpush.msra.mxu0 0.0
      %4781 = vmatpush.msra.mxu0 0.0
      %4782 = vmatpush.msra.mxu0 %v4696
      %4783 = vmatpush.msra.mxu0 %v4695
      %4784 = vmatmul.f32.gmra.mxu0 %v4703
      %v4785 = vpop.f32.mrf.mxu0
      %v4786 = vadd.f32 %v4699, %v4785
      %4787 = vmatmul.f32.gmra.mxu0 %v4706
      %v4788 = vpop.f32.mrf.mxu0
      %v4789 = vadd.f32 %v4699, %v4788
      %4790 = vmatmul.f32.gmra.mxu0 %v4709
      %v4791 = vpop.f32.mrf.mxu0
      %v4792 = vadd.f32 %v4699, %v4791
      %4793 = vmatmul.f32.gmra.mxu0 %v4712
      %v4794 = vpop.f32.mrf.mxu0
      %v4795 = vadd.f32 %v4699, %v4794
      %4796 = vmatmul.f32.gmra.mxu0 %v4715
      %v4797 = vpop.f32.mrf.mxu0
      %v4798 = vadd.f32 %v4699, %v4797
      %4799 = vmatmul.f32.gmra.mxu0 %v4718
      %v4800 = vpop.f32.mrf.mxu0
      %v4801 = vadd.f32 %v4699, %v4800
      %4802 = vmatmul.f32.gmra.mxu0 %v4721
      %v4803 = vpop.f32.mrf.mxu0
      %v4804 = vadd.f32 %v4699, %v4803
      %4805 = vmatmul.f32.gmra.mxu0 %v4724
      %v4806 = vpop.f32.mrf.mxu0
      %v4807 = vadd.f32 %v4699, %v4806
      %4808 = vmatmul.f32.gmra.mxu0 %v4727
      %v4809 = vpop.f32.mrf.mxu0
      %v4810 = vadd.f32 %v4699, %v4809
      %4811 = vmatmul.f32.gmra.mxu0 %v4730
      %v4812 = vpop.f32.mrf.mxu0
      %v4813 = vadd.f32 %v4699, %v4812
      %4814 = vmatmul.f32.gmra.mxu0 %v4733
      %v4815 = vpop.f32.mrf.mxu0
      %v4816 = vadd.f32 %v4699, %v4815
      %4817 = vmatmul.f32.gmra.mxu0 %v4736
      %v4818 = vpop.f32.mrf.mxu0
      %v4819 = vadd.f32 %v4699, %v4818
      %4820 = vmatmul.f32.gmra.mxu0 %v4739
      %v4821 = vpop.f32.mrf.mxu0
      %v4822 = vadd.f32 %v4699, %v4821
      %4823 = vmatmul.f32.gmra.mxu0 %v4742
      %v4824 = vpop.f32.mrf.mxu0
      %v4825 = vadd.f32 %v4699, %v4824
      %4826 = vmatmul.f32.gmra.mxu0 %v4745
      %v4827 = vpop.f32.mrf.mxu0
      %v4828 = vadd.f32 %v4699, %v4827
      %4829 = vmatmul.f32.gmra.mxu0 %v4748
      %v4830 = vpop.f32.mrf.mxu0
      %v4831 = vadd.f32 %v4699, %v4830
      %4832 = vmatmul.f32.gmra.mxu0 %v4751
      %v4833 = vpop.f32.mrf.mxu0
      %v4834 = vadd.f32 %v4699, %v4833
      %4835 = vmatmul.f32.gmra.mxu0 %v4754
      %v4836 = vpop.f32.mrf.mxu0
      %v4837 = vadd.f32 %v4699, %v4836
      %4838 = vmatmul.f32.gmra.mxu0 %v4757
      %v4839 = vpop.f32.mrf.mxu0
      %v4840 = vadd.f32 %v4699, %v4839
      %4841 = vmatmul.f32.gmra.mxu0 %v4760
      %v4842 = vpop.f32.mrf.mxu0
      %v4843 = vadd.f32 %v4699, %v4842
      %4844 = vmatmul.f32.gmra.mxu0 %v4763
      %v4845 = vpop.f32.mrf.mxu0
      %v4846 = vadd.f32 %v4699, %v4845
      %4847 = vmatmul.f32.gmra.mxu0 %v4766
      %v4848 = vpop.f32.mrf.mxu0
      %v4849 = vadd.f32 %v4699, %v4848
      %4850 = vdwg.mxu0
      %v4851 = vadd.f32 %v4786, %v4651
      %v4852 = vadd.f32 %v4789, %v4652
      %v4853 = vadd.f32 %v4792, %v4653
      %v4854 = vadd.f32 %v4795, %v4654
      %v4855 = vadd.f32 %v4798, %v4655
      %v4856 = vadd.f32 %v4801, %v4656
      %v4857 = vadd.f32 %v4804, %v4657
      %v4858 = vadd.f32 %v4807, %v4658
      %v4859 = vadd.f32 %v4810, %v4659
      %v4860 = vadd.f32 %v4813, %v4660
      %v4861 = vadd.f32 %v4816, %v4661
      %v4862 = vadd.f32 %v4819, %v4662
      %v4863 = vadd.f32 %v4822, %v4663
      %v4864 = vadd.f32 %v4825, %v4664
      %v4865 = vadd.f32 %v4828, %v4665
      %v4866 = vadd.f32 %v4831, %v4666
      %v4867 = vadd.f32 %v4834, %v4667
      %v4868 = vadd.f32 %v4837, %v4668
      %v4869 = vadd.f32 %v4840, %v4669
      %v4870 = vadd.f32 %v4843, %v4670
      %v4871 = vadd.f32 %v4846, %v4671
      %v4872 = vadd.f32 %v4849, %v4672
      %4873 = vst.msk [vmem:[#allocation4] sm:$0xff] %vm708, 0.0
      %4874 = vst.msk [vmem:[#allocation4 + $0x8] sm:$0xff] %vm708, 0.0
      %4875 = vst.msk [vmem:[#allocation4 + $0x10] sm:$0xff] %vm708, 0.0
      %4876 = vst.msk [vmem:[#allocation4 + $0x18] sm:$0xff] %vm708, 0.0
      %4877 = vst.msk [vmem:[#allocation4 + $0x20] sm:$0xff] %vm708, 0.0
      %4878 = vst.msk [vmem:[#allocation4 + $0x28] sm:$0xff] %vm708, 0.0
      %4879 = vst.msk [vmem:[#allocation4 + $0x30] sm:$0xff] %vm708, 0.0
      %4880 = vst.msk [vmem:[#allocation4 + $0x38] sm:$0xff] %vm708, 0.0
      %4881 = vst.msk [vmem:[#allocation4 + $0x40] sm:$0xff] %vm708, 0.0
      %4882 = vst.msk [vmem:[#allocation4 + $0x48] sm:$0xff] %vm708, 0.0
      %4883 = vst.msk [vmem:[#allocation4 + $0x50] sm:$0xff] %vm708, 0.0
      %4884 = vst.msk [vmem:[#allocation4 + $0x58] sm:$0xff] %vm708, 0.0
      %4885 = vst.msk [vmem:[#allocation4 + $0x60] sm:$0xff] %vm708, 0.0
      %4886 = vst.msk [vmem:[#allocation4 + $0x68] sm:$0xff] %vm708, 0.0
      %4887 = vst.msk [vmem:[#allocation4 + $0x70] sm:$0xff] %vm708, 0.0
      %4888 = vst.msk [vmem:[#allocation4 + $0x78] sm:$0xff] %vm708, 0.0
      %4889 = vst.msk [vmem:[#allocation4 + $0x80] sm:$0xff] %vm708, 0.0
      %4890 = vst.msk [vmem:[#allocation4 + $0x88] sm:$0xff] %vm708, 0.0
      %4891 = vst.msk [vmem:[#allocation4 + $0x90] sm:$0xff] %vm708, 0.0
      %4892 = vst.msk [vmem:[#allocation4 + $0x98] sm:$0xff] %vm708, 0.0
      %4893 = vst.msk [vmem:[#allocation4 + $0xa0] sm:$0xff] %vm708, 0.0
      %4894 = vst.msk [vmem:[#allocation4 + $0xa8] sm:$0xff] %vm708, 0.0
      %4895 = vst.msk [vmem:[#allocation4 + $0xb0] sm:$0xff] %vm708, 0.0
      %4896 = vst.msk [vmem:[#allocation4 + $0xb8] sm:$0xff] %vm708, 0.0
      %4897 = vst.msk [vmem:[#allocation4 + $0xc0] sm:$0xff] %vm708, 0.0
      %4898 = vst.msk [vmem:[#allocation4 + $0xc8] sm:$0xff] %vm708, 0.0
      %4899 = vst.msk [vmem:[#allocation4 + $0xd0] sm:$0xff] %vm708, 0.0
      %4900 = vst.msk [vmem:[#allocation4 + $0xd8] sm:$0xff] %vm708, 0.0
      %4901 = vst.msk [vmem:[#allocation4 + $0xe0] sm:$0xff] %vm708, 0.0
      %4902 = vst.msk [vmem:[#allocation4 + $0xe8] sm:$0xff] %vm708, 0.0
      %4903 = vst.msk [vmem:[#allocation4 + $0xf0] sm:$0xff] %vm708, 0.0
      %4904 = vst.msk [vmem:[#allocation4 + $0xf8] sm:$0xff] %vm708, 0.0
      %4905 = vst.msk [vmem:[#allocation4 + $0x11] sm:$0xff] %vm708, %v4851
      %4906 = vst.msk [vmem:[#allocation4 + $0x19] sm:$0x1f] %vm2004, %v4852
      %4907 = vst.msk [vmem:[#allocation4 + $0x1c] sm:$0xe0] %vm2006, %v4852
      %4908 = vst.msk [vmem:[#allocation4 + $0x24] sm:$0xff] %vm708, %v4853
      %4909 = vst.msk [vmem:[#allocation4 + $0x2c] sm:$0x3] %vm2014, %v4854
      %4910 = vst.msk [vmem:[#allocation4 + $0x2f] sm:$0xfc] %vm2016, %v4854
      %4911 = vst.msk [vmem:[#allocation4 + $0x37] sm:$0x7f] %vm1996, %v4855
      %4912 = vst.msk [vmem:[#allocation4 + $0x3a] sm:$0x80] %vm1998, %v4855
      %4913 = vst.msk [vmem:[#allocation4 + $0x42] sm:$0xff] %vm708, %v4856
      %4914 = vst.msk [vmem:[#allocation4 + $0x4a] sm:$0xf] %vm716, %v4857
      %4915 = vst.msk [vmem:[#allocation4 + $0x4d] sm:$0xf0] %vm718, %v4857
      %4916 = vst.msk [vmem:[#allocation4 + $0x55] sm:$0xff] %vm708, %v4858
      %4917 = vst.msk [vmem:[#allocation4 + $0x5d] sm:$0x1] %vm2018, %v4859
      %vm4918 = vcmask 523265
      %4919 = vst.msk [vmem:[#allocation4 + $0x60] sm:$0xfe] %vm4918, %v4859
      %4920 = vst.msk [vmem:[#allocation4 + $0x68] sm:$0x3f] %vm2000, %v4860
      %4921 = vst.msk [vmem:[#allocation4 + $0x6b] sm:$0xc0] %vm2002, %v4860
      %4922 = vst.msk [vmem:[#allocation4 + $0x73] sm:$0xff] %vm708, %v4861
      %4923 = vst.msk [vmem:[#allocation4 + $0x7b] sm:$0x7] %vm2010, %v4862
      %4924 = vst.msk [vmem:[#allocation4 + $0x7e] sm:$0xf8] %vm2012, %v4862
      %4925 = vst.msk [vmem:[#allocation4 + $0x86] sm:$0xff] %vm708, %v4863
      %4926 = vst.msk [vmem:[#allocation4 + $0x91] sm:$0xff] %vm708, %v4864
      %4927 = vst.msk [vmem:[#allocation4 + $0x99] sm:$0x1f] %vm2004, %v4865
      %4928 = vst.msk [vmem:[#allocation4 + $0x9c] sm:$0xe0] %vm2006, %v4865
      %4929 = vst.msk [vmem:[#allocation4 + $0xa4] sm:$0xff] %vm708, %v4866
      %4930 = vst.msk [vmem:[#allocation4 + $0xac] sm:$0x3] %vm2014, %v4867
      %4931 = vst.msk [vmem:[#allocation4 + $0xaf] sm:$0xfc] %vm2016, %v4867
      %4932 = vst.msk [vmem:[#allocation4 + $0xb7] sm:$0x7f] %vm1996, %v4868
      %4933 = vst.msk [vmem:[#allocation4 + $0xba] sm:$0x80] %vm1998, %v4868
      %4934 = vst.msk [vmem:[#allocation4 + $0xc2] sm:$0xff] %vm708, %v4869
      %4935 = vst.msk [vmem:[#allocation4 + $0xca] sm:$0xf] %vm716, %v4870
      %4936 = vst.msk [vmem:[#allocation4 + $0xcd] sm:$0xf0] %vm718, %v4870
      %4937 = vst.msk [vmem:[#allocation4 + $0xd5] sm:$0xff] %vm708, %v4871
      %4938 = vst.msk [vmem:[#allocation4 + $0xdd] sm:$0x1] %vm2018, %v4872
      %v4939 = vld [vmem:[#allocation4] sm:$0xff]
      %v4940 = vld [vmem:[#allocation4 + $0x8] sm:$0xff]
      %v4941 = vld [vmem:[#allocation4 + $0x10] sm:$0xff]
      %v4942 = vld [vmem:[#allocation4 + $0x18] sm:$0xff]
      %v4943 = vld [vmem:[#allocation4 + $0x20] sm:$0xff]
      %v4944 = vld [vmem:[#allocation4 + $0x28] sm:$0xff]
      %v4945 = vld [vmem:[#allocation4 + $0x30] sm:$0xff]
      %v4946 = vld [vmem:[#allocation4 + $0x38] sm:$0xff]
      %v4947 = vld [vmem:[#allocation4 + $0x40] sm:$0xff]
      %v4948 = vld [vmem:[#allocation4 + $0x48] sm:$0xff]
      %v4949 = vld [vmem:[#allocation4 + $0x50] sm:$0xff]
      %v4950 = vld [vmem:[#allocation4 + $0x58] sm:$0xff]
      %v4951 = vld [vmem:[#allocation4 + $0x60] sm:$0xff]
      %v4952 = vld [vmem:[#allocation4 + $0x68] sm:$0xff]
      %v4953 = vld [vmem:[#allocation4 + $0x70] sm:$0xff]
      %v4954 = vld [vmem:[#allocation4 + $0x78] sm:$0xff]
      %v4955 = vld [vmem:[#allocation4 + $0x80] sm:$0xff]
      %v4956 = vld [vmem:[#allocation4 + $0x88] sm:$0xff]
      %v4957 = vld [vmem:[#allocation4 + $0x90] sm:$0xff]
      %v4958 = vld [vmem:[#allocation4 + $0x98] sm:$0xff]
      %v4959 = vld [vmem:[#allocation4 + $0xa0] sm:$0xff]
      %v4960 = vld [vmem:[#allocation4 + $0xa8] sm:$0xff]
      %v4961 = vld [vmem:[#allocation4 + $0xb0] sm:$0xff]
      %v4962 = vld [vmem:[#allocation4 + $0xb8] sm:$0xff]
      %v4963 = vld [vmem:[#allocation4 + $0xc0] sm:$0xff]
      %v4964 = vld [vmem:[#allocation4 + $0xc8] sm:$0xff]
      %4965 = vst.msk [vmem:[#allocation5] sm:$0xff] %vm708, %v4939
      %4966 = vst.msk [vmem:[#allocation5 + $0x28] sm:$0xff] %vm708, %v4940
      %4967 = vst.msk [vmem:[#allocation5 + $0x50] sm:$0xff] %vm708, %v4941
      %4968 = vst.msk [vmem:[#allocation5 + $0x78] sm:$0xff] %vm708, %v4942
      %4969 = vst.msk [vmem:[#allocation5 + $0xa0] sm:$0xff] %vm708, %v4943
      %4970 = vst.msk [vmem:[#allocation5 + $0xc8] sm:$0xff] %vm708, %v4944
      %4971 = vst.msk [vmem:[#allocation5 + $0xf0] sm:$0xff] %vm708, %v4945
      %4972 = vst.msk [vmem:[#allocation5 + $0x118] sm:$0xff] %vm708, %v4946
      %4973 = vst.msk [vmem:[#allocation5 + $0x140] sm:$0xff] %vm708, %v4947
      %4974 = vst.msk [vmem:[#allocation5 + $0x168] sm:$0xff] %vm708, %v4948
      %4975 = vst.msk [vmem:[#allocation5 + $0x190] sm:$0xff] %vm708, %v4949
      %4976 = vst.msk [vmem:[#allocation5 + $0x1b8] sm:$0xff] %vm708, %v4950
      %4977 = vst.msk [vmem:[#allocation5 + $0x1e0] sm:$0xff] %vm708, %v4951
      %4978 = vst.msk [vmem:[#allocation5 + $0x208] sm:$0xff] %vm708, %v4952
      %4979 = vst.msk [vmem:[#allocation5 + $0x230] sm:$0xff] %vm708, %v4953
      %4980 = vst.msk [vmem:[#allocation5 + $0x258] sm:$0xff] %vm708, %v4954
      %4981 = vst.msk [vmem:[#allocation5 + $0x280] sm:$0xff] %vm708, %v4955
      %4982 = vst.msk [vmem:[#allocation5 + $0x2a8] sm:$0xff] %vm708, %v4956
      %4983 = vst.msk [vmem:[#allocation5 + $0x2d0] sm:$0xff] %vm708, %v4957
      %4984 = vst.msk [vmem:[#allocation5 + $0x2f8] sm:$0xff] %vm708, %v4958
      %4985 = vst.msk [vmem:[#allocation5 + $0x320] sm:$0xff] %vm708, %v4959
      %4986 = vst.msk [vmem:[#allocation5 + $0x348] sm:$0xff] %vm708, %v4960
      %4987 = vst.msk [vmem:[#allocation5 + $0x370] sm:$0xff] %vm708, %v4961
      %4988 = vst.msk [vmem:[#allocation5 + $0x398] sm:$0xff] %vm708, %v4962
      %4989 = vst.msk [vmem:[#allocation5 + $0x3c0] sm:$0xff] %vm708, %v4963
      %4990 = vst.msk [vmem:[#allocation5 + $0x3e8] sm:$0xff] %vm708, %v4964
      %v4991 = vld [vmem:[#allocation4 + $0x1] sm:$0xff]
      %v4992 = vld [vmem:[#allocation4 + $0x9] sm:$0xff]
      %v4993 = vld [vmem:[#allocation4 + $0x11] sm:$0xff]
      %v4994 = vld [vmem:[#allocation4 + $0x19] sm:$0xff]
      %v4995 = vld [vmem:[#allocation4 + $0x21] sm:$0xff]
      %v4996 = vld [vmem:[#allocation4 + $0x29] sm:$0xff]
      %v4997 = vld [vmem:[#allocation4 + $0x31] sm:$0xff]
      %v4998 = vld [vmem:[#allocation4 + $0x39] sm:$0xff]
      %v4999 = vld [vmem:[#allocation4 + $0x41] sm:$0xff]
      %v5000 = vld [vmem:[#allocation4 + $0x49] sm:$0xff]
      %v5001 = vld [vmem:[#allocation4 + $0x51] sm:$0xff]
      %v5002 = vld [vmem:[#allocation4 + $0x59] sm:$0xff]
      %v5003 = vld [vmem:[#allocation4 + $0x61] sm:$0xff]
      %v5004 = vld [vmem:[#allocation4 + $0x69] sm:$0xff]
      %v5005 = vld [vmem:[#allocation4 + $0x71] sm:$0xff]
      %v5006 = vld [vmem:[#allocation4 + $0x79] sm:$0xff]
      %v5007 = vld [vmem:[#allocation4 + $0x81] sm:$0xff]
      %v5008 = vld [vmem:[#allocation4 + $0x89] sm:$0xff]
      %v5009 = vld [vmem:[#allocation4 + $0x91] sm:$0xff]
      %v5010 = vld [vmem:[#allocation4 + $0x99] sm:$0xff]
      %v5011 = vld [vmem:[#allocation4 + $0xa1] sm:$0xff]
      %v5012 = vld [vmem:[#allocation4 + $0xa9] sm:$0xff]
      %v5013 = vld [vmem:[#allocation4 + $0xb1] sm:$0xff]
      %v5014 = vld [vmem:[#allocation4 + $0xb9] sm:$0xff]
      %v5015 = vld [vmem:[#allocation4 + $0xc1] sm:$0xff]
      %v5016 = vld [vmem:[#allocation4 + $0xc9] sm:$0xff]
      %5043 = vrot.lane.b32.xlu0 %v4991, 64
      %v5044 = vpop.permute.xlu0 %5043
      %5045 = vrot.lane.b32.xlu0 %v4992, 64
      %v5046 = vpop.permute.xlu0 %5045
      %5047 = vrot.lane.b32.xlu0 %v4993, 64
      %v5048 = vpop.permute.xlu0 %5047
      %5049 = vrot.lane.b32.xlu0 %v4994, 64
      %v5050 = vpop.permute.xlu0 %5049
      %5051 = vrot.lane.b32.xlu0 %v4995, 64
      %v5052 = vpop.permute.xlu0 %5051
      %5053 = vrot.lane.b32.xlu0 %v4996, 64
      %v5054 = vpop.permute.xlu0 %5053
      %5055 = vrot.lane.b32.xlu0 %v4997, 64
      %v5056 = vpop.permute.xlu0 %5055
      %5057 = vrot.lane.b32.xlu0 %v4998, 64
      %v5058 = vpop.permute.xlu0 %5057
      %5059 = vrot.lane.b32.xlu0 %v4999, 64
      %v5060 = vpop.permute.xlu0 %5059
      %5061 = vrot.lane.b32.xlu0 %v5000, 64
      %v5062 = vpop.permute.xlu0 %5061
      %5063 = vrot.lane.b32.xlu0 %v5001, 64
      %v5064 = vpop.permute.xlu0 %5063
      %5065 = vrot.lane.b32.xlu0 %v5002, 64
      %v5066 = vpop.permute.xlu0 %5065
      %5067 = vrot.lane.b32.xlu0 %v5003, 64
      %v5068 = vpop.permute.xlu0 %5067
      %5069 = vrot.lane.b32.xlu0 %v5004, 64
      %v5070 = vpop.permute.xlu0 %5069
      %5071 = vrot.lane.b32.xlu0 %v5005, 64
      %v5072 = vpop.permute.xlu0 %5071
      %5073 = vrot.lane.b32.xlu0 %v5006, 64
      %v5074 = vpop.permute.xlu0 %5073
      %5075 = vrot.lane.b32.xlu0 %v5007, 64
      %v5076 = vpop.permute.xlu0 %5075
      %5077 = vrot.lane.b32.xlu0 %v5008, 64
      %v5078 = vpop.permute.xlu0 %5077
      %5079 = vrot.lane.b32.xlu0 %v5009, 64
      %v5080 = vpop.permute.xlu0 %5079
      %5081 = vrot.lane.b32.xlu0 %v5010, 64
      %v5082 = vpop.permute.xlu0 %5081
      %5083 = vrot.lane.b32.xlu0 %v5011, 64
      %v5084 = vpop.permute.xlu0 %5083
      %5085 = vrot.lane.b32.xlu0 %v5012, 64
      %v5086 = vpop.permute.xlu0 %5085
      %5087 = vrot.lane.b32.xlu0 %v5013, 64
      %v5088 = vpop.permute.xlu0 %5087
      %5089 = vrot.lane.b32.xlu0 %v5014, 64
      %v5090 = vpop.permute.xlu0 %5089
      %5091 = vrot.lane.b32.xlu0 %v5015, 64
      %v5092 = vpop.permute.xlu0 %5091
      %5093 = vrot.lane.b32.xlu0 %v5016, 64
      %v5094 = vpop.permute.xlu0 %5093
      %5121 = vst.msk [vmem:[#allocation5] sm:$0xff] %vm750, %v5044
      %5122 = vst.msk [vmem:[#allocation5 + $0x28] sm:$0xff] %vm750, %v5046
      %5123 = vst.msk [vmem:[#allocation5 + $0x50] sm:$0xff] %vm750, %v5048
      %5124 = vst.msk [vmem:[#allocation5 + $0x78] sm:$0xff] %vm750, %v5050
      %5125 = vst.msk [vmem:[#allocation5 + $0xa0] sm:$0xff] %vm750, %v5052
      %5126 = vst.msk [vmem:[#allocation5 + $0xc8] sm:$0xff] %vm750, %v5054
      %5127 = vst.msk [vmem:[#allocation5 + $0xf0] sm:$0xff] %vm750, %v5056
      %5128 = vst.msk [vmem:[#allocation5 + $0x118] sm:$0xff] %vm750, %v5058
      %5129 = vst.msk [vmem:[#allocation5 + $0x140] sm:$0xff] %vm750, %v5060
      %5130 = vst.msk [vmem:[#allocation5 + $0x168] sm:$0xff] %vm750, %v5062
      %5131 = vst.msk [vmem:[#allocation5 + $0x190] sm:$0xff] %vm750, %v5064
      %5132 = vst.msk [vmem:[#allocation5 + $0x1b8] sm:$0xff] %vm750, %v5066
      %5133 = vst.msk [vmem:[#allocation5 + $0x1e0] sm:$0xff] %vm750, %v5068
      %5134 = vst.msk [vmem:[#allocation5 + $0x208] sm:$0xff] %vm750, %v5070
      %5135 = vst.msk [vmem:[#allocation5 + $0x230] sm:$0xff] %vm750, %v5072
      %5136 = vst.msk [vmem:[#allocation5 + $0x258] sm:$0xff] %vm750, %v5074
      %5137 = vst.msk [vmem:[#allocation5 + $0x280] sm:$0xff] %vm750, %v5076
      %5138 = vst.msk [vmem:[#allocation5 + $0x2a8] sm:$0xff] %vm750, %v5078
      %5139 = vst.msk [vmem:[#allocation5 + $0x2d0] sm:$0xff] %vm750, %v5080
      %5140 = vst.msk [vmem:[#allocation5 + $0x2f8] sm:$0xff] %vm750, %v5082
      %5141 = vst.msk [vmem:[#allocation5 + $0x320] sm:$0xff] %vm750, %v5084
      %5142 = vst.msk [vmem:[#allocation5 + $0x348] sm:$0xff] %vm750, %v5086
      %5143 = vst.msk [vmem:[#allocation5 + $0x370] sm:$0xff] %vm750, %v5088
      %5144 = vst.msk [vmem:[#allocation5 + $0x398] sm:$0xff] %vm750, %v5090
      %5145 = vst.msk [vmem:[#allocation5 + $0x3c0] sm:$0xff] %vm750, %v5092
      %5146 = vst.msk [vmem:[#allocation5 + $0x3e8] sm:$0xff] %vm750, %v5094
      %v5147 = vld [vmem:[#allocation4 + $0x2] sm:$0xff]
      %v5148 = vld [vmem:[#allocation4 + $0xa] sm:$0xff]
      %v5149 = vld [vmem:[#allocation4 + $0x12] sm:$0xff]
      %v5150 = vld [vmem:[#allocation4 + $0x1a] sm:$0xff]
      %v5151 = vld [vmem:[#allocation4 + $0x22] sm:$0xff]
      %v5152 = vld [vmem:[#allocation4 + $0x2a] sm:$0xff]
      %v5153 = vld [vmem:[#allocation4 + $0x32] sm:$0xff]
      %v5154 = vld [vmem:[#allocation4 + $0x3a] sm:$0xff]
      %v5155 = vld [vmem:[#allocation4 + $0x42] sm:$0xff]
      %v5156 = vld [vmem:[#allocation4 + $0x4a] sm:$0xff]
      %v5157 = vld [vmem:[#allocation4 + $0x52] sm:$0xff]
      %v5158 = vld [vmem:[#allocation4 + $0x5a] sm:$0xff]
      %v5159 = vld [vmem:[#allocation4 + $0x62] sm:$0xff]
      %v5160 = vld [vmem:[#allocation4 + $0x6a] sm:$0xff]
      %v5161 = vld [vmem:[#allocation4 + $0x72] sm:$0xff]
      %v5162 = vld [vmem:[#allocation4 + $0x7a] sm:$0xff]
      %v5163 = vld [vmem:[#allocation4 + $0x82] sm:$0xff]
      %v5164 = vld [vmem:[#allocation4 + $0x8a] sm:$0xff]
      %v5165 = vld [vmem:[#allocation4 + $0x92] sm:$0xff]
      %v5166 = vld [vmem:[#allocation4 + $0x9a] sm:$0xff]
      %v5167 = vld [vmem:[#allocation4 + $0xa2] sm:$0xff]
      %v5168 = vld [vmem:[#allocation4 + $0xaa] sm:$0xff]
      %v5169 = vld [vmem:[#allocation4 + $0xb2] sm:$0xff]
      %v5170 = vld [vmem:[#allocation4 + $0xba] sm:$0xff]
      %v5171 = vld [vmem:[#allocation4 + $0xc2] sm:$0xff]
      %v5172 = vld [vmem:[#allocation4 + $0xca] sm:$0xff]
      %5173 = vst.msk [vmem:[#allocation5 + $0x8] sm:$0xff] %vm708, %v5147
      %5174 = vst.msk [vmem:[#allocation5 + $0x30] sm:$0xff] %vm708, %v5148
      %5175 = vst.msk [vmem:[#allocation5 + $0x58] sm:$0xff] %vm708, %v5149
      %5176 = vst.msk [vmem:[#allocation5 + $0x80] sm:$0xff] %vm708, %v5150
      %5177 = vst.msk [vmem:[#allocation5 + $0xa8] sm:$0xff] %vm708, %v5151
      %5178 = vst.msk [vmem:[#allocation5 + $0xd0] sm:$0xff] %vm708, %v5152
      %5179 = vst.msk [vmem:[#allocation5 + $0xf8] sm:$0xff] %vm708, %v5153
      %5180 = vst.msk [vmem:[#allocation5 + $0x120] sm:$0xff] %vm708, %v5154
      %5181 = vst.msk [vmem:[#allocation5 + $0x148] sm:$0xff] %vm708, %v5155
      %5182 = vst.msk [vmem:[#allocation5 + $0x170] sm:$0xff] %vm708, %v5156
      %5183 = vst.msk [vmem:[#allocation5 + $0x198] sm:$0xff] %vm708, %v5157
      %5184 = vst.msk [vmem:[#allocation5 + $0x1c0] sm:$0xff] %vm708, %v5158
      %5185 = vst.msk [vmem:[#allocation5 + $0x1e8] sm:$0xff] %vm708, %v5159
      %5186 = vst.msk [vmem:[#allocation5 + $0x210] sm:$0xff] %vm708, %v5160
      %5187 = vst.msk [vmem:[#allocation5 + $0x238] sm:$0xff] %vm708, %v5161
      %5188 = vst.msk [vmem:[#allocation5 + $0x260] sm:$0xff] %vm708, %v5162
      %5189 = vst.msk [vmem:[#allocation5 + $0x288] sm:$0xff] %vm708, %v5163
      %5190 = vst.msk [vmem:[#allocation5 + $0x2b0] sm:$0xff] %vm708, %v5164
      %5191 = vst.msk [vmem:[#allocation5 + $0x2d8] sm:$0xff] %vm708, %v5165
      %5192 = vst.msk [vmem:[#allocation5 + $0x300] sm:$0xff] %vm708, %v5166
      %5193 = vst.msk [vmem:[#allocation5 + $0x328] sm:$0xff] %vm708, %v5167
      %5194 = vst.msk [vmem:[#allocation5 + $0x350] sm:$0xff] %vm708, %v5168
      %5195 = vst.msk [vmem:[#allocation5 + $0x378] sm:$0xff] %vm708, %v5169
      %5196 = vst.msk [vmem:[#allocation5 + $0x3a0] sm:$0xff] %vm708, %v5170
      %5197 = vst.msk [vmem:[#allocation5 + $0x3c8] sm:$0xff] %vm708, %v5171
      %5198 = vst.msk [vmem:[#allocation5 + $0x3f0] sm:$0xff] %vm708, %v5172
      %v5199 = vld [vmem:[#allocation4 + $0x10] sm:$0xff]
      %v5200 = vld [vmem:[#allocation4 + $0x18] sm:$0xff]
      %v5201 = vld [vmem:[#allocation4 + $0x20] sm:$0xff]
      %v5202 = vld [vmem:[#allocation4 + $0x28] sm:$0xff]
      %v5203 = vld [vmem:[#allocation4 + $0x30] sm:$0xff]
      %v5204 = vld [vmem:[#allocation4 + $0x38] sm:$0xff]
      %v5205 = vld [vmem:[#allocation4 + $0x40] sm:$0xff]
      %v5206 = vld [vmem:[#allocation4 + $0x48] sm:$0xff]
      %v5207 = vld [vmem:[#allocation4 + $0x50] sm:$0xff]
      %v5208 = vld [vmem:[#allocation4 + $0x58] sm:$0xff]
      %v5209 = vld [vmem:[#allocation4 + $0x60] sm:$0xff]
      %v5210 = vld [vmem:[#allocation4 + $0x68] sm:$0xff]
      %v5211 = vld [vmem:[#allocation4 + $0x70] sm:$0xff]
      %v5212 = vld [vmem:[#allocation4 + $0x78] sm:$0xff]
      %v5213 = vld [vmem:[#allocation4 + $0x80] sm:$0xff]
      %v5214 = vld [vmem:[#allocation4 + $0x88] sm:$0xff]
      %v5215 = vld [vmem:[#allocation4 + $0x90] sm:$0xff]
      %v5216 = vld [vmem:[#allocation4 + $0x98] sm:$0xff]
      %v5217 = vld [vmem:[#allocation4 + $0xa0] sm:$0xff]
      %v5218 = vld [vmem:[#allocation4 + $0xa8] sm:$0xff]
      %v5219 = vld [vmem:[#allocation4 + $0xb0] sm:$0xff]
      %v5220 = vld [vmem:[#allocation4 + $0xb8] sm:$0xff]
      %v5221 = vld [vmem:[#allocation4 + $0xc0] sm:$0xff]
      %v5222 = vld [vmem:[#allocation4 + $0xc8] sm:$0xff]
      %v5223 = vld [vmem:[#allocation4 + $0xd0] sm:$0xff]
      %v5224 = vld [vmem:[#allocation4 + $0xd8] sm:$0xff]
      %5251 = vrot.lane.b32.xlu0 %v5199, 64
      %v5252 = vpop.permute.xlu0 %5251
      %5253 = vrot.lane.b32.xlu0 %v5200, 64
      %v5254 = vpop.permute.xlu0 %5253
      %5255 = vrot.lane.b32.xlu0 %v5201, 64
      %v5256 = vpop.permute.xlu0 %5255
      %5257 = vrot.lane.b32.xlu0 %v5202, 64
      %v5258 = vpop.permute.xlu0 %5257
      %5259 = vrot.lane.b32.xlu0 %v5203, 64
      %v5260 = vpop.permute.xlu0 %5259
      %5261 = vrot.lane.b32.xlu0 %v5204, 64
      %v5262 = vpop.permute.xlu0 %5261
      %5263 = vrot.lane.b32.xlu0 %v5205, 64
      %v5264 = vpop.permute.xlu0 %5263
      %5265 = vrot.lane.b32.xlu0 %v5206, 64
      %v5266 = vpop.permute.xlu0 %5265
      %5267 = vrot.lane.b32.xlu0 %v5207, 64
      %v5268 = vpop.permute.xlu0 %5267
      %5269 = vrot.lane.b32.xlu0 %v5208, 64
      %v5270 = vpop.permute.xlu0 %5269
      %5271 = vrot.lane.b32.xlu0 %v5209, 64
      %v5272 = vpop.permute.xlu0 %5271
      %5273 = vrot.lane.b32.xlu0 %v5210, 64
      %v5274 = vpop.permute.xlu0 %5273
      %5275 = vrot.lane.b32.xlu0 %v5211, 64
      %v5276 = vpop.permute.xlu0 %5275
      %5277 = vrot.lane.b32.xlu0 %v5212, 64
      %v5278 = vpop.permute.xlu0 %5277
      %5279 = vrot.lane.b32.xlu0 %v5213, 64
      %v5280 = vpop.permute.xlu0 %5279
      %5281 = vrot.lane.b32.xlu0 %v5214, 64
      %v5282 = vpop.permute.xlu0 %5281
      %5283 = vrot.lane.b32.xlu0 %v5215, 64
      %v5284 = vpop.permute.xlu0 %5283
      %5285 = vrot.lane.b32.xlu0 %v5216, 64
      %v5286 = vpop.permute.xlu0 %5285
      %5287 = vrot.lane.b32.xlu0 %v5217, 64
      %v5288 = vpop.permute.xlu0 %5287
      %5289 = vrot.lane.b32.xlu0 %v5218, 64
      %v5290 = vpop.permute.xlu0 %5289
      %5291 = vrot.lane.b32.xlu0 %v5219, 64
      %v5292 = vpop.permute.xlu0 %5291
      %5293 = vrot.lane.b32.xlu0 %v5220, 64
      %v5294 = vpop.permute.xlu0 %5293
      %5295 = vrot.lane.b32.xlu0 %v5221, 64
      %v5296 = vpop.permute.xlu0 %5295
      %5297 = vrot.lane.b32.xlu0 %v5222, 64
      %v5298 = vpop.permute.xlu0 %5297
      %5299 = vrot.lane.b32.xlu0 %v5223, 64
      %v5300 = vpop.permute.xlu0 %5299
      %5301 = vrot.lane.b32.xlu0 %v5224, 64
      %v5302 = vpop.permute.xlu0 %5301
      %5329 = vst.msk [vmem:[#allocation5 + $0x8] sm:$0xff] %vm750, %v5252
      %5330 = vst.msk [vmem:[#allocation5 + $0x30] sm:$0xff] %vm750, %v5254
      %5331 = vst.msk [vmem:[#allocation5 + $0x58] sm:$0xff] %vm750, %v5256
      %5332 = vst.msk [vmem:[#allocation5 + $0x80] sm:$0xff] %vm750, %v5258
      %5333 = vst.msk [vmem:[#allocation5 + $0xa8] sm:$0xff] %vm750, %v5260
      %5334 = vst.msk [vmem:[#allocation5 + $0xd0] sm:$0xff] %vm750, %v5262
      %5335 = vst.msk [vmem:[#allocation5 + $0xf8] sm:$0xff] %vm750, %v5264
      %5336 = vst.msk [vmem:[#allocation5 + $0x120] sm:$0xff] %vm750, %v5266
      %5337 = vst.msk [vmem:[#allocation5 + $0x148] sm:$0xff] %vm750, %v5268
      %5338 = vst.msk [vmem:[#allocation5 + $0x170] sm:$0xff] %vm750, %v5270
      %5339 = vst.msk [vmem:[#allocation5 + $0x198] sm:$0xff] %vm750, %v5272
      %5340 = vst.msk [vmem:[#allocation5 + $0x1c0] sm:$0xff] %vm750, %v5274
      %5341 = vst.msk [vmem:[#allocation5 + $0x1e8] sm:$0xff] %vm750, %v5276
      %5342 = vst.msk [vmem:[#allocation5 + $0x210] sm:$0xff] %vm750, %v5278
      %5343 = vst.msk [vmem:[#allocation5 + $0x238] sm:$0xff] %vm750, %v5280
      %5344 = vst.msk [vmem:[#allocation5 + $0x260] sm:$0xff] %vm750, %v5282
      %5345 = vst.msk [vmem:[#allocation5 + $0x288] sm:$0xff] %vm750, %v5284
      %5346 = vst.msk [vmem:[#allocation5 + $0x2b0] sm:$0xff] %vm750, %v5286
      %5347 = vst.msk [vmem:[#allocation5 + $0x2d8] sm:$0xff] %vm750, %v5288
      %5348 = vst.msk [vmem:[#allocation5 + $0x300] sm:$0xff] %vm750, %v5290
      %5349 = vst.msk [vmem:[#allocation5 + $0x328] sm:$0xff] %vm750, %v5292
      %5350 = vst.msk [vmem:[#allocation5 + $0x350] sm:$0xff] %vm750, %v5294
      %5351 = vst.msk [vmem:[#allocation5 + $0x378] sm:$0xff] %vm750, %v5296
      %5352 = vst.msk [vmem:[#allocation5 + $0x3a0] sm:$0xff] %vm750, %v5298
      %5353 = vst.msk [vmem:[#allocation5 + $0x3c8] sm:$0xff] %vm750, %v5300
      %5354 = vst.msk [vmem:[#allocation5 + $0x3f0] sm:$0xff] %vm750, %v5302
      %v5355 = vld [vmem:[#allocation4 + $0x11] sm:$0xff]
      %v5356 = vld [vmem:[#allocation4 + $0x19] sm:$0xff]
      %v5357 = vld [vmem:[#allocation4 + $0x21] sm:$0xff]
      %v5358 = vld [vmem:[#allocation4 + $0x29] sm:$0xff]
      %v5359 = vld [vmem:[#allocation4 + $0x31] sm:$0xff]
      %v5360 = vld [vmem:[#allocation4 + $0x39] sm:$0xff]
      %v5361 = vld [vmem:[#allocation4 + $0x41] sm:$0xff]
      %v5362 = vld [vmem:[#allocation4 + $0x49] sm:$0xff]
      %v5363 = vld [vmem:[#allocation4 + $0x51] sm:$0xff]
      %v5364 = vld [vmem:[#allocation4 + $0x59] sm:$0xff]
      %v5365 = vld [vmem:[#allocation4 + $0x61] sm:$0xff]
      %v5366 = vld [vmem:[#allocation4 + $0x69] sm:$0xff]
      %v5367 = vld [vmem:[#allocation4 + $0x71] sm:$0xff]
      %v5368 = vld [vmem:[#allocation4 + $0x79] sm:$0xff]
      %v5369 = vld [vmem:[#allocation4 + $0x81] sm:$0xff]
      %v5370 = vld [vmem:[#allocation4 + $0x89] sm:$0xff]
      %v5371 = vld [vmem:[#allocation4 + $0x91] sm:$0xff]
      %v5372 = vld [vmem:[#allocation4 + $0x99] sm:$0xff]
      %v5373 = vld [vmem:[#allocation4 + $0xa1] sm:$0xff]
      %v5374 = vld [vmem:[#allocation4 + $0xa9] sm:$0xff]
      %v5375 = vld [vmem:[#allocation4 + $0xb1] sm:$0xff]
      %v5376 = vld [vmem:[#allocation4 + $0xb9] sm:$0xff]
      %v5377 = vld [vmem:[#allocation4 + $0xc1] sm:$0xff]
      %v5378 = vld [vmem:[#allocation4 + $0xc9] sm:$0xff]
      %v5379 = vld [vmem:[#allocation4 + $0xd1] sm:$0xff]
      %v5380 = vld [vmem:[#allocation4 + $0xd9] sm:$0xff]
      %5381 = vst.msk [vmem:[#allocation5 + $0x10] sm:$0xff] %vm708, %v5355
      %5382 = vst.msk [vmem:[#allocation5 + $0x38] sm:$0xff] %vm708, %v5356
      %5383 = vst.msk [vmem:[#allocation5 + $0x60] sm:$0xff] %vm708, %v5357
      %5384 = vst.msk [vmem:[#allocation5 + $0x88] sm:$0xff] %vm708, %v5358
      %5385 = vst.msk [vmem:[#allocation5 + $0xb0] sm:$0xff] %vm708, %v5359
      %5386 = vst.msk [vmem:[#allocation5 + $0xd8] sm:$0xff] %vm708, %v5360
      %5387 = vst.msk [vmem:[#allocation5 + $0x100] sm:$0xff] %vm708, %v5361
      %5388 = vst.msk [vmem:[#allocation5 + $0x128] sm:$0xff] %vm708, %v5362
      %5389 = vst.msk [vmem:[#allocation5 + $0x150] sm:$0xff] %vm708, %v5363
      %5390 = vst.msk [vmem:[#allocation5 + $0x178] sm:$0xff] %vm708, %v5364
      %5391 = vst.msk [vmem:[#allocation5 + $0x1a0] sm:$0xff] %vm708, %v5365
      %5392 = vst.msk [vmem:[#allocation5 + $0x1c8] sm:$0xff] %vm708, %v5366
      %5393 = vst.msk [vmem:[#allocation5 + $0x1f0] sm:$0xff] %vm708, %v5367
      %5394 = vst.msk [vmem:[#allocation5 + $0x218] sm:$0xff] %vm708, %v5368
      %5395 = vst.msk [vmem:[#allocation5 + $0x240] sm:$0xff] %vm708, %v5369
      %5396 = vst.msk [vmem:[#allocation5 + $0x268] sm:$0xff] %vm708, %v5370
      %5397 = vst.msk [vmem:[#allocation5 + $0x290] sm:$0xff] %vm708, %v5371
      %5398 = vst.msk [vmem:[#allocation5 + $0x2b8] sm:$0xff] %vm708, %v5372
      %5399 = vst.msk [vmem:[#allocation5 + $0x2e0] sm:$0xff] %vm708, %v5373
      %5400 = vst.msk [vmem:[#allocation5 + $0x308] sm:$0xff] %vm708, %v5374
      %5401 = vst.msk [vmem:[#allocation5 + $0x330] sm:$0xff] %vm708, %v5375
      %5402 = vst.msk [vmem:[#allocation5 + $0x358] sm:$0xff] %vm708, %v5376
      %5403 = vst.msk [vmem:[#allocation5 + $0x380] sm:$0xff] %vm708, %v5377
      %5404 = vst.msk [vmem:[#allocation5 + $0x3a8] sm:$0xff] %vm708, %v5378
      %5405 = vst.msk [vmem:[#allocation5 + $0x3d0] sm:$0xff] %vm708, %v5379
      %5406 = vst.msk [vmem:[#allocation5 + $0x3f8] sm:$0xff] %vm708, %v5380
      %v5407 = vld [vmem:[#allocation4 + $0x12] sm:$0xff]
      %v5408 = vld [vmem:[#allocation4 + $0x1a] sm:$0xff]
      %v5409 = vld [vmem:[#allocation4 + $0x22] sm:$0xff]
      %v5410 = vld [vmem:[#allocation4 + $0x2a] sm:$0xff]
      %v5411 = vld [vmem:[#allocation4 + $0x32] sm:$0xff]
      %v5412 = vld [vmem:[#allocation4 + $0x3a] sm:$0xff]
      %v5413 = vld [vmem:[#allocation4 + $0x42] sm:$0xff]
      %v5414 = vld [vmem:[#allocation4 + $0x4a] sm:$0xff]
      %v5415 = vld [vmem:[#allocation4 + $0x52] sm:$0xff]
      %v5416 = vld [vmem:[#allocation4 + $0x5a] sm:$0xff]
      %v5417 = vld [vmem:[#allocation4 + $0x62] sm:$0xff]
      %v5418 = vld [vmem:[#allocation4 + $0x6a] sm:$0xff]
      %v5419 = vld [vmem:[#allocation4 + $0x72] sm:$0xff]
      %v5420 = vld [vmem:[#allocation4 + $0x7a] sm:$0xff]
      %v5421 = vld [vmem:[#allocation4 + $0x82] sm:$0xff]
      %v5422 = vld [vmem:[#allocation4 + $0x8a] sm:$0xff]
      %v5423 = vld [vmem:[#allocation4 + $0x92] sm:$0xff]
      %v5424 = vld [vmem:[#allocation4 + $0x9a] sm:$0xff]
      %v5425 = vld [vmem:[#allocation4 + $0xa2] sm:$0xff]
      %v5426 = vld [vmem:[#allocation4 + $0xaa] sm:$0xff]
      %v5427 = vld [vmem:[#allocation4 + $0xb2] sm:$0xff]
      %v5428 = vld [vmem:[#allocation4 + $0xba] sm:$0xff]
      %v5429 = vld [vmem:[#allocation4 + $0xc2] sm:$0xff]
      %v5430 = vld [vmem:[#allocation4 + $0xca] sm:$0xff]
      %v5431 = vld [vmem:[#allocation4 + $0xd2] sm:$0xff]
      %v5432 = vld [vmem:[#allocation4 + $0xda] sm:$0xff]
      %5459 = vrot.lane.b32.xlu0 %v5407, 64
      %v5460 = vpop.permute.xlu0 %5459
      %5461 = vrot.lane.b32.xlu0 %v5408, 64
      %v5462 = vpop.permute.xlu0 %5461
      %5463 = vrot.lane.b32.xlu0 %v5409, 64
      %v5464 = vpop.permute.xlu0 %5463
      %5465 = vrot.lane.b32.xlu0 %v5410, 64
      %v5466 = vpop.permute.xlu0 %5465
      %5467 = vrot.lane.b32.xlu0 %v5411, 64
      %v5468 = vpop.permute.xlu0 %5467
      %5469 = vrot.lane.b32.xlu0 %v5412, 64
      %v5470 = vpop.permute.xlu0 %5469
      %5471 = vrot.lane.b32.xlu0 %v5413, 64
      %v5472 = vpop.permute.xlu0 %5471
      %5473 = vrot.lane.b32.xlu0 %v5414, 64
      %v5474 = vpop.permute.xlu0 %5473
      %5475 = vrot.lane.b32.xlu0 %v5415, 64
      %v5476 = vpop.permute.xlu0 %5475
      %5477 = vrot.lane.b32.xlu0 %v5416, 64
      %v5478 = vpop.permute.xlu0 %5477
      %5479 = vrot.lane.b32.xlu0 %v5417, 64
      %v5480 = vpop.permute.xlu0 %5479
      %5481 = vrot.lane.b32.xlu0 %v5418, 64
      %v5482 = vpop.permute.xlu0 %5481
      %5483 = vrot.lane.b32.xlu0 %v5419, 64
      %v5484 = vpop.permute.xlu0 %5483
      %5485 = vrot.lane.b32.xlu0 %v5420, 64
      %v5486 = vpop.permute.xlu0 %5485
      %5487 = vrot.lane.b32.xlu0 %v5421, 64
      %v5488 = vpop.permute.xlu0 %5487
      %5489 = vrot.lane.b32.xlu0 %v5422, 64
      %v5490 = vpop.permute.xlu0 %5489
      %5491 = vrot.lane.b32.xlu0 %v5423, 64
      %v5492 = vpop.permute.xlu0 %5491
      %5493 = vrot.lane.b32.xlu0 %v5424, 64
      %v5494 = vpop.permute.xlu0 %5493
      %5495 = vrot.lane.b32.xlu0 %v5425, 64
      %v5496 = vpop.permute.xlu0 %5495
      %5497 = vrot.lane.b32.xlu0 %v5426, 64
      %v5498 = vpop.permute.xlu0 %5497
      %5499 = vrot.lane.b32.xlu0 %v5427, 64
      %v5500 = vpop.permute.xlu0 %5499
      %5501 = vrot.lane.b32.xlu0 %v5428, 64
      %v5502 = vpop.permute.xlu0 %5501
      %5503 = vrot.lane.b32.xlu0 %v5429, 64
      %v5504 = vpop.permute.xlu0 %5503
      %5505 = vrot.lane.b32.xlu0 %v5430, 64
      %v5506 = vpop.permute.xlu0 %5505
      %5507 = vrot.lane.b32.xlu0 %v5431, 64
      %v5508 = vpop.permute.xlu0 %5507
      %5509 = vrot.lane.b32.xlu0 %v5432, 64
      %v5510 = vpop.permute.xlu0 %5509
      %5537 = vst.msk [vmem:[#allocation5 + $0x10] sm:$0xff] %vm750, %v5460
      %5538 = vst.msk [vmem:[#allocation5 + $0x38] sm:$0xff] %vm750, %v5462
      %5539 = vst.msk [vmem:[#allocation5 + $0x60] sm:$0xff] %vm750, %v5464
      %5540 = vst.msk [vmem:[#allocation5 + $0x88] sm:$0xff] %vm750, %v5466
      %5541 = vst.msk [vmem:[#allocation5 + $0xb0] sm:$0xff] %vm750, %v5468
      %5542 = vst.msk [vmem:[#allocation5 + $0xd8] sm:$0xff] %vm750, %v5470
      %5543 = vst.msk [vmem:[#allocation5 + $0x100] sm:$0xff] %vm750, %v5472
      %5544 = vst.msk [vmem:[#allocation5 + $0x128] sm:$0xff] %vm750, %v5474
      %5545 = vst.msk [vmem:[#allocation5 + $0x150] sm:$0xff] %vm750, %v5476
      %5546 = vst.msk [vmem:[#allocation5 + $0x178] sm:$0xff] %vm750, %v5478
      %5547 = vst.msk [vmem:[#allocation5 + $0x1a0] sm:$0xff] %vm750, %v5480
      %5548 = vst.msk [vmem:[#allocation5 + $0x1c8] sm:$0xff] %vm750, %v5482
      %5549 = vst.msk [vmem:[#allocation5 + $0x1f0] sm:$0xff] %vm750, %v5484
      %5550 = vst.msk [vmem:[#allocation5 + $0x218] sm:$0xff] %vm750, %v5486
      %5551 = vst.msk [vmem:[#allocation5 + $0x240] sm:$0xff] %vm750, %v5488
      %5552 = vst.msk [vmem:[#allocation5 + $0x268] sm:$0xff] %vm750, %v5490
      %5553 = vst.msk [vmem:[#allocation5 + $0x290] sm:$0xff] %vm750, %v5492
      %5554 = vst.msk [vmem:[#allocation5 + $0x2b8] sm:$0xff] %vm750, %v5494
      %5555 = vst.msk [vmem:[#allocation5 + $0x2e0] sm:$0xff] %vm750, %v5496
      %5556 = vst.msk [vmem:[#allocation5 + $0x308] sm:$0xff] %vm750, %v5498
      %5557 = vst.msk [vmem:[#allocation5 + $0x330] sm:$0xff] %vm750, %v5500
      %5558 = vst.msk [vmem:[#allocation5 + $0x358] sm:$0xff] %vm750, %v5502
      %5559 = vst.msk [vmem:[#allocation5 + $0x380] sm:$0xff] %vm750, %v5504
      %5560 = vst.msk [vmem:[#allocation5 + $0x3a8] sm:$0xff] %vm750, %v5506
      %5561 = vst.msk [vmem:[#allocation5 + $0x3d0] sm:$0xff] %vm750, %v5508
      %5562 = vst.msk [vmem:[#allocation5 + $0x3f8] sm:$0xff] %vm750, %v5510
      %v5563 = vld [vmem:[#allocation4 + $0x20] sm:$0xff]
      %v5564 = vld [vmem:[#allocation4 + $0x28] sm:$0xff]
      %v5565 = vld [vmem:[#allocation4 + $0x30] sm:$0xff]
      %v5566 = vld [vmem:[#allocation4 + $0x38] sm:$0xff]
      %v5567 = vld [vmem:[#allocation4 + $0x40] sm:$0xff]
      %v5568 = vld [vmem:[#allocation4 + $0x48] sm:$0xff]
      %v5569 = vld [vmem:[#allocation4 + $0x50] sm:$0xff]
      %v5570 = vld [vmem:[#allocation4 + $0x58] sm:$0xff]
      %v5571 = vld [vmem:[#allocation4 + $0x60] sm:$0xff]
      %v5572 = vld [vmem:[#allocation4 + $0x68] sm:$0xff]
      %v5573 = vld [vmem:[#allocation4 + $0x70] sm:$0xff]
      %v5574 = vld [vmem:[#allocation4 + $0x78] sm:$0xff]
      %v5575 = vld [vmem:[#allocation4 + $0x80] sm:$0xff]
      %v5576 = vld [vmem:[#allocation4 + $0x88] sm:$0xff]
      %v5577 = vld [vmem:[#allocation4 + $0x90] sm:$0xff]
      %v5578 = vld [vmem:[#allocation4 + $0x98] sm:$0xff]
      %v5579 = vld [vmem:[#allocation4 + $0xa0] sm:$0xff]
      %v5580 = vld [vmem:[#allocation4 + $0xa8] sm:$0xff]
      %v5581 = vld [vmem:[#allocation4 + $0xb0] sm:$0xff]
      %v5582 = vld [vmem:[#allocation4 + $0xb8] sm:$0xff]
      %v5583 = vld [vmem:[#allocation4 + $0xc0] sm:$0xff]
      %v5584 = vld [vmem:[#allocation4 + $0xc8] sm:$0xff]
      %v5585 = vld [vmem:[#allocation4 + $0xd0] sm:$0xff]
      %v5586 = vld [vmem:[#allocation4 + $0xd8] sm:$0xff]
      %v5587 = vld [vmem:[#allocation4 + $0xe0] sm:$0xff]
      %v5588 = vld [vmem:[#allocation4 + $0xe8] sm:$0xff]
      %5589 = vst.msk [vmem:[#allocation5 + $0x18] sm:$0xff] %vm708, %v5563
      %5590 = vst.msk [vmem:[#allocation5 + $0x40] sm:$0xff] %vm708, %v5564
      %5591 = vst.msk [vmem:[#allocation5 + $0x68] sm:$0xff] %vm708, %v5565
      %5592 = vst.msk [vmem:[#allocation5 + $0x90] sm:$0xff] %vm708, %v5566
      %5593 = vst.msk [vmem:[#allocation5 + $0xb8] sm:$0xff] %vm708, %v5567
      %5594 = vst.msk [vmem:[#allocation5 + $0xe0] sm:$0xff] %vm708, %v5568
      %5595 = vst.msk [vmem:[#allocation5 + $0x108] sm:$0xff] %vm708, %v5569
      %5596 = vst.msk [vmem:[#allocation5 + $0x130] sm:$0xff] %vm708, %v5570
      %5597 = vst.msk [vmem:[#allocation5 + $0x158] sm:$0xff] %vm708, %v5571
      %5598 = vst.msk [vmem:[#allocation5 + $0x180] sm:$0xff] %vm708, %v5572
      %5599 = vst.msk [vmem:[#allocation5 + $0x1a8] sm:$0xff] %vm708, %v5573
      %5600 = vst.msk [vmem:[#allocation5 + $0x1d0] sm:$0xff] %vm708, %v5574
      %5601 = vst.msk [vmem:[#allocation5 + $0x1f8] sm:$0xff] %vm708, %v5575
      %5602 = vst.msk [vmem:[#allocation5 + $0x220] sm:$0xff] %vm708, %v5576
      %5603 = vst.msk [vmem:[#allocation5 + $0x248] sm:$0xff] %vm708, %v5577
      %5604 = vst.msk [vmem:[#allocation5 + $0x270] sm:$0xff] %vm708, %v5578
      %5605 = vst.msk [vmem:[#allocation5 + $0x298] sm:$0xff] %vm708, %v5579
      %5606 = vst.msk [vmem:[#allocation5 + $0x2c0] sm:$0xff] %vm708, %v5580
      %5607 = vst.msk [vmem:[#allocation5 + $0x2e8] sm:$0xff] %vm708, %v5581
      %5608 = vst.msk [vmem:[#allocation5 + $0x310] sm:$0xff] %vm708, %v5582
      %5609 = vst.msk [vmem:[#allocation5 + $0x338] sm:$0xff] %vm708, %v5583
      %5610 = vst.msk [vmem:[#allocation5 + $0x360] sm:$0xff] %vm708, %v5584
      %5611 = vst.msk [vmem:[#allocation5 + $0x388] sm:$0xff] %vm708, %v5585
      %5612 = vst.msk [vmem:[#allocation5 + $0x3b0] sm:$0xff] %vm708, %v5586
      %5613 = vst.msk [vmem:[#allocation5 + $0x3d8] sm:$0xff] %vm708, %v5587
      %5614 = vst.msk [vmem:[#allocation5 + $0x400] sm:$0xff] %vm708, %v5588
      %v5615 = vld [vmem:[#allocation4 + $0x21] sm:$0xff]
      %v5616 = vld [vmem:[#allocation4 + $0x29] sm:$0xff]
      %v5617 = vld [vmem:[#allocation4 + $0x31] sm:$0xff]
      %v5618 = vld [vmem:[#allocation4 + $0x39] sm:$0xff]
      %v5619 = vld [vmem:[#allocation4 + $0x41] sm:$0xff]
      %v5620 = vld [vmem:[#allocation4 + $0x49] sm:$0xff]
      %v5621 = vld [vmem:[#allocation4 + $0x51] sm:$0xff]
      %v5622 = vld [vmem:[#allocation4 + $0x59] sm:$0xff]
      %v5623 = vld [vmem:[#allocation4 + $0x61] sm:$0xff]
      %v5624 = vld [vmem:[#allocation4 + $0x69] sm:$0xff]
      %v5625 = vld [vmem:[#allocation4 + $0x71] sm:$0xff]
      %v5626 = vld [vmem:[#allocation4 + $0x79] sm:$0xff]
      %v5627 = vld [vmem:[#allocation4 + $0x81] sm:$0xff]
      %v5628 = vld [vmem:[#allocation4 + $0x89] sm:$0xff]
      %v5629 = vld [vmem:[#allocation4 + $0x91] sm:$0xff]
      %v5630 = vld [vmem:[#allocation4 + $0x99] sm:$0xff]
      %v5631 = vld [vmem:[#allocation4 + $0xa1] sm:$0xff]
      %v5632 = vld [vmem:[#allocation4 + $0xa9] sm:$0xff]
      %v5633 = vld [vmem:[#allocation4 + $0xb1] sm:$0xff]
      %v5634 = vld [vmem:[#allocation4 + $0xb9] sm:$0xff]
      %v5635 = vld [vmem:[#allocation4 + $0xc1] sm:$0xff]
      %v5636 = vld [vmem:[#allocation4 + $0xc9] sm:$0xff]
      %v5637 = vld [vmem:[#allocation4 + $0xd1] sm:$0xff]
      %v5638 = vld [vmem:[#allocation4 + $0xd9] sm:$0xff]
      %v5639 = vld [vmem:[#allocation4 + $0xe1] sm:$0xff]
      %v5640 = vld [vmem:[#allocation4 + $0xe9] sm:$0xff]
      %5667 = vrot.lane.b32.xlu0 %v5615, 64
      %v5668 = vpop.permute.xlu0 %5667
      %5669 = vrot.lane.b32.xlu0 %v5616, 64
      %v5670 = vpop.permute.xlu0 %5669
      %5671 = vrot.lane.b32.xlu0 %v5617, 64
      %v5672 = vpop.permute.xlu0 %5671
      %5673 = vrot.lane.b32.xlu0 %v5618, 64
      %v5674 = vpop.permute.xlu0 %5673
      %5675 = vrot.lane.b32.xlu0 %v5619, 64
      %v5676 = vpop.permute.xlu0 %5675
      %5677 = vrot.lane.b32.xlu0 %v5620, 64
      %v5678 = vpop.permute.xlu0 %5677
      %5679 = vrot.lane.b32.xlu0 %v5621, 64
      %v5680 = vpop.permute.xlu0 %5679
      %5681 = vrot.lane.b32.xlu0 %v5622, 64
      %v5682 = vpop.permute.xlu0 %5681
      %5683 = vrot.lane.b32.xlu0 %v5623, 64
      %v5684 = vpop.permute.xlu0 %5683
      %5685 = vrot.lane.b32.xlu0 %v5624, 64
      %v5686 = vpop.permute.xlu0 %5685
      %5687 = vrot.lane.b32.xlu0 %v5625, 64
      %v5688 = vpop.permute.xlu0 %5687
      %5689 = vrot.lane.b32.xlu0 %v5626, 64
      %v5690 = vpop.permute.xlu0 %5689
      %5691 = vrot.lane.b32.xlu0 %v5627, 64
      %v5692 = vpop.permute.xlu0 %5691
      %5693 = vrot.lane.b32.xlu0 %v5628, 64
      %v5694 = vpop.permute.xlu0 %5693
      %5695 = vrot.lane.b32.xlu0 %v5629, 64
      %v5696 = vpop.permute.xlu0 %5695
      %5697 = vrot.lane.b32.xlu0 %v5630, 64
      %v5698 = vpop.permute.xlu0 %5697
      %5699 = vrot.lane.b32.xlu0 %v5631, 64
      %v5700 = vpop.permute.xlu0 %5699
      %5701 = vrot.lane.b32.xlu0 %v5632, 64
      %v5702 = vpop.permute.xlu0 %5701
      %5703 = vrot.lane.b32.xlu0 %v5633, 64
      %v5704 = vpop.permute.xlu0 %5703
      %5705 = vrot.lane.b32.xlu0 %v5634, 64
      %v5706 = vpop.permute.xlu0 %5705
      %5707 = vrot.lane.b32.xlu0 %v5635, 64
      %v5708 = vpop.permute.xlu0 %5707
      %5709 = vrot.lane.b32.xlu0 %v5636, 64
      %v5710 = vpop.permute.xlu0 %5709
      %5711 = vrot.lane.b32.xlu0 %v5637, 64
      %v5712 = vpop.permute.xlu0 %5711
      %5713 = vrot.lane.b32.xlu0 %v5638, 64
      %v5714 = vpop.permute.xlu0 %5713
      %5715 = vrot.lane.b32.xlu0 %v5639, 64
      %v5716 = vpop.permute.xlu0 %5715
      %5717 = vrot.lane.b32.xlu0 %v5640, 64
      %v5718 = vpop.permute.xlu0 %5717
      %5745 = vst.msk [vmem:[#allocation5 + $0x18] sm:$0xff] %vm750, %v5668
      %5746 = vst.msk [vmem:[#allocation5 + $0x40] sm:$0xff] %vm750, %v5670
      %5747 = vst.msk [vmem:[#allocation5 + $0x68] sm:$0xff] %vm750, %v5672
      %5748 = vst.msk [vmem:[#allocation5 + $0x90] sm:$0xff] %vm750, %v5674
      %5749 = vst.msk [vmem:[#allocation5 + $0xb8] sm:$0xff] %vm750, %v5676
      %5750 = vst.msk [vmem:[#allocation5 + $0xe0] sm:$0xff] %vm750, %v5678
      %5751 = vst.msk [vmem:[#allocation5 + $0x108] sm:$0xff] %vm750, %v5680
      %5752 = vst.msk [vmem:[#allocation5 + $0x130] sm:$0xff] %vm750, %v5682
      %5753 = vst.msk [vmem:[#allocation5 + $0x158] sm:$0xff] %vm750, %v5684
      %5754 = vst.msk [vmem:[#allocation5 + $0x180] sm:$0xff] %vm750, %v5686
      %5755 = vst.msk [vmem:[#allocation5 + $0x1a8] sm:$0xff] %vm750, %v5688
      %5756 = vst.msk [vmem:[#allocation5 + $0x1d0] sm:$0xff] %vm750, %v5690
      %5757 = vst.msk [vmem:[#allocation5 + $0x1f8] sm:$0xff] %vm750, %v5692
      %5758 = vst.msk [vmem:[#allocation5 + $0x220] sm:$0xff] %vm750, %v5694
      %5759 = vst.msk [vmem:[#allocation5 + $0x248] sm:$0xff] %vm750, %v5696
      %5760 = vst.msk [vmem:[#allocation5 + $0x270] sm:$0xff] %vm750, %v5698
      %5761 = vst.msk [vmem:[#allocation5 + $0x298] sm:$0xff] %vm750, %v5700
      %5762 = vst.msk [vmem:[#allocation5 + $0x2c0] sm:$0xff] %vm750, %v5702
      %5763 = vst.msk [vmem:[#allocation5 + $0x2e8] sm:$0xff] %vm750, %v5704
      %5764 = vst.msk [vmem:[#allocation5 + $0x310] sm:$0xff] %vm750, %v5706
      %5765 = vst.msk [vmem:[#allocation5 + $0x338] sm:$0xff] %vm750, %v5708
      %5766 = vst.msk [vmem:[#allocation5 + $0x360] sm:$0xff] %vm750, %v5710
      %5767 = vst.msk [vmem:[#allocation5 + $0x388] sm:$0xff] %vm750, %v5712
      %5768 = vst.msk [vmem:[#allocation5 + $0x3b0] sm:$0xff] %vm750, %v5714
      %5769 = vst.msk [vmem:[#allocation5 + $0x3d8] sm:$0xff] %vm750, %v5716
      %5770 = vst.msk [vmem:[#allocation5 + $0x400] sm:$0xff] %vm750, %v5718
      %v5771 = vld [vmem:[#allocation4 + $0x22] sm:$0xff]
      %v5772 = vld [vmem:[#allocation4 + $0x2a] sm:$0xff]
      %v5773 = vld [vmem:[#allocation4 + $0x32] sm:$0xff]
      %v5774 = vld [vmem:[#allocation4 + $0x3a] sm:$0xff]
      %v5775 = vld [vmem:[#allocation4 + $0x42] sm:$0xff]
      %v5776 = vld [vmem:[#allocation4 + $0x4a] sm:$0xff]
      %v5777 = vld [vmem:[#allocation4 + $0x52] sm:$0xff]
      %v5778 = vld [vmem:[#allocation4 + $0x5a] sm:$0xff]
      %v5779 = vld [vmem:[#allocation4 + $0x62] sm:$0xff]
      %v5780 = vld [vmem:[#allocation4 + $0x6a] sm:$0xff]
      %v5781 = vld [vmem:[#allocation4 + $0x72] sm:$0xff]
      %v5782 = vld [vmem:[#allocation4 + $0x7a] sm:$0xff]
      %v5783 = vld [vmem:[#allocation4 + $0x82] sm:$0xff]
      %v5784 = vld [vmem:[#allocation4 + $0x8a] sm:$0xff]
      %v5785 = vld [vmem:[#allocation4 + $0x92] sm:$0xff]
      %v5786 = vld [vmem:[#allocation4 + $0x9a] sm:$0xff]
      %v5787 = vld [vmem:[#allocation4 + $0xa2] sm:$0xff]
      %v5788 = vld [vmem:[#allocation4 + $0xaa] sm:$0xff]
      %v5789 = vld [vmem:[#allocation4 + $0xb2] sm:$0xff]
      %v5790 = vld [vmem:[#allocation4 + $0xba] sm:$0xff]
      %v5791 = vld [vmem:[#allocation4 + $0xc2] sm:$0xff]
      %v5792 = vld [vmem:[#allocation4 + $0xca] sm:$0xff]
      %v5793 = vld [vmem:[#allocation4 + $0xd2] sm:$0xff]
      %v5794 = vld [vmem:[#allocation4 + $0xda] sm:$0xff]
      %v5795 = vld [vmem:[#allocation4 + $0xe2] sm:$0xff]
      %v5796 = vld [vmem:[#allocation4 + $0xea] sm:$0xff]
      %5797 = vst.msk [vmem:[#allocation5 + $0x20] sm:$0xff] %vm708, %v5771
      %5798 = vst.msk [vmem:[#allocation5 + $0x48] sm:$0xff] %vm708, %v5772
      %5799 = vst.msk [vmem:[#allocation5 + $0x70] sm:$0xff] %vm708, %v5773
      %5800 = vst.msk [vmem:[#allocation5 + $0x98] sm:$0xff] %vm708, %v5774
      %5801 = vst.msk [vmem:[#allocation5 + $0xc0] sm:$0xff] %vm708, %v5775
      %5802 = vst.msk [vmem:[#allocation5 + $0xe8] sm:$0xff] %vm708, %v5776
      %5803 = vst.msk [vmem:[#allocation5 + $0x110] sm:$0xff] %vm708, %v5777
      %5804 = vst.msk [vmem:[#allocation5 + $0x138] sm:$0xff] %vm708, %v5778
      %5805 = vst.msk [vmem:[#allocation5 + $0x160] sm:$0xff] %vm708, %v5779
      %5806 = vst.msk [vmem:[#allocation5 + $0x188] sm:$0xff] %vm708, %v5780
      %5807 = vst.msk [vmem:[#allocation5 + $0x1b0] sm:$0xff] %vm708, %v5781
      %5808 = vst.msk [vmem:[#allocation5 + $0x1d8] sm:$0xff] %vm708, %v5782
      %5809 = vst.msk [vmem:[#allocation5 + $0x200] sm:$0xff] %vm708, %v5783
      %5810 = vst.msk [vmem:[#allocation5 + $0x228] sm:$0xff] %vm708, %v5784
      %5811 = vst.msk [vmem:[#allocation5 + $0x250] sm:$0xff] %vm708, %v5785
      %5812 = vst.msk [vmem:[#allocation5 + $0x278] sm:$0xff] %vm708, %v5786
      %5813 = vst.msk [vmem:[#allocation5 + $0x2a0] sm:$0xff] %vm708, %v5787
      %5814 = vst.msk [vmem:[#allocation5 + $0x2c8] sm:$0xff] %vm708, %v5788
      %5815 = vst.msk [vmem:[#allocation5 + $0x2f0] sm:$0xff] %vm708, %v5789
      %5816 = vst.msk [vmem:[#allocation5 + $0x318] sm:$0xff] %vm708, %v5790
      %5817 = vst.msk [vmem:[#allocation5 + $0x340] sm:$0xff] %vm708, %v5791
      %5818 = vst.msk [vmem:[#allocation5 + $0x368] sm:$0xff] %vm708, %v5792
      %5819 = vst.msk [vmem:[#allocation5 + $0x390] sm:$0xff] %vm708, %v5793
      %5820 = vst.msk [vmem:[#allocation5 + $0x3b8] sm:$0xff] %vm708, %v5794
      %5821 = vst.msk [vmem:[#allocation5 + $0x3e0] sm:$0xff] %vm708, %v5795
      %5822 = vst.msk [vmem:[#allocation5 + $0x408] sm:$0xff] %vm708, %v5796
      %v5823 = vld [vmem:[#allocation5] sm:$0xff]
      %v5824 = vld [vmem:[#allocation5 + $0x8] sm:$0xff]
      %v5825 = vld [vmem:[#allocation5 + $0x10] sm:$0xff]
      %v5826 = vld [vmem:[#allocation5 + $0x18] sm:$0xff]
      %v5827 = vld [vmem:[#allocation5 + $0x20] sm:$0xff]
      %v5828 = vld [vmem:[#allocation5 + $0x28] sm:$0xff]
      %v5829 = vld [vmem:[#allocation5 + $0x30] sm:$0xff]
      %v5830 = vld [vmem:[#allocation5 + $0x38] sm:$0xff]
      %v5831 = vld [vmem:[#allocation5 + $0x40] sm:$0xff]
      %v5832 = vld [vmem:[#allocation5 + $0x48] sm:$0xff]
      %v5833 = vld [vmem:[#allocation5 + $0x50] sm:$0xff]
      %v5834 = vld [vmem:[#allocation5 + $0x58] sm:$0xff]
      %v5835 = vld [vmem:[#allocation5 + $0x60] sm:$0xff]
      %v5836 = vld [vmem:[#allocation5 + $0x68] sm:$0xff]
      %v5837 = vld [vmem:[#allocation5 + $0x70] sm:$0xff]
      %v5838 = vld [vmem:[#allocation5 + $0x78] sm:$0xff]
      %v5839 = vld [vmem:[#allocation5 + $0x80] sm:$0xff]
      %v5840 = vld [vmem:[#allocation5 + $0x88] sm:$0xff]
      %v5841 = vld [vmem:[#allocation5 + $0x90] sm:$0xff]
      %v5842 = vld [vmem:[#allocation5 + $0x98] sm:$0xff]
      %v5843 = vld [vmem:[#allocation5 + $0xa0] sm:$0xff]
      %v5844 = vld [vmem:[#allocation5 + $0xa8] sm:$0xff]
      %v5845 = vld [vmem:[#allocation5 + $0xb0] sm:$0xff]
      %v5846 = vld [vmem:[#allocation5 + $0xb8] sm:$0xff]
      %v5847 = vld [vmem:[#allocation5 + $0xc0] sm:$0xff]
      %v5848 = vld [vmem:[#allocation5 + $0xc8] sm:$0xff]
      %v5849 = vld [vmem:[#allocation5 + $0xd0] sm:$0xff]
      %v5850 = vld [vmem:[#allocation5 + $0xd8] sm:$0xff]
      %v5851 = vld [vmem:[#allocation5 + $0xe0] sm:$0xff]
      %v5852 = vld [vmem:[#allocation5 + $0xe8] sm:$0xff]
      %v5853 = vld [vmem:[#allocation5 + $0xf0] sm:$0xff]
      %v5854 = vld [vmem:[#allocation5 + $0xf8] sm:$0xff]
      %v5855 = vld [vmem:[#allocation5 + $0x100] sm:$0xff]
      %v5856 = vld [vmem:[#allocation5 + $0x108] sm:$0xff]
      %v5857 = vld [vmem:[#allocation5 + $0x110] sm:$0xff]
      %v5858 = vld [vmem:[#allocation5 + $0x118] sm:$0xff]
      %v5859 = vld [vmem:[#allocation5 + $0x120] sm:$0xff]
      %v5860 = vld [vmem:[#allocation5 + $0x128] sm:$0xff]
      %v5861 = vld [vmem:[#allocation5 + $0x130] sm:$0xff]
      %v5862 = vld [vmem:[#allocation5 + $0x138] sm:$0xff]
      %v5863 = vld [vmem:[#allocation5 + $0x140] sm:$0xff]
      %v5864 = vld [vmem:[#allocation5 + $0x148] sm:$0xff]
      %v5865 = vld [vmem:[#allocation5 + $0x150] sm:$0xff]
      %v5866 = vld [vmem:[#allocation5 + $0x158] sm:$0xff]
      %v5867 = vld [vmem:[#allocation5 + $0x160] sm:$0xff]
      %v5868 = vld [vmem:[#allocation5 + $0x168] sm:$0xff]
      %v5869 = vld [vmem:[#allocation5 + $0x170] sm:$0xff]
      %v5870 = vld [vmem:[#allocation5 + $0x178] sm:$0xff]
      %v5871 = vld [vmem:[#allocation5 + $0x180] sm:$0xff]
      %v5872 = vld [vmem:[#allocation5 + $0x188] sm:$0xff]
      %v5873 = vld [vmem:[#allocation5 + $0x190] sm:$0xff]
      %v5874 = vld [vmem:[#allocation5 + $0x198] sm:$0xff]
      %v5875 = vld [vmem:[#allocation5 + $0x1a0] sm:$0xff]
      %v5876 = vld [vmem:[#allocation5 + $0x1a8] sm:$0xff]
      %v5877 = vld [vmem:[#allocation5 + $0x1b0] sm:$0xff]
      %v5878 = vld [vmem:[#allocation5 + $0x1b8] sm:$0xff]
      %v5879 = vld [vmem:[#allocation5 + $0x1c0] sm:$0xff]
      %v5880 = vld [vmem:[#allocation5 + $0x1c8] sm:$0xff]
      %v5881 = vld [vmem:[#allocation5 + $0x1d0] sm:$0xff]
      %v5882 = vld [vmem:[#allocation5 + $0x1d8] sm:$0xff]
      %v5883 = vld [vmem:[#allocation5 + $0x1e0] sm:$0xff]
      %v5884 = vld [vmem:[#allocation5 + $0x1e8] sm:$0xff]
      %v5885 = vld [vmem:[#allocation5 + $0x1f0] sm:$0xff]
      %v5886 = vld [vmem:[#allocation5 + $0x1f8] sm:$0xff]
      %v5887 = vld [vmem:[#allocation5 + $0x200] sm:$0xff]
      %v5888 = vld [vmem:[#allocation5 + $0x208] sm:$0xff]
      %v5889 = vld [vmem:[#allocation5 + $0x210] sm:$0xff]
      %v5890 = vld [vmem:[#allocation5 + $0x218] sm:$0xff]
      %v5891 = vld [vmem:[#allocation5 + $0x220] sm:$0xff]
      %v5892 = vld [vmem:[#allocation5 + $0x228] sm:$0xff]
      %v5893 = vld [vmem:[#allocation5 + $0x230] sm:$0xff]
      %v5894 = vld [vmem:[#allocation5 + $0x238] sm:$0xff]
      %v5895 = vld [vmem:[#allocation5 + $0x240] sm:$0xff]
      %v5896 = vld [vmem:[#allocation5 + $0x248] sm:$0xff]
      %v5897 = vld [vmem:[#allocation5 + $0x250] sm:$0xff]
      %v5898 = vld [vmem:[#allocation5 + $0x258] sm:$0xff]
      %v5899 = vld [vmem:[#allocation5 + $0x260] sm:$0xff]
      %v5900 = vld [vmem:[#allocation5 + $0x268] sm:$0xff]
      %v5901 = vld [vmem:[#allocation5 + $0x270] sm:$0xff]
      %v5902 = vld [vmem:[#allocation5 + $0x278] sm:$0xff]
      %v5903 = vld [vmem:[#allocation5 + $0x280] sm:$0xff]
      %v5904 = vld [vmem:[#allocation5 + $0x288] sm:$0xff]
      %v5905 = vld [vmem:[#allocation5 + $0x290] sm:$0xff]
      %v5906 = vld [vmem:[#allocation5 + $0x298] sm:$0xff]
      %v5907 = vld [vmem:[#allocation5 + $0x2a0] sm:$0xff]
      %v5908 = vld [vmem:[#allocation5 + $0x2a8] sm:$0xff]
      %v5909 = vld [vmem:[#allocation5 + $0x2b0] sm:$0xff]
      %v5910 = vld [vmem:[#allocation5 + $0x2b8] sm:$0xff]
      %v5911 = vld [vmem:[#allocation5 + $0x2c0] sm:$0xff]
      %v5912 = vld [vmem:[#allocation5 + $0x2c8] sm:$0xff]
      %v5913 = vld [vmem:[#allocation5 + $0x2d0] sm:$0xff]
      %v5914 = vld [vmem:[#allocation5 + $0x2d8] sm:$0xff]
      %v5915 = vld [vmem:[#allocation5 + $0x2e0] sm:$0xff]
      %v5916 = vld [vmem:[#allocation5 + $0x2e8] sm:$0xff]
      %v5917 = vld [vmem:[#allocation5 + $0x2f0] sm:$0xff]
      %v5918 = vld [vmem:[#allocation5 + $0x2f8] sm:$0xff]
      %v5919 = vld [vmem:[#allocation5 + $0x300] sm:$0xff]
      %v5920 = vld [vmem:[#allocation5 + $0x308] sm:$0xff]
      %v5921 = vld [vmem:[#allocation5 + $0x310] sm:$0xff]
      %v5922 = vld [vmem:[#allocation5 + $0x318] sm:$0xff]
      %v5923 = vld [vmem:[#allocation5 + $0x320] sm:$0xff]
      %v5924 = vld [vmem:[#allocation5 + $0x328] sm:$0xff]
      %v5925 = vld [vmem:[#allocation5 + $0x330] sm:$0xff]
      %v5926 = vld [vmem:[#allocation5 + $0x338] sm:$0xff]
      %v5927 = vld [vmem:[#allocation5 + $0x340] sm:$0xff]
      %v5928 = vld [vmem:[#allocation5 + $0x348] sm:$0xff]
      %v5929 = vld [vmem:[#allocation5 + $0x350] sm:$0xff]
      %v5930 = vld [vmem:[#allocation5 + $0x358] sm:$0xff]
      %v5931 = vld [vmem:[#allocation5 + $0x360] sm:$0xff]
      %v5932 = vld [vmem:[#allocation5 + $0x368] sm:$0xff]
      %v5933 = vld [vmem:[#allocation5 + $0x370] sm:$0xff]
      %v5934 = vld [vmem:[#allocation5 + $0x378] sm:$0xff]
      %v5935 = vld [vmem:[#allocation5 + $0x380] sm:$0xff]
      %v5936 = vld [vmem:[#allocation5 + $0x388] sm:$0xff]
      %v5937 = vld [vmem:[#allocation5 + $0x390] sm:$0xff]
      %v5938 = vld [vmem:[#allocation5 + $0x398] sm:$0xff]
      %v5939 = vld [vmem:[#allocation5 + $0x3a0] sm:$0xff]
      %v5940 = vld [vmem:[#allocation5 + $0x3a8] sm:$0xff]
      %v5941 = vld [vmem:[#allocation5 + $0x3b0] sm:$0xff]
      %v5942 = vld [vmem:[#allocation5 + $0x3b8] sm:$0xff]
      %v5943 = vld [vmem:[#allocation5 + $0x3c0] sm:$0xff]
      %v5944 = vld [vmem:[#allocation5 + $0x3c8] sm:$0xff]
      %v5945 = vld [vmem:[#allocation5 + $0x3d0] sm:$0xff]
      %v5946 = vld [vmem:[#allocation5 + $0x3d8] sm:$0xff]
      %v5947 = vld [vmem:[#allocation5 + $0x3e0] sm:$0xff]
      %v5948 = vld [vmem:[#allocation5 + $0x3e8] sm:$0xff]
      %v5949 = vld [vmem:[#allocation5 + $0x3f0] sm:$0xff]
      %v5950 = vld [vmem:[#allocation5 + $0x3f8] sm:$0xff]
      %v5951 = vld [vmem:[#allocation5 + $0x400] sm:$0xff]
      %v5952 = vld [vmem:[#allocation5 + $0x408] sm:$0xff]
      %v5953 = vld [vmem:[%s13] sm:$0xff]
      %v5954 = vld [vmem:[%s13 + $0x8] sm:$0xff]
      %v5955 = vld [vmem:[%s13 + $0x10] sm:$0xff]
      %v5956 = vld [vmem:[%s13 + $0x18] sm:$0xff]
      %v5957 = vld [vmem:[%s13 + $0x20] sm:$0xff]
      %v5958 = vld [vmem:[%s13 + $0x28] sm:$0xff]
      %v5959 = vld [vmem:[%s13 + $0x30] sm:$0xff]
      %v5960 = vld [vmem:[%s13 + $0x38] sm:$0xff]
      %v5961 = vld [vmem:[%s13 + $0x40] sm:$0xff]
      %v5962 = vld [vmem:[%s13 + $0x48] sm:$0xff]
      %v5963 = vld [vmem:[%s13 + $0x50] sm:$0xff]
      %v5964 = vld [vmem:[%s13 + $0x58] sm:$0xff]
      %v5965 = vld [vmem:[%s13 + $0x60] sm:$0xff]
      %v5966 = vld [vmem:[%s13 + $0x68] sm:$0xff]
      %v5967 = vld [vmem:[%s13 + $0x70] sm:$0xff]
      %v5968 = vld [vmem:[%s13 + $0x78] sm:$0xff]
      %v5969 = vld [vmem:[%s13 + $0x80] sm:$0xff]
      %v5970 = vld [vmem:[%s13 + $0x88] sm:$0xff]
      %v5971 = vld [vmem:[%s13 + $0x90] sm:$0xff]
      %v5972 = vld [vmem:[%s13 + $0x98] sm:$0xff]
      %v5973 = vld [vmem:[%s13 + $0xa0] sm:$0xff]
      %v5974 = vld [vmem:[%s13 + $0xa8] sm:$0xff]
      %v5975 = vld [vmem:[%s13 + $0xb0] sm:$0xff]
      %v5976 = vld [vmem:[%s13 + $0xb8] sm:$0xff]
      %v5977 = vld [vmem:[%s13 + $0xc0] sm:$0xff]
      %v5978 = vld [vmem:[%s13 + $0xc8] sm:$0xff]
      %v5979 = vld [vmem:[%s13 + $0xd0] sm:$0xff]
      %v5980 = vld [vmem:[%s13 + $0xd8] sm:$0xff]
      %v5981 = vld [vmem:[%s13 + $0xe0] sm:$0xff]
      %v5982 = vld [vmem:[%s13 + $0xe8] sm:$0xff]
      %v5983 = vld [vmem:[%s13 + $0xf0] sm:$0xff]
      %v5984 = vld [vmem:[%s13 + $0xf8] sm:$0xff]
      %v5985 = vld [vmem:[%s13 + $0x100] sm:$0xff]
      %v5986 = vld [vmem:[%s13 + $0x108] sm:$0xff]
      %v5987 = vld [vmem:[%s13 + $0x110] sm:$0xff]
      %v5988 = vld [vmem:[%s13 + $0x118] sm:$0xff]
      %v5989 = vld [vmem:[%s13 + $0x120] sm:$0xff]
      %v5990 = vld [vmem:[%s13 + $0x128] sm:$0xff]
      %v5991 = vld [vmem:[%s13 + $0x130] sm:$0xff]
      %v5992 = vld [vmem:[%s13 + $0x138] sm:$0xff]
      %v5993 = vld [vmem:[%s13 + $0x140] sm:$0xff]
      %v5994 = vld [vmem:[%s13 + $0x148] sm:$0xff]
      %v5995 = vld [vmem:[%s13 + $0x150] sm:$0xff]
      %v5996 = vld [vmem:[%s13 + $0x158] sm:$0xff]
      %v5997 = vld [vmem:[%s13 + $0x160] sm:$0xff]
      %v5998 = vld [vmem:[%s13 + $0x168] sm:$0xff]
      %v5999 = vld [vmem:[%s13 + $0x170] sm:$0xff]
      %v6000 = vld [vmem:[%s13 + $0x178] sm:$0xff]
      %v6001 = vld [vmem:[%s13 + $0x180] sm:$0xff]
      %v6002 = vld [vmem:[%s13 + $0x188] sm:$0xff]
      %v6003 = vld [vmem:[%s13 + $0x190] sm:$0xff]
      %v6004 = vld [vmem:[%s13 + $0x198] sm:$0xff]
      %v6005 = vld [vmem:[%s13 + $0x1a0] sm:$0xff]
      %v6006 = vld [vmem:[%s13 + $0x1a8] sm:$0xff]
      %v6007 = vld [vmem:[%s13 + $0x1b0] sm:$0xff]
      %v6008 = vld [vmem:[%s13 + $0x1b8] sm:$0xff]
      %v6009 = vld [vmem:[%s13 + $0x1c0] sm:$0xff]
      %v6010 = vld [vmem:[%s13 + $0x1c8] sm:$0xff]
      %v6011 = vld [vmem:[%s13 + $0x1d0] sm:$0xff]
      %v6012 = vld [vmem:[%s13 + $0x1d8] sm:$0xff]
      %v6013 = vld [vmem:[%s13 + $0x1e0] sm:$0xff]
      %v6014 = vld [vmem:[%s13 + $0x1e8] sm:$0xff]
      %v6015 = vld [vmem:[%s13 + $0x1f0] sm:$0xff]
      %v6016 = vld [vmem:[%s13 + $0x1f8] sm:$0xff]
      %v6017 = vld [vmem:[%s13 + $0x200] sm:$0xff]
      %v6018 = vld [vmem:[%s13 + $0x208] sm:$0xff]
      %v6019 = vld [vmem:[%s13 + $0x210] sm:$0xff]
      %v6020 = vld [vmem:[%s13 + $0x218] sm:$0xff]
      %v6021 = vld [vmem:[%s13 + $0x220] sm:$0xff]
      %v6022 = vld [vmem:[%s13 + $0x228] sm:$0xff]
      %v6023 = vld [vmem:[%s13 + $0x230] sm:$0xff]
      %v6024 = vld [vmem:[%s13 + $0x238] sm:$0xff]
      %v6025 = vld [vmem:[%s14] sm:$0x1]
      %v6027 = vperm.slane %v6025, 0
      %v6030 = vsel %vm708, %v5827, 0
      %v6033 = vsel %vm708, %v5832, 0
      %v6036 = vsel %vm708, %v5837, 0
      %v6039 = vsel %vm708, %v5842, 0
      %v6042 = vsel %vm708, %v5847, 0
      %v6045 = vsel %vm708, %v5852, 0
      %v6048 = vsel %vm708, %v5857, 0
      %v6051 = vsel %vm708, %v5862, 0
      %v6054 = vsel %vm708, %v5867, 0
      %v6057 = vsel %vm708, %v5872, 0
      %v6060 = vsel %vm708, %v5877, 0
      %v6063 = vsel %vm708, %v5882, 0
      %v6066 = vsel %vm708, %v5887, 0
      %v6069 = vsel %vm708, %v5892, 0
      %v6072 = vsel %vm708, %v5897, 0
      %v6075 = vsel %vm708, %v5902, 0
      %v6078 = vsel %vm708, %v5907, 0
      %v6081 = vsel %vm708, %v5912, 0
      %v6084 = vsel %vm708, %v5917, 0
      %v6087 = vsel %vm708, %v5922, 0
      %v6090 = vsel %vm708, %v5927, 0
      %v6093 = vsel %vm708, %v5932, 0
      %v6096 = vsel %vm708, %v5937, 0
      %v6099 = vsel %vm708, %v5942, 0
      %v6102 = vsel %vm708, %v5947, 0
      %v6105 = vsel %vm708, %v5952, 0
      %6107 = vmatpush.msra.mxu0 %v5968
      %6108 = vmatpush.msra.mxu0 %v5967
      %6109 = vmatpush.msra.mxu0 %v5966
      %6110 = vmatpush.msra.mxu0 %v5965
      %6111 = vmatpush.msra.mxu0 %v5964
      %6112 = vmatpush.msra.mxu0 %v5963
      %6113 = vmatpush.msra.mxu0 %v5962
      %6114 = vmatpush.msra.mxu0 %v5961
      %6115 = vmatpush.msra.mxu0 %v5960
      %6116 = vmatpush.msra.mxu0 %v5959
      %6117 = vmatpush.msra.mxu0 %v5958
      %6118 = vmatpush.msra.mxu0 %v5957
      %6119 = vmatpush.msra.mxu0 %v5956
      %6120 = vmatpush.msra.mxu0 %v5955
      %6121 = vmatpush.msra.mxu0 %v5954
      %6122 = vmatpush.msra.mxu0 %v5953
      %6123 = vmatmul.f32.gmra.mxu0 %v5823
      %v6124 = vpop.f32.mrf.mxu0
      %v6125 = vadd.f32 %v6027, %v6124
      %6126 = vmatmul.f32.gmra.mxu0 %v5828
      %v6127 = vpop.f32.mrf.mxu0
      %v6128 = vadd.f32 %v6027, %v6127
      %6129 = vmatmul.f32.gmra.mxu0 %v5833
      %v6130 = vpop.f32.mrf.mxu0
      %v6131 = vadd.f32 %v6027, %v6130
      %6132 = vmatmul.f32.gmra.mxu0 %v5838
      %v6133 = vpop.f32.mrf.mxu0
      %v6134 = vadd.f32 %v6027, %v6133
      %6135 = vmatmul.f32.gmra.mxu0 %v5843
      %v6136 = vpop.f32.mrf.mxu0
      %v6137 = vadd.f32 %v6027, %v6136
      %6138 = vmatmul.f32.gmra.mxu0 %v5848
      %v6139 = vpop.f32.mrf.mxu0
      %v6140 = vadd.f32 %v6027, %v6139
      %6141 = vmatmul.f32.gmra.mxu0 %v5853
      %v6142 = vpop.f32.mrf.mxu0
      %v6143 = vadd.f32 %v6027, %v6142
      %6144 = vmatmul.f32.gmra.mxu0 %v5858
      %v6145 = vpop.f32.mrf.mxu0
      %v6146 = vadd.f32 %v6027, %v6145
      %6147 = vmatmul.f32.gmra.mxu0 %v5863
      %v6148 = vpop.f32.mrf.mxu0
      %v6149 = vadd.f32 %v6027, %v6148
      %6150 = vmatmul.f32.gmra.mxu0 %v5868
      %v6151 = vpop.f32.mrf.mxu0
      %v6152 = vadd.f32 %v6027, %v6151
      %6153 = vmatmul.f32.gmra.mxu0 %v5873
      %v6154 = vpop.f32.mrf.mxu0
      %v6155 = vadd.f32 %v6027, %v6154
      %6156 = vmatmul.f32.gmra.mxu0 %v5878
      %v6157 = vpop.f32.mrf.mxu0
      %v6158 = vadd.f32 %v6027, %v6157
      %6159 = vmatmul.f32.gmra.mxu0 %v5883
      %v6160 = vpop.f32.mrf.mxu0
      %v6161 = vadd.f32 %v6027, %v6160
      %6162 = vmatmul.f32.gmra.mxu0 %v5888
      %v6163 = vpop.f32.mrf.mxu0
      %v6164 = vadd.f32 %v6027, %v6163
      %6165 = vmatmul.f32.gmra.mxu0 %v5893
      %v6166 = vpop.f32.mrf.mxu0
      %v6167 = vadd.f32 %v6027, %v6166
      %6168 = vmatmul.f32.gmra.mxu0 %v5898
      %v6169 = vpop.f32.mrf.mxu0
      %v6170 = vadd.f32 %v6027, %v6169
      %6171 = vmatmul.f32.gmra.mxu0 %v5903
      %v6172 = vpop.f32.mrf.mxu0
      %v6173 = vadd.f32 %v6027, %v6172
      %6174 = vmatmul.f32.gmra.mxu0 %v5908
      %v6175 = vpop.f32.mrf.mxu0
      %v6176 = vadd.f32 %v6027, %v6175
      %6177 = vmatmul.f32.gmra.mxu0 %v5913
      %v6178 = vpop.f32.mrf.mxu0
      %v6179 = vadd.f32 %v6027, %v6178
      %6180 = vmatmul.f32.gmra.mxu0 %v5918
      %v6181 = vpop.f32.mrf.mxu0
      %v6182 = vadd.f32 %v6027, %v6181
      %6183 = vmatmul.f32.gmra.mxu0 %v5923
      %v6184 = vpop.f32.mrf.mxu0
      %v6185 = vadd.f32 %v6027, %v6184
      %6186 = vmatmul.f32.gmra.mxu0 %v5928
      %v6187 = vpop.f32.mrf.mxu0
      %v6188 = vadd.f32 %v6027, %v6187
      %6189 = vmatmul.f32.gmra.mxu0 %v5933
      %v6190 = vpop.f32.mrf.mxu0
      %v6191 = vadd.f32 %v6027, %v6190
      %6192 = vmatmul.f32.gmra.mxu0 %v5938
      %v6193 = vpop.f32.mrf.mxu0
      %v6194 = vadd.f32 %v6027, %v6193
      %6195 = vmatmul.f32.gmra.mxu0 %v5943
      %v6196 = vpop.f32.mrf.mxu0
      %v6197 = vadd.f32 %v6027, %v6196
      %6198 = vmatmul.f32.gmra.mxu0 %v5948
      %v6199 = vpop.f32.mrf.mxu0
      %v6200 = vadd.f32 %v6027, %v6199
      %6201 = vdwg.mxu0
      %6202 = vmatpush.msra.mxu0 %v5984
      %6203 = vmatpush.msra.mxu0 %v5983
      %6204 = vmatpush.msra.mxu0 %v5982
      %6205 = vmatpush.msra.mxu0 %v5981
      %6206 = vmatpush.msra.mxu0 %v5980
      %6207 = vmatpush.msra.mxu0 %v5979
      %6208 = vmatpush.msra.mxu0 %v5978
      %6209 = vmatpush.msra.mxu0 %v5977
      %6210 = vmatpush.msra.mxu0 %v5976
      %6211 = vmatpush.msra.mxu0 %v5975
      %6212 = vmatpush.msra.mxu0 %v5974
      %6213 = vmatpush.msra.mxu0 %v5973
      %6214 = vmatpush.msra.mxu0 %v5972
      %6215 = vmatpush.msra.mxu0 %v5971
      %6216 = vmatpush.msra.mxu0 %v5970
      %6217 = vmatpush.msra.mxu0 %v5969
      %6218 = vmatmul.f32.gmra.mxu0 %v5824
      %v6219 = vpop.f32.mrf.mxu0
      %v6220 = vadd.f32 %v6125, %v6219
      %6221 = vmatmul.f32.gmra.mxu0 %v5829
      %v6222 = vpop.f32.mrf.mxu0
      %v6223 = vadd.f32 %v6128, %v6222
      %6224 = vmatmul.f32.gmra.mxu0 %v5834
      %v6225 = vpop.f32.mrf.mxu0
      %v6226 = vadd.f32 %v6131, %v6225
      %6227 = vmatmul.f32.gmra.mxu0 %v5839
      %v6228 = vpop.f32.mrf.mxu0
      %v6229 = vadd.f32 %v6134, %v6228
      %6230 = vmatmul.f32.gmra.mxu0 %v5844
      %v6231 = vpop.f32.mrf.mxu0
      %v6232 = vadd.f32 %v6137, %v6231
      %6233 = vmatmul.f32.gmra.mxu0 %v5849
      %v6234 = vpop.f32.mrf.mxu0
      %v6235 = vadd.f32 %v6140, %v6234
      %6236 = vmatmul.f32.gmra.mxu0 %v5854
      %v6237 = vpop.f32.mrf.mxu0
      %v6238 = vadd.f32 %v6143, %v6237
      %6239 = vmatmul.f32.gmra.mxu0 %v5859
      %v6240 = vpop.f32.mrf.mxu0
      %v6241 = vadd.f32 %v6146, %v6240
      %6242 = vmatmul.f32.gmra.mxu0 %v5864
      %v6243 = vpop.f32.mrf.mxu0
      %v6244 = vadd.f32 %v6149, %v6243
      %6245 = vmatmul.f32.gmra.mxu0 %v5869
      %v6246 = vpop.f32.mrf.mxu0
      %v6247 = vadd.f32 %v6152, %v6246
      %6248 = vmatmul.f32.gmra.mxu0 %v5874
      %v6249 = vpop.f32.mrf.mxu0
      %v6250 = vadd.f32 %v6155, %v6249
      %6251 = vmatmul.f32.gmra.mxu0 %v5879
      %v6252 = vpop.f32.mrf.mxu0
      %v6253 = vadd.f32 %v6158, %v6252
      %6254 = vmatmul.f32.gmra.mxu0 %v5884
      %v6255 = vpop.f32.mrf.mxu0
      %v6256 = vadd.f32 %v6161, %v6255
      %6257 = vmatmul.f32.gmra.mxu0 %v5889
      %v6258 = vpop.f32.mrf.mxu0
      %v6259 = vadd.f32 %v6164, %v6258
      %6260 = vmatmul.f32.gmra.mxu0 %v5894
      %v6261 = vpop.f32.mrf.mxu0
      %v6262 = vadd.f32 %v6167, %v6261
      %6263 = vmatmul.f32.gmra.mxu0 %v5899
      %v6264 = vpop.f32.mrf.mxu0
      %v6265 = vadd.f32 %v6170, %v6264
      %6266 = vmatmul.f32.gmra.mxu0 %v5904
      %v6267 = vpop.f32.mrf.mxu0
      %v6268 = vadd.f32 %v6173, %v6267
      %6269 = vmatmul.f32.gmra.mxu0 %v5909
      %v6270 = vpop.f32.mrf.mxu0
      %v6271 = vadd.f32 %v6176, %v6270
      %6272 = vmatmul.f32.gmra.mxu0 %v5914
      %v6273 = vpop.f32.mrf.mxu0
      %v6274 = vadd.f32 %v6179, %v6273
      %6275 = vmatmul.f32.gmra.mxu0 %v5919
      %v6276 = vpop.f32.mrf.mxu0
      %v6277 = vadd.f32 %v6182, %v6276
      %6278 = vmatmul.f32.gmra.mxu0 %v5924
      %v6279 = vpop.f32.mrf.mxu0
      %v6280 = vadd.f32 %v6185, %v6279
      %6281 = vmatmul.f32.gmra.mxu0 %v5929
      %v6282 = vpop.f32.mrf.mxu0
      %v6283 = vadd.f32 %v6188, %v6282
      %6284 = vmatmul.f32.gmra.mxu0 %v5934
      %v6285 = vpop.f32.mrf.mxu0
      %v6286 = vadd.f32 %v6191, %v6285
      %6287 = vmatmul.f32.gmra.mxu0 %v5939
      %v6288 = vpop.f32.mrf.mxu0
      %v6289 = vadd.f32 %v6194, %v6288
      %6290 = vmatmul.f32.gmra.mxu0 %v5944
      %v6291 = vpop.f32.mrf.mxu0
      %v6292 = vadd.f32 %v6197, %v6291
      %6293 = vmatmul.f32.gmra.mxu0 %v5949
      %v6294 = vpop.f32.mrf.mxu0
      %v6295 = vadd.f32 %v6200, %v6294
      %6296 = vdwg.mxu0
      %6297 = vmatpush.msra.mxu0 %v6000
      %6298 = vmatpush.msra.mxu0 %v5999
      %6299 = vmatpush.msra.mxu0 %v5998
      %6300 = vmatpush.msra.mxu0 %v5997
      %6301 = vmatpush.msra.mxu0 %v5996
      %6302 = vmatpush.msra.mxu0 %v5995
      %6303 = vmatpush.msra.mxu0 %v5994
      %6304 = vmatpush.msra.mxu0 %v5993
      %6305 = vmatpush.msra.mxu0 %v5992
      %6306 = vmatpush.msra.mxu0 %v5991
      %6307 = vmatpush.msra.mxu0 %v5990
      %6308 = vmatpush.msra.mxu0 %v5989
      %6309 = vmatpush.msra.mxu0 %v5988
      %6310 = vmatpush.msra.mxu0 %v5987
      %6311 = vmatpush.msra.mxu0 %v5986
      %6312 = vmatpush.msra.mxu0 %v5985
      %6313 = vmatmul.f32.gmra.mxu0 %v5825
      %v6314 = vpop.f32.mrf.mxu0
      %v6315 = vadd.f32 %v6220, %v6314
      %6316 = vmatmul.f32.gmra.mxu0 %v5830
      %v6317 = vpop.f32.mrf.mxu0
      %v6318 = vadd.f32 %v6223, %v6317
      %6319 = vmatmul.f32.gmra.mxu0 %v5835
      %v6320 = vpop.f32.mrf.mxu0
      %v6321 = vadd.f32 %v6226, %v6320
      %6322 = vmatmul.f32.gmra.mxu0 %v5840
      %v6323 = vpop.f32.mrf.mxu0
      %v6324 = vadd.f32 %v6229, %v6323
      %6325 = vmatmul.f32.gmra.mxu0 %v5845
      %v6326 = vpop.f32.mrf.mxu0
      %v6327 = vadd.f32 %v6232, %v6326
      %6328 = vmatmul.f32.gmra.mxu0 %v5850
      %v6329 = vpop.f32.mrf.mxu0
      %v6330 = vadd.f32 %v6235, %v6329
      %6331 = vmatmul.f32.gmra.mxu0 %v5855
      %v6332 = vpop.f32.mrf.mxu0
      %v6333 = vadd.f32 %v6238, %v6332
      %6334 = vmatmul.f32.gmra.mxu0 %v5860
      %v6335 = vpop.f32.mrf.mxu0
      %v6336 = vadd.f32 %v6241, %v6335
      %6337 = vmatmul.f32.gmra.mxu0 %v5865
      %v6338 = vpop.f32.mrf.mxu0
      %v6339 = vadd.f32 %v6244, %v6338
      %6340 = vmatmul.f32.gmra.mxu0 %v5870
      %v6341 = vpop.f32.mrf.mxu0
      %v6342 = vadd.f32 %v6247, %v6341
      %6343 = vmatmul.f32.gmra.mxu0 %v5875
      %v6344 = vpop.f32.mrf.mxu0
      %v6345 = vadd.f32 %v6250, %v6344
      %6346 = vmatmul.f32.gmra.mxu0 %v5880
      %v6347 = vpop.f32.mrf.mxu0
      %v6348 = vadd.f32 %v6253, %v6347
      %6349 = vmatmul.f32.gmra.mxu0 %v5885
      %v6350 = vpop.f32.mrf.mxu0
      %v6351 = vadd.f32 %v6256, %v6350
      %6352 = vmatmul.f32.gmra.mxu0 %v5890
      %v6353 = vpop.f32.mrf.mxu0
      %v6354 = vadd.f32 %v6259, %v6353
      %6355 = vmatmul.f32.gmra.mxu0 %v5895
      %v6356 = vpop.f32.mrf.mxu0
      %v6357 = vadd.f32 %v6262, %v6356
      %6358 = vmatmul.f32.gmra.mxu0 %v5900
      %v6359 = vpop.f32.mrf.mxu0
      %v6360 = vadd.f32 %v6265, %v6359
      %6361 = vmatmul.f32.gmra.mxu0 %v5905
      %v6362 = vpop.f32.mrf.mxu0
      %v6363 = vadd.f32 %v6268, %v6362
      %6364 = vmatmul.f32.gmra.mxu0 %v5910
      %v6365 = vpop.f32.mrf.mxu0
      %v6366 = vadd.f32 %v6271, %v6365
      %6367 = vmatmul.f32.gmra.mxu0 %v5915
      %v6368 = vpop.f32.mrf.mxu0
      %v6369 = vadd.f32 %v6274, %v6368
      %6370 = vmatmul.f32.gmra.mxu0 %v5920
      %v6371 = vpop.f32.mrf.mxu0
      %v6372 = vadd.f32 %v6277, %v6371
      %6373 = vmatmul.f32.gmra.mxu0 %v5925
      %v6374 = vpop.f32.mrf.mxu0
      %v6375 = vadd.f32 %v6280, %v6374
      %6376 = vmatmul.f32.gmra.mxu0 %v5930
      %v6377 = vpop.f32.mrf.mxu0
      %v6378 = vadd.f32 %v6283, %v6377
      %6379 = vmatmul.f32.gmra.mxu0 %v5935
      %v6380 = vpop.f32.mrf.mxu0
      %v6381 = vadd.f32 %v6286, %v6380
      %6382 = vmatmul.f32.gmra.mxu0 %v5940
      %v6383 = vpop.f32.mrf.mxu0
      %v6384 = vadd.f32 %v6289, %v6383
      %6385 = vmatmul.f32.gmra.mxu0 %v5945
      %v6386 = vpop.f32.mrf.mxu0
      %v6387 = vadd.f32 %v6292, %v6386
      %6388 = vmatmul.f32.gmra.mxu0 %v5950
      %v6389 = vpop.f32.mrf.mxu0
      %v6390 = vadd.f32 %v6295, %v6389
      %6391 = vdwg.mxu0
      %6392 = vmatpush.msra.mxu0 %v6016
      %6393 = vmatpush.msra.mxu0 %v6015
      %6394 = vmatpush.msra.mxu0 %v6014
      %6395 = vmatpush.msra.mxu0 %v6013
      %6396 = vmatpush.msra.mxu0 %v6012
      %6397 = vmatpush.msra.mxu0 %v6011
      %6398 = vmatpush.msra.mxu0 %v6010
      %6399 = vmatpush.msra.mxu0 %v6009
      %6400 = vmatpush.msra.mxu0 %v6008
      %6401 = vmatpush.msra.mxu0 %v6007
      %6402 = vmatpush.msra.mxu0 %v6006
      %6403 = vmatpush.msra.mxu0 %v6005
      %6404 = vmatpush.msra.mxu0 %v6004
      %6405 = vmatpush.msra.mxu0 %v6003
      %6406 = vmatpush.msra.mxu0 %v6002
      %6407 = vmatpush.msra.mxu0 %v6001
      %6408 = vmatmul.f32.gmra.mxu0 %v5826
      %v6409 = vpop.f32.mrf.mxu0
      %v6410 = vadd.f32 %v6315, %v6409
      %6411 = vmatmul.f32.gmra.mxu0 %v5831
      %v6412 = vpop.f32.mrf.mxu0
      %v6413 = vadd.f32 %v6318, %v6412
      %6414 = vmatmul.f32.gmra.mxu0 %v5836
      %v6415 = vpop.f32.mrf.mxu0
      %v6416 = vadd.f32 %v6321, %v6415
      %6417 = vmatmul.f32.gmra.mxu0 %v5841
      %v6418 = vpop.f32.mrf.mxu0
      %v6419 = vadd.f32 %v6324, %v6418
      %6420 = vmatmul.f32.gmra.mxu0 %v5846
      %v6421 = vpop.f32.mrf.mxu0
      %v6422 = vadd.f32 %v6327, %v6421
      %6423 = vmatmul.f32.gmra.mxu0 %v5851
      %v6424 = vpop.f32.mrf.mxu0
      %v6425 = vadd.f32 %v6330, %v6424
      %6426 = vmatmul.f32.gmra.mxu0 %v5856
      %v6427 = vpop.f32.mrf.mxu0
      %v6428 = vadd.f32 %v6333, %v6427
      %6429 = vmatmul.f32.gmra.mxu0 %v5861
      %v6430 = vpop.f32.mrf.mxu0
      %v6431 = vadd.f32 %v6336, %v6430
      %6432 = vmatmul.f32.gmra.mxu0 %v5866
      %v6433 = vpop.f32.mrf.mxu0
      %v6434 = vadd.f32 %v6339, %v6433
      %6435 = vmatmul.f32.gmra.mxu0 %v5871
      %v6436 = vpop.f32.mrf.mxu0
      %v6437 = vadd.f32 %v6342, %v6436
      %6438 = vmatmul.f32.gmra.mxu0 %v5876
      %v6439 = vpop.f32.mrf.mxu0
      %v6440 = vadd.f32 %v6345, %v6439
      %6441 = vmatmul.f32.gmra.mxu0 %v5881
      %v6442 = vpop.f32.mrf.mxu0
      %v6443 = vadd.f32 %v6348, %v6442
      %6444 = vmatmul.f32.gmra.mxu0 %v5886
      %v6445 = vpop.f32.mrf.mxu0
      %v6446 = vadd.f32 %v6351, %v6445
      %6447 = vmatmul.f32.gmra.mxu0 %v5891
      %v6448 = vpop.f32.mrf.mxu0
      %v6449 = vadd.f32 %v6354, %v6448
      %6450 = vmatmul.f32.gmra.mxu0 %v5896
      %v6451 = vpop.f32.mrf.mxu0
      %v6452 = vadd.f32 %v6357, %v6451
      %6453 = vmatmul.f32.gmra.mxu0 %v5901
      %v6454 = vpop.f32.mrf.mxu0
      %v6455 = vadd.f32 %v6360, %v6454
      %6456 = vmatmul.f32.gmra.mxu0 %v5906
      %v6457 = vpop.f32.mrf.mxu0
      %v6458 = vadd.f32 %v6363, %v6457
      %6459 = vmatmul.f32.gmra.mxu0 %v5911
      %v6460 = vpop.f32.mrf.mxu0
      %v6461 = vadd.f32 %v6366, %v6460
      %6462 = vmatmul.f32.gmra.mxu0 %v5916
      %v6463 = vpop.f32.mrf.mxu0
      %v6464 = vadd.f32 %v6369, %v6463
      %6465 = vmatmul.f32.gmra.mxu0 %v5921
      %v6466 = vpop.f32.mrf.mxu0
      %v6467 = vadd.f32 %v6372, %v6466
      %6468 = vmatmul.f32.gmra.mxu0 %v5926
      %v6469 = vpop.f32.mrf.mxu0
      %v6470 = vadd.f32 %v6375, %v6469
      %6471 = vmatmul.f32.gmra.mxu0 %v5931
      %v6472 = vpop.f32.mrf.mxu0
      %v6473 = vadd.f32 %v6378, %v6472
      %6474 = vmatmul.f32.gmra.mxu0 %v5936
      %v6475 = vpop.f32.mrf.mxu0
      %v6476 = vadd.f32 %v6381, %v6475
      %6477 = vmatmul.f32.gmra.mxu0 %v5941
      %v6478 = vpop.f32.mrf.mxu0
      %v6479 = vadd.f32 %v6384, %v6478
      %6480 = vmatmul.f32.gmra.mxu0 %v5946
      %v6481 = vpop.f32.mrf.mxu0
      %v6482 = vadd.f32 %v6387, %v6481
      %6483 = vmatmul.f32.gmra.mxu0 %v5951
      %v6484 = vpop.f32.mrf.mxu0
      %v6485 = vadd.f32 %v6390, %v6484
      %6486 = vdwg.mxu0
      %6487 = vmatpush.msra.mxu0 0.0
      %6488 = vmatpush.msra.mxu0 0.0
      %6489 = vmatpush.msra.mxu0 0.0
      %6490 = vmatpush.msra.mxu0 0.0
      %6491 = vmatpush.msra.mxu0 0.0
      %6492 = vmatpush.msra.mxu0 0.0
      %6493 = vmatpush.msra.mxu0 0.0
      %6494 = vmatpush.msra.mxu0 0.0
      %6495 = vmatpush.msra.mxu0 %v6024
      %6496 = vmatpush.msra.mxu0 %v6023
      %6497 = vmatpush.msra.mxu0 %v6022
      %6498 = vmatpush.msra.mxu0 %v6021
      %6499 = vmatpush.msra.mxu0 %v6020
      %6500 = vmatpush.msra.mxu0 %v6019
      %6501 = vmatpush.msra.mxu0 %v6018
      %6502 = vmatpush.msra.mxu0 %v6017
      %6503 = vmatmul.f32.gmra.mxu0 %v6030
      %v6504 = vpop.f32.mrf.mxu0
      %v6505 = vadd.f32 %v6410, %v6504
      %6506 = vmatmul.f32.gmra.mxu0 %v6033
      %v6507 = vpop.f32.mrf.mxu0
      %v6508 = vadd.f32 %v6413, %v6507
      %6509 = vmatmul.f32.gmra.mxu0 %v6036
      %v6510 = vpop.f32.mrf.mxu0
      %v6511 = vadd.f32 %v6416, %v6510
      %6512 = vmatmul.f32.gmra.mxu0 %v6039
      %v6513 = vpop.f32.mrf.mxu0
      %v6514 = vadd.f32 %v6419, %v6513
      %6515 = vmatmul.f32.gmra.mxu0 %v6042
      %v6516 = vpop.f32.mrf.mxu0
      %v6517 = vadd.f32 %v6422, %v6516
      %6518 = vmatmul.f32.gmra.mxu0 %v6045
      %v6519 = vpop.f32.mrf.mxu0
      %v6520 = vadd.f32 %v6425, %v6519
      %6521 = vmatmul.f32.gmra.mxu0 %v6048
      %v6522 = vpop.f32.mrf.mxu0
      %v6523 = vadd.f32 %v6428, %v6522
      %6524 = vmatmul.f32.gmra.mxu0 %v6051
      %v6525 = vpop.f32.mrf.mxu0
      %v6526 = vadd.f32 %v6431, %v6525
      %6527 = vmatmul.f32.gmra.mxu0 %v6054
      %v6528 = vpop.f32.mrf.mxu0
      %v6529 = vadd.f32 %v6434, %v6528
      %6530 = vmatmul.f32.gmra.mxu0 %v6057
      %v6531 = vpop.f32.mrf.mxu0
      %v6532 = vadd.f32 %v6437, %v6531
      %6533 = vmatmul.f32.gmra.mxu0 %v6060
      %v6534 = vpop.f32.mrf.mxu0
      %v6535 = vadd.f32 %v6440, %v6534
      %6536 = vmatmul.f32.gmra.mxu0 %v6063
      %v6537 = vpop.f32.mrf.mxu0
      %v6538 = vadd.f32 %v6443, %v6537
      %6539 = vmatmul.f32.gmra.mxu0 %v6066
      %v6540 = vpop.f32.mrf.mxu0
      %v6541 = vadd.f32 %v6446, %v6540
      %6542 = vmatmul.f32.gmra.mxu0 %v6069
      %v6543 = vpop.f32.mrf.mxu0
      %v6544 = vadd.f32 %v6449, %v6543
      %6545 = vmatmul.f32.gmra.mxu0 %v6072
      %v6546 = vpop.f32.mrf.mxu0
      %v6547 = vadd.f32 %v6452, %v6546
      %6548 = vmatmul.f32.gmra.mxu0 %v6075
      %v6549 = vpop.f32.mrf.mxu0
      %v6550 = vadd.f32 %v6455, %v6549
      %6551 = vmatmul.f32.gmra.mxu0 %v6078
      %v6552 = vpop.f32.mrf.mxu0
      %v6553 = vadd.f32 %v6458, %v6552
      %6554 = vmatmul.f32.gmra.mxu0 %v6081
      %v6555 = vpop.f32.mrf.mxu0
      %v6556 = vadd.f32 %v6461, %v6555
      %6557 = vmatmul.f32.gmra.mxu0 %v6084
      %v6558 = vpop.f32.mrf.mxu0
      %v6559 = vadd.f32 %v6464, %v6558
      %6560 = vmatmul.f32.gmra.mxu0 %v6087
      %v6561 = vpop.f32.mrf.mxu0
      %v6562 = vadd.f32 %v6467, %v6561
      %6563 = vmatmul.f32.gmra.mxu0 %v6090
      %v6564 = vpop.f32.mrf.mxu0
      %v6565 = vadd.f32 %v6470, %v6564
      %6566 = vmatmul.f32.gmra.mxu0 %v6093
      %v6567 = vpop.f32.mrf.mxu0
      %v6568 = vadd.f32 %v6473, %v6567
      %6569 = vmatmul.f32.gmra.mxu0 %v6096
      %v6570 = vpop.f32.mrf.mxu0
      %v6571 = vadd.f32 %v6476, %v6570
      %6572 = vmatmul.f32.gmra.mxu0 %v6099
      %v6573 = vpop.f32.mrf.mxu0
      %v6574 = vadd.f32 %v6479, %v6573
      %6575 = vmatmul.f32.gmra.mxu0 %v6102
      %v6576 = vpop.f32.mrf.mxu0
      %v6577 = vadd.f32 %v6482, %v6576
      %6578 = vmatmul.f32.gmra.mxu0 %v6105
      %v6579 = vpop.f32.mrf.mxu0
      %v6580 = vadd.f32 %v6485, %v6579
      %6581 = vdwg.mxu0
      %6582 = vst [vmem:[#allocation6] sm:$0xff] %v6505
      %6583 = vst [vmem:[#allocation6 + $0x18] sm:$0xff] %v6508
      %6584 = vst [vmem:[#allocation6 + $0x30] sm:$0xff] %v6511
      %6585 = vst [vmem:[#allocation6 + $0x48] sm:$0xff] %v6514
      %6586 = vst [vmem:[#allocation6 + $0x60] sm:$0xff] %v6517
      %6587 = vst [vmem:[#allocation6 + $0x78] sm:$0xff] %v6520
      %6588 = vst [vmem:[#allocation6 + $0x90] sm:$0xff] %v6523
      %6589 = vst [vmem:[#allocation6 + $0xa8] sm:$0xff] %v6526
      %6590 = vst [vmem:[#allocation6 + $0xc0] sm:$0xff] %v6529
      %6591 = vst [vmem:[#allocation6 + $0xd8] sm:$0xff] %v6532
      %6592 = vst [vmem:[#allocation6 + $0xf0] sm:$0xff] %v6535
      %6593 = vst [vmem:[#allocation6 + $0x108] sm:$0xff] %v6538
      %6594 = vst [vmem:[#allocation6 + $0x120] sm:$0xff] %v6541
      %6595 = vst [vmem:[#allocation6 + $0x138] sm:$0xff] %v6544
      %6596 = vst [vmem:[#allocation6 + $0x150] sm:$0xff] %v6547
      %6597 = vst [vmem:[#allocation6 + $0x168] sm:$0xff] %v6550
      %6598 = vst [vmem:[#allocation6 + $0x180] sm:$0xff] %v6553
      %6599 = vst [vmem:[#allocation6 + $0x198] sm:$0xff] %v6556
      %6600 = vst [vmem:[#allocation6 + $0x1b0] sm:$0xff] %v6559
      %6601 = vst [vmem:[#allocation6 + $0x1c8] sm:$0xff] %v6562
      %6602 = vst [vmem:[#allocation6 + $0x1e0] sm:$0xff] %v6565
      %6603 = vst [vmem:[#allocation6 + $0x1f8] sm:$0xff] %v6568
      %6604 = vst [vmem:[#allocation6 + $0x210] sm:$0xff] %v6571
      %6605 = vst [vmem:[#allocation6 + $0x228] sm:$0xff] %v6574
      %6606 = vst [vmem:[#allocation6 + $0x240] sm:$0xff] %v6577
      %6607 = vst [vmem:[#allocation6 + $0x258] sm:$0xff] %v6580
      %v6608 = vld [vmem:[#allocation6] sm:$0xff]
      %v6609 = vld [vmem:[#allocation6 + $0x18] sm:$0xff]
      %v6610 = vld [vmem:[#allocation6 + $0x30] sm:$0xff]
      %v6611 = vld [vmem:[#allocation6 + $0x48] sm:$0xff]
      %v6612 = vld [vmem:[#allocation6 + $0x60] sm:$0xff]
      %v6613 = vld [vmem:[#allocation6 + $0x78] sm:$0xff]
      %v6614 = vld [vmem:[#allocation6 + $0x90] sm:$0xff]
      %v6615 = vld [vmem:[#allocation6 + $0xa8] sm:$0xff]
      %v6616 = vld [vmem:[#allocation6 + $0xc0] sm:$0xff]
      %v6617 = vld [vmem:[#allocation6 + $0xd8] sm:$0xff]
      %v6618 = vld [vmem:[#allocation6 + $0xf0] sm:$0xff]
      %v6619 = vld [vmem:[#allocation6 + $0x108] sm:$0xff]
      %v6620 = vld [vmem:[#allocation6 + $0x120] sm:$0xff]
      %v6621 = vld [vmem:[#allocation6 + $0x138] sm:$0xff]
      %v6622 = vld [vmem:[#allocation6 + $0x150] sm:$0xff]
      %v6623 = vld [vmem:[#allocation6 + $0x168] sm:$0xff]
      %v6624 = vld [vmem:[#allocation6 + $0x180] sm:$0xff]
      %v6625 = vld [vmem:[#allocation6 + $0x198] sm:$0xff]
      %v6626 = vld [vmem:[#allocation6 + $0x1b0] sm:$0xff]
      %v6627 = vld [vmem:[#allocation6 + $0x1c8] sm:$0xff]
      %v6628 = vld [vmem:[#allocation6 + $0x1e0] sm:$0xff]
      %v6629 = vld [vmem:[#allocation6 + $0x1f8] sm:$0xff]
      %v6630 = vld [vmem:[#allocation6 + $0x210] sm:$0xff]
      %v6631 = vld [vmem:[#allocation6 + $0x228] sm:$0xff]
      %v6632 = vld [vmem:[#allocation6 + $0x240] sm:$0xff]
      %v6633 = vld [vmem:[#allocation6 + $0x258] sm:$0xff]
      %6634 = vst [vmem:[%s667] sm:$0xff] %v6608
      %6635 = vst [vmem:[%s667 + $0x8] sm:$0xff] %v6609
      %6636 = vst [vmem:[%s667 + $0x10] sm:$0xff] %v6610
      %6637 = vst [vmem:[%s667 + $0x18] sm:$0xff] %v6611
      %6638 = vst [vmem:[%s667 + $0x20] sm:$0xff] %v6612
      %6639 = vst [vmem:[%s667 + $0x28] sm:$0xff] %v6613
      %6640 = vst [vmem:[%s667 + $0x30] sm:$0xff] %v6614
      %6641 = vst [vmem:[%s667 + $0x38] sm:$0xff] %v6615
      %6642 = vst [vmem:[%s667 + $0x40] sm:$0xff] %v6616
      %6643 = vst [vmem:[%s667 + $0x48] sm:$0xff] %v6617
      %6644 = vst [vmem:[%s667 + $0x50] sm:$0xff] %v6618
      %6645 = vst [vmem:[%s667 + $0x58] sm:$0xff] %v6619
      %6646 = vst [vmem:[%s667 + $0x60] sm:$0xff] %v6620
      %6647 = vst [vmem:[%s667 + $0x68] sm:$0xff] %v6621
      %6648 = vst [vmem:[%s667 + $0x70] sm:$0xff] %v6622
      %6649 = vst [vmem:[%s667 + $0x78] sm:$0xff] %v6623
      %6650 = vst [vmem:[%s667 + $0x80] sm:$0xff] %v6624
      %6651 = vst [vmem:[%s667 + $0x88] sm:$0xff] %v6625
      %6652 = vst [vmem:[%s667 + $0x90] sm:$0xff] %v6626
      %6653 = vst [vmem:[%s667 + $0x98] sm:$0xff] %v6627
      %6654 = vst [vmem:[%s667 + $0xa0] sm:$0xff] %v6628
      %6655 = vst [vmem:[%s667 + $0xa8] sm:$0xff] %v6629
      %6656 = vst [vmem:[%s667 + $0xb0] sm:$0xff] %v6630
      %6657 = vst [vmem:[%s667 + $0xb8] sm:$0xff] %v6631
      %6658 = vst [vmem:[%s667 + $0xc0] sm:$0xff] %v6632
      %6659 = vst [vmem:[%s667 + $0xc8] sm:$0xff] %v6633
      %p6660 = scmp.lt.s32.totalorder %s31, 1
      %s6661 = scalar_select %p6660, %s31, 1
      %s6662 = smul.addr %s6661, 4
      %s6663 = smul.addr %s6662, 8
      %s6664 = scalar_lea.vmem %s17, %s6663
      %p6665 = scmp.lt.s32.totalorder %s31, 1
      %s6666 = scalar_select %p6665, %s31, 1
      %s6667 = smul.addr %s6666, 14
      %s6668 = smul.addr %s6667, 8
      %s6669 = scalar_lea.vmem %s18, %s6668
      %p6670 = scmp.lt.s32.totalorder %s31, 1
      %s6671 = scalar_select %p6670, %s31, 1
      %s6672 = smul.addr %s6671, 26
      %s6673 = smul.addr %s6672, 8
      %s6674 = scalar_lea.vmem %s19, %s6673
      // Predicated region
      $region89: #{pyramid_features_forward.1} parent=87 // pred_check
        %p6675 = pneg %p421
      $region90: #{pyramid_features_forward.1} parent=87 // pred_check_branch
        %6677 = sbr.rel (%p6675) target = $region92
      $region91: #{pyramid_features_forward.1} parent=87 // pred_region
        _
      $region92: #{pyramid_features_forward.1} parent=87 // pred_fallthru
        _
      // Predicated region
      $region93: #{pyramid_features_forward.1} parent=87 // pred_check
        %p6678 = pneg %p447
      $region94: #{pyramid_features_forward.1} parent=87 // pred_check_branch
        %6680 = sbr.rel (%p6678) target = $region96
      $region95: #{pyramid_features_forward.1} parent=87 // pred_region
        _
      $region96: #{pyramid_features_forward.1} parent=87 // pred_fallthru
        _
      // Predicated region
      $region97: #{pyramid_features_forward.1} parent=87 // pred_check
        %p6681 = pneg %p473
      $region98: #{pyramid_features_forward.1} parent=87 // pred_check_branch
        %6683 = sbr.rel (%p6681) target = $region100
      $region99: #{pyramid_features_forward.1} parent=87 // pred_region
        _
      $region100: #{pyramid_features_forward.1} parent=87 // pred_fallthru
        _
    $region88: #{pyramid_features_forward.1} parent=5 // pred_fallthru
      _
    %p6684 = scmp.le.s32.totalorder 2, %s26
    // Predicated region
    $region101: #{pyramid_features_forward.1} parent=5 // pred_check
      %p6685 = pneg %p6684
    $region102: #{pyramid_features_forward.1} parent=5 // pred_check_branch
      %6687 = sbr.rel (%p6685) target = $region104
    $region103: #{pyramid_features_forward.1} parent=5 // pred_region
      %s6688 = ssub.s32 %s26, 2
      // Predicated region
      $region105: #{pyramid_features_forward.1} parent=103 // pred_check
        %p6689 = pneg %p427
      $region106: #{pyramid_features_forward.1} parent=103 // pred_check_branch
        %6691 = sbr.rel (%p6689) target = $region108
      $region107: #{pyramid_features_forward.1} parent=103 // pred_region
        %p6692 = scmp.lt.s32.totalorder %s32, 1
        %s6693 = scalar_select %p6692, %s32, 1
        %s6694 = smul.addr %s6693, 4
        %s6695 = smul.addr %s6694, 8
        %s6696 = scalar_lea.vmem %s17, %s6695
      $region108: #{pyramid_features_forward.1} parent=103 // pred_fallthru
        _
      // Predicated region
      $region109: #{pyramid_features_forward.1} parent=103 // pred_check
        %p6697 = pneg %p453
      $region110: #{pyramid_features_forward.1} parent=103 // pred_check_branch
        %6699 = sbr.rel (%p6697) target = $region112
      $region111: #{pyramid_features_forward.1} parent=103 // pred_region
        %p6700 = scmp.lt.s32.totalorder %s32, 1
        %s6701 = scalar_select %p6700, %s32, 1
        %s6702 = smul.addr %s6701, 14
        %s6703 = smul.addr %s6702, 8
        %s6704 = scalar_lea.vmem %s18, %s6703
      $region112: #{pyramid_features_forward.1} parent=103 // pred_fallthru
        _
      // Predicated region
      $region113: #{pyramid_features_forward.1} parent=103 // pred_check
        %p6705 = pneg %p479
      $region114: #{pyramid_features_forward.1} parent=103 // pred_check_branch
        %6707 = sbr.rel (%p6705) target = $region116
      $region115: #{pyramid_features_forward.1} parent=103 // pred_region
        %p6708 = scmp.lt.s32.totalorder %s32, 1
        %s6709 = scalar_select %p6708, %s32, 1
        %s6710 = smul.addr %s6709, 26
        %s6711 = smul.addr %s6710, 8
        %s6712 = scalar_lea.vmem %s19, %s6711
      $region116: #{pyramid_features_forward.1} parent=103 // pred_fallthru
        _
    $region104: #{pyramid_features_forward.1} parent=5 // pred_fallthru
      _
  $region6: #{pyramid_features_forward.1} parent=0 // loop_footer
    %s30 = sadd.s32 1, %s26
  $region7: #{pyramid_features_forward.1} parent=0 // loop_footer_branch
    %25 = sbr.rel target = $region3
  $region8: #{pyramid_features_forward.1} parent=0 // loop_exit
    _

</llo_original>
